<compile_context>
chip_gen: v7x
topology: tpu7x:2x2x1
jax: 0.10.0
libtpu: 0.0.40
codegen_flags: <defaults>
</compile_context>

<pallas_src>
import functools

import jax
import jax.numpy as jnp
from jax.experimental import pallas as pl
from jax.experimental.pallas import tpu as pltpu


# ----------------------------------------------------------------------------
# Pallas kernels
# ----------------------------------------------------------------------------
def _gemm_kernel(a_ref, w_ref, b_ref, o_ref, *, act):
    """o = act(a @ w + b); a:(TM,K) bf16, w:(K,N) bf16, b:(1,N) f32."""
    acc = jnp.dot(a_ref[...], w_ref[...], preferred_element_type=jnp.float32)
    acc = acc + b_ref[...]
    if act == "relu":
        acc = jnp.maximum(acc, 0.0)
    elif act == "sigmoid":
        acc = 1.0 / (1.0 + jnp.exp(-acc))
    o_ref[...] = acc.astype(o_ref.dtype)


def gemm_bias_act(a, w, b, act="none", out_dtype=jnp.float32):
    """Fused (M,K)@(K,N) + bias + activation, tiled over M, bf16 MXU inputs."""
    a = a.astype(jnp.bfloat16)
    M, K = a.shape
    N = w.shape[1]
    TM = min(M, 256)
    if M % TM:                       # all shapes in this model divide evenly
        TM = M
    grid = (M // TM,)
    return pl.pallas_call(
        functools.partial(_gemm_kernel, act=act),
        grid=grid,
        in_specs=[
            pl.BlockSpec((TM, K), lambda i: (i, 0)),
            pl.BlockSpec((K, N), lambda i: (0, 0)),
            pl.BlockSpec((1, N), lambda i: (0, 0)),
        ],
        out_specs=pl.BlockSpec((TM, N), lambda i: (i, 0)),
        out_shape=jax.ShapeDtypeStruct((M, N), out_dtype),
        compiler_params=pltpu.CompilerParams(dimension_semantics=("parallel",)),
    )(a, w, b)


def _fc_fsq_kernel(h_ref, w_ref, b_ref, zq_ref, loss_ref, *, num_levels):
    """Encoder FC fused with the FSQ quantizer epilogue."""
    # TODO(synk): FiniteScalarQuantization source was not provided; standard
    # FSQ implemented: tanh-bound to [-1,1], round to `num_levels` levels,
    # quant_loss = MSE(quantized, bounded).
    z = jnp.dot(h_ref[...], w_ref[...], preferred_element_type=jnp.float32)
    z = z + b_ref[...]
    zb = jnp.tanh(z)
    L = float(num_levels)
    zq = 2.0 * jnp.round((zb + 1.0) * 0.5 * (L - 1.0)) / (L - 1.0) - 1.0
    zq_ref[...] = zq.astype(zq_ref.dtype)
    loss_ref[...] = jnp.reshape(jnp.mean((zq - zb) ** 2), (1, 1))


def fc_fsq(h, w, b, num_levels):
    B = h.shape[0]
    N = w.shape[1]
    zq, loss = pl.pallas_call(
        functools.partial(_fc_fsq_kernel, num_levels=num_levels),
        out_shape=(
            jax.ShapeDtypeStruct((B, N), jnp.float32),
            jax.ShapeDtypeStruct((1, 1), jnp.float32),
        ),
    )(h.astype(jnp.bfloat16), w, b)
    return zq, loss[0, 0]


def _final_deconv_kernel(a_ref, w_ref, b_ref, t_ref, o_ref, bce_ref):
    """Last deconv GEMM + sigmoid epilogue + fused BCE(sum) vs. target slab."""
    acc = jnp.dot(a_ref[...], w_ref[...], preferred_element_type=jnp.float32)
    # Exact sigmoid (no approx reciprocal): output must stay in [0,1] for BCE.
    p = 1.0 / (1.0 + jnp.exp(-(acc + b_ref[...])))
    o_ref[...] = p
    t = t_ref[...]
    logp = jnp.maximum(jnp.log(p), -100.0)          # clamp BEFORE multiply
    log1mp = jnp.maximum(jnp.log(1.0 - p), -100.0)  # (matches torch BCE)
    part = -jnp.sum(t * logp + (1.0 - t) * log1mp)

    @pl.when(pl.program_id(0) == 0)
    def _():
        bce_ref[...] = jnp.zeros_like(bce_ref)

    bce_ref[...] += jnp.reshape(part, (1, 1))


def final_deconv_sigmoid_bce(a, w, b, target):
    a = a.astype(jnp.bfloat16)
    M, K = a.shape
    N = w.shape[1]
    TM = min(M, 256)
    if M % TM:
        TM = M
    grid = (M // TM,)
    recon, bce = pl.pallas_call(
        _final_deconv_kernel,
        grid=grid,
        in_specs=[
            pl.BlockSpec((TM, K), lambda i: (i, 0)),
            pl.BlockSpec((K, N), lambda i: (0, 0)),
            pl.BlockSpec((1, N), lambda i: (0, 0)),
            pl.BlockSpec((TM, N), lambda i: (i, 0)),
        ],
        out_specs=(
            pl.BlockSpec((TM, N), lambda i: (i, 0)),
            pl.BlockSpec((1, 1), lambda i: (0, 0)),   # loss accumulator
        ),
        out_shape=(
            jax.ShapeDtypeStruct((M, N), jnp.float32),
            jax.ShapeDtypeStruct((1, 1), jnp.float32),
        ),
        compiler_params=pltpu.CompilerParams(dimension_semantics=("arbitrary",)),
    )(a, w, b, target)
    return recon, bce[0, 0]


# ----------------------------------------------------------------------------
# Patch extraction (wrapper glue, bf16) and layer wrappers
# ----------------------------------------------------------------------------
def _patches_conv_s2k4(x_nhwc):
    """4x4 / stride-2 / pad-1 conv patches -> (B*Ho*Wo, 16*C) bf16."""
    B, H, W, C = x_nhwc.shape
    Ho, Wo = H // 2, W // 2
    xp = jnp.pad(x_nhwc.astype(jnp.bfloat16), ((0, 0), (1, 1), (1, 1), (0, 0)))
    cols = []
    for di in range(4):
        for dj in range(4):
            cols.append(xp[:, di:di + 2 * Ho:2, dj:dj + 2 * Wo:2, :])
    p = jnp.stack(cols, axis=3)                      # (B, Ho, Wo, 16, C)
    return p.reshape(B * Ho * Wo, 16 * C), (B, Ho, Wo)


def _patches_deconv_3x3(x_nhwc):
    """3x3 / stride-1 patches over the 1-padded input -> (B*H*W, 9*C) bf16."""
    B, H, W, C = x_nhwc.shape
    xp = jnp.pad(x_nhwc.astype(jnp.bfloat16), ((0, 0), (1, 1), (1, 1), (0, 0)))
    cols = []
    for r in range(3):
        for s in range(3):
            cols.append(xp[:, r:r + H, s:s + W, :])
    p = jnp.stack(cols, axis=3)                      # (B, H, W, 9, C)
    return p.reshape(B * H * W, 9 * C), (B, H, W)


def _depth_to_space2(y, B, H, W, Cout):
    """(B*H*W, 4*Cout) phase-packed slab -> (B, 2H, 2W, Cout)."""
    y = y.reshape(B, H, W, 2, 2, Cout)
    y = jnp.transpose(y, (0, 1, 3, 2, 4, 5))
    return y.reshape(B, 2 * H, 2 * W, Cout)


def _space_to_depth2(x_nhwc):
    """(B, H, W, C) -> (B*(H/2)*(W/2), 4*C), matching the phase-packed layout."""
    B, H, W, C = x_nhwc.shape
    t = x_nhwc.reshape(B, H // 2, 2, W // 2, 2, C)
    t = jnp.transpose(t, (0, 1, 3, 2, 4, 5))
    return t.reshape(B * (H // 2) * (W // 2), 4 * C)


def conv2d_s2(x_nhwc, wmat, bias, act):
    """Conv2d(k=4, s=2, p=1) as a fused im2col GEMM. Output NHWC bf16."""
    a, (B, Ho, Wo) = _patches_conv_s2k4(x_nhwc)
    Cout = wmat.shape[1]
    y = gemm_bias_act(a, wmat, bias, act, out_dtype=jnp.bfloat16)
    return y.reshape(B, Ho, Wo, Cout)


def conv_transpose2d_s2(x_nhwc, wmat_big, bias_big, act):
    """ConvTranspose2d(k=4, s=2, p=1) via sub-pixel phase decomposition.

    One lane-dense GEMM produces all 4 output phases (M, 4*Cout), then a
    depth-to-space reshuffle interleaves them into (B, 2H, 2W, Cout).
    """
    a, (B, H, W) = _patches_deconv_3x3(x_nhwc)
    Cout = wmat_big.shape[1] // 4
    y = gemm_bias_act(a, wmat_big, bias_big, act, out_dtype=jnp.bfloat16)
    return _depth_to_space2(y, B, H, W, Cout)


# ----------------------------------------------------------------------------
# Parameter init + one-time weight packing (PyTorch layouts -> GEMM layouts)
# ----------------------------------------------------------------------------
def _pack_conv_weight(w_oihw):
    """(Cout, Cin, 4, 4) -> (16*Cin, Cout) bf16, (kh,kw)-major im2col order."""
    co, ci, k, _ = w_oihw.shape
    return (jnp.transpose(w_oihw, (2, 3, 1, 0))
            .reshape(k * k * ci, co).astype(jnp.bfloat16))


def _pack_deconv_weight(w_iohw):
    """(Cin, Cout, 4, 4) -> (9*Cin, 4*Cout) bf16 sparse phase-packed weight.

    Output phase (p, q) of the stride-2 transposed conv reads the 2x2 window
    of the 1-padded input anchored at (p+i, q+j) with kernel taps
    kh = 3 - 2a - p, kw = 3 - 2b - q  (a, b in {0,1}).
    """
    ci, co, _, _ = w_iohw.shape
    row_blocks = []
    for r in range(3):
        for s in range(3):
            phase_blocks = []
            for p in range(2):
                for q in range(2):
                    a, b = r - p, s - q
                    if 0 <= a <= 1 and 0 <= b <= 1:
                        kh, kw = 3 - 2 * a - p, 3 - 2 * b - q
                        phase_blocks.append(w_iohw[:, :, kh, kw])
                    else:
                        phase_blocks.append(jnp.zeros((ci, co), jnp.float32))
            row_blocks.append(jnp.concatenate(phase_blocks, axis=1))
    return jnp.concatenate(row_blocks, axis=0).astype(jnp.bfloat16)


def init_params(key, in_channels, latent_dim, hidden_dim):
    ks = iter(jax.random.split(key, 32))

    def uni(shape, fan_in):
        bnd = 1.0 / jnp.sqrt(float(fan_in))
        return jax.random.uniform(next(ks), shape, jnp.float32, -bnd, bnd)

    p = {}
    # Encoder Conv2d: PyTorch weight (Cout, Cin, 4, 4) -> packed GEMM weight.
    chans_in = [in_channels, hidden_dim, hidden_dim, hidden_dim]
    for i, ci in enumerate(chans_in, start=1):
        w = uni((hidden_dim, ci, 4, 4), ci * 16)
        b = uni((hidden_dim,), ci * 16)
        p[f"e_conv{i}_w"] = _pack_conv_weight(w)
        p[f"e_conv{i}_b"] = b.reshape(1, -1)
    # Encoder FC: PyTorch (latent, hidden*4) -> pre-transposed (hidden*4, latent).
    w = uni((latent_dim, hidden_dim * 4), hidden_dim * 4)
    b = uni((latent_dim,), hidden_dim * 4)
    p["e_fc_w"] = w.T.astype(jnp.bfloat16)
    p["e_fc_b"] = b.reshape(1, -1)
    # Decoder FC: PyTorch (hidden*4, latent) -> pre-transposed (latent, hidden*4).
    w = uni((hidden_dim * 4, latent_dim), latent_dim)
    b = uni((hidden_dim * 4,), latent_dim)
    p["d_fc_w"] = w.T.astype(jnp.bfloat16)
    p["d_fc_b"] = b.reshape(1, -1)
    # Decoder ConvTranspose2d: PyTorch weight (Cin, Cout, 4, 4) -> phase-packed.
    chans_out = [hidden_dim, hidden_dim, hidden_dim, in_channels]
    for i, co in enumerate(chans_out, start=1):
        w = uni((hidden_dim, co, 4, 4), hidden_dim * 16)
        b = uni((co,), hidden_dim * 16)
        p[f"d_deconv{i}_w"] = _pack_deconv_weight(w)
        p[f"d_deconv{i}_b"] = jnp.tile(b, 4).reshape(1, -1)
    return p


# ----------------------------------------------------------------------------
# Full forward pass (Encoder -> FSQ -> Decoder -> losses)
# ----------------------------------------------------------------------------
def fsq_vae_forward(params, x_nchw, num_levels=10):
    B = x_nchw.shape[0]
    hidden_dim = params["e_conv2_b"].shape[1]
    x_nhwc = jnp.transpose(x_nchw, (0, 2, 3, 1)).astype(jnp.float32)

    # Encoder: 4 x [Conv2d(4, s=2, p=1) + ReLU] as fused im2col GEMMs.
    h = x_nhwc
    for i in range(1, 5):
        h = conv2d_s2(h, params[f"e_conv{i}_w"], params[f"e_conv{i}_b"], "relu")
    # flatten in PyTorch NCHW order: (B, hidden, 2, 2) -> (B, hidden*4)
    h_flat = jnp.transpose(h, (0, 3, 1, 2)).reshape(B, -1)

    # Encoder FC fused with the FSQ quantizer.
    zq, quant_loss = fc_fsq(h_flat, params["e_fc_w"], params["e_fc_b"], num_levels)

    # Decoder FC, then view(B, -1, 2, 2) in NCHW order -> NHWC.
    d = gemm_bias_act(zq, params["d_fc_w"], params["d_fc_b"], "none",
                      out_dtype=jnp.bfloat16)
    d = jnp.transpose(d.reshape(B, hidden_dim, 2, 2), (0, 2, 3, 1))

    # Decoder: 3 x [ConvTranspose2d + ReLU] via sub-pixel phase GEMMs.
    for i in range(1, 4):
        d = conv_transpose2d_s2(d, params[f"d_deconv{i}_w"],
                                params[f"d_deconv{i}_b"], "relu")

    # Final ConvTranspose2d + sigmoid, with BCE(sum) fused into the epilogue.
    a, (Bq, Hq, Wq) = _patches_deconv_3x3(d)
    target_slab = _space_to_depth2(x_nhwc)      # same phase-packed row layout
    Cout = params["d_deconv4_w"].shape[1] // 4
    recon_slab, recon_loss = final_deconv_sigmoid_bce(
        a, params["d_deconv4_w"], params["d_deconv4_b"], target_slab)
    recon_nhwc = _depth_to_space2(recon_slab, Bq, Hq, Wq, Cout)
    recon = jnp.transpose(recon_nhwc, (0, 3, 1, 2))               # back to NCHW

    loss = recon_loss + quant_loss
    return {
        "recon_x": recon,
        "loss": loss,
        "recon_loss": recon_loss,
        "quant_loss": quant_loss,
    }


# ----------------------------------------------------------------------------
if __name__ == "__main__":
    # Architecture forces 32x32 inputs (4 stride-2 convs -> 2x2, fc expects H*W=4).
    B, C, H, W = 2, 3, 32, 32
    latent_dim, hidden_dim, num_levels = 64, 64, 10

    key = jax.random.PRNGKey(0)
    kx, kp = jax.random.split(key)
    x = jax.random.uniform(kx, (B, C, H, W), jnp.float32)   # BCE targets in [0,1]
    params = init_params(kp, C, latent_dim, hidden_dim)

    fwd = jax.jit(functools.partial(fsq_vae_forward, num_levels=num_levels))
    out = fwd(params, x)
    jax.block_until_ready(out)

    assert out["recon_x"].shape == (B, C, H, W)
    assert jnp.isfinite(out["loss"]).item()
    print("KERNEL_OK")
</pallas_src>

<mosaic_0001>
module attributes {stable_mosaic.version = 11 : i64} {
  func.func @_gemm_kernel(%arg0: i32, %arg1: memref<256x48xbf16, #tpu.memory_space<vmem>>, %arg2: memref<48x64xbf16, #tpu.memory_space<vmem>>, %arg3: memref<1x64xf32, #tpu.memory_space<vmem>>, %arg4: memref<256x64xbf16, #tpu.memory_space<vmem>>) attributes {dimension_semantics = [#tpu.dimension_semantics<parallel>], iteration_bounds = array<i64: 2>, scalar_prefetch = 0 : i64, scratch_operands = 0 : i64, tpu.core_type = #tpu.core_type<tc>, window_params = [{transform_indices = @transform_0, window_bounds = array<i64: 256, 48>}, {pipeline_mode = #tpu.pipeline_mode<synchronous>, transform_indices = @transform_1, window_bounds = array<i64: 48, 64>}, {pipeline_mode = #tpu.pipeline_mode<synchronous>, transform_indices = @transform_2, window_bounds = array<i64: 1, 64>}, {transform_indices = @transform_3, window_bounds = array<i64: 256, 64>}]} {
    %c0 = arith.constant 0 : index
    %c0_0 = arith.constant 0 : index
    %0 = vector.load %arg1[%c0, %c0_0] : memref<256x48xbf16, #tpu.memory_space<vmem>>, vector<256x48xbf16>
    %c0_1 = arith.constant 0 : index
    %c0_2 = arith.constant 0 : index
    %1 = vector.load %arg2[%c0_1, %c0_2] : memref<48x64xbf16, #tpu.memory_space<vmem>>, vector<48x64xbf16>
    %cst = arith.constant dense<0.000000e+00> : vector<256x64xf32>
    %2 = tpu.matmul %0, %1, %cst {dimension_numbers = #tpu.dot_dimension_numbers<[1], [0], [0], [1], [0, 0, 1, 1], [], []>} : vector<256x48xbf16>, vector<48x64xbf16>, vector<256x64xf32> -> vector<256x64xf32>
    %c0_3 = arith.constant 0 : index
    %c0_4 = arith.constant 0 : index
    %3 = vector.load %arg3[%c0_3, %c0_4] : memref<1x64xf32, #tpu.memory_space<vmem>>, vector<1x64xf32>
    %4 = vector.broadcast %3 : vector<1x64xf32> to vector<256x64xf32>
    %5 = arith.addf %2, %4 : vector<256x64xf32>
    %cst_5 = arith.constant 0.000000e+00 : f32
    %6 = vector.broadcast %cst_5 : f32 to vector<256x64xf32>
    %7 = arith.maximumf %5, %6 : vector<256x64xf32>
    %8 = arith.truncf %7 : vector<256x64xf32> to vector<256x64xbf16>
    %c0_6 = arith.constant 0 : index
    %c0_7 = arith.constant 0 : index
    %9 = vector.load %arg4[%c0_6, %c0_7] : memref<256x64xbf16, #tpu.memory_space<vmem>>, vector<256x64xbf16>
    tpu.vector_store %arg4[%c0_6, %c0_7], %8 {strides = array<i32>} : memref<256x64xbf16, #tpu.memory_space<vmem>>, vector<256x64xbf16>,
    return
  }
  func.func @transform_0(%arg0: i32) -> (i32, i32) {
    %c0_i32 = arith.constant 0 : i32
    %c0_i32_0 = arith.constant 0 : i32
    return %arg0, %c0_i32 : i32, i32
  }
  func.func @transform_1(%arg0: i32) -> (i32, i32) {
    %c0_i32 = arith.constant 0 : i32
    %c0_i32_0 = arith.constant 0 : i32
    %c0_i32_1 = arith.constant 0 : i32
    return %c0_i32, %c0_i32_0 : i32, i32
  }
  func.func @transform_2(%arg0: i32) -> (i32, i32) {
    %c0_i32 = arith.constant 0 : i32
    %c0_i32_0 = arith.constant 0 : i32
    %c0_i32_1 = arith.constant 0 : i32
    return %c0_i32, %c0_i32_0 : i32, i32
  }
  func.func @transform_3(%arg0: i32) -> (i32, i32) {
    %c0_i32 = arith.constant 0 : i32
    %c0_i32_0 = arith.constant 0 : i32
    return %arg0, %c0_i32 : i32, i32
  }
}

module attributes {stable_mosaic.version = 11 : i64} {
  func.func @_gemm_kernel(%arg0: i32, %arg1: memref<128x1024xbf16, #tpu.memory_space<vmem>>, %arg2: memref<1024x64xbf16, #tpu.memory_space<vmem>>, %arg3: memref<1x64xf32, #tpu.memory_space<vmem>>, %arg4: memref<128x64xbf16, #tpu.memory_space<vmem>>) attributes {dimension_semantics = [#tpu.dimension_semantics<parallel>], iteration_bounds = array<i64: 1>, scalar_prefetch = 0 : i64, scratch_operands = 0 : i64, tpu.core_type = #tpu.core_type<tc>, window_params = [{transform_indices = @transform_0, window_bounds = array<i64: 128, 1024>}, {pipeline_mode = #tpu.pipeline_mode<synchronous>, transform_indices = @transform_1, window_bounds = array<i64: 1024, 64>}, {pipeline_mode = #tpu.pipeline_mode<synchronous>, transform_indices = @transform_2, window_bounds = array<i64: 1, 64>}, {transform_indices = @transform_3, window_bounds = array<i64: 128, 64>}]} {
    %c0 = arith.constant 0 : index
    %c0_0 = arith.constant 0 : index
    %0 = vector.load %arg1[%c0, %c0_0] : memref<128x1024xbf16, #tpu.memory_space<vmem>>, vector<128x1024xbf16>
    %c0_1 = arith.constant 0 : index
    %c0_2 = arith.constant 0 : index
    %1 = vector.load %arg2[%c0_1, %c0_2] : memref<1024x64xbf16, #tpu.memory_space<vmem>>, vector<1024x64xbf16>
    %cst = arith.constant dense<0.000000e+00> : vector<128x64xf32>
    %2 = tpu.matmul %0, %1, %cst {dimension_numbers = #tpu.dot_dimension_numbers<[1], [0], [0], [1], [0, 0, 1, 1], [], []>} : vector<128x1024xbf16>, vector<1024x64xbf16>, vector<128x64xf32> -> vector<128x64xf32>
    %c0_3 = arith.constant 0 : index
    %c0_4 = arith.constant 0 : index
    %3 = vector.load %arg3[%c0_3, %c0_4] : memref<1x64xf32, #tpu.memory_space<vmem>>, vector<1x64xf32>
    %4 = vector.broadcast %3 : vector<1x64xf32> to vector<128x64xf32>
    %5 = arith.addf %2, %4 : vector<128x64xf32>
    %cst_5 = arith.constant 0.000000e+00 : f32
    %6 = vector.broadcast %cst_5 : f32 to vector<128x64xf32>
    %7 = arith.maximumf %5, %6 : vector<128x64xf32>
    %8 = arith.truncf %7 : vector<128x64xf32> to vector<128x64xbf16>
    %c0_6 = arith.constant 0 : index
    %c0_7 = arith.constant 0 : index
    %9 = vector.load %arg4[%c0_6, %c0_7] : memref<128x64xbf16, #tpu.memory_space<vmem>>, vector<128x64xbf16>
    tpu.vector_store %arg4[%c0_6, %c0_7], %8 {strides = array<i32>} : memref<128x64xbf16, #tpu.memory_space<vmem>>, vector<128x64xbf16>,
    return
  }
  func.func @transform_0(%arg0: i32) -> (i32, i32) {
    %c0_i32 = arith.constant 0 : i32
    %c0_i32_0 = arith.constant 0 : i32
    return %arg0, %c0_i32 : i32, i32
  }
  func.func @transform_1(%arg0: i32) -> (i32, i32) {
    %c0_i32 = arith.constant 0 : i32
    %c0_i32_0 = arith.constant 0 : i32
    %c0_i32_1 = arith.constant 0 : i32
    return %c0_i32, %c0_i32_0 : i32, i32
  }
  func.func @transform_2(%arg0: i32) -> (i32, i32) {
    %c0_i32 = arith.constant 0 : i32
    %c0_i32_0 = arith.constant 0 : i32
    %c0_i32_1 = arith.constant 0 : i32
    return %c0_i32, %c0_i32_0 : i32, i32
  }
  func.func @transform_3(%arg0: i32) -> (i32, i32) {
    %c0_i32 = arith.constant 0 : i32
    %c0_i32_0 = arith.constant 0 : i32
    return %arg0, %c0_i32 : i32, i32
  }
}

module attributes {stable_mosaic.version = 11 : i64} {
  func.func @_gemm_kernel(%arg0: i32, %arg1: memref<32x1024xbf16, #tpu.memory_space<vmem>>, %arg2: memref<1024x64xbf16, #tpu.memory_space<vmem>>, %arg3: memref<1x64xf32, #tpu.memory_space<vmem>>, %arg4: memref<32x64xbf16, #tpu.memory_space<vmem>>) attributes {dimension_semantics = [#tpu.dimension_semantics<parallel>], iteration_bounds = array<i64: 1>, scalar_prefetch = 0 : i64, scratch_operands = 0 : i64, tpu.core_type = #tpu.core_type<tc>, window_params = [{transform_indices = @transform_0, window_bounds = array<i64: 32, 1024>}, {pipeline_mode = #tpu.pipeline_mode<synchronous>, transform_indices = @transform_1, window_bounds = array<i64: 1024, 64>}, {pipeline_mode = #tpu.pipeline_mode<synchronous>, transform_indices = @transform_2, window_bounds = array<i64: 1, 64>}, {transform_indices = @transform_3, window_bounds = array<i64: 32, 64>}]} {
    %c0 = arith.constant 0 : index
    %c0_0 = arith.constant 0 : index
    %0 = vector.load %arg1[%c0, %c0_0] : memref<32x1024xbf16, #tpu.memory_space<vmem>>, vector<32x1024xbf16>
    %c0_1 = arith.constant 0 : index
    %c0_2 = arith.constant 0 : index
    %1 = vector.load %arg2[%c0_1, %c0_2] : memref<1024x64xbf16, #tpu.memory_space<vmem>>, vector<1024x64xbf16>
    %cst = arith.constant dense<0.000000e+00> : vector<32x64xf32>
    %2 = tpu.matmul %0, %1, %cst {dimension_numbers = #tpu.dot_dimension_numbers<[1], [0], [0], [1], [0, 0, 1, 1], [], []>} : vector<32x1024xbf16>, vector<1024x64xbf16>, vector<32x64xf32> -> vector<32x64xf32>
    %c0_3 = arith.constant 0 : index
    %c0_4 = arith.constant 0 : index
    %3 = vector.load %arg3[%c0_3, %c0_4] : memref<1x64xf32, #tpu.memory_space<vmem>>, vector<1x64xf32>
    %4 = vector.broadcast %3 : vector<1x64xf32> to vector<32x64xf32>
    %5 = arith.addf %2, %4 : vector<32x64xf32>
    %cst_5 = arith.constant 0.000000e+00 : f32
    %6 = vector.broadcast %cst_5 : f32 to vector<32x64xf32>
    %7 = arith.maximumf %5, %6 : vector<32x64xf32>
    %8 = arith.truncf %7 : vector<32x64xf32> to vector<32x64xbf16>
    %c0_6 = arith.constant 0 : index
    %c0_7 = arith.constant 0 : index
    %9 = vector.load %arg4[%c0_6, %c0_7] : memref<32x64xbf16, #tpu.memory_space<vmem>>, vector<32x64xbf16>
    tpu.vector_store %arg4[%c0_6, %c0_7], %8 {strides = array<i32>} : memref<32x64xbf16, #tpu.memory_space<vmem>>, vector<32x64xbf16>,
    return
  }
  func.func @transform_0(%arg0: i32) -> (i32, i32) {
    %c0_i32 = arith.constant 0 : i32
    %c0_i32_0 = arith.constant 0 : i32
    return %arg0, %c0_i32 : i32, i32
  }
  func.func @transform_1(%arg0: i32) -> (i32, i32) {
    %c0_i32 = arith.constant 0 : i32
    %c0_i32_0 = arith.constant 0 : i32
    %c0_i32_1 = arith.constant 0 : i32
    return %c0_i32, %c0_i32_0 : i32, i32
  }
  func.func @transform_2(%arg0: i32) -> (i32, i32) {
    %c0_i32 = arith.constant 0 : i32
    %c0_i32_0 = arith.constant 0 : i32
    %c0_i32_1 = arith.constant 0 : i32
    return %c0_i32, %c0_i32_0 : i32, i32
  }
  func.func @transform_3(%arg0: i32) -> (i32, i32) {
    %c0_i32 = arith.constant 0 : i32
    %c0_i32_0 = arith.constant 0 : i32
    return %arg0, %c0_i32 : i32, i32
  }
}

module attributes {stable_mosaic.version = 11 : i64} {
  func.func @_gemm_kernel(%arg0: i32, %arg1: memref<8x1024xbf16, #tpu.memory_space<vmem>>, %arg2: memref<1024x64xbf16, #tpu.memory_space<vmem>>, %arg3: memref<1x64xf32, #tpu.memory_space<vmem>>, %arg4: memref<8x64xbf16, #tpu.memory_space<vmem>>) attributes {dimension_semantics = [#tpu.dimension_semantics<parallel>], iteration_bounds = array<i64: 1>, scalar_prefetch = 0 : i64, scratch_operands = 0 : i64, tpu.core_type = #tpu.core_type<tc>, window_params = [{transform_indices = @transform_0, window_bounds = array<i64: 8, 1024>}, {pipeline_mode = #tpu.pipeline_mode<synchronous>, transform_indices = @transform_1, window_bounds = array<i64: 1024, 64>}, {pipeline_mode = #tpu.pipeline_mode<synchronous>, transform_indices = @transform_2, window_bounds = array<i64: 1, 64>}, {transform_indices = @transform_3, window_bounds = array<i64: 8, 64>}]} {
    %c0 = arith.constant 0 : index
    %c0_0 = arith.constant 0 : index
    %0 = vector.load %arg1[%c0, %c0_0] : memref<8x1024xbf16, #tpu.memory_space<vmem>>, vector<8x1024xbf16>
    %c0_1 = arith.constant 0 : index
    %c0_2 = arith.constant 0 : index
    %1 = vector.load %arg2[%c0_1, %c0_2] : memref<1024x64xbf16, #tpu.memory_space<vmem>>, vector<1024x64xbf16>
    %cst = arith.constant dense<0.000000e+00> : vector<8x64xf32>
    %2 = tpu.matmul %0, %1, %cst {dimension_numbers = #tpu.dot_dimension_numbers<[1], [0], [0], [1], [0, 0, 1, 1], [], []>} : vector<8x1024xbf16>, vector<1024x64xbf16>, vector<8x64xf32> -> vector<8x64xf32>
    %c0_3 = arith.constant 0 : index
    %c0_4 = arith.constant 0 : index
    %3 = vector.load %arg3[%c0_3, %c0_4] : memref<1x64xf32, #tpu.memory_space<vmem>>, vector<1x64xf32>
    %4 = vector.broadcast %3 : vector<1x64xf32> to vector<8x64xf32>
    %5 = arith.addf %2, %4 : vector<8x64xf32>
    %cst_5 = arith.constant 0.000000e+00 : f32
    %6 = vector.broadcast %cst_5 : f32 to vector<8x64xf32>
    %7 = arith.maximumf %5, %6 : vector<8x64xf32>
    %8 = arith.truncf %7 : vector<8x64xf32> to vector<8x64xbf16>
    %c0_6 = arith.constant 0 : index
    %c0_7 = arith.constant 0 : index
    %9 = vector.load %arg4[%c0_6, %c0_7] : memref<8x64xbf16, #tpu.memory_space<vmem>>, vector<8x64xbf16>
    tpu.vector_store %arg4[%c0_6, %c0_7], %8 {strides = array<i32>} : memref<8x64xbf16, #tpu.memory_space<vmem>>, vector<8x64xbf16>,
    return
  }
  func.func @transform_0(%arg0: i32) -> (i32, i32) {
    %c0_i32 = arith.constant 0 : i32
    %c0_i32_0 = arith.constant 0 : i32
    return %arg0, %c0_i32 : i32, i32
  }
  func.func @transform_1(%arg0: i32) -> (i32, i32) {
    %c0_i32 = arith.constant 0 : i32
    %c0_i32_0 = arith.constant 0 : i32
    %c0_i32_1 = arith.constant 0 : i32
    return %c0_i32, %c0_i32_0 : i32, i32
  }
  func.func @transform_2(%arg0: i32) -> (i32, i32) {
    %c0_i32 = arith.constant 0 : i32
    %c0_i32_0 = arith.constant 0 : i32
    %c0_i32_1 = arith.constant 0 : i32
    return %c0_i32, %c0_i32_0 : i32, i32
  }
  func.func @transform_3(%arg0: i32) -> (i32, i32) {
    %c0_i32 = arith.constant 0 : i32
    %c0_i32_0 = arith.constant 0 : i32
    return %arg0, %c0_i32 : i32, i32
  }
}

module attributes {stable_mosaic.version = 11 : i64} {
  func.func @_fc_fsq_kernel(%arg0: memref<2x256xbf16, #tpu.memory_space<vmem>>, %arg1: memref<256x64xbf16, #tpu.memory_space<vmem>>, %arg2: memref<1x64xf32, #tpu.memory_space<vmem>>, %arg3: memref<2x64xf32, #tpu.memory_space<vmem>>, %arg4: memref<1x1xf32, #tpu.memory_space<vmem>>) attributes {dimension_semantics = [], scalar_prefetch = 0 : i64, scratch_operands = 0 : i64, tpu.core_type = #tpu.core_type<tc>} {
    %c0 = arith.constant 0 : index
    %c0_0 = arith.constant 0 : index
    %0 = vector.load %arg0[%c0, %c0_0] : memref<2x256xbf16, #tpu.memory_space<vmem>>, vector<2x256xbf16>
    %c0_1 = arith.constant 0 : index
    %c0_2 = arith.constant 0 : index
    %1 = vector.load %arg1[%c0_1, %c0_2] : memref<256x64xbf16, #tpu.memory_space<vmem>>, vector<256x64xbf16>
    %cst = arith.constant dense<0.000000e+00> : vector<2x64xf32>
    %2 = tpu.matmul %0, %1, %cst {dimension_numbers = #tpu.dot_dimension_numbers<[1], [0], [0], [1], [0, 0, 1, 1], [], []>} : vector<2x256xbf16>, vector<256x64xbf16>, vector<2x64xf32> -> vector<2x64xf32>
    %c0_3 = arith.constant 0 : index
    %c0_4 = arith.constant 0 : index
    %3 = vector.load %arg2[%c0_3, %c0_4] : memref<1x64xf32, #tpu.memory_space<vmem>>, vector<1x64xf32>
    %4 = vector.broadcast %3 : vector<1x64xf32> to vector<2x64xf32>
    %5 = arith.addf %2, %4 : vector<2x64xf32>
    %6 = math.tanh %5 : vector<2x64xf32>
    %cst_5 = arith.constant 1.000000e+00 : f32
    %7 = vector.broadcast %cst_5 : f32 to vector<2x64xf32>
    %8 = arith.addf %6, %7 : vector<2x64xf32>
    %cst_6 = arith.constant 5.000000e-01 : f32
    %9 = vector.broadcast %cst_6 : f32 to vector<2x64xf32>
    %10 = arith.mulf %8, %9 : vector<2x64xf32>
    %cst_7 = arith.constant 9.000000e+00 : f32
    %11 = vector.broadcast %cst_7 : f32 to vector<2x64xf32>
    %12 = arith.mulf %10, %11 : vector<2x64xf32>
    %13 = math.roundeven %12 : vector<2x64xf32>
    %cst_8 = arith.constant 2.000000e+00 : f32
    %14 = vector.broadcast %cst_8 : f32 to vector<2x64xf32>
    %15 = arith.mulf %14, %13 : vector<2x64xf32>
    %cst_9 = arith.constant 9.000000e+00 : f32
    %16 = vector.broadcast %cst_9 : f32 to vector<2x64xf32>
    %17 = arith.divf %15, %16 : vector<2x64xf32>
    %cst_10 = arith.constant 1.000000e+00 : f32
    %18 = vector.broadcast %cst_10 : f32 to vector<2x64xf32>
    %19 = arith.subf %17, %18 : vector<2x64xf32>
    %c0_11 = arith.constant 0 : index
    %c0_12 = arith.constant 0 : index
    %20 = vector.load %arg3[%c0_11, %c0_12] : memref<2x64xf32, #tpu.memory_space<vmem>>, vector<2x64xf32>
    tpu.vector_store %arg3[%c0_11, %c0_12], %19 {strides = array<i32>} : memref<2x64xf32, #tpu.memory_space<vmem>>, vector<2x64xf32>,
    %21 = arith.subf %19, %6 : vector<2x64xf32>
    %22 = arith.mulf %21, %21 : vector<2x64xf32>
    %23 = vector.shape_cast %22 : vector<2x64xf32> to vector<1x2x64xf32>
    %cst_13 = arith.constant dense<0.000000e+00> : vector<1xf32>
    %24 = vector.multi_reduction <add>, %23, %cst_13 [1, 2] : vector<1x2x64xf32> to vector<1xf32>
    %25 = vector.shape_cast %24 : vector<1xf32> to vector<1x1x1xf32>
    %26 = vector.extract %25[0, 0, 0] : f32 from vector<1x1x1xf32>
    %cst_14 = arith.constant 1.280000e+02 : f32
    %27 = arith.divf %26, %cst_14 : f32
    %28 = vector.broadcast %27 : f32 to vector<1x1xf32>
    %c0_15 = arith.constant 0 : index
    %c0_16 = arith.constant 0 : index
    %29 = vector.load %arg4[%c0_15, %c0_16] : memref<1x1xf32, #tpu.memory_space<vmem>>, vector<1x1xf32>
    tpu.vector_store %arg4[%c0_15, %c0_16], %28 {strides = array<i32>} : memref<1x1xf32, #tpu.memory_space<vmem>>, vector<1x1xf32>,
    return
  }
}

module attributes {stable_mosaic.version = 11 : i64} {
  func.func @_gemm_kernel(%arg0: i32, %arg1: memref<2x64xbf16, #tpu.memory_space<vmem>>, %arg2: memref<64x256xbf16, #tpu.memory_space<vmem>>, %arg3: memref<1x256xf32, #tpu.memory_space<vmem>>, %arg4: memref<2x256xbf16, #tpu.memory_space<vmem>>) attributes {dimension_semantics = [#tpu.dimension_semantics<parallel>], iteration_bounds = array<i64: 1>, scalar_prefetch = 0 : i64, scratch_operands = 0 : i64, tpu.core_type = #tpu.core_type<tc>, window_params = [{transform_indices = @transform_0, window_bounds = array<i64: 2, 64>}, {pipeline_mode = #tpu.pipeline_mode<synchronous>, transform_indices = @transform_1, window_bounds = array<i64: 64, 256>}, {pipeline_mode = #tpu.pipeline_mode<synchronous>, transform_indices = @transform_2, window_bounds = array<i64: 1, 256>}, {transform_indices = @transform_3, window_bounds = array<i64: 2, 256>}]} {
    %c0 = arith.constant 0 : index
    %c0_0 = arith.constant 0 : index
    %0 = vector.load %arg1[%c0, %c0_0] : memref<2x64xbf16, #tpu.memory_space<vmem>>, vector<2x64xbf16>
    %c0_1 = arith.constant 0 : index
    %c0_2 = arith.constant 0 : index
    %1 = vector.load %arg2[%c0_1, %c0_2] : memref<64x256xbf16, #tpu.memory_space<vmem>>, vector<64x256xbf16>
    %cst = arith.constant dense<0.000000e+00> : vector<2x256xf32>
    %2 = tpu.matmul %0, %1, %cst {dimension_numbers = #tpu.dot_dimension_numbers<[1], [0], [0], [1], [0, 0, 1, 1], [], []>} : vector<2x64xbf16>, vector<64x256xbf16>, vector<2x256xf32> -> vector<2x256xf32>
    %c0_3 = arith.constant 0 : index
    %c0_4 = arith.constant 0 : index
    %3 = vector.load %arg3[%c0_3, %c0_4] : memref<1x256xf32, #tpu.memory_space<vmem>>, vector<1x256xf32>
    %4 = vector.broadcast %3 : vector<1x256xf32> to vector<2x256xf32>
    %5 = arith.addf %2, %4 : vector<2x256xf32>
    %6 = arith.truncf %5 : vector<2x256xf32> to vector<2x256xbf16>
    %c0_5 = arith.constant 0 : index
    %c0_6 = arith.constant 0 : index
    %7 = vector.load %arg4[%c0_5, %c0_6] : memref<2x256xbf16, #tpu.memory_space<vmem>>, vector<2x256xbf16>
    tpu.vector_store %arg4[%c0_5, %c0_6], %6 {strides = array<i32>} : memref<2x256xbf16, #tpu.memory_space<vmem>>, vector<2x256xbf16>,
    return
  }
  func.func @transform_0(%arg0: i32) -> (i32, i32) {
    %c0_i32 = arith.constant 0 : i32
    %c0_i32_0 = arith.constant 0 : i32
    return %arg0, %c0_i32 : i32, i32
  }
  func.func @transform_1(%arg0: i32) -> (i32, i32) {
    %c0_i32 = arith.constant 0 : i32
    %c0_i32_0 = arith.constant 0 : i32
    %c0_i32_1 = arith.constant 0 : i32
    return %c0_i32, %c0_i32_0 : i32, i32
  }
  func.func @transform_2(%arg0: i32) -> (i32, i32) {
    %c0_i32 = arith.constant 0 : i32
    %c0_i32_0 = arith.constant 0 : i32
    %c0_i32_1 = arith.constant 0 : i32
    return %c0_i32, %c0_i32_0 : i32, i32
  }
  func.func @transform_3(%arg0: i32) -> (i32, i32) {
    %c0_i32 = arith.constant 0 : i32
    %c0_i32_0 = arith.constant 0 : i32
    return %arg0, %c0_i32 : i32, i32
  }
}

module attributes {stable_mosaic.version = 11 : i64} {
  func.func @_gemm_kernel(%arg0: i32, %arg1: memref<8x576xbf16, #tpu.memory_space<vmem>>, %arg2: memref<576x256xbf16, #tpu.memory_space<vmem>>, %arg3: memref<1x256xf32, #tpu.memory_space<vmem>>, %arg4: memref<8x256xbf16, #tpu.memory_space<vmem>>) attributes {dimension_semantics = [#tpu.dimension_semantics<parallel>], iteration_bounds = array<i64: 1>, scalar_prefetch = 0 : i64, scratch_operands = 0 : i64, tpu.core_type = #tpu.core_type<tc>, window_params = [{transform_indices = @transform_0, window_bounds = array<i64: 8, 576>}, {pipeline_mode = #tpu.pipeline_mode<synchronous>, transform_indices = @transform_1, window_bounds = array<i64: 576, 256>}, {pipeline_mode = #tpu.pipeline_mode<synchronous>, transform_indices = @transform_2, window_bounds = array<i64: 1, 256>}, {transform_indices = @transform_3, window_bounds = array<i64: 8, 256>}]} {
    %c0 = arith.constant 0 : index
    %c0_0 = arith.constant 0 : index
    %0 = vector.load %arg1[%c0, %c0_0] : memref<8x576xbf16, #tpu.memory_space<vmem>>, vector<8x576xbf16>
    %c0_1 = arith.constant 0 : index
    %c0_2 = arith.constant 0 : index
    %1 = vector.load %arg2[%c0_1, %c0_2] : memref<576x256xbf16, #tpu.memory_space<vmem>>, vector<576x256xbf16>
    %cst = arith.constant dense<0.000000e+00> : vector<8x256xf32>
    %2 = tpu.matmul %0, %1, %cst {dimension_numbers = #tpu.dot_dimension_numbers<[1], [0], [0], [1], [0, 0, 1, 1], [], []>} : vector<8x576xbf16>, vector<576x256xbf16>, vector<8x256xf32> -> vector<8x256xf32>
    %c0_3 = arith.constant 0 : index
    %c0_4 = arith.constant 0 : index
    %3 = vector.load %arg3[%c0_3, %c0_4] : memref<1x256xf32, #tpu.memory_space<vmem>>, vector<1x256xf32>
    %4 = vector.broadcast %3 : vector<1x256xf32> to vector<8x256xf32>
    %5 = arith.addf %2, %4 : vector<8x256xf32>
    %cst_5 = arith.constant 0.000000e+00 : f32
    %6 = vector.broadcast %cst_5 : f32 to vector<8x256xf32>
    %7 = arith.maximumf %5, %6 : vector<8x256xf32>
    %8 = arith.truncf %7 : vector<8x256xf32> to vector<8x256xbf16>
    %c0_6 = arith.constant 0 : index
    %c0_7 = arith.constant 0 : index
    %9 = vector.load %arg4[%c0_6, %c0_7] : memref<8x256xbf16, #tpu.memory_space<vmem>>, vector<8x256xbf16>
    tpu.vector_store %arg4[%c0_6, %c0_7], %8 {strides = array<i32>} : memref<8x256xbf16, #tpu.memory_space<vmem>>, vector<8x256xbf16>,
    return
  }
  func.func @transform_0(%arg0: i32) -> (i32, i32) {
    %c0_i32 = arith.constant 0 : i32
    %c0_i32_0 = arith.constant 0 : i32
    return %arg0, %c0_i32 : i32, i32
  }
  func.func @transform_1(%arg0: i32) -> (i32, i32) {
    %c0_i32 = arith.constant 0 : i32
    %c0_i32_0 = arith.constant 0 : i32
    %c0_i32_1 = arith.constant 0 : i32
    return %c0_i32, %c0_i32_0 : i32, i32
  }
  func.func @transform_2(%arg0: i32) -> (i32, i32) {
    %c0_i32 = arith.constant 0 : i32
    %c0_i32_0 = arith.constant 0 : i32
    %c0_i32_1 = arith.constant 0 : i32
    return %c0_i32, %c0_i32_0 : i32, i32
  }
  func.func @transform_3(%arg0: i32) -> (i32, i32) {
    %c0_i32 = arith.constant 0 : i32
    %c0_i32_0 = arith.constant 0 : i32
    return %arg0, %c0_i32 : i32, i32
  }
}

module attributes {stable_mosaic.version = 11 : i64} {
  func.func @_gemm_kernel(%arg0: i32, %arg1: memref<32x576xbf16, #tpu.memory_space<vmem>>, %arg2: memref<576x256xbf16, #tpu.memory_space<vmem>>, %arg3: memref<1x256xf32, #tpu.memory_space<vmem>>, %arg4: memref<32x256xbf16, #tpu.memory_space<vmem>>) attributes {dimension_semantics = [#tpu.dimension_semantics<parallel>], iteration_bounds = array<i64: 1>, scalar_prefetch = 0 : i64, scratch_operands = 0 : i64, tpu.core_type = #tpu.core_type<tc>, window_params = [{transform_indices = @transform_0, window_bounds = array<i64: 32, 576>}, {pipeline_mode = #tpu.pipeline_mode<synchronous>, transform_indices = @transform_1, window_bounds = array<i64: 576, 256>}, {pipeline_mode = #tpu.pipeline_mode<synchronous>, transform_indices = @transform_2, window_bounds = array<i64: 1, 256>}, {transform_indices = @transform_3, window_bounds = array<i64: 32, 256>}]} {
    %c0 = arith.constant 0 : index
    %c0_0 = arith.constant 0 : index
    %0 = vector.load %arg1[%c0, %c0_0] : memref<32x576xbf16, #tpu.memory_space<vmem>>, vector<32x576xbf16>
    %c0_1 = arith.constant 0 : index
    %c0_2 = arith.constant 0 : index
    %1 = vector.load %arg2[%c0_1, %c0_2] : memref<576x256xbf16, #tpu.memory_space<vmem>>, vector<576x256xbf16>
    %cst = arith.constant dense<0.000000e+00> : vector<32x256xf32>
    %2 = tpu.matmul %0, %1, %cst {dimension_numbers = #tpu.dot_dimension_numbers<[1], [0], [0], [1], [0, 0, 1, 1], [], []>} : vector<32x576xbf16>, vector<576x256xbf16>, vector<32x256xf32> -> vector<32x256xf32>
    %c0_3 = arith.constant 0 : index
    %c0_4 = arith.constant 0 : index
    %3 = vector.load %arg3[%c0_3, %c0_4] : memref<1x256xf32, #tpu.memory_space<vmem>>, vector<1x256xf32>
    %4 = vector.broadcast %3 : vector<1x256xf32> to vector<32x256xf32>
    %5 = arith.addf %2, %4 : vector<32x256xf32>
    %cst_5 = arith.constant 0.000000e+00 : f32
    %6 = vector.broadcast %cst_5 : f32 to vector<32x256xf32>
    %7 = arith.maximumf %5, %6 : vector<32x256xf32>
    %8 = arith.truncf %7 : vector<32x256xf32> to vector<32x256xbf16>
    %c0_6 = arith.constant 0 : index
    %c0_7 = arith.constant 0 : index
    %9 = vector.load %arg4[%c0_6, %c0_7] : memref<32x256xbf16, #tpu.memory_space<vmem>>, vector<32x256xbf16>
    tpu.vector_store %arg4[%c0_6, %c0_7], %8 {strides = array<i32>} : memref<32x256xbf16, #tpu.memory_space<vmem>>, vector<32x256xbf16>,
    return
  }
  func.func @transform_0(%arg0: i32) -> (i32, i32) {
    %c0_i32 = arith.constant 0 : i32
    %c0_i32_0 = arith.constant 0 : i32
    return %arg0, %c0_i32 : i32, i32
  }
  func.func @transform_1(%arg0: i32) -> (i32, i32) {
    %c0_i32 = arith.constant 0 : i32
    %c0_i32_0 = arith.constant 0 : i32
    %c0_i32_1 = arith.constant 0 : i32
    return %c0_i32, %c0_i32_0 : i32, i32
  }
  func.func @transform_2(%arg0: i32) -> (i32, i32) {
    %c0_i32 = arith.constant 0 : i32
    %c0_i32_0 = arith.constant 0 : i32
    %c0_i32_1 = arith.constant 0 : i32
    return %c0_i32, %c0_i32_0 : i32, i32
  }
  func.func @transform_3(%arg0: i32) -> (i32, i32) {
    %c0_i32 = arith.constant 0 : i32
    %c0_i32_0 = arith.constant 0 : i32
    return %arg0, %c0_i32 : i32, i32
  }
}

module attributes {stable_mosaic.version = 11 : i64} {
  func.func @_gemm_kernel(%arg0: i32, %arg1: memref<128x576xbf16, #tpu.memory_space<vmem>>, %arg2: memref<576x256xbf16, #tpu.memory_space<vmem>>, %arg3: memref<1x256xf32, #tpu.memory_space<vmem>>, %arg4: memref<128x256xbf16, #tpu.memory_space<vmem>>) attributes {dimension_semantics = [#tpu.dimension_semantics<parallel>], iteration_bounds = array<i64: 1>, scalar_prefetch = 0 : i64, scratch_operands = 0 : i64, tpu.core_type = #tpu.core_type<tc>, window_params = [{transform_indices = @transform_0, window_bounds = array<i64: 128, 576>}, {pipeline_mode = #tpu.pipeline_mode<synchronous>, transform_indices = @transform_1, window_bounds = array<i64: 576, 256>}, {pipeline_mode = #tpu.pipeline_mode<synchronous>, transform_indices = @transform_2, window_bounds = array<i64: 1, 256>}, {transform_indices = @transform_3, window_bounds = array<i64: 128, 256>}]} {
    %c0 = arith.constant 0 : index
    %c0_0 = arith.constant 0 : index
    %0 = vector.load %arg1[%c0, %c0_0] : memref<128x576xbf16, #tpu.memory_space<vmem>>, vector<128x576xbf16>
    %c0_1 = arith.constant 0 : index
    %c0_2 = arith.constant 0 : index
    %1 = vector.load %arg2[%c0_1, %c0_2] : memref<576x256xbf16, #tpu.memory_space<vmem>>, vector<576x256xbf16>
    %cst = arith.constant dense<0.000000e+00> : vector<128x256xf32>
    %2 = tpu.matmul %0, %1, %cst {dimension_numbers = #tpu.dot_dimension_numbers<[1], [0], [0], [1], [0, 0, 1, 1], [], []>} : vector<128x576xbf16>, vector<576x256xbf16>, vector<128x256xf32> -> vector<128x256xf32>
    %c0_3 = arith.constant 0 : index
    %c0_4 = arith.constant 0 : index
    %3 = vector.load %arg3[%c0_3, %c0_4] : memref<1x256xf32, #tpu.memory_space<vmem>>, vector<1x256xf32>
    %4 = vector.broadcast %3 : vector<1x256xf32> to vector<128x256xf32>
    %5 = arith.addf %2, %4 : vector<128x256xf32>
    %cst_5 = arith.constant 0.000000e+00 : f32
    %6 = vector.broadcast %cst_5 : f32 to vector<128x256xf32>
    %7 = arith.maximumf %5, %6 : vector<128x256xf32>
    %8 = arith.truncf %7 : vector<128x256xf32> to vector<128x256xbf16>
    %c0_6 = arith.constant 0 : index
    %c0_7 = arith.constant 0 : index
    %9 = vector.load %arg4[%c0_6, %c0_7] : memref<128x256xbf16, #tpu.memory_space<vmem>>, vector<128x256xbf16>
    tpu.vector_store %arg4[%c0_6, %c0_7], %8 {strides = array<i32>} : memref<128x256xbf16, #tpu.memory_space<vmem>>, vector<128x256xbf16>,
    return
  }
  func.func @transform_0(%arg0: i32) -> (i32, i32) {
    %c0_i32 = arith.constant 0 : i32
    %c0_i32_0 = arith.constant 0 : i32
    return %arg0, %c0_i32 : i32, i32
  }
  func.func @transform_1(%arg0: i32) -> (i32, i32) {
    %c0_i32 = arith.constant 0 : i32
    %c0_i32_0 = arith.constant 0 : i32
    %c0_i32_1 = arith.constant 0 : i32
    return %c0_i32, %c0_i32_0 : i32, i32
  }
  func.func @transform_2(%arg0: i32) -> (i32, i32) {
    %c0_i32 = arith.constant 0 : i32
    %c0_i32_0 = arith.constant 0 : i32
    %c0_i32_1 = arith.constant 0 : i32
    return %c0_i32, %c0_i32_0 : i32, i32
  }
  func.func @transform_3(%arg0: i32) -> (i32, i32) {
    %c0_i32 = arith.constant 0 : i32
    %c0_i32_0 = arith.constant 0 : i32
    return %arg0, %c0_i32 : i32, i32
  }
}

module attributes {stable_mosaic.version = 11 : i64} {
  func.func @_final_deconv_kernel(%arg0: i32, %arg1: memref<256x576xbf16, #tpu.memory_space<vmem>>, %arg2: memref<576x12xbf16, #tpu.memory_space<vmem>>, %arg3: memref<1x12xf32, #tpu.memory_space<vmem>>, %arg4: memref<256x12xf32, #tpu.memory_space<vmem>>, %arg5: memref<256x12xf32, #tpu.memory_space<vmem>>, %arg6: memref<1x1xf32, #tpu.memory_space<vmem>>) attributes {dimension_semantics = [#tpu.dimension_semantics<arbitrary>], iteration_bounds = array<i64: 2>, scalar_prefetch = 0 : i64, scratch_operands = 0 : i64, tpu.core_type = #tpu.core_type<tc>, window_params = [{transform_indices = @transform_0, window_bounds = array<i64: 256, 576>}, {pipeline_mode = #tpu.pipeline_mode<synchronous>, transform_indices = @transform_1, window_bounds = array<i64: 576, 12>}, {pipeline_mode = #tpu.pipeline_mode<synchronous>, transform_indices = @transform_2, window_bounds = array<i64: 1, 12>}, {transform_indices = @transform_3, window_bounds = array<i64: 256, 12>}, {transform_indices = @transform_4, window_bounds = array<i64: 256, 12>}, {pipeline_mode = #tpu.pipeline_mode<synchronous>, transform_indices = @transform_5, window_bounds = array<i64: 1, 1>}]} {
    %c0 = arith.constant 0 : index
    %c0_0 = arith.constant 0 : index
    %0 = vector.load %arg1[%c0, %c0_0] : memref<256x576xbf16, #tpu.memory_space<vmem>>, vector<256x576xbf16>
    %c0_1 = arith.constant 0 : index
    %c0_2 = arith.constant 0 : index
    %1 = vector.load %arg2[%c0_1, %c0_2] : memref<576x12xbf16, #tpu.memory_space<vmem>>, vector<576x12xbf16>
    %cst = arith.constant dense<0.000000e+00> : vector<256x12xf32>
    %2 = tpu.matmul %0, %1, %cst {dimension_numbers = #tpu.dot_dimension_numbers<[1], [0], [0], [1], [0, 0, 1, 1], [], []>} : vector<256x576xbf16>, vector<576x12xbf16>, vector<256x12xf32> -> vector<256x12xf32>
    %c0_3 = arith.constant 0 : index
    %c0_4 = arith.constant 0 : index
    %3 = vector.load %arg3[%c0_3, %c0_4] : memref<1x12xf32, #tpu.memory_space<vmem>>, vector<1x12xf32>
    %4 = vector.broadcast %3 : vector<1x12xf32> to vector<256x12xf32>
    %5 = arith.addf %2, %4 : vector<256x12xf32>
    %cst_5 = arith.constant 0.000000e+00 : f32
    %6 = vector.broadcast %cst_5 : f32 to vector<256x12xf32>
    %7 = arith.subf %6, %5 : vector<256x12xf32>
    %8 = math.exp %7 : vector<256x12xf32>
    %cst_6 = arith.constant 1.000000e+00 : f32
    %9 = vector.broadcast %cst_6 : f32 to vector<256x12xf32>
    %10 = arith.addf %9, %8 : vector<256x12xf32>
    %cst_7 = arith.constant 1.000000e+00 : f32
    %11 = vector.broadcast %cst_7 : f32 to vector<256x12xf32>
    %12 = arith.divf %11, %10 : vector<256x12xf32>
    %c0_8 = arith.constant 0 : index
    %c0_9 = arith.constant 0 : index
    %13 = vector.load %arg5[%c0_8, %c0_9] : memref<256x12xf32, #tpu.memory_space<vmem>>, vector<256x12xf32>
    tpu.vector_store %arg5[%c0_8, %c0_9], %12 {strides = array<i32>} : memref<256x12xf32, #tpu.memory_space<vmem>>, vector<256x12xf32>,
    %c0_10 = arith.constant 0 : index
    %c0_11 = arith.constant 0 : index
    %14 = vector.load %arg4[%c0_10, %c0_11] : memref<256x12xf32, #tpu.memory_space<vmem>>, vector<256x12xf32>
    %15 = math.log %12 : vector<256x12xf32>
    %cst_12 = arith.constant -1.000000e+02 : f32
    %16 = vector.broadcast %cst_12 : f32 to vector<256x12xf32>
    %17 = arith.maximumf %15, %16 : vector<256x12xf32>
    %cst_13 = arith.constant 1.000000e+00 : f32
    %18 = vector.broadcast %cst_13 : f32 to vector<256x12xf32>
    %19 = arith.subf %18, %12 : vector<256x12xf32>
    %20 = math.log %19 : vector<256x12xf32>
    %cst_14 = arith.constant -1.000000e+02 : f32
    %21 = vector.broadcast %cst_14 : f32 to vector<256x12xf32>
    %22 = arith.maximumf %20, %21 : vector<256x12xf32>
    %23 = arith.mulf %14, %17 : vector<256x12xf32>
    %cst_15 = arith.constant 1.000000e+00 : f32
    %24 = vector.broadcast %cst_15 : f32 to vector<256x12xf32>
    %25 = arith.subf %24, %14 : vector<256x12xf32>
    %26 = arith.mulf %25, %22 : vector<256x12xf32>
    %27 = arith.addf %23, %26 : vector<256x12xf32>
    %28 = vector.shape_cast %27 : vector<256x12xf32> to vector<1x256x12xf32>
    %cst_16 = arith.constant dense<0.000000e+00> : vector<1xf32>
    %29 = vector.multi_reduction <add>, %28, %cst_16 [1, 2] : vector<1x256x12xf32> to vector<1xf32>
    %30 = vector.shape_cast %29 : vector<1xf32> to vector<1x1x1xf32>
    %31 = vector.extract %30[0, 0, 0] : f32 from vector<1x1x1xf32>
    %cst_17 = arith.constant 0.000000e+00 : f32
    %32 = arith.subf %cst_17, %31 : f32
    %c0_i32 = arith.constant 0 : i32
    %33 = arith.cmpi eq, %arg0, %c0_i32 : i32
    %34 = arith.extui %33 : i1 to i32
    %c0_i32_18 = arith.constant 0 : i32
    %35 = arith.cmpi ne, %34, %c0_i32_18 : i32
    scf.if %35 {
      %cst_23 = arith.constant 0.000000e+00 : f32
      %40 = vector.broadcast %cst_23 : f32 to vector<1x1xf32>
      %c0_24 = arith.constant 0 : index
      %c0_25 = arith.constant 0 : index
      %41 = vector.load %arg6[%c0_24, %c0_25] : memref<1x1xf32, #tpu.memory_space<vmem>>, vector<1x1xf32>
      tpu.vector_store %arg6[%c0_24, %c0_25], %40 {strides = array<i32>} : memref<1x1xf32, #tpu.memory_space<vmem>>, vector<1x1xf32>,
    } else {
    }
    %c0_19 = arith.constant 0 : index
    %c0_20 = arith.constant 0 : index
    %36 = vector.load %arg6[%c0_19, %c0_20] : memref<1x1xf32, #tpu.memory_space<vmem>>, vector<1x1xf32>
    %37 = vector.broadcast %32 : f32 to vector<1x1xf32>
    %38 = arith.addf %36, %37 : vector<1x1xf32>
    %c0_21 = arith.constant 0 : index
    %c0_22 = arith.constant 0 : index
    %39 = vector.load %arg6[%c0_21, %c0_22] : memref<1x1xf32, #tpu.memory_space<vmem>>, vector<1x1xf32>
    tpu.vector_store %arg6[%c0_21, %c0_22], %38 {strides = array<i32>} : memref<1x1xf32, #tpu.memory_space<vmem>>, vector<1x1xf32>,
    return
  }
  func.func @transform_0(%arg0: i32) -> (i32, i32) {
    %c0_i32 = arith.constant 0 : i32
    %c0_i32_0 = arith.constant 0 : i32
    return %arg0, %c0_i32 : i32, i32
  }
  func.func @transform_1(%arg0: i32) -> (i32, i32) {
    %c0_i32 = arith.constant 0 : i32
    %c0_i32_0 = arith.constant 0 : i32
    %c0_i32_1 = arith.constant 0 : i32
    return %c0_i32, %c0_i32_0 : i32, i32
  }
  func.func @transform_2(%arg0: i32) -> (i32, i32) {
    %c0_i32 = arith.constant 0 : i32
    %c0_i32_0 = arith.constant 0 : i32
    %c0_i32_1 = arith.constant 0 : i32
    return %c0_i32, %c0_i32_0 : i32, i32
  }
  func.func @transform_3(%arg0: i32) -> (i32, i32) {
    %c0_i32 = arith.constant 0 : i32
    %c0_i32_0 = arith.constant 0 : i32
    return %arg0, %c0_i32 : i32, i32
  }
  func.func @transform_4(%arg0: i32) -> (i32, i32) {
    %c0_i32 = arith.constant 0 : i32
    %c0_i32_0 = arith.constant 0 : i32
    return %arg0, %c0_i32 : i32, i32
  }
  func.func @transform_5(%arg0: i32) -> (i32, i32) {
    %c0_i32 = arith.constant 0 : i32
    %c0_i32_0 = arith.constant 0 : i32
    %c0_i32_1 = arith.constant 0 : i32
    return %c0_i32, %c0_i32_0 : i32, i32
  }
}

</mosaic_0001>

<llo_original>
// kernel: fsq_vae_forward.10
$region0: #{fsq_vae_forward.10}
  #allocation0 [shape = 'u32[]', space=smem, size = 0x4, offset = 0x4, fixed_abs, tag = 'smem constant byte address 0x4 - core index']
  #allocation1 [shape = 'u32[144,128]{1,0:T(1,128)}', space=vmem, size = 0x12000, scoped, tag = 'internal scratch']
  %s0 = inlined_call_operand.vmem [shape: bf16[512,48], index: 0, kind: input, shape index: {}]
  %s1 = inlined_call_operand.vmem [shape: bf16[48,64], index: 1, kind: input, shape index: {}]
  %s2 = inlined_call_operand.vmem [shape: f32[1,64], index: 2, kind: input, shape index: {}]
  %s3 = inlined_call_operand.vmem [shape: bf16[512,64], index: 3, kind: output, shape index: {}]
  %s4 = sld [smem:[#allocation0]]
  $region45: #{fsq_vae_forward.10} parent=0
    _
  %s6 = ssub.s32 1, %s4
  %s7 = scalar_select 0, %s6, %s4
  loop: start=0, step=1, limit=4
  $region2: #{fsq_vae_forward.10} parent=0 // loop_pre_header
    _
  $region3: #{fsq_vae_forward.10} parent=0 // loop_header
    %s9 = sphi 0, %s13
    %p10 = scmp.ge.s32.totalorder %s9, 4
    %s19 = sphi 0, %s21
    %s22 = sphi 0, %s19
    %s23 = sphi 0, %s22
    %s39 = sphi 0, %s23
    %s43 = sphi 0, %s43
    %s45 = sphi 0, %s43
    %s46 = sphi 0, %s45
    %s60 = sphi 0, %s46
    %s64 = sphi 0, %s64
    %s66 = sphi 0, %s64
    %s67 = sphi 0, %s66
    %s81 = sphi 0, %s67
    %s87 = sphi 0, %s89
    %s90 = sphi 0, %s87
    %s91 = sphi 0, %s90
    %s107 = sphi 0, %s91
  $region4: #{fsq_vae_forward.10} parent=0 // loop_header_branch
    %12 = sbr.rel (%p10) target = $region8
  $region5: #{fsq_vae_forward.10} parent=0 // loop_body
    %s14 = ssub.s32 %s9, 1
    %s15 = ssub.s32 %s9, 2
    %s16 = sadd.s32 %s9, 1
    %s17 = ssub.s32 %s9, %s16
    %p18 = scmp.eq.s32.totalorder %s17, 0
    %s20 = sadd.s32 %s19, 1
    %s21 = scalar_select %p18, %s19, %s20
    %p24 = pneg %p18
    %p25 = scmp.eq.s32.totalorder %s9, 1
    %p26 = por %p24, %p25
    %p27 = scmp.ne.s32.totalorder %s19, %s22
    %p28 = scmp.eq.s32.totalorder %s9, 0
    %p29 = por %p27, %p28
    %p30 = scmp.ne.s32.totalorder %s19, %s22
    %p31 = scmp.eq.s32.totalorder %s14, 1
    %p32 = por %p30, %p31
    %p33 = scmp.ne.s32.totalorder %s22, %s23
    %p34 = scmp.eq.s32.totalorder %s14, 0
    %p35 = por %p33, %p34
    %p36 = scmp.ne.s32.totalorder %s22, %s23
    %p37 = scmp.eq.s32.totalorder %s15, 1
    %p38 = por %p36, %p37
    %p40 = scmp.ne.s32.totalorder %s23, %s39
    %p41 = scmp.eq.s32.totalorder %s15, 0
    %p42 = por %p40, %p41
    %s44 = sadd.s32 %s43, 1
    %p47 = scmp.eq.s32.totalorder %s9, 1
    %p48 = scmp.ne.s32.totalorder %s43, %s45
    %p49 = scmp.eq.s32.totalorder %s9, 0
    %p50 = por %p48, %p49
    %p51 = scmp.ne.s32.totalorder %s43, %s45
    %p52 = scmp.eq.s32.totalorder %s14, 1
    %p53 = por %p51, %p52
    %p54 = scmp.ne.s32.totalorder %s45, %s46
    %p55 = scmp.eq.s32.totalorder %s14, 0
    %p56 = por %p54, %p55
    %p57 = scmp.ne.s32.totalorder %s45, %s46
    %p58 = scmp.eq.s32.totalorder %s15, 1
    %p59 = por %p57, %p58
    %p61 = scmp.ne.s32.totalorder %s46, %s60
    %p62 = scmp.eq.s32.totalorder %s15, 0
    %p63 = por %p61, %p62
    %s65 = sadd.s32 %s64, 1
    %p68 = scmp.eq.s32.totalorder %s9, 1
    %p69 = scmp.ne.s32.totalorder %s64, %s66
    %p70 = scmp.eq.s32.totalorder %s9, 0
    %p71 = por %p69, %p70
    %p72 = scmp.ne.s32.totalorder %s64, %s66
    %p73 = scmp.eq.s32.totalorder %s14, 1
    %p74 = por %p72, %p73
    %p75 = scmp.ne.s32.totalorder %s66, %s67
    %p76 = scmp.eq.s32.totalorder %s14, 0
    %p77 = por %p75, %p76
    %p78 = scmp.ne.s32.totalorder %s66, %s67
    %p79 = scmp.eq.s32.totalorder %s15, 1
    %p80 = por %p78, %p79
    %p82 = scmp.ne.s32.totalorder %s67, %s81
    %p83 = scmp.eq.s32.totalorder %s15, 0
    %p84 = por %p82, %p83
    %s85 = ssub.s32 %s9, %s16
    %p86 = scmp.eq.s32.totalorder %s85, 0
    %s88 = sadd.s32 %s87, 1
    %s89 = scalar_select %p86, %s87, %s88
    %p92 = pneg %p86
    %p93 = scmp.eq.s32.totalorder %s9, 1
    %p94 = por %p92, %p93
    %p95 = scmp.ne.s32.totalorder %s87, %s90
    %p96 = scmp.eq.s32.totalorder %s9, 0
    %p97 = por %p95, %p96
    %p98 = scmp.ne.s32.totalorder %s87, %s90
    %p99 = scmp.eq.s32.totalorder %s14, 1
    %p100 = por %p98, %p99
    %p101 = scmp.ne.s32.totalorder %s90, %s91
    %p102 = scmp.eq.s32.totalorder %s14, 0
    %p103 = por %p101, %p102
    %p104 = scmp.ne.s32.totalorder %s90, %s91
    %p105 = scmp.eq.s32.totalorder %s15, 1
    %p106 = por %p104, %p105
    %p108 = scmp.ne.s32.totalorder %s91, %s107
    %p109 = scmp.eq.s32.totalorder %s15, 0
    %p110 = por %p108, %p109
    %p111 = scmp.le.s32.totalorder 1, %s9
    %p112 = scmp.lt.s32.totalorder %s9, 3
    %p113 = pnand %p111, %p112
    %p114 = pneg %p113
    // Predicated region
    $region9: #{fsq_vae_forward.10} parent=5 // pred_check
      _
    $region10: #{fsq_vae_forward.10} parent=5 // pred_check_branch
      %116 = sbr.rel (%p113) target = $region12
    $region11: #{fsq_vae_forward.10} parent=5 // pred_region
      %s117 = ssub.s32 %s9, 1
      // Predicated region
      $region13: #{fsq_vae_forward.10} parent=11 // pred_check
        %p118 = pneg %p56
      $region14: #{fsq_vae_forward.10} parent=11 // pred_check_branch
        %120 = sbr.rel (%p118) target = $region16
      $region15: #{fsq_vae_forward.10} parent=11 // pred_region
        _
      $region16: #{fsq_vae_forward.10} parent=11 // pred_fallthru
        _
      // Predicated region
      $region17: #{fsq_vae_forward.10} parent=11 // pred_check
        %p121 = pneg %p77
      $region18: #{fsq_vae_forward.10} parent=11 // pred_check_branch
        %123 = sbr.rel (%p121) target = $region20
      $region19: #{fsq_vae_forward.10} parent=11 // pred_region
        _
      $region20: #{fsq_vae_forward.10} parent=11 // pred_fallthru
        _
    $region12: #{fsq_vae_forward.10} parent=5 // pred_fallthru
      _
    %p124 = scmp.lt.s32.totalorder %s9, 2
    // Predicated region
    $region21: #{fsq_vae_forward.10} parent=5 // pred_check
      %p125 = pneg %p124
    $region22: #{fsq_vae_forward.10} parent=5 // pred_check_branch
      %127 = sbr.rel (%p125) target = $region24
    $region23: #{fsq_vae_forward.10} parent=5 // pred_region
      // Predicated region
      $region25: #{fsq_vae_forward.10} parent=23 // pred_check
        %p128 = pneg %p29
      $region26: #{fsq_vae_forward.10} parent=23 // pred_check_branch
        %130 = sbr.rel (%p128) target = $region28
      $region27: #{fsq_vae_forward.10} parent=23 // pred_region
        %s131 = smul.u32 32, %s9
        %p132 = scmp.lt.s32.totalorder %s131, 63
        %s133 = scalar_select %p132, %s131, 63
        %s134 = smul.addr %s133, 4
        %s135 = scalar_lea.vmem %s0, %s134
        %s136 = smul.u32 32, %s9
      $region28: #{fsq_vae_forward.10} parent=23 // pred_fallthru
        _
    $region24: #{fsq_vae_forward.10} parent=5 // pred_fallthru
      _
    %p137 = scmp.le.s32.totalorder 1, %s9
    %p138 = scmp.lt.s32.totalorder %s9, 3
    %p139 = pnand %p137, %p138
    %p140 = pneg %p139
    // Predicated region
    $region29: #{fsq_vae_forward.10} parent=5 // pred_check
      _
    $region30: #{fsq_vae_forward.10} parent=5 // pred_check_branch
      %142 = sbr.rel (%p139) target = $region32
    $region31: #{fsq_vae_forward.10} parent=5 // pred_region
      %s143 = ssub.s32 %s9, 1
      %s144 = smul.u32 32, %s14
      %p145 = scmp.lt.s32.totalorder %s144, 63
      %s146 = scalar_select %p145, %s144, 63
      %s147 = smul.addr %s146, 4
      %s148 = scalar_lea.vmem %s0, %s147
      %p149 = pneg %p35
      %p150 = pneg %p32
      %p151 = pneg %p56
      %p152 = pneg %p53
      %p153 = pneg %p77
      %p154 = pneg %p74
      %p155 = pneg %p103
      %p156 = pneg %p100
      %s157 = smul.u32 32, %s14
      %p158 = scmp.lt.s32.totalorder %s157, 63
      %s159 = scalar_select %p158, %s157, 63
      %s160 = smul.addr %s159, 4
      %s161 = scalar_lea.vmem %s3, %s160
      %s162 = smul.u32 32, %s14
      %p163 = scmp.lt.s32.totalorder %s162, 63
      %s164 = scalar_select %p163, %s162, 63
      %s165 = smul.addr %s164, 4
      %s166 = scalar_lea.vmem %s0, %s165
      %s167 = smul.u32 32, %s14
      %s168 = smul.u32 32, %s14
      %p169 = scmp.lt.s32.totalorder %s168, 63
      %s170 = scalar_select %p169, %s168, 63
      %s171 = smul.addr %s170, 4
      %s172 = scalar_lea.vmem %s3, %s171
      %s173 = smul.u32 32, %s14
      %v175 = vld [vmem:[%s166] sm:$0xf]
      %v176 = vld [vmem:[%s166 + $0x4] sm:$0xf]
      %v177 = vld [vmem:[%s166 + $0x8] sm:$0xf]
      %v178 = vld [vmem:[%s166 + $0xc] sm:$0xf]
      %v179 = vld [vmem:[%s166 + $0x10] sm:$0xf]
      %v180 = vld [vmem:[%s166 + $0x14] sm:$0xf]
      %v181 = vld [vmem:[%s166 + $0x18] sm:$0xf]
      %v182 = vld [vmem:[%s166 + $0x1c] sm:$0xf]
      %v183 = vld [vmem:[%s166 + $0x20] sm:$0xf]
      %v184 = vld [vmem:[%s166 + $0x24] sm:$0xf]
      %v185 = vld [vmem:[%s166 + $0x28] sm:$0xf]
      %v186 = vld [vmem:[%s166 + $0x2c] sm:$0xf]
      %v187 = vld [vmem:[%s166 + $0x30] sm:$0xf]
      %v188 = vld [vmem:[%s166 + $0x34] sm:$0xf]
      %v189 = vld [vmem:[%s166 + $0x38] sm:$0xf]
      %v190 = vld [vmem:[%s166 + $0x3c] sm:$0xf]
      %v191 = vld [vmem:[%s166 + $0x40] sm:$0xf]
      %v192 = vld [vmem:[%s166 + $0x44] sm:$0xf]
      %v193 = vld [vmem:[%s166 + $0x48] sm:$0xf]
      %v194 = vld [vmem:[%s166 + $0x4c] sm:$0xf]
      %v195 = vld [vmem:[%s166 + $0x50] sm:$0xf]
      %v196 = vld [vmem:[%s166 + $0x54] sm:$0xf]
      %v197 = vld [vmem:[%s166 + $0x58] sm:$0xf]
      %v198 = vld [vmem:[%s166 + $0x5c] sm:$0xf]
      %v199 = vld [vmem:[%s166 + $0x60] sm:$0xf]
      %v200 = vld [vmem:[%s166 + $0x64] sm:$0xf]
      %v201 = vld [vmem:[%s166 + $0x68] sm:$0xf]
      %v202 = vld [vmem:[%s166 + $0x6c] sm:$0xf]
      %v203 = vld [vmem:[%s166 + $0x70] sm:$0xf]
      %v204 = vld [vmem:[%s166 + $0x74] sm:$0xf]
      %v205 = vld [vmem:[%s166 + $0x78] sm:$0xf]
      %v206 = vld [vmem:[%s166 + $0x7c] sm:$0xf]
      %v207 = vld [vmem:[%s1] sm:$0xf]
      %v208 = vld [vmem:[%s1 + $0x4] sm:$0xf]
      %v209 = vld [vmem:[%s1 + $0x8] sm:$0xf]
      %v210 = vld [vmem:[%s1 + $0xc] sm:$0xf]
      %v211 = vld [vmem:[%s1 + $0x10] sm:$0xf]
      %v212 = vld [vmem:[%s1 + $0x14] sm:$0xf]
      %v213 = vld [vmem:[%s2] sm:$0x1]
      %v215 = vlaneseq
      %v216 = vshrl.u32 %v215, 7
      %v217 = vsub.s32 0, %v216
      %v218 = vrot.slane %v213, %v217
      %v252 = vunpack.c.l.b16 %v175
      %v253 = vunpack.c.l.b16 %v176
      %v254 = vunpack.c.l.b16 %v177
      %v255 = vunpack.c.l.b16 %v178
      %v256 = vunpack.c.l.b16 %v179
      %v257 = vunpack.c.l.b16 %v180
      %v258 = vunpack.c.l.b16 %v181
      %v259 = vunpack.c.l.b16 %v182
      %v260 = vunpack.c.l.b16 %v183
      %v261 = vunpack.c.l.b16 %v184
      %v262 = vunpack.c.l.b16 %v185
      %v263 = vunpack.c.l.b16 %v186
      %v264 = vunpack.c.l.b16 %v187
      %v265 = vunpack.c.l.b16 %v188
      %v266 = vunpack.c.l.b16 %v189
      %v267 = vunpack.c.l.b16 %v190
      %v268 = vunpack.c.l.b16 %v191
      %v269 = vunpack.c.l.b16 %v192
      %v270 = vunpack.c.l.b16 %v193
      %v271 = vunpack.c.l.b16 %v194
      %v272 = vunpack.c.l.b16 %v195
      %v273 = vunpack.c.l.b16 %v196
      %v274 = vunpack.c.l.b16 %v197
      %v275 = vunpack.c.l.b16 %v198
      %v276 = vunpack.c.l.b16 %v199
      %v277 = vunpack.c.l.b16 %v200
      %v278 = vunpack.c.l.b16 %v201
      %v279 = vunpack.c.l.b16 %v202
      %v280 = vunpack.c.l.b16 %v203
      %v281 = vunpack.c.l.b16 %v204
      %v282 = vunpack.c.l.b16 %v205
      %v283 = vunpack.c.l.b16 %v206
      %v284 = vpack.c.b16 %v253, %v252
      %v285 = vpack.c.b16 %v255, %v254
      %v286 = vpack.c.b16 %v257, %v256
      %v287 = vpack.c.b16 %v259, %v258
      %v288 = vpack.c.b16 %v261, %v260
      %v289 = vpack.c.b16 %v263, %v262
      %v290 = vpack.c.b16 %v265, %v264
      %v291 = vpack.c.b16 %v267, %v266
      %v292 = vpack.c.b16 %v269, %v268
      %v293 = vpack.c.b16 %v271, %v270
      %v294 = vpack.c.b16 %v273, %v272
      %v295 = vpack.c.b16 %v275, %v274
      %v296 = vpack.c.b16 %v277, %v276
      %v297 = vpack.c.b16 %v279, %v278
      %v298 = vpack.c.b16 %v281, %v280
      %v299 = vpack.c.b16 %v283, %v282
      %v306 = vunpack.c.l.b16 %v207
      %v307 = vunpack.c.l.b16 %v208
      %v308 = vunpack.c.l.b16 %v209
      %v309 = vunpack.c.l.b16 %v210
      %v310 = vunpack.c.l.b16 %v211
      %v311 = vunpack.c.l.b16 %v212
      %v312 = vpack.c.b16 %v307, %v306
      %v313 = vpack.c.b16 %v309, %v308
      %v314 = vpack.c.b16 %v311, %v310
      %vm318 = vcmask 392192
      %v320 = vsel %vm318, %v284, 0
      %v323 = vsel %vm318, %v285, 0
      %v326 = vsel %vm318, %v286, 0
      %v329 = vsel %vm318, %v287, 0
      %v332 = vsel %vm318, %v288, 0
      %v335 = vsel %vm318, %v289, 0
      %v338 = vsel %vm318, %v290, 0
      %v341 = vsel %vm318, %v291, 0
      %v344 = vsel %vm318, %v292, 0
      %v347 = vsel %vm318, %v293, 0
      %v350 = vsel %vm318, %v294, 0
      %v353 = vsel %vm318, %v295, 0
      %v356 = vsel %vm318, %v296, 0
      %v359 = vsel %vm318, %v297, 0
      %v362 = vsel %vm318, %v298, 0
      %v365 = vsel %vm318, %v299, 0
      %367 = vmatprep.subr.bf16.mxu0 0
      %368 = vmatpush1.bf16.msra.mxu0 %v312
      %369 = vmatprep.subr.bf16.mxu0 0
      %370 = vmatpush1.bf16.msra.mxu0 %v313
      %371 = vmatprep.subr.bf16.mxu0 0
      %372 = vmatpush1.bf16.msra.mxu0 %v314
      %373 = vmatprep.subr.bf16.mxu0 0
      %374 = vmatpush1.bf16.msra.mxu0 0
      %375 = vmatprep.subr.bf16.mxu0 0
      %376 = vmatpush1.bf16.msra.mxu0 0
      %377 = vmatprep.subr.bf16.mxu0 0
      %378 = vmatpush1.bf16.msra.mxu0 0
      %379 = vmatprep.subr.bf16.mxu0 0
      %380 = vmatpush1.bf16.msra.mxu0 0
      %381 = vmatprep.subr.bf16.mxu0 0
      %382 = vmatpush1.bf16.msra.mxu0 0
      %383 = vmatprep.subr.bf16.mxu0 0
      %384 = vmatpush1.bf16.msra.mxu0 0
      %385 = vmatprep.subr.bf16.mxu0 0
      %386 = vmatpush1.bf16.msra.mxu0 0
      %387 = vmatprep.subr.bf16.mxu0 0
      %388 = vmatpush1.bf16.msra.mxu0 0
      %389 = vmatprep.subr.bf16.mxu0 0
      %390 = vmatpush1.bf16.msra.mxu0 0
      %391 = vmatprep.subr.bf16.mxu0 0
      %392 = vmatpush1.bf16.msra.mxu0 0
      %393 = vmatprep.subr.bf16.mxu0 0
      %394 = vmatpush1.bf16.msra.mxu0 0
      %395 = vmatprep.subr.bf16.mxu0 0
      %396 = vmatpush1.bf16.msra.mxu0 0
      %397 = vmatprep.subr.bf16.mxu0 0
      %398 = vmatpush1.bf16.msra.mxu0 0
      %399 = vmatprep.mubr.bf16.mxu0 0
      %400 = vmatmul.mubr.bf16.gmra.mrb[0].mxu0 %v320
      %v401 = vpop.f32.mrb[0].mxu0
      %v402 = vadd.f32 %v218, %v401
      %v403 = vpop.f32.mrb[0].mxu0
      %v404 = vpop.f32.mrb[0].mxu0
      %v405 = vadd.f32 %v218, %v404
      %v406 = vpop.f32.mrb[0].mxu0
      %407 = vmatprep.mubr.bf16.mxu0 0
      %408 = vmatmul.mubr.bf16.gmra.mrb[0].mxu0 %v323
      %v409 = vpop.f32.mrb[0].mxu0
      %v410 = vadd.f32 %v218, %v409
      %v411 = vpop.f32.mrb[0].mxu0
      %v412 = vpop.f32.mrb[0].mxu0
      %v413 = vadd.f32 %v218, %v412
      %v414 = vpop.f32.mrb[0].mxu0
      %415 = vmatprep.mubr.bf16.mxu0 0
      %416 = vmatmul.mubr.bf16.gmra.mrb[0].mxu0 %v326
      %v417 = vpop.f32.mrb[0].mxu0
      %v418 = vadd.f32 %v218, %v417
      %v419 = vpop.f32.mrb[0].mxu0
      %v420 = vpop.f32.mrb[0].mxu0
      %v421 = vadd.f32 %v218, %v420
      %v422 = vpop.f32.mrb[0].mxu0
      %423 = vmatprep.mubr.bf16.mxu0 0
      %424 = vmatmul.mubr.bf16.gmra.mrb[0].mxu0 %v329
      %v425 = vpop.f32.mrb[0].mxu0
      %v426 = vadd.f32 %v218, %v425
      %v427 = vpop.f32.mrb[0].mxu0
      %v428 = vpop.f32.mrb[0].mxu0
      %v429 = vadd.f32 %v218, %v428
      %v430 = vpop.f32.mrb[0].mxu0
      %431 = vmatprep.mubr.bf16.mxu0 0
      %432 = vmatmul.mubr.bf16.gmra.mrb[0].mxu0 %v332
      %v433 = vpop.f32.mrb[0].mxu0
      %v434 = vadd.f32 %v218, %v433
      %v435 = vpop.f32.mrb[0].mxu0
      %v436 = vpop.f32.mrb[0].mxu0
      %v437 = vadd.f32 %v218, %v436
      %v438 = vpop.f32.mrb[0].mxu0
      %439 = vmatprep.mubr.bf16.mxu0 0
      %440 = vmatmul.mubr.bf16.gmra.mrb[0].mxu0 %v335
      %v441 = vpop.f32.mrb[0].mxu0
      %v442 = vadd.f32 %v218, %v441
      %v443 = vpop.f32.mrb[0].mxu0
      %v444 = vpop.f32.mrb[0].mxu0
      %v445 = vadd.f32 %v218, %v444
      %v446 = vpop.f32.mrb[0].mxu0
      %447 = vmatprep.mubr.bf16.mxu0 0
      %448 = vmatmul.mubr.bf16.gmra.mrb[0].mxu0 %v338
      %v449 = vpop.f32.mrb[0].mxu0
      %v450 = vadd.f32 %v218, %v449
      %v451 = vpop.f32.mrb[0].mxu0
      %v452 = vpop.f32.mrb[0].mxu0
      %v453 = vadd.f32 %v218, %v452
      %v454 = vpop.f32.mrb[0].mxu0
      %455 = vmatprep.mubr.bf16.mxu0 0
      %456 = vmatmul.mubr.bf16.gmra.mrb[0].mxu0 %v341
      %v457 = vpop.f32.mrb[0].mxu0
      %v458 = vadd.f32 %v218, %v457
      %v459 = vpop.f32.mrb[0].mxu0
      %v460 = vpop.f32.mrb[0].mxu0
      %v461 = vadd.f32 %v218, %v460
      %v462 = vpop.f32.mrb[0].mxu0
      %463 = vmatprep.mubr.bf16.mxu0 0
      %464 = vmatmul.mubr.bf16.gmra.mrb[0].mxu0 %v344
      %v465 = vpop.f32.mrb[0].mxu0
      %v466 = vadd.f32 %v218, %v465
      %v467 = vpop.f32.mrb[0].mxu0
      %v468 = vpop.f32.mrb[0].mxu0
      %v469 = vadd.f32 %v218, %v468
      %v470 = vpop.f32.mrb[0].mxu0
      %471 = vmatprep.mubr.bf16.mxu0 0
      %472 = vmatmul.mubr.bf16.gmra.mrb[0].mxu0 %v347
      %v473 = vpop.f32.mrb[0].mxu0
      %v474 = vadd.f32 %v218, %v473
      %v475 = vpop.f32.mrb[0].mxu0
      %v476 = vpop.f32.mrb[0].mxu0
      %v477 = vadd.f32 %v218, %v476
      %v478 = vpop.f32.mrb[0].mxu0
      %479 = vmatprep.mubr.bf16.mxu0 0
      %480 = vmatmul.mubr.bf16.gmra.mrb[0].mxu0 %v350
      %v481 = vpop.f32.mrb[0].mxu0
      %v482 = vadd.f32 %v218, %v481
      %v483 = vpop.f32.mrb[0].mxu0
      %v484 = vpop.f32.mrb[0].mxu0
      %v485 = vadd.f32 %v218, %v484
      %v486 = vpop.f32.mrb[0].mxu0
      %487 = vmatprep.mubr.bf16.mxu0 0
      %488 = vmatmul.mubr.bf16.gmra.mrb[0].mxu0 %v353
      %v489 = vpop.f32.mrb[0].mxu0
      %v490 = vadd.f32 %v218, %v489
      %v491 = vpop.f32.mrb[0].mxu0
      %v492 = vpop.f32.mrb[0].mxu0
      %v493 = vadd.f32 %v218, %v492
      %v494 = vpop.f32.mrb[0].mxu0
      %495 = vmatprep.mubr.bf16.mxu0 0
      %496 = vmatmul.mubr.bf16.gmra.mrb[0].mxu0 %v356
      %v497 = vpop.f32.mrb[0].mxu0
      %v498 = vadd.f32 %v218, %v497
      %v499 = vpop.f32.mrb[0].mxu0
      %v500 = vpop.f32.mrb[0].mxu0
      %v501 = vadd.f32 %v218, %v500
      %v502 = vpop.f32.mrb[0].mxu0
      %503 = vmatprep.mubr.bf16.mxu0 0
      %504 = vmatmul.mubr.bf16.gmra.mrb[0].mxu0 %v359
      %v505 = vpop.f32.mrb[0].mxu0
      %v506 = vadd.f32 %v218, %v505
      %v507 = vpop.f32.mrb[0].mxu0
      %v508 = vpop.f32.mrb[0].mxu0
      %v509 = vadd.f32 %v218, %v508
      %v510 = vpop.f32.mrb[0].mxu0
      %511 = vmatprep.mubr.bf16.mxu0 0
      %512 = vmatmul.mubr.bf16.gmra.mrb[0].mxu0 %v362
      %v513 = vpop.f32.mrb[0].mxu0
      %v514 = vadd.f32 %v218, %v513
      %v515 = vpop.f32.mrb[0].mxu0
      %v516 = vpop.f32.mrb[0].mxu0
      %v517 = vadd.f32 %v218, %v516
      %v518 = vpop.f32.mrb[0].mxu0
      %519 = vmatprep.mubr.bf16.mxu0 0
      %520 = vmatmul.mubr.bf16.gmra.mrb[0].mxu0 %v365
      %v521 = vpop.f32.mrb[0].mxu0
      %v522 = vadd.f32 %v218, %v521
      %v523 = vpop.f32.mrb[0].mxu0
      %v524 = vpop.f32.mrb[0].mxu0
      %v525 = vadd.f32 %v218, %v524
      %v526 = vpop.f32.mrb[0].mxu0
      %527 = vdwg.mxu0
      %v528 = vmax.f32 %v402, 0.0
      %v529 = vmax.f32 %v405, 0.0
      %v530 = vmax.f32 %v410, 0.0
      %v531 = vmax.f32 %v413, 0.0
      %v532 = vmax.f32 %v418, 0.0
      %v533 = vmax.f32 %v421, 0.0
      %v534 = vmax.f32 %v426, 0.0
      %v535 = vmax.f32 %v429, 0.0
      %v536 = vmax.f32 %v434, 0.0
      %v537 = vmax.f32 %v437, 0.0
      %v538 = vmax.f32 %v442, 0.0
      %v539 = vmax.f32 %v445, 0.0
      %v540 = vmax.f32 %v450, 0.0
      %v541 = vmax.f32 %v453, 0.0
      %v542 = vmax.f32 %v458, 0.0
      %v543 = vmax.f32 %v461, 0.0
      %v544 = vmax.f32 %v466, 0.0
      %v545 = vmax.f32 %v469, 0.0
      %v546 = vmax.f32 %v474, 0.0
      %v547 = vmax.f32 %v477, 0.0
      %v548 = vmax.f32 %v482, 0.0
      %v549 = vmax.f32 %v485, 0.0
      %v550 = vmax.f32 %v490, 0.0
      %v551 = vmax.f32 %v493, 0.0
      %v552 = vmax.f32 %v498, 0.0
      %v553 = vmax.f32 %v501, 0.0
      %v554 = vmax.f32 %v506, 0.0
      %v555 = vmax.f32 %v509, 0.0
      %v556 = vmax.f32 %v514, 0.0
      %v557 = vmax.f32 %v517, 0.0
      %v558 = vmax.f32 %v522, 0.0
      %v559 = vmax.f32 %v525, 0.0
      %v560 = vpack.c.bf16 %v529, %v528
      %v561 = vpack.c.bf16 %v531, %v530
      %v562 = vpack.c.bf16 %v533, %v532
      %v563 = vpack.c.bf16 %v535, %v534
      %v564 = vpack.c.bf16 %v537, %v536
      %v565 = vpack.c.bf16 %v539, %v538
      %v566 = vpack.c.bf16 %v541, %v540
      %v567 = vpack.c.bf16 %v543, %v542
      %v568 = vpack.c.bf16 %v545, %v544
      %v569 = vpack.c.bf16 %v547, %v546
      %v570 = vpack.c.bf16 %v549, %v548
      %v571 = vpack.c.bf16 %v551, %v550
      %v572 = vpack.c.bf16 %v553, %v552
      %v573 = vpack.c.bf16 %v555, %v554
      %v574 = vpack.c.bf16 %v557, %v556
      %v575 = vpack.c.bf16 %v559, %v558
      %v592 = vunpack.c.l.b16 %v560
      %v593 = vunpack.c.h.b16 %v560
      %v594 = vunpack.c.l.b16 %v561
      %v595 = vunpack.c.h.b16 %v561
      %v596 = vunpack.c.l.b16 %v562
      %v597 = vunpack.c.h.b16 %v562
      %v598 = vunpack.c.l.b16 %v563
      %v599 = vunpack.c.h.b16 %v563
      %v600 = vunpack.c.l.b16 %v564
      %v601 = vunpack.c.h.b16 %v564
      %v602 = vunpack.c.l.b16 %v565
      %v603 = vunpack.c.h.b16 %v565
      %v604 = vunpack.c.l.b16 %v566
      %v605 = vunpack.c.h.b16 %v566
      %v606 = vunpack.c.l.b16 %v567
      %v607 = vunpack.c.h.b16 %v567
      %v608 = vunpack.c.l.b16 %v568
      %v609 = vunpack.c.h.b16 %v568
      %v610 = vunpack.c.l.b16 %v569
      %v611 = vunpack.c.h.b16 %v569
      %v612 = vunpack.c.l.b16 %v570
      %v613 = vunpack.c.h.b16 %v570
      %v614 = vunpack.c.l.b16 %v571
      %v615 = vunpack.c.h.b16 %v571
      %v616 = vunpack.c.l.b16 %v572
      %v617 = vunpack.c.h.b16 %v572
      %v618 = vunpack.c.l.b16 %v573
      %v619 = vunpack.c.h.b16 %v573
      %v620 = vunpack.c.l.b16 %v574
      %v621 = vunpack.c.h.b16 %v574
      %v622 = vunpack.c.l.b16 %v575
      %v623 = vunpack.c.h.b16 %v575
      %v624 = vpack.c.b16 %v592, %v592
      %v625 = vpack.c.b16 %v593, %v593
      %v626 = vpack.c.b16 %v594, %v594
      %v627 = vpack.c.b16 %v595, %v595
      %v628 = vpack.c.b16 %v596, %v596
      %v629 = vpack.c.b16 %v597, %v597
      %v630 = vpack.c.b16 %v598, %v598
      %v631 = vpack.c.b16 %v599, %v599
      %v632 = vpack.c.b16 %v600, %v600
      %v633 = vpack.c.b16 %v601, %v601
      %v634 = vpack.c.b16 %v602, %v602
      %v635 = vpack.c.b16 %v603, %v603
      %v636 = vpack.c.b16 %v604, %v604
      %v637 = vpack.c.b16 %v605, %v605
      %v638 = vpack.c.b16 %v606, %v606
      %v639 = vpack.c.b16 %v607, %v607
      %v640 = vpack.c.b16 %v608, %v608
      %v641 = vpack.c.b16 %v609, %v609
      %v642 = vpack.c.b16 %v610, %v610
      %v643 = vpack.c.b16 %v611, %v611
      %v644 = vpack.c.b16 %v612, %v612
      %v645 = vpack.c.b16 %v613, %v613
      %v646 = vpack.c.b16 %v614, %v614
      %v647 = vpack.c.b16 %v615, %v615
      %v648 = vpack.c.b16 %v616, %v616
      %v649 = vpack.c.b16 %v617, %v617
      %v650 = vpack.c.b16 %v618, %v618
      %v651 = vpack.c.b16 %v619, %v619
      %v652 = vpack.c.b16 %v620, %v620
      %v653 = vpack.c.b16 %v621, %v621
      %v654 = vpack.c.b16 %v622, %v622
      %v655 = vpack.c.b16 %v623, %v623
      %vm688 = vcmask 519168
      %689 = vst.msk [vmem:[%s172] sm:$0xf] %vm688, %v624
      %690 = vst.msk [vmem:[%s172 + $0x4] sm:$0xf] %vm688, %v625
      %691 = vst.msk [vmem:[%s172 + $0x8] sm:$0xf] %vm688, %v626
      %692 = vst.msk [vmem:[%s172 + $0xc] sm:$0xf] %vm688, %v627
      %693 = vst.msk [vmem:[%s172 + $0x10] sm:$0xf] %vm688, %v628
      %694 = vst.msk [vmem:[%s172 + $0x14] sm:$0xf] %vm688, %v629
      %695 = vst.msk [vmem:[%s172 + $0x18] sm:$0xf] %vm688, %v630
      %696 = vst.msk [vmem:[%s172 + $0x1c] sm:$0xf] %vm688, %v631
      %697 = vst.msk [vmem:[%s172 + $0x20] sm:$0xf] %vm688, %v632
      %698 = vst.msk [vmem:[%s172 + $0x24] sm:$0xf] %vm688, %v633
      %699 = vst.msk [vmem:[%s172 + $0x28] sm:$0xf] %vm688, %v634
      %700 = vst.msk [vmem:[%s172 + $0x2c] sm:$0xf] %vm688, %v635
      %701 = vst.msk [vmem:[%s172 + $0x30] sm:$0xf] %vm688, %v636
      %702 = vst.msk [vmem:[%s172 + $0x34] sm:$0xf] %vm688, %v637
      %703 = vst.msk [vmem:[%s172 + $0x38] sm:$0xf] %vm688, %v638
      %704 = vst.msk [vmem:[%s172 + $0x3c] sm:$0xf] %vm688, %v639
      %705 = vst.msk [vmem:[%s172 + $0x40] sm:$0xf] %vm688, %v640
      %706 = vst.msk [vmem:[%s172 + $0x44] sm:$0xf] %vm688, %v641
      %707 = vst.msk [vmem:[%s172 + $0x48] sm:$0xf] %vm688, %v642
      %708 = vst.msk [vmem:[%s172 + $0x4c] sm:$0xf] %vm688, %v643
      %709 = vst.msk [vmem:[%s172 + $0x50] sm:$0xf] %vm688, %v644
      %710 = vst.msk [vmem:[%s172 + $0x54] sm:$0xf] %vm688, %v645
      %711 = vst.msk [vmem:[%s172 + $0x58] sm:$0xf] %vm688, %v646
      %712 = vst.msk [vmem:[%s172 + $0x5c] sm:$0xf] %vm688, %v647
      %713 = vst.msk [vmem:[%s172 + $0x60] sm:$0xf] %vm688, %v648
      %714 = vst.msk [vmem:[%s172 + $0x64] sm:$0xf] %vm688, %v649
      %715 = vst.msk [vmem:[%s172 + $0x68] sm:$0xf] %vm688, %v650
      %716 = vst.msk [vmem:[%s172 + $0x6c] sm:$0xf] %vm688, %v651
      %717 = vst.msk [vmem:[%s172 + $0x70] sm:$0xf] %vm688, %v652
      %718 = vst.msk [vmem:[%s172 + $0x74] sm:$0xf] %vm688, %v653
      %719 = vst.msk [vmem:[%s172 + $0x78] sm:$0xf] %vm688, %v654
      %720 = vst.msk [vmem:[%s172 + $0x7c] sm:$0xf] %vm688, %v655
      %s721 = smul.u32 32, %s14
      %p722 = scmp.lt.s32.totalorder %s721, 63
      %s723 = scalar_select %p722, %s721, 63
      %s724 = smul.addr %s723, 4
      %s725 = scalar_lea.vmem %s3, %s724
      // Predicated region
      $region33: #{fsq_vae_forward.10} parent=31 // pred_check
        %p726 = pneg %p100
      $region34: #{fsq_vae_forward.10} parent=31 // pred_check_branch
        %728 = sbr.rel (%p726) target = $region36
      $region35: #{fsq_vae_forward.10} parent=31 // pred_region
        %s729 = smul.u32 32, %s14
      $region36: #{fsq_vae_forward.10} parent=31 // pred_fallthru
        _
    $region32: #{fsq_vae_forward.10} parent=5 // pred_fallthru
      _
    %p730 = scmp.le.s32.totalorder 2, %s9
    // Predicated region
    $region37: #{fsq_vae_forward.10} parent=5 // pred_check
      %p731 = pneg %p730
    $region38: #{fsq_vae_forward.10} parent=5 // pred_check_branch
      %733 = sbr.rel (%p731) target = $region40
    $region39: #{fsq_vae_forward.10} parent=5 // pred_region
      %s734 = ssub.s32 %s9, 2
      // Predicated region
      $region41: #{fsq_vae_forward.10} parent=39 // pred_check
        %p735 = pneg %p106
      $region42: #{fsq_vae_forward.10} parent=39 // pred_check_branch
        %737 = sbr.rel (%p735) target = $region44
      $region43: #{fsq_vae_forward.10} parent=39 // pred_region
        %s738 = smul.u32 32, %s15
        %p739 = scmp.lt.s32.totalorder %s738, 63
        %s740 = scalar_select %p739, %s738, 63
        %s741 = smul.addr %s740, 4
        %s742 = scalar_lea.vmem %s3, %s741
      $region44: #{fsq_vae_forward.10} parent=39 // pred_fallthru
        _
    $region40: #{fsq_vae_forward.10} parent=5 // pred_fallthru
      _
  $region6: #{fsq_vae_forward.10} parent=0 // loop_footer
    %s13 = sadd.s32 1, %s9
  $region7: #{fsq_vae_forward.10} parent=0 // loop_footer_branch
    %8 = sbr.rel target = $region3
  $region8: #{fsq_vae_forward.10} parent=0 // loop_exit
    _

// kernel: fsq_vae_forward.11
$region0: #{fsq_vae_forward.11}
  #allocation0 [shape = 'u32[]', space=smem, size = 0x4, offset = 0x4, fixed_abs, tag = 'smem constant byte address 0x4 - core index']
  #allocation1 [shape = 'u32[144,128]{1,0:T(1,128)}', space=vmem, size = 0x12000, scoped, tag = 'internal scratch']
  %s0 = inlined_call_operand.vmem [shape: bf16[128,1024], index: 0, kind: input, shape index: {}]
  %s1 = inlined_call_operand.vmem [shape: bf16[1024,64], index: 1, kind: input, shape index: {}]
  %s2 = inlined_call_operand.vmem [shape: f32[1,64], index: 2, kind: input, shape index: {}]
  %s3 = inlined_call_operand.vmem [shape: bf16[128,64], index: 3, kind: output, shape index: {}]
  %s4 = sld [smem:[#allocation0]]
  $region22: #{fsq_vae_forward.11} parent=0
    _
  %s6 = ssub.s32 1, %s4
  %s7 = scalar_select 0, %s6, %s4
  // Predicated region
  $region2: #{fsq_vae_forward.11} parent=0 // pred_check
    _
  $region3: #{fsq_vae_forward.11} parent=0 // pred_check_branch
    %9 = sbr.rel (0) target = $region5
  $region4: #{fsq_vae_forward.11} parent=0 // pred_region
    _
  $region5: #{fsq_vae_forward.11} parent=0 // pred_fallthru
    _
  // Predicated region
  $region6: #{fsq_vae_forward.11} parent=0 // pred_check
    _
  $region7: #{fsq_vae_forward.11} parent=0 // pred_check_branch
    %11 = sbr.rel (0) target = $region9
  $region8: #{fsq_vae_forward.11} parent=0 // pred_region
    _
  $region9: #{fsq_vae_forward.11} parent=0 // pred_fallthru
    _
  // Predicated region
  $region10: #{fsq_vae_forward.11} parent=0 // pred_check
    _
  $region11: #{fsq_vae_forward.11} parent=0 // pred_check_branch
    %13 = sbr.rel (0) target = $region13
  $region12: #{fsq_vae_forward.11} parent=0 // pred_region
    _
  $region13: #{fsq_vae_forward.11} parent=0 // pred_fallthru
    _
  %v15 = vld [vmem:[%s0] sm:$0xff]
  %v16 = vld [vmem:[%s0 + $0x8] sm:$0xff]
  %v17 = vld [vmem:[%s0 + $0x10] sm:$0xff]
  %v18 = vld [vmem:[%s0 + $0x18] sm:$0xff]
  %v19 = vld [vmem:[%s0 + $0x20] sm:$0xff]
  %v20 = vld [vmem:[%s0 + $0x28] sm:$0xff]
  %v21 = vld [vmem:[%s0 + $0x30] sm:$0xff]
  %v22 = vld [vmem:[%s0 + $0x38] sm:$0xff]
  %v23 = vld [vmem:[%s0 + $0x40] sm:$0xff]
  %v24 = vld [vmem:[%s0 + $0x48] sm:$0xff]
  %v25 = vld [vmem:[%s0 + $0x50] sm:$0xff]
  %v26 = vld [vmem:[%s0 + $0x58] sm:$0xff]
  %v27 = vld [vmem:[%s0 + $0x60] sm:$0xff]
  %v28 = vld [vmem:[%s0 + $0x68] sm:$0xff]
  %v29 = vld [vmem:[%s0 + $0x70] sm:$0xff]
  %v30 = vld [vmem:[%s0 + $0x78] sm:$0xff]
  %v31 = vld [vmem:[%s0 + $0x80] sm:$0xff]
  %v32 = vld [vmem:[%s0 + $0x88] sm:$0xff]
  %v33 = vld [vmem:[%s0 + $0x90] sm:$0xff]
  %v34 = vld [vmem:[%s0 + $0x98] sm:$0xff]
  %v35 = vld [vmem:[%s0 + $0xa0] sm:$0xff]
  %v36 = vld [vmem:[%s0 + $0xa8] sm:$0xff]
  %v37 = vld [vmem:[%s0 + $0xb0] sm:$0xff]
  %v38 = vld [vmem:[%s0 + $0xb8] sm:$0xff]
  %v39 = vld [vmem:[%s0 + $0xc0] sm:$0xff]
  %v40 = vld [vmem:[%s0 + $0xc8] sm:$0xff]
  %v41 = vld [vmem:[%s0 + $0xd0] sm:$0xff]
  %v42 = vld [vmem:[%s0 + $0xd8] sm:$0xff]
  %v43 = vld [vmem:[%s0 + $0xe0] sm:$0xff]
  %v44 = vld [vmem:[%s0 + $0xe8] sm:$0xff]
  %v45 = vld [vmem:[%s0 + $0xf0] sm:$0xff]
  %v46 = vld [vmem:[%s0 + $0xf8] sm:$0xff]
  %v47 = vld [vmem:[%s0 + $0x100] sm:$0xff]
  %v48 = vld [vmem:[%s0 + $0x108] sm:$0xff]
  %v49 = vld [vmem:[%s0 + $0x110] sm:$0xff]
  %v50 = vld [vmem:[%s0 + $0x118] sm:$0xff]
  %v51 = vld [vmem:[%s0 + $0x120] sm:$0xff]
  %v52 = vld [vmem:[%s0 + $0x128] sm:$0xff]
  %v53 = vld [vmem:[%s0 + $0x130] sm:$0xff]
  %v54 = vld [vmem:[%s0 + $0x138] sm:$0xff]
  %v55 = vld [vmem:[%s0 + $0x140] sm:$0xff]
  %v56 = vld [vmem:[%s0 + $0x148] sm:$0xff]
  %v57 = vld [vmem:[%s0 + $0x150] sm:$0xff]
  %v58 = vld [vmem:[%s0 + $0x158] sm:$0xff]
  %v59 = vld [vmem:[%s0 + $0x160] sm:$0xff]
  %v60 = vld [vmem:[%s0 + $0x168] sm:$0xff]
  %v61 = vld [vmem:[%s0 + $0x170] sm:$0xff]
  %v62 = vld [vmem:[%s0 + $0x178] sm:$0xff]
  %v63 = vld [vmem:[%s0 + $0x180] sm:$0xff]
  %v64 = vld [vmem:[%s0 + $0x188] sm:$0xff]
  %v65 = vld [vmem:[%s0 + $0x190] sm:$0xff]
  %v66 = vld [vmem:[%s0 + $0x198] sm:$0xff]
  %v67 = vld [vmem:[%s0 + $0x1a0] sm:$0xff]
  %v68 = vld [vmem:[%s0 + $0x1a8] sm:$0xff]
  %v69 = vld [vmem:[%s0 + $0x1b0] sm:$0xff]
  %v70 = vld [vmem:[%s0 + $0x1b8] sm:$0xff]
  %v71 = vld [vmem:[%s0 + $0x1c0] sm:$0xff]
  %v72 = vld [vmem:[%s0 + $0x1c8] sm:$0xff]
  %v73 = vld [vmem:[%s0 + $0x1d0] sm:$0xff]
  %v74 = vld [vmem:[%s0 + $0x1d8] sm:$0xff]
  %v75 = vld [vmem:[%s0 + $0x1e0] sm:$0xff]
  %v76 = vld [vmem:[%s0 + $0x1e8] sm:$0xff]
  %v77 = vld [vmem:[%s0 + $0x1f0] sm:$0xff]
  %v78 = vld [vmem:[%s0 + $0x1f8] sm:$0xff]
  %v79 = vld [vmem:[%s1] sm:$0xf]
  %v80 = vld [vmem:[%s1 + $0x4] sm:$0xf]
  %v81 = vld [vmem:[%s1 + $0x8] sm:$0xf]
  %v82 = vld [vmem:[%s1 + $0xc] sm:$0xf]
  %v83 = vld [vmem:[%s1 + $0x10] sm:$0xf]
  %v84 = vld [vmem:[%s1 + $0x14] sm:$0xf]
  %v85 = vld [vmem:[%s1 + $0x18] sm:$0xf]
  %v86 = vld [vmem:[%s1 + $0x1c] sm:$0xf]
  %v87 = vld [vmem:[%s1 + $0x20] sm:$0xf]
  %v88 = vld [vmem:[%s1 + $0x24] sm:$0xf]
  %v89 = vld [vmem:[%s1 + $0x28] sm:$0xf]
  %v90 = vld [vmem:[%s1 + $0x2c] sm:$0xf]
  %v91 = vld [vmem:[%s1 + $0x30] sm:$0xf]
  %v92 = vld [vmem:[%s1 + $0x34] sm:$0xf]
  %v93 = vld [vmem:[%s1 + $0x38] sm:$0xf]
  %v94 = vld [vmem:[%s1 + $0x3c] sm:$0xf]
  %v95 = vld [vmem:[%s1 + $0x40] sm:$0xf]
  %v96 = vld [vmem:[%s1 + $0x44] sm:$0xf]
  %v97 = vld [vmem:[%s1 + $0x48] sm:$0xf]
  %v98 = vld [vmem:[%s1 + $0x4c] sm:$0xf]
  %v99 = vld [vmem:[%s1 + $0x50] sm:$0xf]
  %v100 = vld [vmem:[%s1 + $0x54] sm:$0xf]
  %v101 = vld [vmem:[%s1 + $0x58] sm:$0xf]
  %v102 = vld [vmem:[%s1 + $0x5c] sm:$0xf]
  %v103 = vld [vmem:[%s1 + $0x60] sm:$0xf]
  %v104 = vld [vmem:[%s1 + $0x64] sm:$0xf]
  %v105 = vld [vmem:[%s1 + $0x68] sm:$0xf]
  %v106 = vld [vmem:[%s1 + $0x6c] sm:$0xf]
  %v107 = vld [vmem:[%s1 + $0x70] sm:$0xf]
  %v108 = vld [vmem:[%s1 + $0x74] sm:$0xf]
  %v109 = vld [vmem:[%s1 + $0x78] sm:$0xf]
  %v110 = vld [vmem:[%s1 + $0x7c] sm:$0xf]
  %v111 = vld [vmem:[%s1 + $0x80] sm:$0xf]
  %v112 = vld [vmem:[%s1 + $0x84] sm:$0xf]
  %v113 = vld [vmem:[%s1 + $0x88] sm:$0xf]
  %v114 = vld [vmem:[%s1 + $0x8c] sm:$0xf]
  %v115 = vld [vmem:[%s1 + $0x90] sm:$0xf]
  %v116 = vld [vmem:[%s1 + $0x94] sm:$0xf]
  %v117 = vld [vmem:[%s1 + $0x98] sm:$0xf]
  %v118 = vld [vmem:[%s1 + $0x9c] sm:$0xf]
  %v119 = vld [vmem:[%s1 + $0xa0] sm:$0xf]
  %v120 = vld [vmem:[%s1 + $0xa4] sm:$0xf]
  %v121 = vld [vmem:[%s1 + $0xa8] sm:$0xf]
  %v122 = vld [vmem:[%s1 + $0xac] sm:$0xf]
  %v123 = vld [vmem:[%s1 + $0xb0] sm:$0xf]
  %v124 = vld [vmem:[%s1 + $0xb4] sm:$0xf]
  %v125 = vld [vmem:[%s1 + $0xb8] sm:$0xf]
  %v126 = vld [vmem:[%s1 + $0xbc] sm:$0xf]
  %v127 = vld [vmem:[%s1 + $0xc0] sm:$0xf]
  %v128 = vld [vmem:[%s1 + $0xc4] sm:$0xf]
  %v129 = vld [vmem:[%s1 + $0xc8] sm:$0xf]
  %v130 = vld [vmem:[%s1 + $0xcc] sm:$0xf]
  %v131 = vld [vmem:[%s1 + $0xd0] sm:$0xf]
  %v132 = vld [vmem:[%s1 + $0xd4] sm:$0xf]
  %v133 = vld [vmem:[%s1 + $0xd8] sm:$0xf]
  %v134 = vld [vmem:[%s1 + $0xdc] sm:$0xf]
  %v135 = vld [vmem:[%s1 + $0xe0] sm:$0xf]
  %v136 = vld [vmem:[%s1 + $0xe4] sm:$0xf]
  %v137 = vld [vmem:[%s1 + $0xe8] sm:$0xf]
  %v138 = vld [vmem:[%s1 + $0xec] sm:$0xf]
  %v139 = vld [vmem:[%s1 + $0xf0] sm:$0xf]
  %v140 = vld [vmem:[%s1 + $0xf4] sm:$0xf]
  %v141 = vld [vmem:[%s1 + $0xf8] sm:$0xf]
  %v142 = vld [vmem:[%s1 + $0xfc] sm:$0xf]
  %v143 = vld [vmem:[%s1 + $0x100] sm:$0xf]
  %v144 = vld [vmem:[%s1 + $0x104] sm:$0xf]
  %v145 = vld [vmem:[%s1 + $0x108] sm:$0xf]
  %v146 = vld [vmem:[%s1 + $0x10c] sm:$0xf]
  %v147 = vld [vmem:[%s1 + $0x110] sm:$0xf]
  %v148 = vld [vmem:[%s1 + $0x114] sm:$0xf]
  %v149 = vld [vmem:[%s1 + $0x118] sm:$0xf]
  %v150 = vld [vmem:[%s1 + $0x11c] sm:$0xf]
  %v151 = vld [vmem:[%s1 + $0x120] sm:$0xf]
  %v152 = vld [vmem:[%s1 + $0x124] sm:$0xf]
  %v153 = vld [vmem:[%s1 + $0x128] sm:$0xf]
  %v154 = vld [vmem:[%s1 + $0x12c] sm:$0xf]
  %v155 = vld [vmem:[%s1 + $0x130] sm:$0xf]
  %v156 = vld [vmem:[%s1 + $0x134] sm:$0xf]
  %v157 = vld [vmem:[%s1 + $0x138] sm:$0xf]
  %v158 = vld [vmem:[%s1 + $0x13c] sm:$0xf]
  %v159 = vld [vmem:[%s1 + $0x140] sm:$0xf]
  %v160 = vld [vmem:[%s1 + $0x144] sm:$0xf]
  %v161 = vld [vmem:[%s1 + $0x148] sm:$0xf]
  %v162 = vld [vmem:[%s1 + $0x14c] sm:$0xf]
  %v163 = vld [vmem:[%s1 + $0x150] sm:$0xf]
  %v164 = vld [vmem:[%s1 + $0x154] sm:$0xf]
  %v165 = vld [vmem:[%s1 + $0x158] sm:$0xf]
  %v166 = vld [vmem:[%s1 + $0x15c] sm:$0xf]
  %v167 = vld [vmem:[%s1 + $0x160] sm:$0xf]
  %v168 = vld [vmem:[%s1 + $0x164] sm:$0xf]
  %v169 = vld [vmem:[%s1 + $0x168] sm:$0xf]
  %v170 = vld [vmem:[%s1 + $0x16c] sm:$0xf]
  %v171 = vld [vmem:[%s1 + $0x170] sm:$0xf]
  %v172 = vld [vmem:[%s1 + $0x174] sm:$0xf]
  %v173 = vld [vmem:[%s1 + $0x178] sm:$0xf]
  %v174 = vld [vmem:[%s1 + $0x17c] sm:$0xf]
  %v175 = vld [vmem:[%s1 + $0x180] sm:$0xf]
  %v176 = vld [vmem:[%s1 + $0x184] sm:$0xf]
  %v177 = vld [vmem:[%s1 + $0x188] sm:$0xf]
  %v178 = vld [vmem:[%s1 + $0x18c] sm:$0xf]
  %v179 = vld [vmem:[%s1 + $0x190] sm:$0xf]
  %v180 = vld [vmem:[%s1 + $0x194] sm:$0xf]
  %v181 = vld [vmem:[%s1 + $0x198] sm:$0xf]
  %v182 = vld [vmem:[%s1 + $0x19c] sm:$0xf]
  %v183 = vld [vmem:[%s1 + $0x1a0] sm:$0xf]
  %v184 = vld [vmem:[%s1 + $0x1a4] sm:$0xf]
  %v185 = vld [vmem:[%s1 + $0x1a8] sm:$0xf]
  %v186 = vld [vmem:[%s1 + $0x1ac] sm:$0xf]
  %v187 = vld [vmem:[%s1 + $0x1b0] sm:$0xf]
  %v188 = vld [vmem:[%s1 + $0x1b4] sm:$0xf]
  %v189 = vld [vmem:[%s1 + $0x1b8] sm:$0xf]
  %v190 = vld [vmem:[%s1 + $0x1bc] sm:$0xf]
  %v191 = vld [vmem:[%s1 + $0x1c0] sm:$0xf]
  %v192 = vld [vmem:[%s1 + $0x1c4] sm:$0xf]
  %v193 = vld [vmem:[%s1 + $0x1c8] sm:$0xf]
  %v194 = vld [vmem:[%s1 + $0x1cc] sm:$0xf]
  %v195 = vld [vmem:[%s1 + $0x1d0] sm:$0xf]
  %v196 = vld [vmem:[%s1 + $0x1d4] sm:$0xf]
  %v197 = vld [vmem:[%s1 + $0x1d8] sm:$0xf]
  %v198 = vld [vmem:[%s1 + $0x1dc] sm:$0xf]
  %v199 = vld [vmem:[%s1 + $0x1e0] sm:$0xf]
  %v200 = vld [vmem:[%s1 + $0x1e4] sm:$0xf]
  %v201 = vld [vmem:[%s1 + $0x1e8] sm:$0xf]
  %v202 = vld [vmem:[%s1 + $0x1ec] sm:$0xf]
  %v203 = vld [vmem:[%s1 + $0x1f0] sm:$0xf]
  %v204 = vld [vmem:[%s1 + $0x1f4] sm:$0xf]
  %v205 = vld [vmem:[%s1 + $0x1f8] sm:$0xf]
  %v206 = vld [vmem:[%s1 + $0x1fc] sm:$0xf]
  %v207 = vld [vmem:[%s2] sm:$0x1]
  %v209 = vlaneseq
  %v210 = vshrl.u32 %v209, 7
  %v211 = vsub.s32 0, %v210
  %v212 = vrot.slane %v207, %v211
  %v278 = vunpack.c.l.b16 %v15
  %v279 = vunpack.c.h.b16 %v15
  %v280 = vunpack.c.l.b16 %v16
  %v281 = vunpack.c.h.b16 %v16
  %v282 = vunpack.c.l.b16 %v17
  %v283 = vunpack.c.h.b16 %v17
  %v284 = vunpack.c.l.b16 %v18
  %v285 = vunpack.c.h.b16 %v18
  %v286 = vunpack.c.l.b16 %v19
  %v287 = vunpack.c.h.b16 %v19
  %v288 = vunpack.c.l.b16 %v20
  %v289 = vunpack.c.h.b16 %v20
  %v290 = vunpack.c.l.b16 %v21
  %v291 = vunpack.c.h.b16 %v21
  %v292 = vunpack.c.l.b16 %v22
  %v293 = vunpack.c.h.b16 %v22
  %v294 = vunpack.c.l.b16 %v23
  %v295 = vunpack.c.h.b16 %v23
  %v296 = vunpack.c.l.b16 %v24
  %v297 = vunpack.c.h.b16 %v24
  %v298 = vunpack.c.l.b16 %v25
  %v299 = vunpack.c.h.b16 %v25
  %v300 = vunpack.c.l.b16 %v26
  %v301 = vunpack.c.h.b16 %v26
  %v302 = vunpack.c.l.b16 %v27
  %v303 = vunpack.c.h.b16 %v27
  %v304 = vunpack.c.l.b16 %v28
  %v305 = vunpack.c.h.b16 %v28
  %v306 = vunpack.c.l.b16 %v29
  %v307 = vunpack.c.h.b16 %v29
  %v308 = vunpack.c.l.b16 %v30
  %v309 = vunpack.c.h.b16 %v30
  %v310 = vunpack.c.l.b16 %v31
  %v311 = vunpack.c.h.b16 %v31
  %v312 = vunpack.c.l.b16 %v32
  %v313 = vunpack.c.h.b16 %v32
  %v314 = vunpack.c.l.b16 %v33
  %v315 = vunpack.c.h.b16 %v33
  %v316 = vunpack.c.l.b16 %v34
  %v317 = vunpack.c.h.b16 %v34
  %v318 = vunpack.c.l.b16 %v35
  %v319 = vunpack.c.h.b16 %v35
  %v320 = vunpack.c.l.b16 %v36
  %v321 = vunpack.c.h.b16 %v36
  %v322 = vunpack.c.l.b16 %v37
  %v323 = vunpack.c.h.b16 %v37
  %v324 = vunpack.c.l.b16 %v38
  %v325 = vunpack.c.h.b16 %v38
  %v326 = vunpack.c.l.b16 %v39
  %v327 = vunpack.c.h.b16 %v39
  %v328 = vunpack.c.l.b16 %v40
  %v329 = vunpack.c.h.b16 %v40
  %v330 = vunpack.c.l.b16 %v41
  %v331 = vunpack.c.h.b16 %v41
  %v332 = vunpack.c.l.b16 %v42
  %v333 = vunpack.c.h.b16 %v42
  %v334 = vunpack.c.l.b16 %v43
  %v335 = vunpack.c.h.b16 %v43
  %v336 = vunpack.c.l.b16 %v44
  %v337 = vunpack.c.h.b16 %v44
  %v338 = vunpack.c.l.b16 %v45
  %v339 = vunpack.c.h.b16 %v45
  %v340 = vunpack.c.l.b16 %v46
  %v341 = vunpack.c.h.b16 %v46
  %v342 = vunpack.c.l.b16 %v47
  %v343 = vunpack.c.h.b16 %v47
  %v344 = vunpack.c.l.b16 %v48
  %v345 = vunpack.c.h.b16 %v48
  %v346 = vunpack.c.l.b16 %v49
  %v347 = vunpack.c.h.b16 %v49
  %v348 = vunpack.c.l.b16 %v50
  %v349 = vunpack.c.h.b16 %v50
  %v350 = vunpack.c.l.b16 %v51
  %v351 = vunpack.c.h.b16 %v51
  %v352 = vunpack.c.l.b16 %v52
  %v353 = vunpack.c.h.b16 %v52
  %v354 = vunpack.c.l.b16 %v53
  %v355 = vunpack.c.h.b16 %v53
  %v356 = vunpack.c.l.b16 %v54
  %v357 = vunpack.c.h.b16 %v54
  %v358 = vunpack.c.l.b16 %v55
  %v359 = vunpack.c.h.b16 %v55
  %v360 = vunpack.c.l.b16 %v56
  %v361 = vunpack.c.h.b16 %v56
  %v362 = vunpack.c.l.b16 %v57
  %v363 = vunpack.c.h.b16 %v57
  %v364 = vunpack.c.l.b16 %v58
  %v365 = vunpack.c.h.b16 %v58
  %v366 = vunpack.c.l.b16 %v59
  %v367 = vunpack.c.h.b16 %v59
  %v368 = vunpack.c.l.b16 %v60
  %v369 = vunpack.c.h.b16 %v60
  %v370 = vunpack.c.l.b16 %v61
  %v371 = vunpack.c.h.b16 %v61
  %v372 = vunpack.c.l.b16 %v62
  %v373 = vunpack.c.h.b16 %v62
  %v374 = vunpack.c.l.b16 %v63
  %v375 = vunpack.c.h.b16 %v63
  %v376 = vunpack.c.l.b16 %v64
  %v377 = vunpack.c.h.b16 %v64
  %v378 = vunpack.c.l.b16 %v65
  %v379 = vunpack.c.h.b16 %v65
  %v380 = vunpack.c.l.b16 %v66
  %v381 = vunpack.c.h.b16 %v66
  %v382 = vunpack.c.l.b16 %v67
  %v383 = vunpack.c.h.b16 %v67
  %v384 = vunpack.c.l.b16 %v68
  %v385 = vunpack.c.h.b16 %v68
  %v386 = vunpack.c.l.b16 %v69
  %v387 = vunpack.c.h.b16 %v69
  %v388 = vunpack.c.l.b16 %v70
  %v389 = vunpack.c.h.b16 %v70
  %v390 = vunpack.c.l.b16 %v71
  %v391 = vunpack.c.h.b16 %v71
  %v392 = vunpack.c.l.b16 %v72
  %v393 = vunpack.c.h.b16 %v72
  %v394 = vunpack.c.l.b16 %v73
  %v395 = vunpack.c.h.b16 %v73
  %v396 = vunpack.c.l.b16 %v74
  %v397 = vunpack.c.h.b16 %v74
  %v398 = vunpack.c.l.b16 %v75
  %v399 = vunpack.c.h.b16 %v75
  %v400 = vunpack.c.l.b16 %v76
  %v401 = vunpack.c.h.b16 %v76
  %v402 = vunpack.c.l.b16 %v77
  %v403 = vunpack.c.h.b16 %v77
  %v404 = vunpack.c.l.b16 %v78
  %v405 = vunpack.c.h.b16 %v78
  %v406 = vpack.c.b16 %v286, %v278
  %v407 = vpack.c.b16 %v287, %v279
  %v408 = vpack.c.b16 %v288, %v280
  %v409 = vpack.c.b16 %v289, %v281
  %v410 = vpack.c.b16 %v290, %v282
  %v411 = vpack.c.b16 %v291, %v283
  %v412 = vpack.c.b16 %v292, %v284
  %v413 = vpack.c.b16 %v293, %v285
  %v414 = vpack.c.b16 %v302, %v294
  %v415 = vpack.c.b16 %v303, %v295
  %v416 = vpack.c.b16 %v304, %v296
  %v417 = vpack.c.b16 %v305, %v297
  %v418 = vpack.c.b16 %v306, %v298
  %v419 = vpack.c.b16 %v307, %v299
  %v420 = vpack.c.b16 %v308, %v300
  %v421 = vpack.c.b16 %v309, %v301
  %v422 = vpack.c.b16 %v318, %v310
  %v423 = vpack.c.b16 %v319, %v311
  %v424 = vpack.c.b16 %v320, %v312
  %v425 = vpack.c.b16 %v321, %v313
  %v426 = vpack.c.b16 %v322, %v314
  %v427 = vpack.c.b16 %v323, %v315
  %v428 = vpack.c.b16 %v324, %v316
  %v429 = vpack.c.b16 %v325, %v317
  %v430 = vpack.c.b16 %v334, %v326
  %v431 = vpack.c.b16 %v335, %v327
  %v432 = vpack.c.b16 %v336, %v328
  %v433 = vpack.c.b16 %v337, %v329
  %v434 = vpack.c.b16 %v338, %v330
  %v435 = vpack.c.b16 %v339, %v331
  %v436 = vpack.c.b16 %v340, %v332
  %v437 = vpack.c.b16 %v341, %v333
  %v438 = vpack.c.b16 %v350, %v342
  %v439 = vpack.c.b16 %v351, %v343
  %v440 = vpack.c.b16 %v352, %v344
  %v441 = vpack.c.b16 %v353, %v345
  %v442 = vpack.c.b16 %v354, %v346
  %v443 = vpack.c.b16 %v355, %v347
  %v444 = vpack.c.b16 %v356, %v348
  %v445 = vpack.c.b16 %v357, %v349
  %v446 = vpack.c.b16 %v366, %v358
  %v447 = vpack.c.b16 %v367, %v359
  %v448 = vpack.c.b16 %v368, %v360
  %v449 = vpack.c.b16 %v369, %v361
  %v450 = vpack.c.b16 %v370, %v362
  %v451 = vpack.c.b16 %v371, %v363
  %v452 = vpack.c.b16 %v372, %v364
  %v453 = vpack.c.b16 %v373, %v365
  %v454 = vpack.c.b16 %v382, %v374
  %v455 = vpack.c.b16 %v383, %v375
  %v456 = vpack.c.b16 %v384, %v376
  %v457 = vpack.c.b16 %v385, %v377
  %v458 = vpack.c.b16 %v386, %v378
  %v459 = vpack.c.b16 %v387, %v379
  %v460 = vpack.c.b16 %v388, %v380
  %v461 = vpack.c.b16 %v389, %v381
  %v462 = vpack.c.b16 %v398, %v390
  %v463 = vpack.c.b16 %v399, %v391
  %v464 = vpack.c.b16 %v400, %v392
  %v465 = vpack.c.b16 %v401, %v393
  %v466 = vpack.c.b16 %v402, %v394
  %v467 = vpack.c.b16 %v403, %v395
  %v468 = vpack.c.b16 %v404, %v396
  %v469 = vpack.c.b16 %v405, %v397
  %v662 = vunpack.c.l.b16 %v79
  %v663 = vunpack.c.l.b16 %v80
  %v664 = vunpack.c.l.b16 %v81
  %v665 = vunpack.c.l.b16 %v82
  %v666 = vunpack.c.l.b16 %v83
  %v667 = vunpack.c.l.b16 %v84
  %v668 = vunpack.c.l.b16 %v85
  %v669 = vunpack.c.l.b16 %v86
  %v670 = vunpack.c.l.b16 %v87
  %v671 = vunpack.c.l.b16 %v88
  %v672 = vunpack.c.l.b16 %v89
  %v673 = vunpack.c.l.b16 %v90
  %v674 = vunpack.c.l.b16 %v91
  %v675 = vunpack.c.l.b16 %v92
  %v676 = vunpack.c.l.b16 %v93
  %v677 = vunpack.c.l.b16 %v94
  %v678 = vunpack.c.l.b16 %v95
  %v679 = vunpack.c.l.b16 %v96
  %v680 = vunpack.c.l.b16 %v97
  %v681 = vunpack.c.l.b16 %v98
  %v682 = vunpack.c.l.b16 %v99
  %v683 = vunpack.c.l.b16 %v100
  %v684 = vunpack.c.l.b16 %v101
  %v685 = vunpack.c.l.b16 %v102
  %v686 = vunpack.c.l.b16 %v103
  %v687 = vunpack.c.l.b16 %v104
  %v688 = vunpack.c.l.b16 %v105
  %v689 = vunpack.c.l.b16 %v106
  %v690 = vunpack.c.l.b16 %v107
  %v691 = vunpack.c.l.b16 %v108
  %v692 = vunpack.c.l.b16 %v109
  %v693 = vunpack.c.l.b16 %v110
  %v694 = vunpack.c.l.b16 %v111
  %v695 = vunpack.c.l.b16 %v112
  %v696 = vunpack.c.l.b16 %v113
  %v697 = vunpack.c.l.b16 %v114
  %v698 = vunpack.c.l.b16 %v115
  %v699 = vunpack.c.l.b16 %v116
  %v700 = vunpack.c.l.b16 %v117
  %v701 = vunpack.c.l.b16 %v118
  %v702 = vunpack.c.l.b16 %v119
  %v703 = vunpack.c.l.b16 %v120
  %v704 = vunpack.c.l.b16 %v121
  %v705 = vunpack.c.l.b16 %v122
  %v706 = vunpack.c.l.b16 %v123
  %v707 = vunpack.c.l.b16 %v124
  %v708 = vunpack.c.l.b16 %v125
  %v709 = vunpack.c.l.b16 %v126
  %v710 = vunpack.c.l.b16 %v127
  %v711 = vunpack.c.l.b16 %v128
  %v712 = vunpack.c.l.b16 %v129
  %v713 = vunpack.c.l.b16 %v130
  %v714 = vunpack.c.l.b16 %v131
  %v715 = vunpack.c.l.b16 %v132
  %v716 = vunpack.c.l.b16 %v133
  %v717 = vunpack.c.l.b16 %v134
  %v718 = vunpack.c.l.b16 %v135
  %v719 = vunpack.c.l.b16 %v136
  %v720 = vunpack.c.l.b16 %v137
  %v721 = vunpack.c.l.b16 %v138
  %v722 = vunpack.c.l.b16 %v139
  %v723 = vunpack.c.l.b16 %v140
  %v724 = vunpack.c.l.b16 %v141
  %v725 = vunpack.c.l.b16 %v142
  %v726 = vunpack.c.l.b16 %v143
  %v727 = vunpack.c.l.b16 %v144
  %v728 = vunpack.c.l.b16 %v145
  %v729 = vunpack.c.l.b16 %v146
  %v730 = vunpack.c.l.b16 %v147
  %v731 = vunpack.c.l.b16 %v148
  %v732 = vunpack.c.l.b16 %v149
  %v733 = vunpack.c.l.b16 %v150
  %v734 = vunpack.c.l.b16 %v151
  %v735 = vunpack.c.l.b16 %v152
  %v736 = vunpack.c.l.b16 %v153
  %v737 = vunpack.c.l.b16 %v154
  %v738 = vunpack.c.l.b16 %v155
  %v739 = vunpack.c.l.b16 %v156
  %v740 = vunpack.c.l.b16 %v157
  %v741 = vunpack.c.l.b16 %v158
  %v742 = vunpack.c.l.b16 %v159
  %v743 = vunpack.c.l.b16 %v160
  %v744 = vunpack.c.l.b16 %v161
  %v745 = vunpack.c.l.b16 %v162
  %v746 = vunpack.c.l.b16 %v163
  %v747 = vunpack.c.l.b16 %v164
  %v748 = vunpack.c.l.b16 %v165
  %v749 = vunpack.c.l.b16 %v166
  %v750 = vunpack.c.l.b16 %v167
  %v751 = vunpack.c.l.b16 %v168
  %v752 = vunpack.c.l.b16 %v169
  %v753 = vunpack.c.l.b16 %v170
  %v754 = vunpack.c.l.b16 %v171
  %v755 = vunpack.c.l.b16 %v172
  %v756 = vunpack.c.l.b16 %v173
  %v757 = vunpack.c.l.b16 %v174
  %v758 = vunpack.c.l.b16 %v175
  %v759 = vunpack.c.l.b16 %v176
  %v760 = vunpack.c.l.b16 %v177
  %v761 = vunpack.c.l.b16 %v178
  %v762 = vunpack.c.l.b16 %v179
  %v763 = vunpack.c.l.b16 %v180
  %v764 = vunpack.c.l.b16 %v181
  %v765 = vunpack.c.l.b16 %v182
  %v766 = vunpack.c.l.b16 %v183
  %v767 = vunpack.c.l.b16 %v184
  %v768 = vunpack.c.l.b16 %v185
  %v769 = vunpack.c.l.b16 %v186
  %v770 = vunpack.c.l.b16 %v187
  %v771 = vunpack.c.l.b16 %v188
  %v772 = vunpack.c.l.b16 %v189
  %v773 = vunpack.c.l.b16 %v190
  %v774 = vunpack.c.l.b16 %v191
  %v775 = vunpack.c.l.b16 %v192
  %v776 = vunpack.c.l.b16 %v193
  %v777 = vunpack.c.l.b16 %v194
  %v778 = vunpack.c.l.b16 %v195
  %v779 = vunpack.c.l.b16 %v196
  %v780 = vunpack.c.l.b16 %v197
  %v781 = vunpack.c.l.b16 %v198
  %v782 = vunpack.c.l.b16 %v199
  %v783 = vunpack.c.l.b16 %v200
  %v784 = vunpack.c.l.b16 %v201
  %v785 = vunpack.c.l.b16 %v202
  %v786 = vunpack.c.l.b16 %v203
  %v787 = vunpack.c.l.b16 %v204
  %v788 = vunpack.c.l.b16 %v205
  %v789 = vunpack.c.l.b16 %v206
  %v790 = vpack.c.b16 %v663, %v662
  %v791 = vpack.c.b16 %v665, %v664
  %v792 = vpack.c.b16 %v667, %v666
  %v793 = vpack.c.b16 %v669, %v668
  %v794 = vpack.c.b16 %v671, %v670
  %v795 = vpack.c.b16 %v673, %v672
  %v796 = vpack.c.b16 %v675, %v674
  %v797 = vpack.c.b16 %v677, %v676
  %v798 = vpack.c.b16 %v679, %v678
  %v799 = vpack.c.b16 %v681, %v680
  %v800 = vpack.c.b16 %v683, %v682
  %v801 = vpack.c.b16 %v685, %v684
  %v802 = vpack.c.b16 %v687, %v686
  %v803 = vpack.c.b16 %v689, %v688
  %v804 = vpack.c.b16 %v691, %v690
  %v805 = vpack.c.b16 %v693, %v692
  %v806 = vpack.c.b16 %v695, %v694
  %v807 = vpack.c.b16 %v697, %v696
  %v808 = vpack.c.b16 %v699, %v698
  %v809 = vpack.c.b16 %v701, %v700
  %v810 = vpack.c.b16 %v703, %v702
  %v811 = vpack.c.b16 %v705, %v704
  %v812 = vpack.c.b16 %v707, %v706
  %v813 = vpack.c.b16 %v709, %v708
  %v814 = vpack.c.b16 %v711, %v710
  %v815 = vpack.c.b16 %v713, %v712
  %v816 = vpack.c.b16 %v715, %v714
  %v817 = vpack.c.b16 %v717, %v716
  %v818 = vpack.c.b16 %v719, %v718
  %v819 = vpack.c.b16 %v721, %v720
  %v820 = vpack.c.b16 %v723, %v722
  %v821 = vpack.c.b16 %v725, %v724
  %v822 = vpack.c.b16 %v727, %v726
  %v823 = vpack.c.b16 %v729, %v728
  %v824 = vpack.c.b16 %v731, %v730
  %v825 = vpack.c.b16 %v733, %v732
  %v826 = vpack.c.b16 %v735, %v734
  %v827 = vpack.c.b16 %v737, %v736
  %v828 = vpack.c.b16 %v739, %v738
  %v829 = vpack.c.b16 %v741, %v740
  %v830 = vpack.c.b16 %v743, %v742
  %v831 = vpack.c.b16 %v745, %v744
  %v832 = vpack.c.b16 %v747, %v746
  %v833 = vpack.c.b16 %v749, %v748
  %v834 = vpack.c.b16 %v751, %v750
  %v835 = vpack.c.b16 %v753, %v752
  %v836 = vpack.c.b16 %v755, %v754
  %v837 = vpack.c.b16 %v757, %v756
  %v838 = vpack.c.b16 %v759, %v758
  %v839 = vpack.c.b16 %v761, %v760
  %v840 = vpack.c.b16 %v763, %v762
  %v841 = vpack.c.b16 %v765, %v764
  %v842 = vpack.c.b16 %v767, %v766
  %v843 = vpack.c.b16 %v769, %v768
  %v844 = vpack.c.b16 %v771, %v770
  %v845 = vpack.c.b16 %v773, %v772
  %v846 = vpack.c.b16 %v775, %v774
  %v847 = vpack.c.b16 %v777, %v776
  %v848 = vpack.c.b16 %v779, %v778
  %v849 = vpack.c.b16 %v781, %v780
  %v850 = vpack.c.b16 %v783, %v782
  %v851 = vpack.c.b16 %v785, %v784
  %v852 = vpack.c.b16 %v787, %v786
  %v853 = vpack.c.b16 %v789, %v788
  %918 = vmatprep.subr.bf16.mxu0 0
  %919 = vmatpush1.bf16.msra.mxu0 %v790
  %920 = vmatprep.subr.bf16.mxu0 0
  %921 = vmatpush1.bf16.msra.mxu0 %v791
  %922 = vmatprep.subr.bf16.mxu0 0
  %923 = vmatpush1.bf16.msra.mxu0 %v792
  %924 = vmatprep.subr.bf16.mxu0 0
  %925 = vmatpush1.bf16.msra.mxu0 %v793
  %926 = vmatprep.subr.bf16.mxu0 0
  %927 = vmatpush1.bf16.msra.mxu0 %v794
  %928 = vmatprep.subr.bf16.mxu0 0
  %929 = vmatpush1.bf16.msra.mxu0 %v795
  %930 = vmatprep.subr.bf16.mxu0 0
  %931 = vmatpush1.bf16.msra.mxu0 %v796
  %932 = vmatprep.subr.bf16.mxu0 0
  %933 = vmatpush1.bf16.msra.mxu0 %v797
  %934 = vmatprep.subr.bf16.mxu0 0
  %935 = vmatpush1.bf16.msra.mxu0 %v798
  %936 = vmatprep.subr.bf16.mxu0 0
  %937 = vmatpush1.bf16.msra.mxu0 %v799
  %938 = vmatprep.subr.bf16.mxu0 0
  %939 = vmatpush1.bf16.msra.mxu0 %v800
  %940 = vmatprep.subr.bf16.mxu0 0
  %941 = vmatpush1.bf16.msra.mxu0 %v801
  %942 = vmatprep.subr.bf16.mxu0 0
  %943 = vmatpush1.bf16.msra.mxu0 %v802
  %944 = vmatprep.subr.bf16.mxu0 0
  %945 = vmatpush1.bf16.msra.mxu0 %v803
  %946 = vmatprep.subr.bf16.mxu0 0
  %947 = vmatpush1.bf16.msra.mxu0 %v804
  %948 = vmatprep.subr.bf16.mxu0 0
  %949 = vmatpush1.bf16.msra.mxu0 %v805
  %950 = vmatprep.mubr.bf16.mxu0 %v407
  %951 = vmatmul.mubr.bf16.gmra.mrb[0].mxu0 %v406
  %v952 = vpop.f32.mrb[0].mxu0
  %v953 = vadd.f32 %v212, %v952
  %v954 = vpop.f32.mrb[0].mxu0
  %v955 = vpop.f32.mrb[0].mxu0
  %v956 = vadd.f32 %v212, %v955
  %v957 = vpop.f32.mrb[0].mxu0
  %958 = vmatprep.mubr.bf16.mxu0 %v415
  %959 = vmatmul.mubr.bf16.gmra.mrb[0].mxu0 %v414
  %v960 = vpop.f32.mrb[0].mxu0
  %v961 = vadd.f32 %v212, %v960
  %v962 = vpop.f32.mrb[0].mxu0
  %v963 = vpop.f32.mrb[0].mxu0
  %v964 = vadd.f32 %v212, %v963
  %v965 = vpop.f32.mrb[0].mxu0
  %966 = vmatprep.mubr.bf16.mxu0 %v423
  %967 = vmatmul.mubr.bf16.gmra.mrb[0].mxu0 %v422
  %v968 = vpop.f32.mrb[0].mxu0
  %v969 = vadd.f32 %v212, %v968
  %v970 = vpop.f32.mrb[0].mxu0
  %v971 = vpop.f32.mrb[0].mxu0
  %v972 = vadd.f32 %v212, %v971
  %v973 = vpop.f32.mrb[0].mxu0
  %974 = vmatprep.mubr.bf16.mxu0 %v431
  %975 = vmatmul.mubr.bf16.gmra.mrb[0].mxu0 %v430
  %v976 = vpop.f32.mrb[0].mxu0
  %v977 = vadd.f32 %v212, %v976
  %v978 = vpop.f32.mrb[0].mxu0
  %v979 = vpop.f32.mrb[0].mxu0
  %v980 = vadd.f32 %v212, %v979
  %v981 = vpop.f32.mrb[0].mxu0
  %982 = vmatprep.mubr.bf16.mxu0 %v439
  %983 = vmatmul.mubr.bf16.gmra.mrb[0].mxu0 %v438
  %v984 = vpop.f32.mrb[0].mxu0
  %v985 = vadd.f32 %v212, %v984
  %v986 = vpop.f32.mrb[0].mxu0
  %v987 = vpop.f32.mrb[0].mxu0
  %v988 = vadd.f32 %v212, %v987
  %v989 = vpop.f32.mrb[0].mxu0
  %990 = vmatprep.mubr.bf16.mxu0 %v447
  %991 = vmatmul.mubr.bf16.gmra.mrb[0].mxu0 %v446
  %v992 = vpop.f32.mrb[0].mxu0
  %v993 = vadd.f32 %v212, %v992
  %v994 = vpop.f32.mrb[0].mxu0
  %v995 = vpop.f32.mrb[0].mxu0
  %v996 = vadd.f32 %v212, %v995
  %v997 = vpop.f32.mrb[0].mxu0
  %998 = vmatprep.mubr.bf16.mxu0 %v455
  %999 = vmatmul.mubr.bf16.gmra.mrb[0].mxu0 %v454
  %v1000 = vpop.f32.mrb[0].mxu0
  %v1001 = vadd.f32 %v212, %v1000
  %v1002 = vpop.f32.mrb[0].mxu0
  %v1003 = vpop.f32.mrb[0].mxu0
  %v1004 = vadd.f32 %v212, %v1003
  %v1005 = vpop.f32.mrb[0].mxu0
  %1006 = vmatprep.mubr.bf16.mxu0 %v463
  %1007 = vmatmul.mubr.bf16.gmra.mrb[0].mxu0 %v462
  %v1008 = vpop.f32.mrb[0].mxu0
  %v1009 = vadd.f32 %v212, %v1008
  %v1010 = vpop.f32.mrb[0].mxu0
  %v1011 = vpop.f32.mrb[0].mxu0
  %v1012 = vadd.f32 %v212, %v1011
  %v1013 = vpop.f32.mrb[0].mxu0
  %1014 = vdwg.mxu0
  %1015 = vmatprep.subr.bf16.mxu0 0
  %1016 = vmatpush1.bf16.msra.mxu0 %v806
  %1017 = vmatprep.subr.bf16.mxu0 0
  %1018 = vmatpush1.bf16.msra.mxu0 %v807
  %1019 = vmatprep.subr.bf16.mxu0 0
  %1020 = vmatpush1.bf16.msra.mxu0 %v808
  %1021 = vmatprep.subr.bf16.mxu0 0
  %1022 = vmatpush1.bf16.msra.mxu0 %v809
  %1023 = vmatprep.subr.bf16.mxu0 0
  %1024 = vmatpush1.bf16.msra.mxu0 %v810
  %1025 = vmatprep.subr.bf16.mxu0 0
  %1026 = vmatpush1.bf16.msra.mxu0 %v811
  %1027 = vmatprep.subr.bf16.mxu0 0
  %1028 = vmatpush1.bf16.msra.mxu0 %v812
  %1029 = vmatprep.subr.bf16.mxu0 0
  %1030 = vmatpush1.bf16.msra.mxu0 %v813
  %1031 = vmatprep.subr.bf16.mxu0 0
  %1032 = vmatpush1.bf16.msra.mxu0 %v814
  %1033 = vmatprep.subr.bf16.mxu0 0
  %1034 = vmatpush1.bf16.msra.mxu0 %v815
  %1035 = vmatprep.subr.bf16.mxu0 0
  %1036 = vmatpush1.bf16.msra.mxu0 %v816
  %1037 = vmatprep.subr.bf16.mxu0 0
  %1038 = vmatpush1.bf16.msra.mxu0 %v817
  %1039 = vmatprep.subr.bf16.mxu0 0
  %1040 = vmatpush1.bf16.msra.mxu0 %v818
  %1041 = vmatprep.subr.bf16.mxu0 0
  %1042 = vmatpush1.bf16.msra.mxu0 %v819
  %1043 = vmatprep.subr.bf16.mxu0 0
  %1044 = vmatpush1.bf16.msra.mxu0 %v820
  %1045 = vmatprep.subr.bf16.mxu0 0
  %1046 = vmatpush1.bf16.msra.mxu0 %v821
  %1047 = vmatprep.mubr.bf16.mxu0 %v409
  %1048 = vmatmul.mubr.bf16.gmra.mrb[0].mxu0 %v408
  %v1049 = vpop.f32.mrb[0].mxu0
  %v1050 = vadd.f32 %v953, %v1049
  %v1051 = vpop.f32.mrb[0].mxu0
  %v1052 = vpop.f32.mrb[0].mxu0
  %v1053 = vadd.f32 %v956, %v1052
  %v1054 = vpop.f32.mrb[0].mxu0
  %1055 = vmatprep.mubr.bf16.mxu0 %v417
  %1056 = vmatmul.mubr.bf16.gmra.mrb[0].mxu0 %v416
  %v1057 = vpop.f32.mrb[0].mxu0
  %v1058 = vadd.f32 %v961, %v1057
  %v1059 = vpop.f32.mrb[0].mxu0
  %v1060 = vpop.f32.mrb[0].mxu0
  %v1061 = vadd.f32 %v964, %v1060
  %v1062 = vpop.f32.mrb[0].mxu0
  %1063 = vmatprep.mubr.bf16.mxu0 %v425
  %1064 = vmatmul.mubr.bf16.gmra.mrb[0].mxu0 %v424
  %v1065 = vpop.f32.mrb[0].mxu0
  %v1066 = vadd.f32 %v969, %v1065
  %v1067 = vpop.f32.mrb[0].mxu0
  %v1068 = vpop.f32.mrb[0].mxu0
  %v1069 = vadd.f32 %v972, %v1068
  %v1070 = vpop.f32.mrb[0].mxu0
  %1071 = vmatprep.mubr.bf16.mxu0 %v433
  %1072 = vmatmul.mubr.bf16.gmra.mrb[0].mxu0 %v432
  %v1073 = vpop.f32.mrb[0].mxu0
  %v1074 = vadd.f32 %v977, %v1073
  %v1075 = vpop.f32.mrb[0].mxu0
  %v1076 = vpop.f32.mrb[0].mxu0
  %v1077 = vadd.f32 %v980, %v1076
  %v1078 = vpop.f32.mrb[0].mxu0
  %1079 = vmatprep.mubr.bf16.mxu0 %v441
  %1080 = vmatmul.mubr.bf16.gmra.mrb[0].mxu0 %v440
  %v1081 = vpop.f32.mrb[0].mxu0
  %v1082 = vadd.f32 %v985, %v1081
  %v1083 = vpop.f32.mrb[0].mxu0
  %v1084 = vpop.f32.mrb[0].mxu0
  %v1085 = vadd.f32 %v988, %v1084
  %v1086 = vpop.f32.mrb[0].mxu0
  %1087 = vmatprep.mubr.bf16.mxu0 %v449
  %1088 = vmatmul.mubr.bf16.gmra.mrb[0].mxu0 %v448
  %v1089 = vpop.f32.mrb[0].mxu0
  %v1090 = vadd.f32 %v993, %v1089
  %v1091 = vpop.f32.mrb[0].mxu0
  %v1092 = vpop.f32.mrb[0].mxu0
  %v1093 = vadd.f32 %v996, %v1092
  %v1094 = vpop.f32.mrb[0].mxu0
  %1095 = vmatprep.mubr.bf16.mxu0 %v457
  %1096 = vmatmul.mubr.bf16.gmra.mrb[0].mxu0 %v456
  %v1097 = vpop.f32.mrb[0].mxu0
  %v1098 = vadd.f32 %v1001, %v1097
  %v1099 = vpop.f32.mrb[0].mxu0
  %v1100 = vpop.f32.mrb[0].mxu0
  %v1101 = vadd.f32 %v1004, %v1100
  %v1102 = vpop.f32.mrb[0].mxu0
  %1103 = vmatprep.mubr.bf16.mxu0 %v465
  %1104 = vmatmul.mubr.bf16.gmra.mrb[0].mxu0 %v464
  %v1105 = vpop.f32.mrb[0].mxu0
  %v1106 = vadd.f32 %v1009, %v1105
  %v1107 = vpop.f32.mrb[0].mxu0
  %v1108 = vpop.f32.mrb[0].mxu0
  %v1109 = vadd.f32 %v1012, %v1108
  %v1110 = vpop.f32.mrb[0].mxu0
  %1111 = vdwg.mxu0
  %1112 = vmatprep.subr.bf16.mxu0 0
  %1113 = vmatpush1.bf16.msra.mxu0 %v822
  %1114 = vmatprep.subr.bf16.mxu0 0
  %1115 = vmatpush1.bf16.msra.mxu0 %v823
  %1116 = vmatprep.subr.bf16.mxu0 0
  %1117 = vmatpush1.bf16.msra.mxu0 %v824
  %1118 = vmatprep.subr.bf16.mxu0 0
  %1119 = vmatpush1.bf16.msra.mxu0 %v825
  %1120 = vmatprep.subr.bf16.mxu0 0
  %1121 = vmatpush1.bf16.msra.mxu0 %v826
  %1122 = vmatprep.subr.bf16.mxu0 0
  %1123 = vmatpush1.bf16.msra.mxu0 %v827
  %1124 = vmatprep.subr.bf16.mxu0 0
  %1125 = vmatpush1.bf16.msra.mxu0 %v828
  %1126 = vmatprep.subr.bf16.mxu0 0
  %1127 = vmatpush1.bf16.msra.mxu0 %v829
  %1128 = vmatprep.subr.bf16.mxu0 0
  %1129 = vmatpush1.bf16.msra.mxu0 %v830
  %1130 = vmatprep.subr.bf16.mxu0 0
  %1131 = vmatpush1.bf16.msra.mxu0 %v831
  %1132 = vmatprep.subr.bf16.mxu0 0
  %1133 = vmatpush1.bf16.msra.mxu0 %v832
  %1134 = vmatprep.subr.bf16.mxu0 0
  %1135 = vmatpush1.bf16.msra.mxu0 %v833
  %1136 = vmatprep.subr.bf16.mxu0 0
  %1137 = vmatpush1.bf16.msra.mxu0 %v834
  %1138 = vmatprep.subr.bf16.mxu0 0
  %1139 = vmatpush1.bf16.msra.mxu0 %v835
  %1140 = vmatprep.subr.bf16.mxu0 0
  %1141 = vmatpush1.bf16.msra.mxu0 %v836
  %1142 = vmatprep.subr.bf16.mxu0 0
  %1143 = vmatpush1.bf16.msra.mxu0 %v837
  %1144 = vmatprep.mubr.bf16.mxu0 %v411
  %1145 = vmatmul.mubr.bf16.gmra.mrb[0].mxu0 %v410
  %v1146 = vpop.f32.mrb[0].mxu0
  %v1147 = vadd.f32 %v1050, %v1146
  %v1148 = vpop.f32.mrb[0].mxu0
  %v1149 = vpop.f32.mrb[0].mxu0
  %v1150 = vadd.f32 %v1053, %v1149
  %v1151 = vpop.f32.mrb[0].mxu0
  %1152 = vmatprep.mubr.bf16.mxu0 %v419
  %1153 = vmatmul.mubr.bf16.gmra.mrb[0].mxu0 %v418
  %v1154 = vpop.f32.mrb[0].mxu0
  %v1155 = vadd.f32 %v1058, %v1154
  %v1156 = vpop.f32.mrb[0].mxu0
  %v1157 = vpop.f32.mrb[0].mxu0
  %v1158 = vadd.f32 %v1061, %v1157
  %v1159 = vpop.f32.mrb[0].mxu0
  %1160 = vmatprep.mubr.bf16.mxu0 %v427
  %1161 = vmatmul.mubr.bf16.gmra.mrb[0].mxu0 %v426
  %v1162 = vpop.f32.mrb[0].mxu0
  %v1163 = vadd.f32 %v1066, %v1162
  %v1164 = vpop.f32.mrb[0].mxu0
  %v1165 = vpop.f32.mrb[0].mxu0
  %v1166 = vadd.f32 %v1069, %v1165
  %v1167 = vpop.f32.mrb[0].mxu0
  %1168 = vmatprep.mubr.bf16.mxu0 %v435
  %1169 = vmatmul.mubr.bf16.gmra.mrb[0].mxu0 %v434
  %v1170 = vpop.f32.mrb[0].mxu0
  %v1171 = vadd.f32 %v1074, %v1170
  %v1172 = vpop.f32.mrb[0].mxu0
  %v1173 = vpop.f32.mrb[0].mxu0
  %v1174 = vadd.f32 %v1077, %v1173
  %v1175 = vpop.f32.mrb[0].mxu0
  %1176 = vmatprep.mubr.bf16.mxu0 %v443
  %1177 = vmatmul.mubr.bf16.gmra.mrb[0].mxu0 %v442
  %v1178 = vpop.f32.mrb[0].mxu0
  %v1179 = vadd.f32 %v1082, %v1178
  %v1180 = vpop.f32.mrb[0].mxu0
  %v1181 = vpop.f32.mrb[0].mxu0
  %v1182 = vadd.f32 %v1085, %v1181
  %v1183 = vpop.f32.mrb[0].mxu0
  %1184 = vmatprep.mubr.bf16.mxu0 %v451
  %1185 = vmatmul.mubr.bf16.gmra.mrb[0].mxu0 %v450
  %v1186 = vpop.f32.mrb[0].mxu0
  %v1187 = vadd.f32 %v1090, %v1186
  %v1188 = vpop.f32.mrb[0].mxu0
  %v1189 = vpop.f32.mrb[0].mxu0
  %v1190 = vadd.f32 %v1093, %v1189
  %v1191 = vpop.f32.mrb[0].mxu0
  %1192 = vmatprep.mubr.bf16.mxu0 %v459
  %1193 = vmatmul.mubr.bf16.gmra.mrb[0].mxu0 %v458
  %v1194 = vpop.f32.mrb[0].mxu0
  %v1195 = vadd.f32 %v1098, %v1194
  %v1196 = vpop.f32.mrb[0].mxu0
  %v1197 = vpop.f32.mrb[0].mxu0
  %v1198 = vadd.f32 %v1101, %v1197
  %v1199 = vpop.f32.mrb[0].mxu0
  %1200 = vmatprep.mubr.bf16.mxu0 %v467
  %1201 = vmatmul.mubr.bf16.gmra.mrb[0].mxu0 %v466
  %v1202 = vpop.f32.mrb[0].mxu0
  %v1203 = vadd.f32 %v1106, %v1202
  %v1204 = vpop.f32.mrb[0].mxu0
  %v1205 = vpop.f32.mrb[0].mxu0
  %v1206 = vadd.f32 %v1109, %v1205
  %v1207 = vpop.f32.mrb[0].mxu0
  %1208 = vdwg.mxu0
  %1209 = vmatprep.subr.bf16.mxu0 0
  %1210 = vmatpush1.bf16.msra.mxu0 %v838
  %1211 = vmatprep.subr.bf16.mxu0 0
  %1212 = vmatpush1.bf16.msra.mxu0 %v839
  %1213 = vmatprep.subr.bf16.mxu0 0
  %1214 = vmatpush1.bf16.msra.mxu0 %v840
  %1215 = vmatprep.subr.bf16.mxu0 0
  %1216 = vmatpush1.bf16.msra.mxu0 %v841
  %1217 = vmatprep.subr.bf16.mxu0 0
  %1218 = vmatpush1.bf16.msra.mxu0 %v842
  %1219 = vmatprep.subr.bf16.mxu0 0
  %1220 = vmatpush1.bf16.msra.mxu0 %v843
  %1221 = vmatprep.subr.bf16.mxu0 0
  %1222 = vmatpush1.bf16.msra.mxu0 %v844
  %1223 = vmatprep.subr.bf16.mxu0 0
  %1224 = vmatpush1.bf16.msra.mxu0 %v845
  %1225 = vmatprep.subr.bf16.mxu0 0
  %1226 = vmatpush1.bf16.msra.mxu0 %v846
  %1227 = vmatprep.subr.bf16.mxu0 0
  %1228 = vmatpush1.bf16.msra.mxu0 %v847
  %1229 = vmatprep.subr.bf16.mxu0 0
  %1230 = vmatpush1.bf16.msra.mxu0 %v848
  %1231 = vmatprep.subr.bf16.mxu0 0
  %1232 = vmatpush1.bf16.msra.mxu0 %v849
  %1233 = vmatprep.subr.bf16.mxu0 0
  %1234 = vmatpush1.bf16.msra.mxu0 %v850
  %1235 = vmatprep.subr.bf16.mxu0 0
  %1236 = vmatpush1.bf16.msra.mxu0 %v851
  %1237 = vmatprep.subr.bf16.mxu0 0
  %1238 = vmatpush1.bf16.msra.mxu0 %v852
  %1239 = vmatprep.subr.bf16.mxu0 0
  %1240 = vmatpush1.bf16.msra.mxu0 %v853
  %1241 = vmatprep.mubr.bf16.mxu0 %v413
  %1242 = vmatmul.mubr.bf16.gmra.mrb[0].mxu0 %v412
  %v1243 = vpop.f32.mrb[0].mxu0
  %v1244 = vadd.f32 %v1147, %v1243
  %v1245 = vpop.f32.mrb[0].mxu0
  %v1246 = vpop.f32.mrb[0].mxu0
  %v1247 = vadd.f32 %v1150, %v1246
  %v1248 = vpop.f32.mrb[0].mxu0
  %1249 = vmatprep.mubr.bf16.mxu0 %v421
  %1250 = vmatmul.mubr.bf16.gmra.mrb[0].mxu0 %v420
  %v1251 = vpop.f32.mrb[0].mxu0
  %v1252 = vadd.f32 %v1155, %v1251
  %v1253 = vpop.f32.mrb[0].mxu0
  %v1254 = vpop.f32.mrb[0].mxu0
  %v1255 = vadd.f32 %v1158, %v1254
  %v1256 = vpop.f32.mrb[0].mxu0
  %1257 = vmatprep.mubr.bf16.mxu0 %v429
  %1258 = vmatmul.mubr.bf16.gmra.mrb[0].mxu0 %v428
  %v1259 = vpop.f32.mrb[0].mxu0
  %v1260 = vadd.f32 %v1163, %v1259
  %v1261 = vpop.f32.mrb[0].mxu0
  %v1262 = vpop.f32.mrb[0].mxu0
  %v1263 = vadd.f32 %v1166, %v1262
  %v1264 = vpop.f32.mrb[0].mxu0
  %1265 = vmatprep.mubr.bf16.mxu0 %v437
  %1266 = vmatmul.mubr.bf16.gmra.mrb[0].mxu0 %v436
  %v1267 = vpop.f32.mrb[0].mxu0
  %v1268 = vadd.f32 %v1171, %v1267
  %v1269 = vpop.f32.mrb[0].mxu0
  %v1270 = vpop.f32.mrb[0].mxu0
  %v1271 = vadd.f32 %v1174, %v1270
  %v1272 = vpop.f32.mrb[0].mxu0
  %1273 = vmatprep.mubr.bf16.mxu0 %v445
  %1274 = vmatmul.mubr.bf16.gmra.mrb[0].mxu0 %v444
  %v1275 = vpop.f32.mrb[0].mxu0
  %v1276 = vadd.f32 %v1179, %v1275
  %v1277 = vpop.f32.mrb[0].mxu0
  %v1278 = vpop.f32.mrb[0].mxu0
  %v1279 = vadd.f32 %v1182, %v1278
  %v1280 = vpop.f32.mrb[0].mxu0
  %1281 = vmatprep.mubr.bf16.mxu0 %v453
  %1282 = vmatmul.mubr.bf16.gmra.mrb[0].mxu0 %v452
  %v1283 = vpop.f32.mrb[0].mxu0
  %v1284 = vadd.f32 %v1187, %v1283
  %v1285 = vpop.f32.mrb[0].mxu0
  %v1286 = vpop.f32.mrb[0].mxu0
  %v1287 = vadd.f32 %v1190, %v1286
  %v1288 = vpop.f32.mrb[0].mxu0
  %1289 = vmatprep.mubr.bf16.mxu0 %v461
  %1290 = vmatmul.mubr.bf16.gmra.mrb[0].mxu0 %v460
  %v1291 = vpop.f32.mrb[0].mxu0
  %v1292 = vadd.f32 %v1195, %v1291
  %v1293 = vpop.f32.mrb[0].mxu0
  %v1294 = vpop.f32.mrb[0].mxu0
  %v1295 = vadd.f32 %v1198, %v1294
  %v1296 = vpop.f32.mrb[0].mxu0
  %1297 = vmatprep.mubr.bf16.mxu0 %v469
  %1298 = vmatmul.mubr.bf16.gmra.mrb[0].mxu0 %v468
  %v1299 = vpop.f32.mrb[0].mxu0
  %v1300 = vadd.f32 %v1203, %v1299
  %v1301 = vpop.f32.mrb[0].mxu0
  %v1302 = vpop.f32.mrb[0].mxu0
  %v1303 = vadd.f32 %v1206, %v1302
  %v1304 = vpop.f32.mrb[0].mxu0
  %1305 = vdwg.mxu0
  %v1306 = vmax.f32 %v1244, 0.0
  %v1307 = vmax.f32 %v1247, 0.0
  %v1308 = vmax.f32 %v1252, 0.0
  %v1309 = vmax.f32 %v1255, 0.0
  %v1310 = vmax.f32 %v1260, 0.0
  %v1311 = vmax.f32 %v1263, 0.0
  %v1312 = vmax.f32 %v1268, 0.0
  %v1313 = vmax.f32 %v1271, 0.0
  %v1314 = vmax.f32 %v1276, 0.0
  %v1315 = vmax.f32 %v1279, 0.0
  %v1316 = vmax.f32 %v1284, 0.0
  %v1317 = vmax.f32 %v1287, 0.0
  %v1318 = vmax.f32 %v1292, 0.0
  %v1319 = vmax.f32 %v1295, 0.0
  %v1320 = vmax.f32 %v1300, 0.0
  %v1321 = vmax.f32 %v1303, 0.0
  %v1322 = vpack.c.bf16 %v1307, %v1306
  %v1323 = vpack.c.bf16 %v1309, %v1308
  %v1324 = vpack.c.bf16 %v1311, %v1310
  %v1325 = vpack.c.bf16 %v1313, %v1312
  %v1326 = vpack.c.bf16 %v1315, %v1314
  %v1327 = vpack.c.bf16 %v1317, %v1316
  %v1328 = vpack.c.bf16 %v1319, %v1318
  %v1329 = vpack.c.bf16 %v1321, %v1320
  %v1338 = vunpack.c.l.b16 %v1322
  %v1339 = vunpack.c.h.b16 %v1322
  %v1340 = vunpack.c.l.b16 %v1323
  %v1341 = vunpack.c.h.b16 %v1323
  %v1342 = vunpack.c.l.b16 %v1324
  %v1343 = vunpack.c.h.b16 %v1324
  %v1344 = vunpack.c.l.b16 %v1325
  %v1345 = vunpack.c.h.b16 %v1325
  %v1346 = vunpack.c.l.b16 %v1326
  %v1347 = vunpack.c.h.b16 %v1326
  %v1348 = vunpack.c.l.b16 %v1327
  %v1349 = vunpack.c.h.b16 %v1327
  %v1350 = vunpack.c.l.b16 %v1328
  %v1351 = vunpack.c.h.b16 %v1328
  %v1352 = vunpack.c.l.b16 %v1329
  %v1353 = vunpack.c.h.b16 %v1329
  %v1354 = vpack.c.b16 %v1338, %v1338
  %v1355 = vpack.c.b16 %v1339, %v1339
  %v1356 = vpack.c.b16 %v1340, %v1340
  %v1357 = vpack.c.b16 %v1341, %v1341
  %v1358 = vpack.c.b16 %v1342, %v1342
  %v1359 = vpack.c.b16 %v1343, %v1343
  %v1360 = vpack.c.b16 %v1344, %v1344
  %v1361 = vpack.c.b16 %v1345, %v1345
  %v1362 = vpack.c.b16 %v1346, %v1346
  %v1363 = vpack.c.b16 %v1347, %v1347
  %v1364 = vpack.c.b16 %v1348, %v1348
  %v1365 = vpack.c.b16 %v1349, %v1349
  %v1366 = vpack.c.b16 %v1350, %v1350
  %v1367 = vpack.c.b16 %v1351, %v1351
  %v1368 = vpack.c.b16 %v1352, %v1352
  %v1369 = vpack.c.b16 %v1353, %v1353
  %vm1386 = vcmask 519168
  %1387 = vst.msk [vmem:[%s3] sm:$0xf] %vm1386, %v1354
  %1388 = vst.msk [vmem:[%s3 + $0x4] sm:$0xf] %vm1386, %v1355
  %1389 = vst.msk [vmem:[%s3 + $0x8] sm:$0xf] %vm1386, %v1356
  %1390 = vst.msk [vmem:[%s3 + $0xc] sm:$0xf] %vm1386, %v1357
  %1391 = vst.msk [vmem:[%s3 + $0x10] sm:$0xf] %vm1386, %v1358
  %1392 = vst.msk [vmem:[%s3 + $0x14] sm:$0xf] %vm1386, %v1359
  %1393 = vst.msk [vmem:[%s3 + $0x18] sm:$0xf] %vm1386, %v1360
  %1394 = vst.msk [vmem:[%s3 + $0x1c] sm:$0xf] %vm1386, %v1361
  %1395 = vst.msk [vmem:[%s3 + $0x20] sm:$0xf] %vm1386, %v1362
  %1396 = vst.msk [vmem:[%s3 + $0x24] sm:$0xf] %vm1386, %v1363
  %1397 = vst.msk [vmem:[%s3 + $0x28] sm:$0xf] %vm1386, %v1364
  %1398 = vst.msk [vmem:[%s3 + $0x2c] sm:$0xf] %vm1386, %v1365
  %1399 = vst.msk [vmem:[%s3 + $0x30] sm:$0xf] %vm1386, %v1366
  %1400 = vst.msk [vmem:[%s3 + $0x34] sm:$0xf] %vm1386, %v1367
  %1401 = vst.msk [vmem:[%s3 + $0x38] sm:$0xf] %vm1386, %v1368
  %1402 = vst.msk [vmem:[%s3 + $0x3c] sm:$0xf] %vm1386, %v1369
  // Predicated region
  $region14: #{fsq_vae_forward.11} parent=0 // pred_check
    _
  $region15: #{fsq_vae_forward.11} parent=0 // pred_check_branch
    %1404 = sbr.rel (0) target = $region17
  $region16: #{fsq_vae_forward.11} parent=0 // pred_region
    _
  $region17: #{fsq_vae_forward.11} parent=0 // pred_fallthru
    _
  // Predicated region
  $region18: #{fsq_vae_forward.11} parent=0 // pred_check
    _
  $region19: #{fsq_vae_forward.11} parent=0 // pred_check_branch
    %1406 = sbr.rel (0) target = $region21
  $region20: #{fsq_vae_forward.11} parent=0 // pred_region
    _
  $region21: #{fsq_vae_forward.11} parent=0 // pred_fallthru
    _

// kernel: fsq_vae_forward.12
$region0: #{fsq_vae_forward.12}
  #allocation0 [shape = 'u32[]', space=smem, size = 0x4, offset = 0x4, fixed_abs, tag = 'smem constant byte address 0x4 - core index']
  #allocation1 [shape = 'u32[144,128]{1,0:T(1,128)}', space=vmem, size = 0x12000, scoped, tag = 'internal scratch']
  %s0 = inlined_call_operand.vmem [shape: bf16[32,1024], index: 0, kind: input, shape index: {}]
  %s1 = inlined_call_operand.vmem [shape: bf16[1024,64], index: 1, kind: input, shape index: {}]
  %s2 = inlined_call_operand.vmem [shape: f32[1,64], index: 2, kind: input, shape index: {}]
  %s3 = inlined_call_operand.vmem [shape: bf16[32,64], index: 3, kind: output, shape index: {}]
  %s4 = sld [smem:[#allocation0]]
  $region22: #{fsq_vae_forward.12} parent=0
    _
  %s6 = ssub.s32 1, %s4
  %s7 = scalar_select 0, %s6, %s4
  // Predicated region
  $region2: #{fsq_vae_forward.12} parent=0 // pred_check
    _
  $region3: #{fsq_vae_forward.12} parent=0 // pred_check_branch
    %9 = sbr.rel (0) target = $region5
  $region4: #{fsq_vae_forward.12} parent=0 // pred_region
    _
  $region5: #{fsq_vae_forward.12} parent=0 // pred_fallthru
    _
  // Predicated region
  $region6: #{fsq_vae_forward.12} parent=0 // pred_check
    _
  $region7: #{fsq_vae_forward.12} parent=0 // pred_check_branch
    %11 = sbr.rel (0) target = $region9
  $region8: #{fsq_vae_forward.12} parent=0 // pred_region
    _
  $region9: #{fsq_vae_forward.12} parent=0 // pred_fallthru
    _
  // Predicated region
  $region10: #{fsq_vae_forward.12} parent=0 // pred_check
    _
  $region11: #{fsq_vae_forward.12} parent=0 // pred_check_branch
    %13 = sbr.rel (0) target = $region13
  $region12: #{fsq_vae_forward.12} parent=0 // pred_region
    _
  $region13: #{fsq_vae_forward.12} parent=0 // pred_fallthru
    _
  %v15 = vld [vmem:[%s0] sm:$0xff]
  %v16 = vld [vmem:[%s0 + $0x8] sm:$0xff]
  %v17 = vld [vmem:[%s0 + $0x10] sm:$0xff]
  %v18 = vld [vmem:[%s0 + $0x18] sm:$0xff]
  %v19 = vld [vmem:[%s0 + $0x20] sm:$0xff]
  %v20 = vld [vmem:[%s0 + $0x28] sm:$0xff]
  %v21 = vld [vmem:[%s0 + $0x30] sm:$0xff]
  %v22 = vld [vmem:[%s0 + $0x38] sm:$0xff]
  %v23 = vld [vmem:[%s0 + $0x40] sm:$0xff]
  %v24 = vld [vmem:[%s0 + $0x48] sm:$0xff]
  %v25 = vld [vmem:[%s0 + $0x50] sm:$0xff]
  %v26 = vld [vmem:[%s0 + $0x58] sm:$0xff]
  %v27 = vld [vmem:[%s0 + $0x60] sm:$0xff]
  %v28 = vld [vmem:[%s0 + $0x68] sm:$0xff]
  %v29 = vld [vmem:[%s0 + $0x70] sm:$0xff]
  %v30 = vld [vmem:[%s0 + $0x78] sm:$0xff]
  %v31 = vld [vmem:[%s1] sm:$0xf]
  %v32 = vld [vmem:[%s1 + $0x4] sm:$0xf]
  %v33 = vld [vmem:[%s1 + $0x8] sm:$0xf]
  %v34 = vld [vmem:[%s1 + $0xc] sm:$0xf]
  %v35 = vld [vmem:[%s1 + $0x10] sm:$0xf]
  %v36 = vld [vmem:[%s1 + $0x14] sm:$0xf]
  %v37 = vld [vmem:[%s1 + $0x18] sm:$0xf]
  %v38 = vld [vmem:[%s1 + $0x1c] sm:$0xf]
  %v39 = vld [vmem:[%s1 + $0x20] sm:$0xf]
  %v40 = vld [vmem:[%s1 + $0x24] sm:$0xf]
  %v41 = vld [vmem:[%s1 + $0x28] sm:$0xf]
  %v42 = vld [vmem:[%s1 + $0x2c] sm:$0xf]
  %v43 = vld [vmem:[%s1 + $0x30] sm:$0xf]
  %v44 = vld [vmem:[%s1 + $0x34] sm:$0xf]
  %v45 = vld [vmem:[%s1 + $0x38] sm:$0xf]
  %v46 = vld [vmem:[%s1 + $0x3c] sm:$0xf]
  %v47 = vld [vmem:[%s1 + $0x40] sm:$0xf]
  %v48 = vld [vmem:[%s1 + $0x44] sm:$0xf]
  %v49 = vld [vmem:[%s1 + $0x48] sm:$0xf]
  %v50 = vld [vmem:[%s1 + $0x4c] sm:$0xf]
  %v51 = vld [vmem:[%s1 + $0x50] sm:$0xf]
  %v52 = vld [vmem:[%s1 + $0x54] sm:$0xf]
  %v53 = vld [vmem:[%s1 + $0x58] sm:$0xf]
  %v54 = vld [vmem:[%s1 + $0x5c] sm:$0xf]
  %v55 = vld [vmem:[%s1 + $0x60] sm:$0xf]
  %v56 = vld [vmem:[%s1 + $0x64] sm:$0xf]
  %v57 = vld [vmem:[%s1 + $0x68] sm:$0xf]
  %v58 = vld [vmem:[%s1 + $0x6c] sm:$0xf]
  %v59 = vld [vmem:[%s1 + $0x70] sm:$0xf]
  %v60 = vld [vmem:[%s1 + $0x74] sm:$0xf]
  %v61 = vld [vmem:[%s1 + $0x78] sm:$0xf]
  %v62 = vld [vmem:[%s1 + $0x7c] sm:$0xf]
  %v63 = vld [vmem:[%s1 + $0x80] sm:$0xf]
  %v64 = vld [vmem:[%s1 + $0x84] sm:$0xf]
  %v65 = vld [vmem:[%s1 + $0x88] sm:$0xf]
  %v66 = vld [vmem:[%s1 + $0x8c] sm:$0xf]
  %v67 = vld [vmem:[%s1 + $0x90] sm:$0xf]
  %v68 = vld [vmem:[%s1 + $0x94] sm:$0xf]
  %v69 = vld [vmem:[%s1 + $0x98] sm:$0xf]
  %v70 = vld [vmem:[%s1 + $0x9c] sm:$0xf]
  %v71 = vld [vmem:[%s1 + $0xa0] sm:$0xf]
  %v72 = vld [vmem:[%s1 + $0xa4] sm:$0xf]
  %v73 = vld [vmem:[%s1 + $0xa8] sm:$0xf]
  %v74 = vld [vmem:[%s1 + $0xac] sm:$0xf]
  %v75 = vld [vmem:[%s1 + $0xb0] sm:$0xf]
  %v76 = vld [vmem:[%s1 + $0xb4] sm:$0xf]
  %v77 = vld [vmem:[%s1 + $0xb8] sm:$0xf]
  %v78 = vld [vmem:[%s1 + $0xbc] sm:$0xf]
  %v79 = vld [vmem:[%s1 + $0xc0] sm:$0xf]
  %v80 = vld [vmem:[%s1 + $0xc4] sm:$0xf]
  %v81 = vld [vmem:[%s1 + $0xc8] sm:$0xf]
  %v82 = vld [vmem:[%s1 + $0xcc] sm:$0xf]
  %v83 = vld [vmem:[%s1 + $0xd0] sm:$0xf]
  %v84 = vld [vmem:[%s1 + $0xd4] sm:$0xf]
  %v85 = vld [vmem:[%s1 + $0xd8] sm:$0xf]
  %v86 = vld [vmem:[%s1 + $0xdc] sm:$0xf]
  %v87 = vld [vmem:[%s1 + $0xe0] sm:$0xf]
  %v88 = vld [vmem:[%s1 + $0xe4] sm:$0xf]
  %v89 = vld [vmem:[%s1 + $0xe8] sm:$0xf]
  %v90 = vld [vmem:[%s1 + $0xec] sm:$0xf]
  %v91 = vld [vmem:[%s1 + $0xf0] sm:$0xf]
  %v92 = vld [vmem:[%s1 + $0xf4] sm:$0xf]
  %v93 = vld [vmem:[%s1 + $0xf8] sm:$0xf]
  %v94 = vld [vmem:[%s1 + $0xfc] sm:$0xf]
  %v95 = vld [vmem:[%s1 + $0x100] sm:$0xf]
  %v96 = vld [vmem:[%s1 + $0x104] sm:$0xf]
  %v97 = vld [vmem:[%s1 + $0x108] sm:$0xf]
  %v98 = vld [vmem:[%s1 + $0x10c] sm:$0xf]
  %v99 = vld [vmem:[%s1 + $0x110] sm:$0xf]
  %v100 = vld [vmem:[%s1 + $0x114] sm:$0xf]
  %v101 = vld [vmem:[%s1 + $0x118] sm:$0xf]
  %v102 = vld [vmem:[%s1 + $0x11c] sm:$0xf]
  %v103 = vld [vmem:[%s1 + $0x120] sm:$0xf]
  %v104 = vld [vmem:[%s1 + $0x124] sm:$0xf]
  %v105 = vld [vmem:[%s1 + $0x128] sm:$0xf]
  %v106 = vld [vmem:[%s1 + $0x12c] sm:$0xf]
  %v107 = vld [vmem:[%s1 + $0x130] sm:$0xf]
  %v108 = vld [vmem:[%s1 + $0x134] sm:$0xf]
  %v109 = vld [vmem:[%s1 + $0x138] sm:$0xf]
  %v110 = vld [vmem:[%s1 + $0x13c] sm:$0xf]
  %v111 = vld [vmem:[%s1 + $0x140] sm:$0xf]
  %v112 = vld [vmem:[%s1 + $0x144] sm:$0xf]
  %v113 = vld [vmem:[%s1 + $0x148] sm:$0xf]
  %v114 = vld [vmem:[%s1 + $0x14c] sm:$0xf]
  %v115 = vld [vmem:[%s1 + $0x150] sm:$0xf]
  %v116 = vld [vmem:[%s1 + $0x154] sm:$0xf]
  %v117 = vld [vmem:[%s1 + $0x158] sm:$0xf]
  %v118 = vld [vmem:[%s1 + $0x15c] sm:$0xf]
  %v119 = vld [vmem:[%s1 + $0x160] sm:$0xf]
  %v120 = vld [vmem:[%s1 + $0x164] sm:$0xf]
  %v121 = vld [vmem:[%s1 + $0x168] sm:$0xf]
  %v122 = vld [vmem:[%s1 + $0x16c] sm:$0xf]
  %v123 = vld [vmem:[%s1 + $0x170] sm:$0xf]
  %v124 = vld [vmem:[%s1 + $0x174] sm:$0xf]
  %v125 = vld [vmem:[%s1 + $0x178] sm:$0xf]
  %v126 = vld [vmem:[%s1 + $0x17c] sm:$0xf]
  %v127 = vld [vmem:[%s1 + $0x180] sm:$0xf]
  %v128 = vld [vmem:[%s1 + $0x184] sm:$0xf]
  %v129 = vld [vmem:[%s1 + $0x188] sm:$0xf]
  %v130 = vld [vmem:[%s1 + $0x18c] sm:$0xf]
  %v131 = vld [vmem:[%s1 + $0x190] sm:$0xf]
  %v132 = vld [vmem:[%s1 + $0x194] sm:$0xf]
  %v133 = vld [vmem:[%s1 + $0x198] sm:$0xf]
  %v134 = vld [vmem:[%s1 + $0x19c] sm:$0xf]
  %v135 = vld [vmem:[%s1 + $0x1a0] sm:$0xf]
  %v136 = vld [vmem:[%s1 + $0x1a4] sm:$0xf]
  %v137 = vld [vmem:[%s1 + $0x1a8] sm:$0xf]
  %v138 = vld [vmem:[%s1 + $0x1ac] sm:$0xf]
  %v139 = vld [vmem:[%s1 + $0x1b0] sm:$0xf]
  %v140 = vld [vmem:[%s1 + $0x1b4] sm:$0xf]
  %v141 = vld [vmem:[%s1 + $0x1b8] sm:$0xf]
  %v142 = vld [vmem:[%s1 + $0x1bc] sm:$0xf]
  %v143 = vld [vmem:[%s1 + $0x1c0] sm:$0xf]
  %v144 = vld [vmem:[%s1 + $0x1c4] sm:$0xf]
  %v145 = vld [vmem:[%s1 + $0x1c8] sm:$0xf]
  %v146 = vld [vmem:[%s1 + $0x1cc] sm:$0xf]
  %v147 = vld [vmem:[%s1 + $0x1d0] sm:$0xf]
  %v148 = vld [vmem:[%s1 + $0x1d4] sm:$0xf]
  %v149 = vld [vmem:[%s1 + $0x1d8] sm:$0xf]
  %v150 = vld [vmem:[%s1 + $0x1dc] sm:$0xf]
  %v151 = vld [vmem:[%s1 + $0x1e0] sm:$0xf]
  %v152 = vld [vmem:[%s1 + $0x1e4] sm:$0xf]
  %v153 = vld [vmem:[%s1 + $0x1e8] sm:$0xf]
  %v154 = vld [vmem:[%s1 + $0x1ec] sm:$0xf]
  %v155 = vld [vmem:[%s1 + $0x1f0] sm:$0xf]
  %v156 = vld [vmem:[%s1 + $0x1f4] sm:$0xf]
  %v157 = vld [vmem:[%s1 + $0x1f8] sm:$0xf]
  %v158 = vld [vmem:[%s1 + $0x1fc] sm:$0xf]
  %v159 = vld [vmem:[%s2] sm:$0x1]
  %v161 = vlaneseq
  %v162 = vshrl.u32 %v161, 7
  %v163 = vsub.s32 0, %v162
  %v164 = vrot.slane %v159, %v163
  %v182 = vunpack.c.l.b16 %v15
  %v183 = vunpack.c.h.b16 %v15
  %v184 = vunpack.c.l.b16 %v16
  %v185 = vunpack.c.h.b16 %v16
  %v186 = vunpack.c.l.b16 %v17
  %v187 = vunpack.c.h.b16 %v17
  %v188 = vunpack.c.l.b16 %v18
  %v189 = vunpack.c.h.b16 %v18
  %v190 = vunpack.c.l.b16 %v19
  %v191 = vunpack.c.h.b16 %v19
  %v192 = vunpack.c.l.b16 %v20
  %v193 = vunpack.c.h.b16 %v20
  %v194 = vunpack.c.l.b16 %v21
  %v195 = vunpack.c.h.b16 %v21
  %v196 = vunpack.c.l.b16 %v22
  %v197 = vunpack.c.h.b16 %v22
  %v198 = vunpack.c.l.b16 %v23
  %v199 = vunpack.c.h.b16 %v23
  %v200 = vunpack.c.l.b16 %v24
  %v201 = vunpack.c.h.b16 %v24
  %v202 = vunpack.c.l.b16 %v25
  %v203 = vunpack.c.h.b16 %v25
  %v204 = vunpack.c.l.b16 %v26
  %v205 = vunpack.c.h.b16 %v26
  %v206 = vunpack.c.l.b16 %v27
  %v207 = vunpack.c.h.b16 %v27
  %v208 = vunpack.c.l.b16 %v28
  %v209 = vunpack.c.h.b16 %v28
  %v210 = vunpack.c.l.b16 %v29
  %v211 = vunpack.c.h.b16 %v29
  %v212 = vunpack.c.l.b16 %v30
  %v213 = vunpack.c.h.b16 %v30
  %v214 = vpack.c.b16 %v190, %v182
  %v215 = vpack.c.b16 %v191, %v183
  %v216 = vpack.c.b16 %v192, %v184
  %v217 = vpack.c.b16 %v193, %v185
  %v218 = vpack.c.b16 %v194, %v186
  %v219 = vpack.c.b16 %v195, %v187
  %v220 = vpack.c.b16 %v196, %v188
  %v221 = vpack.c.b16 %v197, %v189
  %v222 = vpack.c.b16 %v206, %v198
  %v223 = vpack.c.b16 %v207, %v199
  %v224 = vpack.c.b16 %v208, %v200
  %v225 = vpack.c.b16 %v209, %v201
  %v226 = vpack.c.b16 %v210, %v202
  %v227 = vpack.c.b16 %v211, %v203
  %v228 = vpack.c.b16 %v212, %v204
  %v229 = vpack.c.b16 %v213, %v205
  %v374 = vunpack.c.l.b16 %v31
  %v375 = vunpack.c.l.b16 %v32
  %v376 = vunpack.c.l.b16 %v33
  %v377 = vunpack.c.l.b16 %v34
  %v378 = vunpack.c.l.b16 %v35
  %v379 = vunpack.c.l.b16 %v36
  %v380 = vunpack.c.l.b16 %v37
  %v381 = vunpack.c.l.b16 %v38
  %v382 = vunpack.c.l.b16 %v39
  %v383 = vunpack.c.l.b16 %v40
  %v384 = vunpack.c.l.b16 %v41
  %v385 = vunpack.c.l.b16 %v42
  %v386 = vunpack.c.l.b16 %v43
  %v387 = vunpack.c.l.b16 %v44
  %v388 = vunpack.c.l.b16 %v45
  %v389 = vunpack.c.l.b16 %v46
  %v390 = vunpack.c.l.b16 %v47
  %v391 = vunpack.c.l.b16 %v48
  %v392 = vunpack.c.l.b16 %v49
  %v393 = vunpack.c.l.b16 %v50
  %v394 = vunpack.c.l.b16 %v51
  %v395 = vunpack.c.l.b16 %v52
  %v396 = vunpack.c.l.b16 %v53
  %v397 = vunpack.c.l.b16 %v54
  %v398 = vunpack.c.l.b16 %v55
  %v399 = vunpack.c.l.b16 %v56
  %v400 = vunpack.c.l.b16 %v57
  %v401 = vunpack.c.l.b16 %v58
  %v402 = vunpack.c.l.b16 %v59
  %v403 = vunpack.c.l.b16 %v60
  %v404 = vunpack.c.l.b16 %v61
  %v405 = vunpack.c.l.b16 %v62
  %v406 = vunpack.c.l.b16 %v63
  %v407 = vunpack.c.l.b16 %v64
  %v408 = vunpack.c.l.b16 %v65
  %v409 = vunpack.c.l.b16 %v66
  %v410 = vunpack.c.l.b16 %v67
  %v411 = vunpack.c.l.b16 %v68
  %v412 = vunpack.c.l.b16 %v69
  %v413 = vunpack.c.l.b16 %v70
  %v414 = vunpack.c.l.b16 %v71
  %v415 = vunpack.c.l.b16 %v72
  %v416 = vunpack.c.l.b16 %v73
  %v417 = vunpack.c.l.b16 %v74
  %v418 = vunpack.c.l.b16 %v75
  %v419 = vunpack.c.l.b16 %v76
  %v420 = vunpack.c.l.b16 %v77
  %v421 = vunpack.c.l.b16 %v78
  %v422 = vunpack.c.l.b16 %v79
  %v423 = vunpack.c.l.b16 %v80
  %v424 = vunpack.c.l.b16 %v81
  %v425 = vunpack.c.l.b16 %v82
  %v426 = vunpack.c.l.b16 %v83
  %v427 = vunpack.c.l.b16 %v84
  %v428 = vunpack.c.l.b16 %v85
  %v429 = vunpack.c.l.b16 %v86
  %v430 = vunpack.c.l.b16 %v87
  %v431 = vunpack.c.l.b16 %v88
  %v432 = vunpack.c.l.b16 %v89
  %v433 = vunpack.c.l.b16 %v90
  %v434 = vunpack.c.l.b16 %v91
  %v435 = vunpack.c.l.b16 %v92
  %v436 = vunpack.c.l.b16 %v93
  %v437 = vunpack.c.l.b16 %v94
  %v438 = vunpack.c.l.b16 %v95
  %v439 = vunpack.c.l.b16 %v96
  %v440 = vunpack.c.l.b16 %v97
  %v441 = vunpack.c.l.b16 %v98
  %v442 = vunpack.c.l.b16 %v99
  %v443 = vunpack.c.l.b16 %v100
  %v444 = vunpack.c.l.b16 %v101
  %v445 = vunpack.c.l.b16 %v102
  %v446 = vunpack.c.l.b16 %v103
  %v447 = vunpack.c.l.b16 %v104
  %v448 = vunpack.c.l.b16 %v105
  %v449 = vunpack.c.l.b16 %v106
  %v450 = vunpack.c.l.b16 %v107
  %v451 = vunpack.c.l.b16 %v108
  %v452 = vunpack.c.l.b16 %v109
  %v453 = vunpack.c.l.b16 %v110
  %v454 = vunpack.c.l.b16 %v111
  %v455 = vunpack.c.l.b16 %v112
  %v456 = vunpack.c.l.b16 %v113
  %v457 = vunpack.c.l.b16 %v114
  %v458 = vunpack.c.l.b16 %v115
  %v459 = vunpack.c.l.b16 %v116
  %v460 = vunpack.c.l.b16 %v117
  %v461 = vunpack.c.l.b16 %v118
  %v462 = vunpack.c.l.b16 %v119
  %v463 = vunpack.c.l.b16 %v120
  %v464 = vunpack.c.l.b16 %v121
  %v465 = vunpack.c.l.b16 %v122
  %v466 = vunpack.c.l.b16 %v123
  %v467 = vunpack.c.l.b16 %v124
  %v468 = vunpack.c.l.b16 %v125
  %v469 = vunpack.c.l.b16 %v126
  %v470 = vunpack.c.l.b16 %v127
  %v471 = vunpack.c.l.b16 %v128
  %v472 = vunpack.c.l.b16 %v129
  %v473 = vunpack.c.l.b16 %v130
  %v474 = vunpack.c.l.b16 %v131
  %v475 = vunpack.c.l.b16 %v132
  %v476 = vunpack.c.l.b16 %v133
  %v477 = vunpack.c.l.b16 %v134
  %v478 = vunpack.c.l.b16 %v135
  %v479 = vunpack.c.l.b16 %v136
  %v480 = vunpack.c.l.b16 %v137
  %v481 = vunpack.c.l.b16 %v138
  %v482 = vunpack.c.l.b16 %v139
  %v483 = vunpack.c.l.b16 %v140
  %v484 = vunpack.c.l.b16 %v141
  %v485 = vunpack.c.l.b16 %v142
  %v486 = vunpack.c.l.b16 %v143
  %v487 = vunpack.c.l.b16 %v144
  %v488 = vunpack.c.l.b16 %v145
  %v489 = vunpack.c.l.b16 %v146
  %v490 = vunpack.c.l.b16 %v147
  %v491 = vunpack.c.l.b16 %v148
  %v492 = vunpack.c.l.b16 %v149
  %v493 = vunpack.c.l.b16 %v150
  %v494 = vunpack.c.l.b16 %v151
  %v495 = vunpack.c.l.b16 %v152
  %v496 = vunpack.c.l.b16 %v153
  %v497 = vunpack.c.l.b16 %v154
  %v498 = vunpack.c.l.b16 %v155
  %v499 = vunpack.c.l.b16 %v156
  %v500 = vunpack.c.l.b16 %v157
  %v501 = vunpack.c.l.b16 %v158
  %v502 = vpack.c.b16 %v375, %v374
  %v503 = vpack.c.b16 %v377, %v376
  %v504 = vpack.c.b16 %v379, %v378
  %v505 = vpack.c.b16 %v381, %v380
  %v506 = vpack.c.b16 %v383, %v382
  %v507 = vpack.c.b16 %v385, %v384
  %v508 = vpack.c.b16 %v387, %v386
  %v509 = vpack.c.b16 %v389, %v388
  %v510 = vpack.c.b16 %v391, %v390
  %v511 = vpack.c.b16 %v393, %v392
  %v512 = vpack.c.b16 %v395, %v394
  %v513 = vpack.c.b16 %v397, %v396
  %v514 = vpack.c.b16 %v399, %v398
  %v515 = vpack.c.b16 %v401, %v400
  %v516 = vpack.c.b16 %v403, %v402
  %v517 = vpack.c.b16 %v405, %v404
  %v518 = vpack.c.b16 %v407, %v406
  %v519 = vpack.c.b16 %v409, %v408
  %v520 = vpack.c.b16 %v411, %v410
  %v521 = vpack.c.b16 %v413, %v412
  %v522 = vpack.c.b16 %v415, %v414
  %v523 = vpack.c.b16 %v417, %v416
  %v524 = vpack.c.b16 %v419, %v418
  %v525 = vpack.c.b16 %v421, %v420
  %v526 = vpack.c.b16 %v423, %v422
  %v527 = vpack.c.b16 %v425, %v424
  %v528 = vpack.c.b16 %v427, %v426
  %v529 = vpack.c.b16 %v429, %v428
  %v530 = vpack.c.b16 %v431, %v430
  %v531 = vpack.c.b16 %v433, %v432
  %v532 = vpack.c.b16 %v435, %v434
  %v533 = vpack.c.b16 %v437, %v436
  %v534 = vpack.c.b16 %v439, %v438
  %v535 = vpack.c.b16 %v441, %v440
  %v536 = vpack.c.b16 %v443, %v442
  %v537 = vpack.c.b16 %v445, %v444
  %v538 = vpack.c.b16 %v447, %v446
  %v539 = vpack.c.b16 %v449, %v448
  %v540 = vpack.c.b16 %v451, %v450
  %v541 = vpack.c.b16 %v453, %v452
  %v542 = vpack.c.b16 %v455, %v454
  %v543 = vpack.c.b16 %v457, %v456
  %v544 = vpack.c.b16 %v459, %v458
  %v545 = vpack.c.b16 %v461, %v460
  %v546 = vpack.c.b16 %v463, %v462
  %v547 = vpack.c.b16 %v465, %v464
  %v548 = vpack.c.b16 %v467, %v466
  %v549 = vpack.c.b16 %v469, %v468
  %v550 = vpack.c.b16 %v471, %v470
  %v551 = vpack.c.b16 %v473, %v472
  %v552 = vpack.c.b16 %v475, %v474
  %v553 = vpack.c.b16 %v477, %v476
  %v554 = vpack.c.b16 %v479, %v478
  %v555 = vpack.c.b16 %v481, %v480
  %v556 = vpack.c.b16 %v483, %v482
  %v557 = vpack.c.b16 %v485, %v484
  %v558 = vpack.c.b16 %v487, %v486
  %v559 = vpack.c.b16 %v489, %v488
  %v560 = vpack.c.b16 %v491, %v490
  %v561 = vpack.c.b16 %v493, %v492
  %v562 = vpack.c.b16 %v495, %v494
  %v563 = vpack.c.b16 %v497, %v496
  %v564 = vpack.c.b16 %v499, %v498
  %v565 = vpack.c.b16 %v501, %v500
  %630 = vmatprep.subr.bf16.mxu0 0
  %631 = vmatpush1.bf16.msra.mxu0 %v502
  %632 = vmatprep.subr.bf16.mxu0 0
  %633 = vmatpush1.bf16.msra.mxu0 %v503
  %634 = vmatprep.subr.bf16.mxu0 0
  %635 = vmatpush1.bf16.msra.mxu0 %v504
  %636 = vmatprep.subr.bf16.mxu0 0
  %637 = vmatpush1.bf16.msra.mxu0 %v505
  %638 = vmatprep.subr.bf16.mxu0 0
  %639 = vmatpush1.bf16.msra.mxu0 %v506
  %640 = vmatprep.subr.bf16.mxu0 0
  %641 = vmatpush1.bf16.msra.mxu0 %v507
  %642 = vmatprep.subr.bf16.mxu0 0
  %643 = vmatpush1.bf16.msra.mxu0 %v508
  %644 = vmatprep.subr.bf16.mxu0 0
  %645 = vmatpush1.bf16.msra.mxu0 %v509
  %646 = vmatprep.subr.bf16.mxu0 0
  %647 = vmatpush1.bf16.msra.mxu0 %v510
  %648 = vmatprep.subr.bf16.mxu0 0
  %649 = vmatpush1.bf16.msra.mxu0 %v511
  %650 = vmatprep.subr.bf16.mxu0 0
  %651 = vmatpush1.bf16.msra.mxu0 %v512
  %652 = vmatprep.subr.bf16.mxu0 0
  %653 = vmatpush1.bf16.msra.mxu0 %v513
  %654 = vmatprep.subr.bf16.mxu0 0
  %655 = vmatpush1.bf16.msra.mxu0 %v514
  %656 = vmatprep.subr.bf16.mxu0 0
  %657 = vmatpush1.bf16.msra.mxu0 %v515
  %658 = vmatprep.subr.bf16.mxu0 0
  %659 = vmatpush1.bf16.msra.mxu0 %v516
  %660 = vmatprep.subr.bf16.mxu0 0
  %661 = vmatpush1.bf16.msra.mxu0 %v517
  %662 = vmatprep.mubr.bf16.mxu0 %v215
  %663 = vmatmul.mubr.bf16.gmra.mrb[0].mxu0 %v214
  %v664 = vpop.f32.mrb[0].mxu0
  %v665 = vadd.f32 %v164, %v664
  %v666 = vpop.f32.mrb[0].mxu0
  %v667 = vpop.f32.mrb[0].mxu0
  %v668 = vadd.f32 %v164, %v667
  %v669 = vpop.f32.mrb[0].mxu0
  %670 = vmatprep.mubr.bf16.mxu0 %v223
  %671 = vmatmul.mubr.bf16.gmra.mrb[0].mxu0 %v222
  %v672 = vpop.f32.mrb[0].mxu0
  %v673 = vadd.f32 %v164, %v672
  %v674 = vpop.f32.mrb[0].mxu0
  %v675 = vpop.f32.mrb[0].mxu0
  %v676 = vadd.f32 %v164, %v675
  %v677 = vpop.f32.mrb[0].mxu0
  %678 = vdwg.mxu0
  %679 = vmatprep.subr.bf16.mxu0 0
  %680 = vmatpush1.bf16.msra.mxu0 %v518
  %681 = vmatprep.subr.bf16.mxu0 0
  %682 = vmatpush1.bf16.msra.mxu0 %v519
  %683 = vmatprep.subr.bf16.mxu0 0
  %684 = vmatpush1.bf16.msra.mxu0 %v520
  %685 = vmatprep.subr.bf16.mxu0 0
  %686 = vmatpush1.bf16.msra.mxu0 %v521
  %687 = vmatprep.subr.bf16.mxu0 0
  %688 = vmatpush1.bf16.msra.mxu0 %v522
  %689 = vmatprep.subr.bf16.mxu0 0
  %690 = vmatpush1.bf16.msra.mxu0 %v523
  %691 = vmatprep.subr.bf16.mxu0 0
  %692 = vmatpush1.bf16.msra.mxu0 %v524
  %693 = vmatprep.subr.bf16.mxu0 0
  %694 = vmatpush1.bf16.msra.mxu0 %v525
  %695 = vmatprep.subr.bf16.mxu0 0
  %696 = vmatpush1.bf16.msra.mxu0 %v526
  %697 = vmatprep.subr.bf16.mxu0 0
  %698 = vmatpush1.bf16.msra.mxu0 %v527
  %699 = vmatprep.subr.bf16.mxu0 0
  %700 = vmatpush1.bf16.msra.mxu0 %v528
  %701 = vmatprep.subr.bf16.mxu0 0
  %702 = vmatpush1.bf16.msra.mxu0 %v529
  %703 = vmatprep.subr.bf16.mxu0 0
  %704 = vmatpush1.bf16.msra.mxu0 %v530
  %705 = vmatprep.subr.bf16.mxu0 0
  %706 = vmatpush1.bf16.msra.mxu0 %v531
  %707 = vmatprep.subr.bf16.mxu0 0
  %708 = vmatpush1.bf16.msra.mxu0 %v532
  %709 = vmatprep.subr.bf16.mxu0 0
  %710 = vmatpush1.bf16.msra.mxu0 %v533
  %711 = vmatprep.mubr.bf16.mxu0 %v217
  %712 = vmatmul.mubr.bf16.gmra.mrb[0].mxu0 %v216
  %v713 = vpop.f32.mrb[0].mxu0
  %v714 = vadd.f32 %v665, %v713
  %v715 = vpop.f32.mrb[0].mxu0
  %v716 = vpop.f32.mrb[0].mxu0
  %v717 = vadd.f32 %v668, %v716
  %v718 = vpop.f32.mrb[0].mxu0
  %719 = vmatprep.mubr.bf16.mxu0 %v225
  %720 = vmatmul.mubr.bf16.gmra.mrb[0].mxu0 %v224
  %v721 = vpop.f32.mrb[0].mxu0
  %v722 = vadd.f32 %v673, %v721
  %v723 = vpop.f32.mrb[0].mxu0
  %v724 = vpop.f32.mrb[0].mxu0
  %v725 = vadd.f32 %v676, %v724
  %v726 = vpop.f32.mrb[0].mxu0
  %727 = vdwg.mxu0
  %728 = vmatprep.subr.bf16.mxu0 0
  %729 = vmatpush1.bf16.msra.mxu0 %v534
  %730 = vmatprep.subr.bf16.mxu0 0
  %731 = vmatpush1.bf16.msra.mxu0 %v535
  %732 = vmatprep.subr.bf16.mxu0 0
  %733 = vmatpush1.bf16.msra.mxu0 %v536
  %734 = vmatprep.subr.bf16.mxu0 0
  %735 = vmatpush1.bf16.msra.mxu0 %v537
  %736 = vmatprep.subr.bf16.mxu0 0
  %737 = vmatpush1.bf16.msra.mxu0 %v538
  %738 = vmatprep.subr.bf16.mxu0 0
  %739 = vmatpush1.bf16.msra.mxu0 %v539
  %740 = vmatprep.subr.bf16.mxu0 0
  %741 = vmatpush1.bf16.msra.mxu0 %v540
  %742 = vmatprep.subr.bf16.mxu0 0
  %743 = vmatpush1.bf16.msra.mxu0 %v541
  %744 = vmatprep.subr.bf16.mxu0 0
  %745 = vmatpush1.bf16.msra.mxu0 %v542
  %746 = vmatprep.subr.bf16.mxu0 0
  %747 = vmatpush1.bf16.msra.mxu0 %v543
  %748 = vmatprep.subr.bf16.mxu0 0
  %749 = vmatpush1.bf16.msra.mxu0 %v544
  %750 = vmatprep.subr.bf16.mxu0 0
  %751 = vmatpush1.bf16.msra.mxu0 %v545
  %752 = vmatprep.subr.bf16.mxu0 0
  %753 = vmatpush1.bf16.msra.mxu0 %v546
  %754 = vmatprep.subr.bf16.mxu0 0
  %755 = vmatpush1.bf16.msra.mxu0 %v547
  %756 = vmatprep.subr.bf16.mxu0 0
  %757 = vmatpush1.bf16.msra.mxu0 %v548
  %758 = vmatprep.subr.bf16.mxu0 0
  %759 = vmatpush1.bf16.msra.mxu0 %v549
  %760 = vmatprep.mubr.bf16.mxu0 %v219
  %761 = vmatmul.mubr.bf16.gmra.mrb[0].mxu0 %v218
  %v762 = vpop.f32.mrb[0].mxu0
  %v763 = vadd.f32 %v714, %v762
  %v764 = vpop.f32.mrb[0].mxu0
  %v765 = vpop.f32.mrb[0].mxu0
  %v766 = vadd.f32 %v717, %v765
  %v767 = vpop.f32.mrb[0].mxu0
  %768 = vmatprep.mubr.bf16.mxu0 %v227
  %769 = vmatmul.mubr.bf16.gmra.mrb[0].mxu0 %v226
  %v770 = vpop.f32.mrb[0].mxu0
  %v771 = vadd.f32 %v722, %v770
  %v772 = vpop.f32.mrb[0].mxu0
  %v773 = vpop.f32.mrb[0].mxu0
  %v774 = vadd.f32 %v725, %v773
  %v775 = vpop.f32.mrb[0].mxu0
  %776 = vdwg.mxu0
  %777 = vmatprep.subr.bf16.mxu0 0
  %778 = vmatpush1.bf16.msra.mxu0 %v550
  %779 = vmatprep.subr.bf16.mxu0 0
  %780 = vmatpush1.bf16.msra.mxu0 %v551
  %781 = vmatprep.subr.bf16.mxu0 0
  %782 = vmatpush1.bf16.msra.mxu0 %v552
  %783 = vmatprep.subr.bf16.mxu0 0
  %784 = vmatpush1.bf16.msra.mxu0 %v553
  %785 = vmatprep.subr.bf16.mxu0 0
  %786 = vmatpush1.bf16.msra.mxu0 %v554
  %787 = vmatprep.subr.bf16.mxu0 0
  %788 = vmatpush1.bf16.msra.mxu0 %v555
  %789 = vmatprep.subr.bf16.mxu0 0
  %790 = vmatpush1.bf16.msra.mxu0 %v556
  %791 = vmatprep.subr.bf16.mxu0 0
  %792 = vmatpush1.bf16.msra.mxu0 %v557
  %793 = vmatprep.subr.bf16.mxu0 0
  %794 = vmatpush1.bf16.msra.mxu0 %v558
  %795 = vmatprep.subr.bf16.mxu0 0
  %796 = vmatpush1.bf16.msra.mxu0 %v559
  %797 = vmatprep.subr.bf16.mxu0 0
  %798 = vmatpush1.bf16.msra.mxu0 %v560
  %799 = vmatprep.subr.bf16.mxu0 0
  %800 = vmatpush1.bf16.msra.mxu0 %v561
  %801 = vmatprep.subr.bf16.mxu0 0
  %802 = vmatpush1.bf16.msra.mxu0 %v562
  %803 = vmatprep.subr.bf16.mxu0 0
  %804 = vmatpush1.bf16.msra.mxu0 %v563
  %805 = vmatprep.subr.bf16.mxu0 0
  %806 = vmatpush1.bf16.msra.mxu0 %v564
  %807 = vmatprep.subr.bf16.mxu0 0
  %808 = vmatpush1.bf16.msra.mxu0 %v565
  %809 = vmatprep.mubr.bf16.mxu0 %v221
  %810 = vmatmul.mubr.bf16.gmra.mrb[0].mxu0 %v220
  %v811 = vpop.f32.mrb[0].mxu0
  %v812 = vadd.f32 %v763, %v811
  %v813 = vpop.f32.mrb[0].mxu0
  %v814 = vpop.f32.mrb[0].mxu0
  %v815 = vadd.f32 %v766, %v814
  %v816 = vpop.f32.mrb[0].mxu0
  %817 = vmatprep.mubr.bf16.mxu0 %v229
  %818 = vmatmul.mubr.bf16.gmra.mrb[0].mxu0 %v228
  %v819 = vpop.f32.mrb[0].mxu0
  %v820 = vadd.f32 %v771, %v819
  %v821 = vpop.f32.mrb[0].mxu0
  %v822 = vpop.f32.mrb[0].mxu0
  %v823 = vadd.f32 %v774, %v822
  %v824 = vpop.f32.mrb[0].mxu0
  %825 = vdwg.mxu0
  %v826 = vmax.f32 %v812, 0.0
  %v827 = vmax.f32 %v815, 0.0
  %v828 = vmax.f32 %v820, 0.0
  %v829 = vmax.f32 %v823, 0.0
  %v830 = vpack.c.bf16 %v827, %v826
  %v831 = vpack.c.bf16 %v829, %v828
  %v834 = vunpack.c.l.b16 %v830
  %v835 = vunpack.c.h.b16 %v830
  %v836 = vunpack.c.l.b16 %v831
  %v837 = vunpack.c.h.b16 %v831
  %v838 = vpack.c.b16 %v834, %v834
  %v839 = vpack.c.b16 %v835, %v835
  %v840 = vpack.c.b16 %v836, %v836
  %v841 = vpack.c.b16 %v837, %v837
  %vm846 = vcmask 519168
  %847 = vst.msk [vmem:[%s3] sm:$0xf] %vm846, %v838
  %848 = vst.msk [vmem:[%s3 + $0x4] sm:$0xf] %vm846, %v839
  %849 = vst.msk [vmem:[%s3 + $0x8] sm:$0xf] %vm846, %v840
  %850 = vst.msk [vmem:[%s3 + $0xc] sm:$0xf] %vm846, %v841
  // Predicated region
  $region14: #{fsq_vae_forward.12} parent=0 // pred_check
    _
  $region15: #{fsq_vae_forward.12} parent=0 // pred_check_branch
    %852 = sbr.rel (0) target = $region17
  $region16: #{fsq_vae_forward.12} parent=0 // pred_region
    _
  $region17: #{fsq_vae_forward.12} parent=0 // pred_fallthru
    _
  // Predicated region
  $region18: #{fsq_vae_forward.12} parent=0 // pred_check
    _
  $region19: #{fsq_vae_forward.12} parent=0 // pred_check_branch
    %854 = sbr.rel (0) target = $region21
  $region20: #{fsq_vae_forward.12} parent=0 // pred_region
    _
  $region21: #{fsq_vae_forward.12} parent=0 // pred_fallthru
    _

// kernel: fsq_vae_forward.13
$region0: #{fsq_vae_forward.13}
  #allocation0 [shape = 'u32[]', space=smem, size = 0x4, offset = 0x4, fixed_abs, tag = 'smem constant byte address 0x4 - core index']
  #allocation1 [shape = 'u32[144,128]{1,0:T(1,128)}', space=vmem, size = 0x12000, scoped, tag = 'internal scratch']
  %s0 = inlined_call_operand.vmem [shape: bf16[8,1024], index: 0, kind: input, shape index: {}]
  %s1 = inlined_call_operand.vmem [shape: bf16[1024,64], index: 1, kind: input, shape index: {}]
  %s2 = inlined_call_operand.vmem [shape: f32[1,64], index: 2, kind: input, shape index: {}]
  %s3 = inlined_call_operand.vmem [shape: bf16[8,64], index: 3, kind: output, shape index: {}]
  %s4 = sld [smem:[#allocation0]]
  $region22: #{fsq_vae_forward.13} parent=0
    _
  %s6 = ssub.s32 1, %s4
  %s7 = scalar_select 0, %s6, %s4
  // Predicated region
  $region2: #{fsq_vae_forward.13} parent=0 // pred_check
    _
  $region3: #{fsq_vae_forward.13} parent=0 // pred_check_branch
    %9 = sbr.rel (0) target = $region5
  $region4: #{fsq_vae_forward.13} parent=0 // pred_region
    _
  $region5: #{fsq_vae_forward.13} parent=0 // pred_fallthru
    _
  // Predicated region
  $region6: #{fsq_vae_forward.13} parent=0 // pred_check
    _
  $region7: #{fsq_vae_forward.13} parent=0 // pred_check_branch
    %11 = sbr.rel (0) target = $region9
  $region8: #{fsq_vae_forward.13} parent=0 // pred_region
    _
  $region9: #{fsq_vae_forward.13} parent=0 // pred_fallthru
    _
  // Predicated region
  $region10: #{fsq_vae_forward.13} parent=0 // pred_check
    _
  $region11: #{fsq_vae_forward.13} parent=0 // pred_check_branch
    %13 = sbr.rel (0) target = $region13
  $region12: #{fsq_vae_forward.13} parent=0 // pred_region
    _
  $region13: #{fsq_vae_forward.13} parent=0 // pred_fallthru
    _
  %v15 = vld [vmem:[%s0] sm:$0xff]
  %v16 = vld [vmem:[%s0 + $0x8] sm:$0xff]
  %v17 = vld [vmem:[%s0 + $0x10] sm:$0xff]
  %v18 = vld [vmem:[%s0 + $0x18] sm:$0xff]
  %v19 = vld [vmem:[%s1] sm:$0xf]
  %v20 = vld [vmem:[%s1 + $0x4] sm:$0xf]
  %v21 = vld [vmem:[%s1 + $0x8] sm:$0xf]
  %v22 = vld [vmem:[%s1 + $0xc] sm:$0xf]
  %v23 = vld [vmem:[%s1 + $0x10] sm:$0xf]
  %v24 = vld [vmem:[%s1 + $0x14] sm:$0xf]
  %v25 = vld [vmem:[%s1 + $0x18] sm:$0xf]
  %v26 = vld [vmem:[%s1 + $0x1c] sm:$0xf]
  %v27 = vld [vmem:[%s1 + $0x20] sm:$0xf]
  %v28 = vld [vmem:[%s1 + $0x24] sm:$0xf]
  %v29 = vld [vmem:[%s1 + $0x28] sm:$0xf]
  %v30 = vld [vmem:[%s1 + $0x2c] sm:$0xf]
  %v31 = vld [vmem:[%s1 + $0x30] sm:$0xf]
  %v32 = vld [vmem:[%s1 + $0x34] sm:$0xf]
  %v33 = vld [vmem:[%s1 + $0x38] sm:$0xf]
  %v34 = vld [vmem:[%s1 + $0x3c] sm:$0xf]
  %v35 = vld [vmem:[%s1 + $0x40] sm:$0xf]
  %v36 = vld [vmem:[%s1 + $0x44] sm:$0xf]
  %v37 = vld [vmem:[%s1 + $0x48] sm:$0xf]
  %v38 = vld [vmem:[%s1 + $0x4c] sm:$0xf]
  %v39 = vld [vmem:[%s1 + $0x50] sm:$0xf]
  %v40 = vld [vmem:[%s1 + $0x54] sm:$0xf]
  %v41 = vld [vmem:[%s1 + $0x58] sm:$0xf]
  %v42 = vld [vmem:[%s1 + $0x5c] sm:$0xf]
  %v43 = vld [vmem:[%s1 + $0x60] sm:$0xf]
  %v44 = vld [vmem:[%s1 + $0x64] sm:$0xf]
  %v45 = vld [vmem:[%s1 + $0x68] sm:$0xf]
  %v46 = vld [vmem:[%s1 + $0x6c] sm:$0xf]
  %v47 = vld [vmem:[%s1 + $0x70] sm:$0xf]
  %v48 = vld [vmem:[%s1 + $0x74] sm:$0xf]
  %v49 = vld [vmem:[%s1 + $0x78] sm:$0xf]
  %v50 = vld [vmem:[%s1 + $0x7c] sm:$0xf]
  %v51 = vld [vmem:[%s1 + $0x80] sm:$0xf]
  %v52 = vld [vmem:[%s1 + $0x84] sm:$0xf]
  %v53 = vld [vmem:[%s1 + $0x88] sm:$0xf]
  %v54 = vld [vmem:[%s1 + $0x8c] sm:$0xf]
  %v55 = vld [vmem:[%s1 + $0x90] sm:$0xf]
  %v56 = vld [vmem:[%s1 + $0x94] sm:$0xf]
  %v57 = vld [vmem:[%s1 + $0x98] sm:$0xf]
  %v58 = vld [vmem:[%s1 + $0x9c] sm:$0xf]
  %v59 = vld [vmem:[%s1 + $0xa0] sm:$0xf]
  %v60 = vld [vmem:[%s1 + $0xa4] sm:$0xf]
  %v61 = vld [vmem:[%s1 + $0xa8] sm:$0xf]
  %v62 = vld [vmem:[%s1 + $0xac] sm:$0xf]
  %v63 = vld [vmem:[%s1 + $0xb0] sm:$0xf]
  %v64 = vld [vmem:[%s1 + $0xb4] sm:$0xf]
  %v65 = vld [vmem:[%s1 + $0xb8] sm:$0xf]
  %v66 = vld [vmem:[%s1 + $0xbc] sm:$0xf]
  %v67 = vld [vmem:[%s1 + $0xc0] sm:$0xf]
  %v68 = vld [vmem:[%s1 + $0xc4] sm:$0xf]
  %v69 = vld [vmem:[%s1 + $0xc8] sm:$0xf]
  %v70 = vld [vmem:[%s1 + $0xcc] sm:$0xf]
  %v71 = vld [vmem:[%s1 + $0xd0] sm:$0xf]
  %v72 = vld [vmem:[%s1 + $0xd4] sm:$0xf]
  %v73 = vld [vmem:[%s1 + $0xd8] sm:$0xf]
  %v74 = vld [vmem:[%s1 + $0xdc] sm:$0xf]
  %v75 = vld [vmem:[%s1 + $0xe0] sm:$0xf]
  %v76 = vld [vmem:[%s1 + $0xe4] sm:$0xf]
  %v77 = vld [vmem:[%s1 + $0xe8] sm:$0xf]
  %v78 = vld [vmem:[%s1 + $0xec] sm:$0xf]
  %v79 = vld [vmem:[%s1 + $0xf0] sm:$0xf]
  %v80 = vld [vmem:[%s1 + $0xf4] sm:$0xf]
  %v81 = vld [vmem:[%s1 + $0xf8] sm:$0xf]
  %v82 = vld [vmem:[%s1 + $0xfc] sm:$0xf]
  %v83 = vld [vmem:[%s1 + $0x100] sm:$0xf]
  %v84 = vld [vmem:[%s1 + $0x104] sm:$0xf]
  %v85 = vld [vmem:[%s1 + $0x108] sm:$0xf]
  %v86 = vld [vmem:[%s1 + $0x10c] sm:$0xf]
  %v87 = vld [vmem:[%s1 + $0x110] sm:$0xf]
  %v88 = vld [vmem:[%s1 + $0x114] sm:$0xf]
  %v89 = vld [vmem:[%s1 + $0x118] sm:$0xf]
  %v90 = vld [vmem:[%s1 + $0x11c] sm:$0xf]
  %v91 = vld [vmem:[%s1 + $0x120] sm:$0xf]
  %v92 = vld [vmem:[%s1 + $0x124] sm:$0xf]
  %v93 = vld [vmem:[%s1 + $0x128] sm:$0xf]
  %v94 = vld [vmem:[%s1 + $0x12c] sm:$0xf]
  %v95 = vld [vmem:[%s1 + $0x130] sm:$0xf]
  %v96 = vld [vmem:[%s1 + $0x134] sm:$0xf]
  %v97 = vld [vmem:[%s1 + $0x138] sm:$0xf]
  %v98 = vld [vmem:[%s1 + $0x13c] sm:$0xf]
  %v99 = vld [vmem:[%s1 + $0x140] sm:$0xf]
  %v100 = vld [vmem:[%s1 + $0x144] sm:$0xf]
  %v101 = vld [vmem:[%s1 + $0x148] sm:$0xf]
  %v102 = vld [vmem:[%s1 + $0x14c] sm:$0xf]
  %v103 = vld [vmem:[%s1 + $0x150] sm:$0xf]
  %v104 = vld [vmem:[%s1 + $0x154] sm:$0xf]
  %v105 = vld [vmem:[%s1 + $0x158] sm:$0xf]
  %v106 = vld [vmem:[%s1 + $0x15c] sm:$0xf]
  %v107 = vld [vmem:[%s1 + $0x160] sm:$0xf]
  %v108 = vld [vmem:[%s1 + $0x164] sm:$0xf]
  %v109 = vld [vmem:[%s1 + $0x168] sm:$0xf]
  %v110 = vld [vmem:[%s1 + $0x16c] sm:$0xf]
  %v111 = vld [vmem:[%s1 + $0x170] sm:$0xf]
  %v112 = vld [vmem:[%s1 + $0x174] sm:$0xf]
  %v113 = vld [vmem:[%s1 + $0x178] sm:$0xf]
  %v114 = vld [vmem:[%s1 + $0x17c] sm:$0xf]
  %v115 = vld [vmem:[%s1 + $0x180] sm:$0xf]
  %v116 = vld [vmem:[%s1 + $0x184] sm:$0xf]
  %v117 = vld [vmem:[%s1 + $0x188] sm:$0xf]
  %v118 = vld [vmem:[%s1 + $0x18c] sm:$0xf]
  %v119 = vld [vmem:[%s1 + $0x190] sm:$0xf]
  %v120 = vld [vmem:[%s1 + $0x194] sm:$0xf]
  %v121 = vld [vmem:[%s1 + $0x198] sm:$0xf]
  %v122 = vld [vmem:[%s1 + $0x19c] sm:$0xf]
  %v123 = vld [vmem:[%s1 + $0x1a0] sm:$0xf]
  %v124 = vld [vmem:[%s1 + $0x1a4] sm:$0xf]
  %v125 = vld [vmem:[%s1 + $0x1a8] sm:$0xf]
  %v126 = vld [vmem:[%s1 + $0x1ac] sm:$0xf]
  %v127 = vld [vmem:[%s1 + $0x1b0] sm:$0xf]
  %v128 = vld [vmem:[%s1 + $0x1b4] sm:$0xf]
  %v129 = vld [vmem:[%s1 + $0x1b8] sm:$0xf]
  %v130 = vld [vmem:[%s1 + $0x1bc] sm:$0xf]
  %v131 = vld [vmem:[%s1 + $0x1c0] sm:$0xf]
  %v132 = vld [vmem:[%s1 + $0x1c4] sm:$0xf]
  %v133 = vld [vmem:[%s1 + $0x1c8] sm:$0xf]
  %v134 = vld [vmem:[%s1 + $0x1cc] sm:$0xf]
  %v135 = vld [vmem:[%s1 + $0x1d0] sm:$0xf]
  %v136 = vld [vmem:[%s1 + $0x1d4] sm:$0xf]
  %v137 = vld [vmem:[%s1 + $0x1d8] sm:$0xf]
  %v138 = vld [vmem:[%s1 + $0x1dc] sm:$0xf]
  %v139 = vld [vmem:[%s1 + $0x1e0] sm:$0xf]
  %v140 = vld [vmem:[%s1 + $0x1e4] sm:$0xf]
  %v141 = vld [vmem:[%s1 + $0x1e8] sm:$0xf]
  %v142 = vld [vmem:[%s1 + $0x1ec] sm:$0xf]
  %v143 = vld [vmem:[%s1 + $0x1f0] sm:$0xf]
  %v144 = vld [vmem:[%s1 + $0x1f4] sm:$0xf]
  %v145 = vld [vmem:[%s1 + $0x1f8] sm:$0xf]
  %v146 = vld [vmem:[%s1 + $0x1fc] sm:$0xf]
  %v147 = vld [vmem:[%s2] sm:$0x1]
  %v149 = vlaneseq
  %v150 = vshrl.u32 %v149, 7
  %v151 = vsub.s32 0, %v150
  %v152 = vrot.slane %v147, %v151
  %v158 = vunpack.c.l.b16 %v15
  %v159 = vunpack.c.h.b16 %v15
  %v160 = vunpack.c.l.b16 %v16
  %v161 = vunpack.c.h.b16 %v16
  %v162 = vunpack.c.l.b16 %v17
  %v163 = vunpack.c.h.b16 %v17
  %v164 = vunpack.c.l.b16 %v18
  %v165 = vunpack.c.h.b16 %v18
  %v166 = vpack.c.b16 %v158, %v158
  %v167 = vpack.c.b16 %v159, %v159
  %v168 = vpack.c.b16 %v160, %v160
  %v169 = vpack.c.b16 %v161, %v161
  %v170 = vpack.c.b16 %v162, %v162
  %v171 = vpack.c.b16 %v163, %v163
  %v172 = vpack.c.b16 %v164, %v164
  %v173 = vpack.c.b16 %v165, %v165
  %v310 = vunpack.c.l.b16 %v19
  %v311 = vunpack.c.l.b16 %v20
  %v312 = vunpack.c.l.b16 %v21
  %v313 = vunpack.c.l.b16 %v22
  %v314 = vunpack.c.l.b16 %v23
  %v315 = vunpack.c.l.b16 %v24
  %v316 = vunpack.c.l.b16 %v25
  %v317 = vunpack.c.l.b16 %v26
  %v318 = vunpack.c.l.b16 %v27
  %v319 = vunpack.c.l.b16 %v28
  %v320 = vunpack.c.l.b16 %v29
  %v321 = vunpack.c.l.b16 %v30
  %v322 = vunpack.c.l.b16 %v31
  %v323 = vunpack.c.l.b16 %v32
  %v324 = vunpack.c.l.b16 %v33
  %v325 = vunpack.c.l.b16 %v34
  %v326 = vunpack.c.l.b16 %v35
  %v327 = vunpack.c.l.b16 %v36
  %v328 = vunpack.c.l.b16 %v37
  %v329 = vunpack.c.l.b16 %v38
  %v330 = vunpack.c.l.b16 %v39
  %v331 = vunpack.c.l.b16 %v40
  %v332 = vunpack.c.l.b16 %v41
  %v333 = vunpack.c.l.b16 %v42
  %v334 = vunpack.c.l.b16 %v43
  %v335 = vunpack.c.l.b16 %v44
  %v336 = vunpack.c.l.b16 %v45
  %v337 = vunpack.c.l.b16 %v46
  %v338 = vunpack.c.l.b16 %v47
  %v339 = vunpack.c.l.b16 %v48
  %v340 = vunpack.c.l.b16 %v49
  %v341 = vunpack.c.l.b16 %v50
  %v342 = vunpack.c.l.b16 %v51
  %v343 = vunpack.c.l.b16 %v52
  %v344 = vunpack.c.l.b16 %v53
  %v345 = vunpack.c.l.b16 %v54
  %v346 = vunpack.c.l.b16 %v55
  %v347 = vunpack.c.l.b16 %v56
  %v348 = vunpack.c.l.b16 %v57
  %v349 = vunpack.c.l.b16 %v58
  %v350 = vunpack.c.l.b16 %v59
  %v351 = vunpack.c.l.b16 %v60
  %v352 = vunpack.c.l.b16 %v61
  %v353 = vunpack.c.l.b16 %v62
  %v354 = vunpack.c.l.b16 %v63
  %v355 = vunpack.c.l.b16 %v64
  %v356 = vunpack.c.l.b16 %v65
  %v357 = vunpack.c.l.b16 %v66
  %v358 = vunpack.c.l.b16 %v67
  %v359 = vunpack.c.l.b16 %v68
  %v360 = vunpack.c.l.b16 %v69
  %v361 = vunpack.c.l.b16 %v70
  %v362 = vunpack.c.l.b16 %v71
  %v363 = vunpack.c.l.b16 %v72
  %v364 = vunpack.c.l.b16 %v73
  %v365 = vunpack.c.l.b16 %v74
  %v366 = vunpack.c.l.b16 %v75
  %v367 = vunpack.c.l.b16 %v76
  %v368 = vunpack.c.l.b16 %v77
  %v369 = vunpack.c.l.b16 %v78
  %v370 = vunpack.c.l.b16 %v79
  %v371 = vunpack.c.l.b16 %v80
  %v372 = vunpack.c.l.b16 %v81
  %v373 = vunpack.c.l.b16 %v82
  %v374 = vunpack.c.l.b16 %v83
  %v375 = vunpack.c.l.b16 %v84
  %v376 = vunpack.c.l.b16 %v85
  %v377 = vunpack.c.l.b16 %v86
  %v378 = vunpack.c.l.b16 %v87
  %v379 = vunpack.c.l.b16 %v88
  %v380 = vunpack.c.l.b16 %v89
  %v381 = vunpack.c.l.b16 %v90
  %v382 = vunpack.c.l.b16 %v91
  %v383 = vunpack.c.l.b16 %v92
  %v384 = vunpack.c.l.b16 %v93
  %v385 = vunpack.c.l.b16 %v94
  %v386 = vunpack.c.l.b16 %v95
  %v387 = vunpack.c.l.b16 %v96
  %v388 = vunpack.c.l.b16 %v97
  %v389 = vunpack.c.l.b16 %v98
  %v390 = vunpack.c.l.b16 %v99
  %v391 = vunpack.c.l.b16 %v100
  %v392 = vunpack.c.l.b16 %v101
  %v393 = vunpack.c.l.b16 %v102
  %v394 = vunpack.c.l.b16 %v103
  %v395 = vunpack.c.l.b16 %v104
  %v396 = vunpack.c.l.b16 %v105
  %v397 = vunpack.c.l.b16 %v106
  %v398 = vunpack.c.l.b16 %v107
  %v399 = vunpack.c.l.b16 %v108
  %v400 = vunpack.c.l.b16 %v109
  %v401 = vunpack.c.l.b16 %v110
  %v402 = vunpack.c.l.b16 %v111
  %v403 = vunpack.c.l.b16 %v112
  %v404 = vunpack.c.l.b16 %v113
  %v405 = vunpack.c.l.b16 %v114
  %v406 = vunpack.c.l.b16 %v115
  %v407 = vunpack.c.l.b16 %v116
  %v408 = vunpack.c.l.b16 %v117
  %v409 = vunpack.c.l.b16 %v118
  %v410 = vunpack.c.l.b16 %v119
  %v411 = vunpack.c.l.b16 %v120
  %v412 = vunpack.c.l.b16 %v121
  %v413 = vunpack.c.l.b16 %v122
  %v414 = vunpack.c.l.b16 %v123
  %v415 = vunpack.c.l.b16 %v124
  %v416 = vunpack.c.l.b16 %v125
  %v417 = vunpack.c.l.b16 %v126
  %v418 = vunpack.c.l.b16 %v127
  %v419 = vunpack.c.l.b16 %v128
  %v420 = vunpack.c.l.b16 %v129
  %v421 = vunpack.c.l.b16 %v130
  %v422 = vunpack.c.l.b16 %v131
  %v423 = vunpack.c.l.b16 %v132
  %v424 = vunpack.c.l.b16 %v133
  %v425 = vunpack.c.l.b16 %v134
  %v426 = vunpack.c.l.b16 %v135
  %v427 = vunpack.c.l.b16 %v136
  %v428 = vunpack.c.l.b16 %v137
  %v429 = vunpack.c.l.b16 %v138
  %v430 = vunpack.c.l.b16 %v139
  %v431 = vunpack.c.l.b16 %v140
  %v432 = vunpack.c.l.b16 %v141
  %v433 = vunpack.c.l.b16 %v142
  %v434 = vunpack.c.l.b16 %v143
  %v435 = vunpack.c.l.b16 %v144
  %v436 = vunpack.c.l.b16 %v145
  %v437 = vunpack.c.l.b16 %v146
  %v438 = vpack.c.b16 %v311, %v310
  %v439 = vpack.c.b16 %v313, %v312
  %v440 = vpack.c.b16 %v315, %v314
  %v441 = vpack.c.b16 %v317, %v316
  %v442 = vpack.c.b16 %v319, %v318
  %v443 = vpack.c.b16 %v321, %v320
  %v444 = vpack.c.b16 %v323, %v322
  %v445 = vpack.c.b16 %v325, %v324
  %v446 = vpack.c.b16 %v327, %v326
  %v447 = vpack.c.b16 %v329, %v328
  %v448 = vpack.c.b16 %v331, %v330
  %v449 = vpack.c.b16 %v333, %v332
  %v450 = vpack.c.b16 %v335, %v334
  %v451 = vpack.c.b16 %v337, %v336
  %v452 = vpack.c.b16 %v339, %v338
  %v453 = vpack.c.b16 %v341, %v340
  %v454 = vpack.c.b16 %v343, %v342
  %v455 = vpack.c.b16 %v345, %v344
  %v456 = vpack.c.b16 %v347, %v346
  %v457 = vpack.c.b16 %v349, %v348
  %v458 = vpack.c.b16 %v351, %v350
  %v459 = vpack.c.b16 %v353, %v352
  %v460 = vpack.c.b16 %v355, %v354
  %v461 = vpack.c.b16 %v357, %v356
  %v462 = vpack.c.b16 %v359, %v358
  %v463 = vpack.c.b16 %v361, %v360
  %v464 = vpack.c.b16 %v363, %v362
  %v465 = vpack.c.b16 %v365, %v364
  %v466 = vpack.c.b16 %v367, %v366
  %v467 = vpack.c.b16 %v369, %v368
  %v468 = vpack.c.b16 %v371, %v370
  %v469 = vpack.c.b16 %v373, %v372
  %v470 = vpack.c.b16 %v375, %v374
  %v471 = vpack.c.b16 %v377, %v376
  %v472 = vpack.c.b16 %v379, %v378
  %v473 = vpack.c.b16 %v381, %v380
  %v474 = vpack.c.b16 %v383, %v382
  %v475 = vpack.c.b16 %v385, %v384
  %v476 = vpack.c.b16 %v387, %v386
  %v477 = vpack.c.b16 %v389, %v388
  %v478 = vpack.c.b16 %v391, %v390
  %v479 = vpack.c.b16 %v393, %v392
  %v480 = vpack.c.b16 %v395, %v394
  %v481 = vpack.c.b16 %v397, %v396
  %v482 = vpack.c.b16 %v399, %v398
  %v483 = vpack.c.b16 %v401, %v400
  %v484 = vpack.c.b16 %v403, %v402
  %v485 = vpack.c.b16 %v405, %v404
  %v486 = vpack.c.b16 %v407, %v406
  %v487 = vpack.c.b16 %v409, %v408
  %v488 = vpack.c.b16 %v411, %v410
  %v489 = vpack.c.b16 %v413, %v412
  %v490 = vpack.c.b16 %v415, %v414
  %v491 = vpack.c.b16 %v417, %v416
  %v492 = vpack.c.b16 %v419, %v418
  %v493 = vpack.c.b16 %v421, %v420
  %v494 = vpack.c.b16 %v423, %v422
  %v495 = vpack.c.b16 %v425, %v424
  %v496 = vpack.c.b16 %v427, %v426
  %v497 = vpack.c.b16 %v429, %v428
  %v498 = vpack.c.b16 %v431, %v430
  %v499 = vpack.c.b16 %v433, %v432
  %v500 = vpack.c.b16 %v435, %v434
  %v501 = vpack.c.b16 %v437, %v436
  %566 = vmatprep.subr.bf16.mxu0 0
  %567 = vmatpush1.bf16.msra.mxu0 %v438
  %568 = vmatprep.subr.bf16.mxu0 0
  %569 = vmatpush1.bf16.msra.mxu0 %v439
  %570 = vmatprep.subr.bf16.mxu0 0
  %571 = vmatpush1.bf16.msra.mxu0 %v440
  %572 = vmatprep.subr.bf16.mxu0 0
  %573 = vmatpush1.bf16.msra.mxu0 %v441
  %574 = vmatprep.subr.bf16.mxu0 0
  %575 = vmatpush1.bf16.msra.mxu0 %v442
  %576 = vmatprep.subr.bf16.mxu0 0
  %577 = vmatpush1.bf16.msra.mxu0 %v443
  %578 = vmatprep.subr.bf16.mxu0 0
  %579 = vmatpush1.bf16.msra.mxu0 %v444
  %580 = vmatprep.subr.bf16.mxu0 0
  %581 = vmatpush1.bf16.msra.mxu0 %v445
  %582 = vmatprep.subr.bf16.mxu0 0
  %583 = vmatpush1.bf16.msra.mxu0 %v446
  %584 = vmatprep.subr.bf16.mxu0 0
  %585 = vmatpush1.bf16.msra.mxu0 %v447
  %586 = vmatprep.subr.bf16.mxu0 0
  %587 = vmatpush1.bf16.msra.mxu0 %v448
  %588 = vmatprep.subr.bf16.mxu0 0
  %589 = vmatpush1.bf16.msra.mxu0 %v449
  %590 = vmatprep.subr.bf16.mxu0 0
  %591 = vmatpush1.bf16.msra.mxu0 %v450
  %592 = vmatprep.subr.bf16.mxu0 0
  %593 = vmatpush1.bf16.msra.mxu0 %v451
  %594 = vmatprep.subr.bf16.mxu0 0
  %595 = vmatpush1.bf16.msra.mxu0 %v452
  %596 = vmatprep.subr.bf16.mxu0 0
  %597 = vmatpush1.bf16.msra.mxu0 %v453
  %598 = vmatprep.mubr.bf16.mxu0 %v167
  %599 = vmatmul.mubr.bf16.gmra.mrb[0].mxu0 %v166
  %v600 = vpop.f32.mrb[0].mxu0
  %v601 = vadd.f32 %v152, %v600
  %v602 = vpop.f32.mrb[0].mxu0
  %v603 = vpop.f32.mrb[0].mxu0
  %v604 = vpop.f32.mrb[0].mxu0
  %605 = vdwg.mxu0
  %606 = vmatprep.subr.bf16.mxu0 0
  %607 = vmatpush1.bf16.msra.mxu0 %v454
  %608 = vmatprep.subr.bf16.mxu0 0
  %609 = vmatpush1.bf16.msra.mxu0 %v455
  %610 = vmatprep.subr.bf16.mxu0 0
  %611 = vmatpush1.bf16.msra.mxu0 %v456
  %612 = vmatprep.subr.bf16.mxu0 0
  %613 = vmatpush1.bf16.msra.mxu0 %v457
  %614 = vmatprep.subr.bf16.mxu0 0
  %615 = vmatpush1.bf16.msra.mxu0 %v458
  %616 = vmatprep.subr.bf16.mxu0 0
  %617 = vmatpush1.bf16.msra.mxu0 %v459
  %618 = vmatprep.subr.bf16.mxu0 0
  %619 = vmatpush1.bf16.msra.mxu0 %v460
  %620 = vmatprep.subr.bf16.mxu0 0
  %621 = vmatpush1.bf16.msra.mxu0 %v461
  %622 = vmatprep.subr.bf16.mxu0 0
  %623 = vmatpush1.bf16.msra.mxu0 %v462
  %624 = vmatprep.subr.bf16.mxu0 0
  %625 = vmatpush1.bf16.msra.mxu0 %v463
  %626 = vmatprep.subr.bf16.mxu0 0
  %627 = vmatpush1.bf16.msra.mxu0 %v464
  %628 = vmatprep.subr.bf16.mxu0 0
  %629 = vmatpush1.bf16.msra.mxu0 %v465
  %630 = vmatprep.subr.bf16.mxu0 0
  %631 = vmatpush1.bf16.msra.mxu0 %v466
  %632 = vmatprep.subr.bf16.mxu0 0
  %633 = vmatpush1.bf16.msra.mxu0 %v467
  %634 = vmatprep.subr.bf16.mxu0 0
  %635 = vmatpush1.bf16.msra.mxu0 %v468
  %636 = vmatprep.subr.bf16.mxu0 0
  %637 = vmatpush1.bf16.msra.mxu0 %v469
  %638 = vmatprep.mubr.bf16.mxu0 %v169
  %639 = vmatmul.mubr.bf16.gmra.mrb[0].mxu0 %v168
  %v640 = vpop.f32.mrb[0].mxu0
  %v641 = vadd.f32 %v601, %v640
  %v642 = vpop.f32.mrb[0].mxu0
  %v643 = vpop.f32.mrb[0].mxu0
  %v644 = vpop.f32.mrb[0].mxu0
  %645 = vdwg.mxu0
  %646 = vmatprep.subr.bf16.mxu0 0
  %647 = vmatpush1.bf16.msra.mxu0 %v470
  %648 = vmatprep.subr.bf16.mxu0 0
  %649 = vmatpush1.bf16.msra.mxu0 %v471
  %650 = vmatprep.subr.bf16.mxu0 0
  %651 = vmatpush1.bf16.msra.mxu0 %v472
  %652 = vmatprep.subr.bf16.mxu0 0
  %653 = vmatpush1.bf16.msra.mxu0 %v473
  %654 = vmatprep.subr.bf16.mxu0 0
  %655 = vmatpush1.bf16.msra.mxu0 %v474
  %656 = vmatprep.subr.bf16.mxu0 0
  %657 = vmatpush1.bf16.msra.mxu0 %v475
  %658 = vmatprep.subr.bf16.mxu0 0
  %659 = vmatpush1.bf16.msra.mxu0 %v476
  %660 = vmatprep.subr.bf16.mxu0 0
  %661 = vmatpush1.bf16.msra.mxu0 %v477
  %662 = vmatprep.subr.bf16.mxu0 0
  %663 = vmatpush1.bf16.msra.mxu0 %v478
  %664 = vmatprep.subr.bf16.mxu0 0
  %665 = vmatpush1.bf16.msra.mxu0 %v479
  %666 = vmatprep.subr.bf16.mxu0 0
  %667 = vmatpush1.bf16.msra.mxu0 %v480
  %668 = vmatprep.subr.bf16.mxu0 0
  %669 = vmatpush1.bf16.msra.mxu0 %v481
  %670 = vmatprep.subr.bf16.mxu0 0
  %671 = vmatpush1.bf16.msra.mxu0 %v482
  %672 = vmatprep.subr.bf16.mxu0 0
  %673 = vmatpush1.bf16.msra.mxu0 %v483
  %674 = vmatprep.subr.bf16.mxu0 0
  %675 = vmatpush1.bf16.msra.mxu0 %v484
  %676 = vmatprep.subr.bf16.mxu0 0
  %677 = vmatpush1.bf16.msra.mxu0 %v485
  %678 = vmatprep.mubr.bf16.mxu0 %v171
  %679 = vmatmul.mubr.bf16.gmra.mrb[0].mxu0 %v170
  %v680 = vpop.f32.mrb[0].mxu0
  %v681 = vadd.f32 %v641, %v680
  %v682 = vpop.f32.mrb[0].mxu0
  %v683 = vpop.f32.mrb[0].mxu0
  %v684 = vpop.f32.mrb[0].mxu0
  %685 = vdwg.mxu0
  %686 = vmatprep.subr.bf16.mxu0 0
  %687 = vmatpush1.bf16.msra.mxu0 %v486
  %688 = vmatprep.subr.bf16.mxu0 0
  %689 = vmatpush1.bf16.msra.mxu0 %v487
  %690 = vmatprep.subr.bf16.mxu0 0
  %691 = vmatpush1.bf16.msra.mxu0 %v488
  %692 = vmatprep.subr.bf16.mxu0 0
  %693 = vmatpush1.bf16.msra.mxu0 %v489
  %694 = vmatprep.subr.bf16.mxu0 0
  %695 = vmatpush1.bf16.msra.mxu0 %v490
  %696 = vmatprep.subr.bf16.mxu0 0
  %697 = vmatpush1.bf16.msra.mxu0 %v491
  %698 = vmatprep.subr.bf16.mxu0 0
  %699 = vmatpush1.bf16.msra.mxu0 %v492
  %700 = vmatprep.subr.bf16.mxu0 0
  %701 = vmatpush1.bf16.msra.mxu0 %v493
  %702 = vmatprep.subr.bf16.mxu0 0
  %703 = vmatpush1.bf16.msra.mxu0 %v494
  %704 = vmatprep.subr.bf16.mxu0 0
  %705 = vmatpush1.bf16.msra.mxu0 %v495
  %706 = vmatprep.subr.bf16.mxu0 0
  %707 = vmatpush1.bf16.msra.mxu0 %v496
  %708 = vmatprep.subr.bf16.mxu0 0
  %709 = vmatpush1.bf16.msra.mxu0 %v497
  %710 = vmatprep.subr.bf16.mxu0 0
  %711 = vmatpush1.bf16.msra.mxu0 %v498
  %712 = vmatprep.subr.bf16.mxu0 0
  %713 = vmatpush1.bf16.msra.mxu0 %v499
  %714 = vmatprep.subr.bf16.mxu0 0
  %715 = vmatpush1.bf16.msra.mxu0 %v500
  %716 = vmatprep.subr.bf16.mxu0 0
  %717 = vmatpush1.bf16.msra.mxu0 %v501
  %718 = vmatprep.mubr.bf16.mxu0 %v173
  %719 = vmatmul.mubr.bf16.gmra.mrb[0].mxu0 %v172
  %v720 = vpop.f32.mrb[0].mxu0
  %v721 = vadd.f32 %v681, %v720
  %v722 = vpop.f32.mrb[0].mxu0
  %v723 = vpop.f32.mrb[0].mxu0
  %v724 = vpop.f32.mrb[0].mxu0
  %725 = vdwg.mxu0
  %v726 = vmax.f32 %v721, 0.0
  %v727 = vpack.c.bf16 %v726, %v726
  %vm728 = vcmask 519168
  %729 = vst.msk [vmem:[%s3] sm:$0xf] %vm728, %v727
  // Predicated region
  $region14: #{fsq_vae_forward.13} parent=0 // pred_check
    _
  $region15: #{fsq_vae_forward.13} parent=0 // pred_check_branch
    %731 = sbr.rel (0) target = $region17
  $region16: #{fsq_vae_forward.13} parent=0 // pred_region
    _
  $region17: #{fsq_vae_forward.13} parent=0 // pred_fallthru
    _
  // Predicated region
  $region18: #{fsq_vae_forward.13} parent=0 // pred_check
    _
  $region19: #{fsq_vae_forward.13} parent=0 // pred_check_branch
    %733 = sbr.rel (0) target = $region21
  $region20: #{fsq_vae_forward.13} parent=0 // pred_region
    _
  $region21: #{fsq_vae_forward.13} parent=0 // pred_fallthru
    _

// kernel: fsq_vae_forward.14
$region0: #{fsq_vae_forward.14}
  #allocation0 [shape = 'u32[]', space=smem, size = 0x4, offset = 0x4, fixed_abs, tag = 'smem constant byte address 0x4 - core index']
  #allocation1 [shape = 'u32[144,128]{1,0:T(1,128)}', space=vmem, size = 0x12000, scoped, tag = 'internal scratch']
  %s0 = inlined_call_operand.vmem [shape: bf16[2,256], index: 0, kind: input, shape index: {}]
  %s1 = inlined_call_operand.vmem [shape: bf16[256,64], index: 1, kind: input, shape index: {}]
  %s2 = inlined_call_operand.vmem [shape: f32[1,64], index: 2, kind: input, shape index: {}]
  %s3 = inlined_call_operand.vmem [shape: f32[2,64], index: 3, kind: output, shape index: {0}]
  %s4 = inlined_call_operand.hbm [shape: f32[1,1], index: 4, kind: output, shape index: {1}]
  %5 = xla_tuple %s3, %s4
  %s6 = sld [smem:[#allocation0]]
  $region30: #{fsq_vae_forward.14} parent=0
    _
  %s8 = ssub.s32 1, %s6
  %s9 = scalar_select 0, %s8, %s6
  $region1: #{fsq_vae_forward.14} parent=0
    #allocation2 [shape = 'u8[512]{0}', space=vmem, size = 0x400, scoped, tag = 'output window, operand 1, single buffered']
    #allocation3 [shape = 's32[1]{0}', space=sflag, size = 0x4, scoped, tag = 'scoped memory for fsq_vae_forward.14']
    %10 = vsyncpa [#allocation3], 0
    // Predicated region
    $region2: #{fsq_vae_forward.14} parent=1 // pred_check
      _
    $region3: #{fsq_vae_forward.14} parent=1 // pred_check_branch
      %12 = sbr.rel (0) target = $region5
    $region4: #{fsq_vae_forward.14} parent=1 // pred_region
      _
    $region5: #{fsq_vae_forward.14} parent=1 // pred_fallthru
      _
    // Predicated region
    $region6: #{fsq_vae_forward.14} parent=1 // pred_check
      _
    $region7: #{fsq_vae_forward.14} parent=1 // pred_check_branch
      %14 = sbr.rel (0) target = $region9
    $region8: #{fsq_vae_forward.14} parent=1 // pred_region
      _
    $region9: #{fsq_vae_forward.14} parent=1 // pred_fallthru
      _
    // Predicated region
    $region10: #{fsq_vae_forward.14} parent=1 // pred_check
      _
    $region11: #{fsq_vae_forward.14} parent=1 // pred_check_branch
      %16 = sbr.rel (0) target = $region13
    $region12: #{fsq_vae_forward.14} parent=1 // pred_region
      _
    $region13: #{fsq_vae_forward.14} parent=1 // pred_fallthru
      _
    %v18 = vld [vmem:[%s0] sm:$0x3]
    %v19 = vld [vmem:[%s1] sm:$0xf]
    %v20 = vld [vmem:[%s1 + $0x4] sm:$0xf]
    %v21 = vld [vmem:[%s1 + $0x8] sm:$0xf]
    %v22 = vld [vmem:[%s1 + $0xc] sm:$0xf]
    %v23 = vld [vmem:[%s1 + $0x10] sm:$0xf]
    %v24 = vld [vmem:[%s1 + $0x14] sm:$0xf]
    %v25 = vld [vmem:[%s1 + $0x18] sm:$0xf]
    %v26 = vld [vmem:[%s1 + $0x1c] sm:$0xf]
    %v27 = vld [vmem:[%s1 + $0x20] sm:$0xf]
    %v28 = vld [vmem:[%s1 + $0x24] sm:$0xf]
    %v29 = vld [vmem:[%s1 + $0x28] sm:$0xf]
    %v30 = vld [vmem:[%s1 + $0x2c] sm:$0xf]
    %v31 = vld [vmem:[%s1 + $0x30] sm:$0xf]
    %v32 = vld [vmem:[%s1 + $0x34] sm:$0xf]
    %v33 = vld [vmem:[%s1 + $0x38] sm:$0xf]
    %v34 = vld [vmem:[%s1 + $0x3c] sm:$0xf]
    %v35 = vld [vmem:[%s1 + $0x40] sm:$0xf]
    %v36 = vld [vmem:[%s1 + $0x44] sm:$0xf]
    %v37 = vld [vmem:[%s1 + $0x48] sm:$0xf]
    %v38 = vld [vmem:[%s1 + $0x4c] sm:$0xf]
    %v39 = vld [vmem:[%s1 + $0x50] sm:$0xf]
    %v40 = vld [vmem:[%s1 + $0x54] sm:$0xf]
    %v41 = vld [vmem:[%s1 + $0x58] sm:$0xf]
    %v42 = vld [vmem:[%s1 + $0x5c] sm:$0xf]
    %v43 = vld [vmem:[%s1 + $0x60] sm:$0xf]
    %v44 = vld [vmem:[%s1 + $0x64] sm:$0xf]
    %v45 = vld [vmem:[%s1 + $0x68] sm:$0xf]
    %v46 = vld [vmem:[%s1 + $0x6c] sm:$0xf]
    %v47 = vld [vmem:[%s1 + $0x70] sm:$0xf]
    %v48 = vld [vmem:[%s1 + $0x74] sm:$0xf]
    %v49 = vld [vmem:[%s1 + $0x78] sm:$0xf]
    %v50 = vld [vmem:[%s1 + $0x7c] sm:$0xf]
    %v51 = vld [vmem:[%s2] sm:$0x1]
    %v53 = vlaneseq
    %v54 = vshrl.u32 %v53, 7
    %v55 = vsub.s32 0, %v54
    %v56 = vrot.slane %v51, %v55
    %v60 = vunpack.c.l.s4 1966171168
    %v61 = vunpack.c.0.s8 %v60
    %v62 = vlaneseq
    %v63 = vshrl.u32 %v62, 7
    %v64 = vsub.s32 %v61, %v63
    %v65 = vrot.slane %v18, %v64
    %v66 = vcombine.high %v65, %v65
    %v68 = vunpack.c.l.s4 1966171168
    %v69 = vunpack.c.0.s8 %v68
    %v70 = vlaneseq
    %v71 = vshrl.u32 %v70, 7
    %v72 = vsub.s32 %v69, %v71
    %v73 = vrot.slane %v65, %v72
    %v75 = vunpack.c.l.s4 1966171168
    %v76 = vunpack.c.0.s8 %v75
    %v77 = vlaneseq
    %v78 = vshrl.u32 %v77, 7
    %v79 = vsub.s32 %v76, %v78
    %v80 = vrot.slane %v66, %v79
    %v115 = vunpack.c.l.b16 %v19
    %v116 = vunpack.c.l.b16 %v20
    %v117 = vunpack.c.l.b16 %v21
    %v118 = vunpack.c.l.b16 %v22
    %v119 = vunpack.c.l.b16 %v23
    %v120 = vunpack.c.l.b16 %v24
    %v121 = vunpack.c.l.b16 %v25
    %v122 = vunpack.c.l.b16 %v26
    %v123 = vunpack.c.l.b16 %v27
    %v124 = vunpack.c.l.b16 %v28
    %v125 = vunpack.c.l.b16 %v29
    %v126 = vunpack.c.l.b16 %v30
    %v127 = vunpack.c.l.b16 %v31
    %v128 = vunpack.c.l.b16 %v32
    %v129 = vunpack.c.l.b16 %v33
    %v130 = vunpack.c.l.b16 %v34
    %v131 = vunpack.c.l.b16 %v35
    %v132 = vunpack.c.l.b16 %v36
    %v133 = vunpack.c.l.b16 %v37
    %v134 = vunpack.c.l.b16 %v38
    %v135 = vunpack.c.l.b16 %v39
    %v136 = vunpack.c.l.b16 %v40
    %v137 = vunpack.c.l.b16 %v41
    %v138 = vunpack.c.l.b16 %v42
    %v139 = vunpack.c.l.b16 %v43
    %v140 = vunpack.c.l.b16 %v44
    %v141 = vunpack.c.l.b16 %v45
    %v142 = vunpack.c.l.b16 %v46
    %v143 = vunpack.c.l.b16 %v47
    %v144 = vunpack.c.l.b16 %v48
    %v145 = vunpack.c.l.b16 %v49
    %v146 = vunpack.c.l.b16 %v50
    %v147 = vpack.c.b16 %v116, %v115
    %v148 = vpack.c.b16 %v118, %v117
    %v149 = vpack.c.b16 %v120, %v119
    %v150 = vpack.c.b16 %v122, %v121
    %v151 = vpack.c.b16 %v124, %v123
    %v152 = vpack.c.b16 %v126, %v125
    %v153 = vpack.c.b16 %v128, %v127
    %v154 = vpack.c.b16 %v130, %v129
    %v155 = vpack.c.b16 %v132, %v131
    %v156 = vpack.c.b16 %v134, %v133
    %v157 = vpack.c.b16 %v136, %v135
    %v158 = vpack.c.b16 %v138, %v137
    %v159 = vpack.c.b16 %v140, %v139
    %v160 = vpack.c.b16 %v142, %v141
    %v161 = vpack.c.b16 %v144, %v143
    %v162 = vpack.c.b16 %v146, %v145
    %179 = vmatprep.subr.bf16.mxu0 0
    %180 = vmatpush1.bf16.msra.mxu0 %v147
    %181 = vmatprep.subr.bf16.mxu0 0
    %182 = vmatpush1.bf16.msra.mxu0 %v148
    %183 = vmatprep.subr.bf16.mxu0 0
    %184 = vmatpush1.bf16.msra.mxu0 %v149
    %185 = vmatprep.subr.bf16.mxu0 0
    %186 = vmatpush1.bf16.msra.mxu0 %v150
    %187 = vmatprep.subr.bf16.mxu0 0
    %188 = vmatpush1.bf16.msra.mxu0 %v151
    %189 = vmatprep.subr.bf16.mxu0 0
    %190 = vmatpush1.bf16.msra.mxu0 %v152
    %191 = vmatprep.subr.bf16.mxu0 0
    %192 = vmatpush1.bf16.msra.mxu0 %v153
    %193 = vmatprep.subr.bf16.mxu0 0
    %194 = vmatpush1.bf16.msra.mxu0 %v154
    %195 = vmatprep.subr.bf16.mxu0 0
    %196 = vmatpush1.bf16.msra.mxu0 %v155
    %197 = vmatprep.subr.bf16.mxu0 0
    %198 = vmatpush1.bf16.msra.mxu0 %v156
    %199 = vmatprep.subr.bf16.mxu0 0
    %200 = vmatpush1.bf16.msra.mxu0 %v157
    %201 = vmatprep.subr.bf16.mxu0 0
    %202 = vmatpush1.bf16.msra.mxu0 %v158
    %203 = vmatprep.subr.bf16.mxu0 0
    %204 = vmatpush1.bf16.msra.mxu0 %v159
    %205 = vmatprep.subr.bf16.mxu0 0
    %206 = vmatpush1.bf16.msra.mxu0 %v160
    %207 = vmatprep.subr.bf16.mxu0 0
    %208 = vmatpush1.bf16.msra.mxu0 %v161
    %209 = vmatprep.subr.bf16.mxu0 0
    %210 = vmatpush1.bf16.msra.mxu0 %v162
    %211 = vmatprep.mubr.bf16.mxu0 %v80
    %212 = vmatmul.mubr.bf16.gmra.mrb[0].mxu0 %v73
    %v213 = vpop.f32.mrb[0].mxu0
    %v214 = vadd.f32 %v56, %v213
    %v215 = vpop.f32.mrb[0].mxu0
    %v216 = vpop.f32.mrb[0].mxu0
    %v217 = vpop.f32.mrb[0].mxu0
    %218 = vdwg.mxu0
    %v219 = vtanh.pop %v214
    %v220 = vadd.f32 %v219, 1.0
    %v221 = vmul.f32 %v220, 0.5
    %v222 = vmul.f32 %v221, 9.0
    %v223 = vround.ne.pseudo %v222
    %v224 = vmul.f32 %v223, 2.0
    %v225 = vrcp.pop 9.0
    %v226 = vmul.f32 %v224, %v225
    %v227 = vsub.f32 %v226, 1.0
    %vm228 = vcmask 517120
    %229 = vst.msk [vmem:[%s3] sm:$0x3] %vm228, %v227
    %v230 = vsub.f32 %v227, %v219
    %v231 = vmul.f32 %v230, %v230
    %v232 = vsel %vm228, %v231, 0.0
    %233 = vadd.xlane.f32.xlu0 %v232
    %v234 = vpop.xlane.xlu0 %233
    %v235 = vrot.slane %v234, 4
    %v236 = vadd.f32 %v234, %v235
    %v237 = vrot.slane %v236, 2
    %v238 = vadd.f32 %v236, %v237
    %v239 = vrot.slane %v238, 1
    %v240 = vadd.f32 %v238, %v239
    %s241 = vtos %v240
    %v242 = vrcp.pop 128.0
    %s243 = vtos %v242
    %s244 = smul.f32 %s241, %s243
    %v245 = vstv %s244
    %vm246 = vcmask 0
    %247 = vst.msk [vmem:[#allocation2] sm:$0x1] %vm246, %v245
    // Predicated region
    $region14: #{fsq_vae_forward.14} parent=1 // pred_check
      _
    $region15: #{fsq_vae_forward.14} parent=1 // pred_check_branch
      %249 = sbr.rel (0) target = $region17
    $region16: #{fsq_vae_forward.14} parent=1 // pred_region
      _
    $region17: #{fsq_vae_forward.14} parent=1 // pred_fallthru
      _
    // Predicated region
    $region18: #{fsq_vae_forward.14} parent=1 // pred_check
      _
    $region19: #{fsq_vae_forward.14} parent=1 // pred_check_branch
      %251 = sbr.rel (0) target = $region21
    $region20: #{fsq_vae_forward.14} parent=1 // pred_region
      %s253 = ssub.s32 16, 16
      %254 = vsyncadd [#allocation3], %s253
      %s256 = sshll.u32 [#allocation2], 4
      %s257 = int_to_ptr.vmem [resolvable:$true] %s256
      %259 = dma.vmem_to_hbm [thread:$0]  %s257, 16, %s4, [#allocation3]
    $region21: #{fsq_vae_forward.14} parent=1 // pred_fallthru
      _
    // Predicated region
    $region22: #{fsq_vae_forward.14} parent=1 // pred_check
      _
    $region23: #{fsq_vae_forward.14} parent=1 // pred_check_branch
      %261 = sbr.rel (0) target = $region25
    $region24: #{fsq_vae_forward.14} parent=1 // pred_region
      _
    $region25: #{fsq_vae_forward.14} parent=1 // pred_fallthru
      _
    // Predicated region
    $region26: #{fsq_vae_forward.14} parent=1 // pred_check
      _
    $region27: #{fsq_vae_forward.14} parent=1 // pred_check_branch
      %263 = sbr.rel (0) target = $region29
    $region28: #{fsq_vae_forward.14} parent=1 // pred_region
      %264 = dma.done [#allocation3], 16
    $region29: #{fsq_vae_forward.14} parent=1 // pred_fallthru
      _
    %265 = vsyncpa [#allocation3], 1

// kernel: fsq_vae_forward.15
$region0: #{fsq_vae_forward.15}
  #allocation0 [shape = 'u32[]', space=smem, size = 0x4, offset = 0x4, fixed_abs, tag = 'smem constant byte address 0x4 - core index']
  #allocation1 [shape = 'u32[144,128]{1,0:T(1,128)}', space=vmem, size = 0x12000, scoped, tag = 'internal scratch']
  %s0 = inlined_call_operand.vmem [shape: bf16[2,64], index: 0, kind: input, shape index: {}]
  %s1 = inlined_call_operand.vmem [shape: bf16[64,256], index: 1, kind: input, shape index: {}]
  %s2 = inlined_call_operand.vmem [shape: f32[1,256], index: 2, kind: input, shape index: {}]
  %s3 = inlined_call_operand.vmem [shape: bf16[2,256], index: 3, kind: output, shape index: {}]
  %s4 = sld [smem:[#allocation0]]
  $region22: #{fsq_vae_forward.15} parent=0
    _
  %s6 = ssub.s32 1, %s4
  %s7 = scalar_select 0, %s6, %s4
  // Predicated region
  $region2: #{fsq_vae_forward.15} parent=0 // pred_check
    _
  $region3: #{fsq_vae_forward.15} parent=0 // pred_check_branch
    %9 = sbr.rel (0) target = $region5
  $region4: #{fsq_vae_forward.15} parent=0 // pred_region
    _
  $region5: #{fsq_vae_forward.15} parent=0 // pred_fallthru
    _
  // Predicated region
  $region6: #{fsq_vae_forward.15} parent=0 // pred_check
    _
  $region7: #{fsq_vae_forward.15} parent=0 // pred_check_branch
    %11 = sbr.rel (0) target = $region9
  $region8: #{fsq_vae_forward.15} parent=0 // pred_region
    _
  $region9: #{fsq_vae_forward.15} parent=0 // pred_fallthru
    _
  // Predicated region
  $region10: #{fsq_vae_forward.15} parent=0 // pred_check
    _
  $region11: #{fsq_vae_forward.15} parent=0 // pred_check_branch
    %13 = sbr.rel (0) target = $region13
  $region12: #{fsq_vae_forward.15} parent=0 // pred_region
    _
  $region13: #{fsq_vae_forward.15} parent=0 // pred_fallthru
    _
  %v15 = vld [vmem:[%s0] sm:$0x1]
  %v16 = vld [vmem:[%s1] sm:$0xff]
  %v17 = vld [vmem:[%s1 + $0x8] sm:$0xff]
  %v18 = vld [vmem:[%s1 + $0x10] sm:$0xff]
  %v19 = vld [vmem:[%s1 + $0x18] sm:$0xff]
  %v20 = vld [vmem:[%s1 + $0x20] sm:$0xff]
  %v21 = vld [vmem:[%s1 + $0x28] sm:$0xff]
  %v22 = vld [vmem:[%s1 + $0x30] sm:$0xff]
  %v23 = vld [vmem:[%s1 + $0x38] sm:$0xff]
  %v24 = vld [vmem:[%s2] sm:$0x3]
  %v26 = vlaneseq
  %v27 = vshrl.u32 %v26, 7
  %v28 = vsub.s32 0, %v27
  %v29 = vrot.slane %v24, %v28
  %v30 = vlaneseq
  %v31 = vshrl.u32 %v30, 7
  %v32 = vsub.s32 1, %v31
  %v33 = vrot.slane %v24, %v32
  %v44 = vunpack.c.l.b16 %v16
  %v45 = vunpack.c.h.b16 %v16
  %v46 = vunpack.c.l.b16 %v17
  %v47 = vunpack.c.h.b16 %v17
  %v48 = vunpack.c.l.b16 %v18
  %v49 = vunpack.c.h.b16 %v18
  %v50 = vunpack.c.l.b16 %v19
  %v51 = vunpack.c.h.b16 %v19
  %v52 = vunpack.c.l.b16 %v20
  %v53 = vunpack.c.h.b16 %v20
  %v54 = vunpack.c.l.b16 %v21
  %v55 = vunpack.c.h.b16 %v21
  %v56 = vunpack.c.l.b16 %v22
  %v57 = vunpack.c.h.b16 %v22
  %v58 = vunpack.c.l.b16 %v23
  %v59 = vunpack.c.h.b16 %v23
  %v60 = vpack.c.b16 %v46, %v44
  %v61 = vpack.c.b16 %v47, %v45
  %v62 = vpack.c.b16 %v50, %v48
  %v63 = vpack.c.b16 %v51, %v49
  %v64 = vpack.c.b16 %v54, %v52
  %v65 = vpack.c.b16 %v55, %v53
  %v66 = vpack.c.b16 %v58, %v56
  %v67 = vpack.c.b16 %v59, %v57
  %vm76 = vcmask 523264
  %v78 = vsel %vm76, %v15, 0
  %80 = vmatprep.subr.bf16.mxu0 %v61
  %81 = vmatpush1.bf16.msra.mxu0 %v60
  %82 = vmatprep.subr.bf16.mxu0 %v63
  %83 = vmatpush1.bf16.msra.mxu0 %v62
  %84 = vmatprep.subr.bf16.mxu0 %v65
  %85 = vmatpush1.bf16.msra.mxu0 %v64
  %86 = vmatprep.subr.bf16.mxu0 %v67
  %87 = vmatpush1.bf16.msra.mxu0 %v66
  %88 = vmatprep.subr.bf16.mxu0 0
  %89 = vmatpush1.bf16.msra.mxu0 0
  %90 = vmatprep.subr.bf16.mxu0 0
  %91 = vmatpush1.bf16.msra.mxu0 0
  %92 = vmatprep.subr.bf16.mxu0 0
  %93 = vmatpush1.bf16.msra.mxu0 0
  %94 = vmatprep.subr.bf16.mxu0 0
  %95 = vmatpush1.bf16.msra.mxu0 0
  %96 = vmatprep.subr.bf16.mxu0 0
  %97 = vmatpush1.bf16.msra.mxu0 0
  %98 = vmatprep.subr.bf16.mxu0 0
  %99 = vmatpush1.bf16.msra.mxu0 0
  %100 = vmatprep.subr.bf16.mxu0 0
  %101 = vmatpush1.bf16.msra.mxu0 0
  %102 = vmatprep.subr.bf16.mxu0 0
  %103 = vmatpush1.bf16.msra.mxu0 0
  %104 = vmatprep.subr.bf16.mxu0 0
  %105 = vmatpush1.bf16.msra.mxu0 0
  %106 = vmatprep.subr.bf16.mxu0 0
  %107 = vmatpush1.bf16.msra.mxu0 0
  %108 = vmatprep.subr.bf16.mxu0 0
  %109 = vmatpush1.bf16.msra.mxu0 0
  %110 = vmatprep.subr.bf16.mxu0 0
  %111 = vmatpush1.bf16.msra.mxu0 0
  %112 = vmatprep.mubr.bf16.mxu0 0
  %113 = vmatmul.mubr.bf16.gmra.mrb[0].mxu0 %v78
  %v114 = vpop.f32.mrb[0].mxu0
  %v115 = vadd.f32 %v29, %v114
  %v116 = vpop.f32.mrb[0].mxu0
  %v117 = vadd.f32 %v33, %v116
  %v118 = vpop.f32.mrb[0].mxu0
  %v119 = vpop.f32.mrb[0].mxu0
  %120 = vdwg.mxu0
  %v121 = vpack.c.bf16 %v115, %v115
  %v122 = vpack.c.bf16 %v117, %v117
  %v125 = vcombine.low %v121, %v122
  %v127 = vunpack.c.l.s4 1966171168
  %v128 = vunpack.c.0.s8 %v127
  %v129 = vlaneseq
  %v130 = vshrl.u32 %v129, 7
  %v131 = vsub.s32 %v128, %v130
  %v132 = vrot.slane %v125, %v131
  %v134 = vunpack.c.l.s4 1966171168
  %v135 = vunpack.c.0.s8 %v134
  %v136 = vlaneseq
  %v137 = vshrl.u32 %v136, 7
  %v138 = vsub.s32 %v135, %v137
  %v139 = vrot.slane %v132, %v138
  %141 = vst [vmem:[%s3] sm:$0x3] %v139
  // Predicated region
  $region14: #{fsq_vae_forward.15} parent=0 // pred_check
    _
  $region15: #{fsq_vae_forward.15} parent=0 // pred_check_branch
    %143 = sbr.rel (0) target = $region17
  $region16: #{fsq_vae_forward.15} parent=0 // pred_region
    _
  $region17: #{fsq_vae_forward.15} parent=0 // pred_fallthru
    _
  // Predicated region
  $region18: #{fsq_vae_forward.15} parent=0 // pred_check
    _
  $region19: #{fsq_vae_forward.15} parent=0 // pred_check_branch
    %145 = sbr.rel (0) target = $region21
  $region20: #{fsq_vae_forward.15} parent=0 // pred_region
    _
  $region21: #{fsq_vae_forward.15} parent=0 // pred_fallthru
    _

// kernel: fsq_vae_forward.16
$region0: #{fsq_vae_forward.16}
  #allocation0 [shape = 'u32[]', space=smem, size = 0x4, offset = 0x4, fixed_abs, tag = 'smem constant byte address 0x4 - core index']
  #allocation1 [shape = 'u32[144,128]{1,0:T(1,128)}', space=vmem, size = 0x12000, scoped, tag = 'internal scratch']
  %s0 = inlined_call_operand.vmem [shape: bf16[8,576], index: 0, kind: input, shape index: {}]
  %s1 = inlined_call_operand.vmem [shape: bf16[576,256], index: 1, kind: input, shape index: {}]
  %s2 = inlined_call_operand.vmem [shape: f32[1,256], index: 2, kind: input, shape index: {}]
  %s3 = inlined_call_operand.vmem [shape: bf16[8,256], index: 3, kind: output, shape index: {}]
  %s4 = sld [smem:[#allocation0]]
  $region22: #{fsq_vae_forward.16} parent=0
    _
  %s6 = ssub.s32 1, %s4
  %s7 = scalar_select 0, %s6, %s4
  // Predicated region
  $region2: #{fsq_vae_forward.16} parent=0 // pred_check
    _
  $region3: #{fsq_vae_forward.16} parent=0 // pred_check_branch
    %9 = sbr.rel (0) target = $region5
  $region4: #{fsq_vae_forward.16} parent=0 // pred_region
    _
  $region5: #{fsq_vae_forward.16} parent=0 // pred_fallthru
    _
  // Predicated region
  $region6: #{fsq_vae_forward.16} parent=0 // pred_check
    _
  $region7: #{fsq_vae_forward.16} parent=0 // pred_check_branch
    %11 = sbr.rel (0) target = $region9
  $region8: #{fsq_vae_forward.16} parent=0 // pred_region
    _
  $region9: #{fsq_vae_forward.16} parent=0 // pred_fallthru
    _
  // Predicated region
  $region10: #{fsq_vae_forward.16} parent=0 // pred_check
    _
  $region11: #{fsq_vae_forward.16} parent=0 // pred_check_branch
    %13 = sbr.rel (0) target = $region13
  $region12: #{fsq_vae_forward.16} parent=0 // pred_region
    _
  $region13: #{fsq_vae_forward.16} parent=0 // pred_fallthru
    _
  %v15 = vld [vmem:[%s0] sm:$0xff]
  %v16 = vld [vmem:[%s0 + $0x8] sm:$0xff]
  %v17 = vld [vmem:[%s0 + $0x10] sm:$0xf]
  %v18 = vld [vmem:[%s1] sm:$0xff]
  %v19 = vld [vmem:[%s1 + $0x8] sm:$0xff]
  %v20 = vld [vmem:[%s1 + $0x10] sm:$0xff]
  %v21 = vld [vmem:[%s1 + $0x18] sm:$0xff]
  %v22 = vld [vmem:[%s1 + $0x20] sm:$0xff]
  %v23 = vld [vmem:[%s1 + $0x28] sm:$0xff]
  %v24 = vld [vmem:[%s1 + $0x30] sm:$0xff]
  %v25 = vld [vmem:[%s1 + $0x38] sm:$0xff]
  %v26 = vld [vmem:[%s1 + $0x40] sm:$0xff]
  %v27 = vld [vmem:[%s1 + $0x48] sm:$0xff]
  %v28 = vld [vmem:[%s1 + $0x50] sm:$0xff]
  %v29 = vld [vmem:[%s1 + $0x58] sm:$0xff]
  %v30 = vld [vmem:[%s1 + $0x60] sm:$0xff]
  %v31 = vld [vmem:[%s1 + $0x68] sm:$0xff]
  %v32 = vld [vmem:[%s1 + $0x70] sm:$0xff]
  %v33 = vld [vmem:[%s1 + $0x78] sm:$0xff]
  %v34 = vld [vmem:[%s1 + $0x80] sm:$0xff]
  %v35 = vld [vmem:[%s1 + $0x88] sm:$0xff]
  %v36 = vld [vmem:[%s1 + $0x90] sm:$0xff]
  %v37 = vld [vmem:[%s1 + $0x98] sm:$0xff]
  %v38 = vld [vmem:[%s1 + $0xa0] sm:$0xff]
  %v39 = vld [vmem:[%s1 + $0xa8] sm:$0xff]
  %v40 = vld [vmem:[%s1 + $0xb0] sm:$0xff]
  %v41 = vld [vmem:[%s1 + $0xb8] sm:$0xff]
  %v42 = vld [vmem:[%s1 + $0xc0] sm:$0xff]
  %v43 = vld [vmem:[%s1 + $0xc8] sm:$0xff]
  %v44 = vld [vmem:[%s1 + $0xd0] sm:$0xff]
  %v45 = vld [vmem:[%s1 + $0xd8] sm:$0xff]
  %v46 = vld [vmem:[%s1 + $0xe0] sm:$0xff]
  %v47 = vld [vmem:[%s1 + $0xe8] sm:$0xff]
  %v48 = vld [vmem:[%s1 + $0xf0] sm:$0xff]
  %v49 = vld [vmem:[%s1 + $0xf8] sm:$0xff]
  %v50 = vld [vmem:[%s1 + $0x100] sm:$0xff]
  %v51 = vld [vmem:[%s1 + $0x108] sm:$0xff]
  %v52 = vld [vmem:[%s1 + $0x110] sm:$0xff]
  %v53 = vld [vmem:[%s1 + $0x118] sm:$0xff]
  %v54 = vld [vmem:[%s1 + $0x120] sm:$0xff]
  %v55 = vld [vmem:[%s1 + $0x128] sm:$0xff]
  %v56 = vld [vmem:[%s1 + $0x130] sm:$0xff]
  %v57 = vld [vmem:[%s1 + $0x138] sm:$0xff]
  %v58 = vld [vmem:[%s1 + $0x140] sm:$0xff]
  %v59 = vld [vmem:[%s1 + $0x148] sm:$0xff]
  %v60 = vld [vmem:[%s1 + $0x150] sm:$0xff]
  %v61 = vld [vmem:[%s1 + $0x158] sm:$0xff]
  %v62 = vld [vmem:[%s1 + $0x160] sm:$0xff]
  %v63 = vld [vmem:[%s1 + $0x168] sm:$0xff]
  %v64 = vld [vmem:[%s1 + $0x170] sm:$0xff]
  %v65 = vld [vmem:[%s1 + $0x178] sm:$0xff]
  %v66 = vld [vmem:[%s1 + $0x180] sm:$0xff]
  %v67 = vld [vmem:[%s1 + $0x188] sm:$0xff]
  %v68 = vld [vmem:[%s1 + $0x190] sm:$0xff]
  %v69 = vld [vmem:[%s1 + $0x198] sm:$0xff]
  %v70 = vld [vmem:[%s1 + $0x1a0] sm:$0xff]
  %v71 = vld [vmem:[%s1 + $0x1a8] sm:$0xff]
  %v72 = vld [vmem:[%s1 + $0x1b0] sm:$0xff]
  %v73 = vld [vmem:[%s1 + $0x1b8] sm:$0xff]
  %v74 = vld [vmem:[%s1 + $0x1c0] sm:$0xff]
  %v75 = vld [vmem:[%s1 + $0x1c8] sm:$0xff]
  %v76 = vld [vmem:[%s1 + $0x1d0] sm:$0xff]
  %v77 = vld [vmem:[%s1 + $0x1d8] sm:$0xff]
  %v78 = vld [vmem:[%s1 + $0x1e0] sm:$0xff]
  %v79 = vld [vmem:[%s1 + $0x1e8] sm:$0xff]
  %v80 = vld [vmem:[%s1 + $0x1f0] sm:$0xff]
  %v81 = vld [vmem:[%s1 + $0x1f8] sm:$0xff]
  %v82 = vld [vmem:[%s1 + $0x200] sm:$0xff]
  %v83 = vld [vmem:[%s1 + $0x208] sm:$0xff]
  %v84 = vld [vmem:[%s1 + $0x210] sm:$0xff]
  %v85 = vld [vmem:[%s1 + $0x218] sm:$0xff]
  %v86 = vld [vmem:[%s1 + $0x220] sm:$0xff]
  %v87 = vld [vmem:[%s1 + $0x228] sm:$0xff]
  %v88 = vld [vmem:[%s1 + $0x230] sm:$0xff]
  %v89 = vld [vmem:[%s1 + $0x238] sm:$0xff]
  %v90 = vld [vmem:[%s2] sm:$0x3]
  %v92 = vlaneseq
  %v93 = vshrl.u32 %v92, 7
  %v94 = vsub.s32 0, %v93
  %v95 = vrot.slane %v90, %v94
  %v96 = vlaneseq
  %v97 = vshrl.u32 %v96, 7
  %v98 = vsub.s32 1, %v97
  %v99 = vrot.slane %v90, %v98
  %v105 = vunpack.c.l.b16 %v15
  %v106 = vunpack.c.h.b16 %v15
  %v107 = vunpack.c.l.b16 %v16
  %v108 = vunpack.c.h.b16 %v16
  %v109 = vunpack.c.l.b16 %v17
  %v110 = vpack.c.b16 %v105, %v105
  %v111 = vpack.c.b16 %v106, %v106
  %v112 = vpack.c.b16 %v107, %v107
  %v113 = vpack.c.b16 %v108, %v108
  %v114 = vpack.c.b16 %v109, %v109
  %v191 = vunpack.c.l.b16 %v18
  %v192 = vunpack.c.h.b16 %v18
  %v193 = vunpack.c.l.b16 %v19
  %v194 = vunpack.c.h.b16 %v19
  %v195 = vunpack.c.l.b16 %v20
  %v196 = vunpack.c.h.b16 %v20
  %v197 = vunpack.c.l.b16 %v21
  %v198 = vunpack.c.h.b16 %v21
  %v199 = vunpack.c.l.b16 %v22
  %v200 = vunpack.c.h.b16 %v22
  %v201 = vunpack.c.l.b16 %v23
  %v202 = vunpack.c.h.b16 %v23
  %v203 = vunpack.c.l.b16 %v24
  %v204 = vunpack.c.h.b16 %v24
  %v205 = vunpack.c.l.b16 %v25
  %v206 = vunpack.c.h.b16 %v25
  %v207 = vunpack.c.l.b16 %v26
  %v208 = vunpack.c.h.b16 %v26
  %v209 = vunpack.c.l.b16 %v27
  %v210 = vunpack.c.h.b16 %v27
  %v211 = vunpack.c.l.b16 %v28
  %v212 = vunpack.c.h.b16 %v28
  %v213 = vunpack.c.l.b16 %v29
  %v214 = vunpack.c.h.b16 %v29
  %v215 = vunpack.c.l.b16 %v30
  %v216 = vunpack.c.h.b16 %v30
  %v217 = vunpack.c.l.b16 %v31
  %v218 = vunpack.c.h.b16 %v31
  %v219 = vunpack.c.l.b16 %v32
  %v220 = vunpack.c.h.b16 %v32
  %v221 = vunpack.c.l.b16 %v33
  %v222 = vunpack.c.h.b16 %v33
  %v223 = vunpack.c.l.b16 %v34
  %v224 = vunpack.c.h.b16 %v34
  %v225 = vunpack.c.l.b16 %v35
  %v226 = vunpack.c.h.b16 %v35
  %v227 = vunpack.c.l.b16 %v36
  %v228 = vunpack.c.h.b16 %v36
  %v229 = vunpack.c.l.b16 %v37
  %v230 = vunpack.c.h.b16 %v37
  %v231 = vunpack.c.l.b16 %v38
  %v232 = vunpack.c.h.b16 %v38
  %v233 = vunpack.c.l.b16 %v39
  %v234 = vunpack.c.h.b16 %v39
  %v235 = vunpack.c.l.b16 %v40
  %v236 = vunpack.c.h.b16 %v40
  %v237 = vunpack.c.l.b16 %v41
  %v238 = vunpack.c.h.b16 %v41
  %v239 = vunpack.c.l.b16 %v42
  %v240 = vunpack.c.h.b16 %v42
  %v241 = vunpack.c.l.b16 %v43
  %v242 = vunpack.c.h.b16 %v43
  %v243 = vunpack.c.l.b16 %v44
  %v244 = vunpack.c.h.b16 %v44
  %v245 = vunpack.c.l.b16 %v45
  %v246 = vunpack.c.h.b16 %v45
  %v247 = vunpack.c.l.b16 %v46
  %v248 = vunpack.c.h.b16 %v46
  %v249 = vunpack.c.l.b16 %v47
  %v250 = vunpack.c.h.b16 %v47
  %v251 = vunpack.c.l.b16 %v48
  %v252 = vunpack.c.h.b16 %v48
  %v253 = vunpack.c.l.b16 %v49
  %v254 = vunpack.c.h.b16 %v49
  %v255 = vunpack.c.l.b16 %v50
  %v256 = vunpack.c.h.b16 %v50
  %v257 = vunpack.c.l.b16 %v51
  %v258 = vunpack.c.h.b16 %v51
  %v259 = vunpack.c.l.b16 %v52
  %v260 = vunpack.c.h.b16 %v52
  %v261 = vunpack.c.l.b16 %v53
  %v262 = vunpack.c.h.b16 %v53
  %v263 = vunpack.c.l.b16 %v54
  %v264 = vunpack.c.h.b16 %v54
  %v265 = vunpack.c.l.b16 %v55
  %v266 = vunpack.c.h.b16 %v55
  %v267 = vunpack.c.l.b16 %v56
  %v268 = vunpack.c.h.b16 %v56
  %v269 = vunpack.c.l.b16 %v57
  %v270 = vunpack.c.h.b16 %v57
  %v271 = vunpack.c.l.b16 %v58
  %v272 = vunpack.c.h.b16 %v58
  %v273 = vunpack.c.l.b16 %v59
  %v274 = vunpack.c.h.b16 %v59
  %v275 = vunpack.c.l.b16 %v60
  %v276 = vunpack.c.h.b16 %v60
  %v277 = vunpack.c.l.b16 %v61
  %v278 = vunpack.c.h.b16 %v61
  %v279 = vunpack.c.l.b16 %v62
  %v280 = vunpack.c.h.b16 %v62
  %v281 = vunpack.c.l.b16 %v63
  %v282 = vunpack.c.h.b16 %v63
  %v283 = vunpack.c.l.b16 %v64
  %v284 = vunpack.c.h.b16 %v64
  %v285 = vunpack.c.l.b16 %v65
  %v286 = vunpack.c.h.b16 %v65
  %v287 = vunpack.c.l.b16 %v66
  %v288 = vunpack.c.h.b16 %v66
  %v289 = vunpack.c.l.b16 %v67
  %v290 = vunpack.c.h.b16 %v67
  %v291 = vunpack.c.l.b16 %v68
  %v292 = vunpack.c.h.b16 %v68
  %v293 = vunpack.c.l.b16 %v69
  %v294 = vunpack.c.h.b16 %v69
  %v295 = vunpack.c.l.b16 %v70
  %v296 = vunpack.c.h.b16 %v70
  %v297 = vunpack.c.l.b16 %v71
  %v298 = vunpack.c.h.b16 %v71
  %v299 = vunpack.c.l.b16 %v72
  %v300 = vunpack.c.h.b16 %v72
  %v301 = vunpack.c.l.b16 %v73
  %v302 = vunpack.c.h.b16 %v73
  %v303 = vunpack.c.l.b16 %v74
  %v304 = vunpack.c.h.b16 %v74
  %v305 = vunpack.c.l.b16 %v75
  %v306 = vunpack.c.h.b16 %v75
  %v307 = vunpack.c.l.b16 %v76
  %v308 = vunpack.c.h.b16 %v76
  %v309 = vunpack.c.l.b16 %v77
  %v310 = vunpack.c.h.b16 %v77
  %v311 = vunpack.c.l.b16 %v78
  %v312 = vunpack.c.h.b16 %v78
  %v313 = vunpack.c.l.b16 %v79
  %v314 = vunpack.c.h.b16 %v79
  %v315 = vunpack.c.l.b16 %v80
  %v316 = vunpack.c.h.b16 %v80
  %v317 = vunpack.c.l.b16 %v81
  %v318 = vunpack.c.h.b16 %v81
  %v319 = vunpack.c.l.b16 %v82
  %v320 = vunpack.c.h.b16 %v82
  %v321 = vunpack.c.l.b16 %v83
  %v322 = vunpack.c.h.b16 %v83
  %v323 = vunpack.c.l.b16 %v84
  %v324 = vunpack.c.h.b16 %v84
  %v325 = vunpack.c.l.b16 %v85
  %v326 = vunpack.c.h.b16 %v85
  %v327 = vunpack.c.l.b16 %v86
  %v328 = vunpack.c.h.b16 %v86
  %v329 = vunpack.c.l.b16 %v87
  %v330 = vunpack.c.h.b16 %v87
  %v331 = vunpack.c.l.b16 %v88
  %v332 = vunpack.c.h.b16 %v88
  %v333 = vunpack.c.l.b16 %v89
  %v334 = vunpack.c.h.b16 %v89
  %v335 = vpack.c.b16 %v193, %v191
  %v336 = vpack.c.b16 %v194, %v192
  %v337 = vpack.c.b16 %v197, %v195
  %v338 = vpack.c.b16 %v198, %v196
  %v339 = vpack.c.b16 %v201, %v199
  %v340 = vpack.c.b16 %v202, %v200
  %v341 = vpack.c.b16 %v205, %v203
  %v342 = vpack.c.b16 %v206, %v204
  %v343 = vpack.c.b16 %v209, %v207
  %v344 = vpack.c.b16 %v210, %v208
  %v345 = vpack.c.b16 %v213, %v211
  %v346 = vpack.c.b16 %v214, %v212
  %v347 = vpack.c.b16 %v217, %v215
  %v348 = vpack.c.b16 %v218, %v216
  %v349 = vpack.c.b16 %v221, %v219
  %v350 = vpack.c.b16 %v222, %v220
  %v351 = vpack.c.b16 %v225, %v223
  %v352 = vpack.c.b16 %v226, %v224
  %v353 = vpack.c.b16 %v229, %v227
  %v354 = vpack.c.b16 %v230, %v228
  %v355 = vpack.c.b16 %v233, %v231
  %v356 = vpack.c.b16 %v234, %v232
  %v357 = vpack.c.b16 %v237, %v235
  %v358 = vpack.c.b16 %v238, %v236
  %v359 = vpack.c.b16 %v241, %v239
  %v360 = vpack.c.b16 %v242, %v240
  %v361 = vpack.c.b16 %v245, %v243
  %v362 = vpack.c.b16 %v246, %v244
  %v363 = vpack.c.b16 %v249, %v247
  %v364 = vpack.c.b16 %v250, %v248
  %v365 = vpack.c.b16 %v253, %v251
  %v366 = vpack.c.b16 %v254, %v252
  %v367 = vpack.c.b16 %v257, %v255
  %v368 = vpack.c.b16 %v258, %v256
  %v369 = vpack.c.b16 %v261, %v259
  %v370 = vpack.c.b16 %v262, %v260
  %v371 = vpack.c.b16 %v265, %v263
  %v372 = vpack.c.b16 %v266, %v264
  %v373 = vpack.c.b16 %v269, %v267
  %v374 = vpack.c.b16 %v270, %v268
  %v375 = vpack.c.b16 %v273, %v271
  %v376 = vpack.c.b16 %v274, %v272
  %v377 = vpack.c.b16 %v277, %v275
  %v378 = vpack.c.b16 %v278, %v276
  %v379 = vpack.c.b16 %v281, %v279
  %v380 = vpack.c.b16 %v282, %v280
  %v381 = vpack.c.b16 %v285, %v283
  %v382 = vpack.c.b16 %v286, %v284
  %v383 = vpack.c.b16 %v289, %v287
  %v384 = vpack.c.b16 %v290, %v288
  %v385 = vpack.c.b16 %v293, %v291
  %v386 = vpack.c.b16 %v294, %v292
  %v387 = vpack.c.b16 %v297, %v295
  %v388 = vpack.c.b16 %v298, %v296
  %v389 = vpack.c.b16 %v301, %v299
  %v390 = vpack.c.b16 %v302, %v300
  %v391 = vpack.c.b16 %v305, %v303
  %v392 = vpack.c.b16 %v306, %v304
  %v393 = vpack.c.b16 %v309, %v307
  %v394 = vpack.c.b16 %v310, %v308
  %v395 = vpack.c.b16 %v313, %v311
  %v396 = vpack.c.b16 %v314, %v312
  %v397 = vpack.c.b16 %v317, %v315
  %v398 = vpack.c.b16 %v318, %v316
  %v399 = vpack.c.b16 %v321, %v319
  %v400 = vpack.c.b16 %v322, %v320
  %v401 = vpack.c.b16 %v325, %v323
  %v402 = vpack.c.b16 %v326, %v324
  %v403 = vpack.c.b16 %v329, %v327
  %v404 = vpack.c.b16 %v330, %v328
  %v405 = vpack.c.b16 %v333, %v331
  %v406 = vpack.c.b16 %v334, %v332
  %vm479 = vcmask 523264
  %v481 = vsel %vm479, %v114, 0
  %483 = vmatprep.subr.bf16.mxu0 %v336
  %484 = vmatpush1.bf16.msra.mxu0 %v335
  %485 = vmatprep.subr.bf16.mxu0 %v338
  %486 = vmatpush1.bf16.msra.mxu0 %v337
  %487 = vmatprep.subr.bf16.mxu0 %v340
  %488 = vmatpush1.bf16.msra.mxu0 %v339
  %489 = vmatprep.subr.bf16.mxu0 %v342
  %490 = vmatpush1.bf16.msra.mxu0 %v341
  %491 = vmatprep.subr.bf16.mxu0 %v344
  %492 = vmatpush1.bf16.msra.mxu0 %v343
  %493 = vmatprep.subr.bf16.mxu0 %v346
  %494 = vmatpush1.bf16.msra.mxu0 %v345
  %495 = vmatprep.subr.bf16.mxu0 %v348
  %496 = vmatpush1.bf16.msra.mxu0 %v347
  %497 = vmatprep.subr.bf16.mxu0 %v350
  %498 = vmatpush1.bf16.msra.mxu0 %v349
  %499 = vmatprep.subr.bf16.mxu0 %v352
  %500 = vmatpush1.bf16.msra.mxu0 %v351
  %501 = vmatprep.subr.bf16.mxu0 %v354
  %502 = vmatpush1.bf16.msra.mxu0 %v353
  %503 = vmatprep.subr.bf16.mxu0 %v356
  %504 = vmatpush1.bf16.msra.mxu0 %v355
  %505 = vmatprep.subr.bf16.mxu0 %v358
  %506 = vmatpush1.bf16.msra.mxu0 %v357
  %507 = vmatprep.subr.bf16.mxu0 %v360
  %508 = vmatpush1.bf16.msra.mxu0 %v359
  %509 = vmatprep.subr.bf16.mxu0 %v362
  %510 = vmatpush1.bf16.msra.mxu0 %v361
  %511 = vmatprep.subr.bf16.mxu0 %v364
  %512 = vmatpush1.bf16.msra.mxu0 %v363
  %513 = vmatprep.subr.bf16.mxu0 %v366
  %514 = vmatpush1.bf16.msra.mxu0 %v365
  %515 = vmatprep.mubr.bf16.mxu0 %v111
  %516 = vmatmul.mubr.bf16.gmra.mrb[0].mxu0 %v110
  %v517 = vpop.f32.mrb[0].mxu0
  %v518 = vadd.f32 %v95, %v517
  %v519 = vpop.f32.mrb[0].mxu0
  %v520 = vadd.f32 %v99, %v519
  %v521 = vpop.f32.mrb[0].mxu0
  %v522 = vpop.f32.mrb[0].mxu0
  %523 = vdwg.mxu0
  %524 = vmatprep.subr.bf16.mxu0 %v368
  %525 = vmatpush1.bf16.msra.mxu0 %v367
  %526 = vmatprep.subr.bf16.mxu0 %v370
  %527 = vmatpush1.bf16.msra.mxu0 %v369
  %528 = vmatprep.subr.bf16.mxu0 %v372
  %529 = vmatpush1.bf16.msra.mxu0 %v371
  %530 = vmatprep.subr.bf16.mxu0 %v374
  %531 = vmatpush1.bf16.msra.mxu0 %v373
  %532 = vmatprep.subr.bf16.mxu0 %v376
  %533 = vmatpush1.bf16.msra.mxu0 %v375
  %534 = vmatprep.subr.bf16.mxu0 %v378
  %535 = vmatpush1.bf16.msra.mxu0 %v377
  %536 = vmatprep.subr.bf16.mxu0 %v380
  %537 = vmatpush1.bf16.msra.mxu0 %v379
  %538 = vmatprep.subr.bf16.mxu0 %v382
  %539 = vmatpush1.bf16.msra.mxu0 %v381
  %540 = vmatprep.subr.bf16.mxu0 %v384
  %541 = vmatpush1.bf16.msra.mxu0 %v383
  %542 = vmatprep.subr.bf16.mxu0 %v386
  %543 = vmatpush1.bf16.msra.mxu0 %v385
  %544 = vmatprep.subr.bf16.mxu0 %v388
  %545 = vmatpush1.bf16.msra.mxu0 %v387
  %546 = vmatprep.subr.bf16.mxu0 %v390
  %547 = vmatpush1.bf16.msra.mxu0 %v389
  %548 = vmatprep.subr.bf16.mxu0 %v392
  %549 = vmatpush1.bf16.msra.mxu0 %v391
  %550 = vmatprep.subr.bf16.mxu0 %v394
  %551 = vmatpush1.bf16.msra.mxu0 %v393
  %552 = vmatprep.subr.bf16.mxu0 %v396
  %553 = vmatpush1.bf16.msra.mxu0 %v395
  %554 = vmatprep.subr.bf16.mxu0 %v398
  %555 = vmatpush1.bf16.msra.mxu0 %v397
  %556 = vmatprep.mubr.bf16.mxu0 %v113
  %557 = vmatmul.mubr.bf16.gmra.mrb[0].mxu0 %v112
  %v558 = vpop.f32.mrb[0].mxu0
  %v559 = vadd.f32 %v518, %v558
  %v560 = vpop.f32.mrb[0].mxu0
  %v561 = vadd.f32 %v520, %v560
  %v562 = vpop.f32.mrb[0].mxu0
  %v563 = vpop.f32.mrb[0].mxu0
  %564 = vdwg.mxu0
  %565 = vmatprep.subr.bf16.mxu0 %v400
  %566 = vmatpush1.bf16.msra.mxu0 %v399
  %567 = vmatprep.subr.bf16.mxu0 %v402
  %568 = vmatpush1.bf16.msra.mxu0 %v401
  %569 = vmatprep.subr.bf16.mxu0 %v404
  %570 = vmatpush1.bf16.msra.mxu0 %v403
  %571 = vmatprep.subr.bf16.mxu0 %v406
  %572 = vmatpush1.bf16.msra.mxu0 %v405
  %573 = vmatprep.subr.bf16.mxu0 0
  %574 = vmatpush1.bf16.msra.mxu0 0
  %575 = vmatprep.subr.bf16.mxu0 0
  %576 = vmatpush1.bf16.msra.mxu0 0
  %577 = vmatprep.subr.bf16.mxu0 0
  %578 = vmatpush1.bf16.msra.mxu0 0
  %579 = vmatprep.subr.bf16.mxu0 0
  %580 = vmatpush1.bf16.msra.mxu0 0
  %581 = vmatprep.subr.bf16.mxu0 0
  %582 = vmatpush1.bf16.msra.mxu0 0
  %583 = vmatprep.subr.bf16.mxu0 0
  %584 = vmatpush1.bf16.msra.mxu0 0
  %585 = vmatprep.subr.bf16.mxu0 0
  %586 = vmatpush1.bf16.msra.mxu0 0
  %587 = vmatprep.subr.bf16.mxu0 0
  %588 = vmatpush1.bf16.msra.mxu0 0
  %589 = vmatprep.subr.bf16.mxu0 0
  %590 = vmatpush1.bf16.msra.mxu0 0
  %591 = vmatprep.subr.bf16.mxu0 0
  %592 = vmatpush1.bf16.msra.mxu0 0
  %593 = vmatprep.subr.bf16.mxu0 0
  %594 = vmatpush1.bf16.msra.mxu0 0
  %595 = vmatprep.subr.bf16.mxu0 0
  %596 = vmatpush1.bf16.msra.mxu0 0
  %597 = vmatprep.mubr.bf16.mxu0 0
  %598 = vmatmul.mubr.bf16.gmra.mrb[0].mxu0 %v481
  %v599 = vpop.f32.mrb[0].mxu0
  %v600 = vadd.f32 %v559, %v599
  %v601 = vpop.f32.mrb[0].mxu0
  %v602 = vadd.f32 %v561, %v601
  %v603 = vpop.f32.mrb[0].mxu0
  %v604 = vpop.f32.mrb[0].mxu0
  %605 = vdwg.mxu0
  %v606 = vmax.f32 %v600, 0.0
  %v607 = vmax.f32 %v602, 0.0
  %v608 = vpack.c.bf16 %v606, %v606
  %v609 = vpack.c.bf16 %v607, %v607
  %v612 = vunpack.c.l.b16 %v608
  %v613 = vunpack.c.l.b16 %v609
  %v614 = vpack.c.b16 %v613, %v612
  %616 = vst [vmem:[%s3] sm:$0xff] %v614
  // Predicated region
  $region14: #{fsq_vae_forward.16} parent=0 // pred_check
    _
  $region15: #{fsq_vae_forward.16} parent=0 // pred_check_branch
    %618 = sbr.rel (0) target = $region17
  $region16: #{fsq_vae_forward.16} parent=0 // pred_region
    _
  $region17: #{fsq_vae_forward.16} parent=0 // pred_fallthru
    _
  // Predicated region
  $region18: #{fsq_vae_forward.16} parent=0 // pred_check
    _
  $region19: #{fsq_vae_forward.16} parent=0 // pred_check_branch
    %620 = sbr.rel (0) target = $region21
  $region20: #{fsq_vae_forward.16} parent=0 // pred_region
    _
  $region21: #{fsq_vae_forward.16} parent=0 // pred_fallthru
    _

// kernel: fsq_vae_forward.17
$region0: #{fsq_vae_forward.17}
  #allocation0 [shape = 'u32[]', space=smem, size = 0x4, offset = 0x4, fixed_abs, tag = 'smem constant byte address 0x4 - core index']
  #allocation1 [shape = 'u32[144,128]{1,0:T(1,128)}', space=vmem, size = 0x12000, scoped, tag = 'internal scratch']
  %s0 = inlined_call_operand.vmem [shape: bf16[32,576], index: 0, kind: input, shape index: {}]
  %s1 = inlined_call_operand.vmem [shape: bf16[576,256], index: 1, kind: input, shape index: {}]
  %s2 = inlined_call_operand.vmem [shape: f32[1,256], index: 2, kind: input, shape index: {}]
  %s3 = inlined_call_operand.vmem [shape: bf16[32,256], index: 3, kind: output, shape index: {}]
  %s4 = sld [smem:[#allocation0]]
  $region22: #{fsq_vae_forward.17} parent=0
    _
  %s6 = ssub.s32 1, %s4
  %s7 = scalar_select 0, %s6, %s4
  // Predicated region
  $region2: #{fsq_vae_forward.17} parent=0 // pred_check
    _
  $region3: #{fsq_vae_forward.17} parent=0 // pred_check_branch
    %9 = sbr.rel (0) target = $region5
  $region4: #{fsq_vae_forward.17} parent=0 // pred_region
    _
  $region5: #{fsq_vae_forward.17} parent=0 // pred_fallthru
    _
  // Predicated region
  $region6: #{fsq_vae_forward.17} parent=0 // pred_check
    _
  $region7: #{fsq_vae_forward.17} parent=0 // pred_check_branch
    %11 = sbr.rel (0) target = $region9
  $region8: #{fsq_vae_forward.17} parent=0 // pred_region
    _
  $region9: #{fsq_vae_forward.17} parent=0 // pred_fallthru
    _
  // Predicated region
  $region10: #{fsq_vae_forward.17} parent=0 // pred_check
    _
  $region11: #{fsq_vae_forward.17} parent=0 // pred_check_branch
    %13 = sbr.rel (0) target = $region13
  $region12: #{fsq_vae_forward.17} parent=0 // pred_region
    _
  $region13: #{fsq_vae_forward.17} parent=0 // pred_fallthru
    _
  %v15 = vld [vmem:[%s0] sm:$0xff]
  %v16 = vld [vmem:[%s0 + $0x8] sm:$0xff]
  %v17 = vld [vmem:[%s0 + $0x10] sm:$0xf]
  %v18 = vld [vmem:[%s0 + $0x14] sm:$0xff]
  %v19 = vld [vmem:[%s0 + $0x1c] sm:$0xff]
  %v20 = vld [vmem:[%s0 + $0x24] sm:$0xf]
  %v21 = vld [vmem:[%s0 + $0x28] sm:$0xff]
  %v22 = vld [vmem:[%s0 + $0x30] sm:$0xff]
  %v23 = vld [vmem:[%s0 + $0x38] sm:$0xf]
  %v24 = vld [vmem:[%s0 + $0x3c] sm:$0xff]
  %v25 = vld [vmem:[%s0 + $0x44] sm:$0xff]
  %v26 = vld [vmem:[%s0 + $0x4c] sm:$0xf]
  %v27 = vld [vmem:[%s1] sm:$0xff]
  %v28 = vld [vmem:[%s1 + $0x8] sm:$0xff]
  %v29 = vld [vmem:[%s1 + $0x10] sm:$0xff]
  %v30 = vld [vmem:[%s1 + $0x18] sm:$0xff]
  %v31 = vld [vmem:[%s1 + $0x20] sm:$0xff]
  %v32 = vld [vmem:[%s1 + $0x28] sm:$0xff]
  %v33 = vld [vmem:[%s1 + $0x30] sm:$0xff]
  %v34 = vld [vmem:[%s1 + $0x38] sm:$0xff]
  %v35 = vld [vmem:[%s1 + $0x40] sm:$0xff]
  %v36 = vld [vmem:[%s1 + $0x48] sm:$0xff]
  %v37 = vld [vmem:[%s1 + $0x50] sm:$0xff]
  %v38 = vld [vmem:[%s1 + $0x58] sm:$0xff]
  %v39 = vld [vmem:[%s1 + $0x60] sm:$0xff]
  %v40 = vld [vmem:[%s1 + $0x68] sm:$0xff]
  %v41 = vld [vmem:[%s1 + $0x70] sm:$0xff]
  %v42 = vld [vmem:[%s1 + $0x78] sm:$0xff]
  %v43 = vld [vmem:[%s1 + $0x80] sm:$0xff]
  %v44 = vld [vmem:[%s1 + $0x88] sm:$0xff]
  %v45 = vld [vmem:[%s1 + $0x90] sm:$0xff]
  %v46 = vld [vmem:[%s1 + $0x98] sm:$0xff]
  %v47 = vld [vmem:[%s1 + $0xa0] sm:$0xff]
  %v48 = vld [vmem:[%s1 + $0xa8] sm:$0xff]
  %v49 = vld [vmem:[%s1 + $0xb0] sm:$0xff]
  %v50 = vld [vmem:[%s1 + $0xb8] sm:$0xff]
  %v51 = vld [vmem:[%s1 + $0xc0] sm:$0xff]
  %v52 = vld [vmem:[%s1 + $0xc8] sm:$0xff]
  %v53 = vld [vmem:[%s1 + $0xd0] sm:$0xff]
  %v54 = vld [vmem:[%s1 + $0xd8] sm:$0xff]
  %v55 = vld [vmem:[%s1 + $0xe0] sm:$0xff]
  %v56 = vld [vmem:[%s1 + $0xe8] sm:$0xff]
  %v57 = vld [vmem:[%s1 + $0xf0] sm:$0xff]
  %v58 = vld [vmem:[%s1 + $0xf8] sm:$0xff]
  %v59 = vld [vmem:[%s1 + $0x100] sm:$0xff]
  %v60 = vld [vmem:[%s1 + $0x108] sm:$0xff]
  %v61 = vld [vmem:[%s1 + $0x110] sm:$0xff]
  %v62 = vld [vmem:[%s1 + $0x118] sm:$0xff]
  %v63 = vld [vmem:[%s1 + $0x120] sm:$0xff]
  %v64 = vld [vmem:[%s1 + $0x128] sm:$0xff]
  %v65 = vld [vmem:[%s1 + $0x130] sm:$0xff]
  %v66 = vld [vmem:[%s1 + $0x138] sm:$0xff]
  %v67 = vld [vmem:[%s1 + $0x140] sm:$0xff]
  %v68 = vld [vmem:[%s1 + $0x148] sm:$0xff]
  %v69 = vld [vmem:[%s1 + $0x150] sm:$0xff]
  %v70 = vld [vmem:[%s1 + $0x158] sm:$0xff]
  %v71 = vld [vmem:[%s1 + $0x160] sm:$0xff]
  %v72 = vld [vmem:[%s1 + $0x168] sm:$0xff]
  %v73 = vld [vmem:[%s1 + $0x170] sm:$0xff]
  %v74 = vld [vmem:[%s1 + $0x178] sm:$0xff]
  %v75 = vld [vmem:[%s1 + $0x180] sm:$0xff]
  %v76 = vld [vmem:[%s1 + $0x188] sm:$0xff]
  %v77 = vld [vmem:[%s1 + $0x190] sm:$0xff]
  %v78 = vld [vmem:[%s1 + $0x198] sm:$0xff]
  %v79 = vld [vmem:[%s1 + $0x1a0] sm:$0xff]
  %v80 = vld [vmem:[%s1 + $0x1a8] sm:$0xff]
  %v81 = vld [vmem:[%s1 + $0x1b0] sm:$0xff]
  %v82 = vld [vmem:[%s1 + $0x1b8] sm:$0xff]
  %v83 = vld [vmem:[%s1 + $0x1c0] sm:$0xff]
  %v84 = vld [vmem:[%s1 + $0x1c8] sm:$0xff]
  %v85 = vld [vmem:[%s1 + $0x1d0] sm:$0xff]
  %v86 = vld [vmem:[%s1 + $0x1d8] sm:$0xff]
  %v87 = vld [vmem:[%s1 + $0x1e0] sm:$0xff]
  %v88 = vld [vmem:[%s1 + $0x1e8] sm:$0xff]
  %v89 = vld [vmem:[%s1 + $0x1f0] sm:$0xff]
  %v90 = vld [vmem:[%s1 + $0x1f8] sm:$0xff]
  %v91 = vld [vmem:[%s1 + $0x200] sm:$0xff]
  %v92 = vld [vmem:[%s1 + $0x208] sm:$0xff]
  %v93 = vld [vmem:[%s1 + $0x210] sm:$0xff]
  %v94 = vld [vmem:[%s1 + $0x218] sm:$0xff]
  %v95 = vld [vmem:[%s1 + $0x220] sm:$0xff]
  %v96 = vld [vmem:[%s1 + $0x228] sm:$0xff]
  %v97 = vld [vmem:[%s1 + $0x230] sm:$0xff]
  %v98 = vld [vmem:[%s1 + $0x238] sm:$0xff]
  %v99 = vld [vmem:[%s2] sm:$0x3]
  %v101 = vlaneseq
  %v102 = vshrl.u32 %v101, 7
  %v103 = vsub.s32 0, %v102
  %v104 = vrot.slane %v99, %v103
  %v105 = vlaneseq
  %v106 = vshrl.u32 %v105, 7
  %v107 = vsub.s32 1, %v106
  %v108 = vrot.slane %v99, %v107
  %v123 = vunpack.c.l.b16 %v15
  %v124 = vunpack.c.h.b16 %v15
  %v125 = vunpack.c.l.b16 %v16
  %v126 = vunpack.c.h.b16 %v16
  %v127 = vunpack.c.l.b16 %v17
  %v128 = vunpack.c.l.b16 %v18
  %v129 = vunpack.c.h.b16 %v18
  %v130 = vunpack.c.l.b16 %v19
  %v131 = vunpack.c.h.b16 %v19
  %v132 = vunpack.c.l.b16 %v20
  %v133 = vunpack.c.l.b16 %v21
  %v134 = vunpack.c.h.b16 %v21
  %v135 = vunpack.c.l.b16 %v22
  %v136 = vunpack.c.h.b16 %v22
  %v137 = vunpack.c.l.b16 %v23
  %v138 = vunpack.c.l.b16 %v24
  %v139 = vunpack.c.h.b16 %v24
  %v140 = vunpack.c.l.b16 %v25
  %v141 = vunpack.c.h.b16 %v25
  %v142 = vunpack.c.l.b16 %v26
  %v143 = vpack.c.b16 %v128, %v123
  %v144 = vpack.c.b16 %v129, %v124
  %v145 = vpack.c.b16 %v130, %v125
  %v146 = vpack.c.b16 %v131, %v126
  %v147 = vpack.c.b16 %v132, %v127
  %v148 = vpack.c.b16 %v138, %v133
  %v149 = vpack.c.b16 %v139, %v134
  %v150 = vpack.c.b16 %v140, %v135
  %v151 = vpack.c.b16 %v141, %v136
  %v152 = vpack.c.b16 %v142, %v137
  %v233 = vunpack.c.l.b16 %v27
  %v234 = vunpack.c.h.b16 %v27
  %v235 = vunpack.c.l.b16 %v28
  %v236 = vunpack.c.h.b16 %v28
  %v237 = vunpack.c.l.b16 %v29
  %v238 = vunpack.c.h.b16 %v29
  %v239 = vunpack.c.l.b16 %v30
  %v240 = vunpack.c.h.b16 %v30
  %v241 = vunpack.c.l.b16 %v31
  %v242 = vunpack.c.h.b16 %v31
  %v243 = vunpack.c.l.b16 %v32
  %v244 = vunpack.c.h.b16 %v32
  %v245 = vunpack.c.l.b16 %v33
  %v246 = vunpack.c.h.b16 %v33
  %v247 = vunpack.c.l.b16 %v34
  %v248 = vunpack.c.h.b16 %v34
  %v249 = vunpack.c.l.b16 %v35
  %v250 = vunpack.c.h.b16 %v35
  %v251 = vunpack.c.l.b16 %v36
  %v252 = vunpack.c.h.b16 %v36
  %v253 = vunpack.c.l.b16 %v37
  %v254 = vunpack.c.h.b16 %v37
  %v255 = vunpack.c.l.b16 %v38
  %v256 = vunpack.c.h.b16 %v38
  %v257 = vunpack.c.l.b16 %v39
  %v258 = vunpack.c.h.b16 %v39
  %v259 = vunpack.c.l.b16 %v40
  %v260 = vunpack.c.h.b16 %v40
  %v261 = vunpack.c.l.b16 %v41
  %v262 = vunpack.c.h.b16 %v41
  %v263 = vunpack.c.l.b16 %v42
  %v264 = vunpack.c.h.b16 %v42
  %v265 = vunpack.c.l.b16 %v43
  %v266 = vunpack.c.h.b16 %v43
  %v267 = vunpack.c.l.b16 %v44
  %v268 = vunpack.c.h.b16 %v44
  %v269 = vunpack.c.l.b16 %v45
  %v270 = vunpack.c.h.b16 %v45
  %v271 = vunpack.c.l.b16 %v46
  %v272 = vunpack.c.h.b16 %v46
  %v273 = vunpack.c.l.b16 %v47
  %v274 = vunpack.c.h.b16 %v47
  %v275 = vunpack.c.l.b16 %v48
  %v276 = vunpack.c.h.b16 %v48
  %v277 = vunpack.c.l.b16 %v49
  %v278 = vunpack.c.h.b16 %v49
  %v279 = vunpack.c.l.b16 %v50
  %v280 = vunpack.c.h.b16 %v50
  %v281 = vunpack.c.l.b16 %v51
  %v282 = vunpack.c.h.b16 %v51
  %v283 = vunpack.c.l.b16 %v52
  %v284 = vunpack.c.h.b16 %v52
  %v285 = vunpack.c.l.b16 %v53
  %v286 = vunpack.c.h.b16 %v53
  %v287 = vunpack.c.l.b16 %v54
  %v288 = vunpack.c.h.b16 %v54
  %v289 = vunpack.c.l.b16 %v55
  %v290 = vunpack.c.h.b16 %v55
  %v291 = vunpack.c.l.b16 %v56
  %v292 = vunpack.c.h.b16 %v56
  %v293 = vunpack.c.l.b16 %v57
  %v294 = vunpack.c.h.b16 %v57
  %v295 = vunpack.c.l.b16 %v58
  %v296 = vunpack.c.h.b16 %v58
  %v297 = vunpack.c.l.b16 %v59
  %v298 = vunpack.c.h.b16 %v59
  %v299 = vunpack.c.l.b16 %v60
  %v300 = vunpack.c.h.b16 %v60
  %v301 = vunpack.c.l.b16 %v61
  %v302 = vunpack.c.h.b16 %v61
  %v303 = vunpack.c.l.b16 %v62
  %v304 = vunpack.c.h.b16 %v62
  %v305 = vunpack.c.l.b16 %v63
  %v306 = vunpack.c.h.b16 %v63
  %v307 = vunpack.c.l.b16 %v64
  %v308 = vunpack.c.h.b16 %v64
  %v309 = vunpack.c.l.b16 %v65
  %v310 = vunpack.c.h.b16 %v65
  %v311 = vunpack.c.l.b16 %v66
  %v312 = vunpack.c.h.b16 %v66
  %v313 = vunpack.c.l.b16 %v67
  %v314 = vunpack.c.h.b16 %v67
  %v315 = vunpack.c.l.b16 %v68
  %v316 = vunpack.c.h.b16 %v68
  %v317 = vunpack.c.l.b16 %v69
  %v318 = vunpack.c.h.b16 %v69
  %v319 = vunpack.c.l.b16 %v70
  %v320 = vunpack.c.h.b16 %v70
  %v321 = vunpack.c.l.b16 %v71
  %v322 = vunpack.c.h.b16 %v71
  %v323 = vunpack.c.l.b16 %v72
  %v324 = vunpack.c.h.b16 %v72
  %v325 = vunpack.c.l.b16 %v73
  %v326 = vunpack.c.h.b16 %v73
  %v327 = vunpack.c.l.b16 %v74
  %v328 = vunpack.c.h.b16 %v74
  %v329 = vunpack.c.l.b16 %v75
  %v330 = vunpack.c.h.b16 %v75
  %v331 = vunpack.c.l.b16 %v76
  %v332 = vunpack.c.h.b16 %v76
  %v333 = vunpack.c.l.b16 %v77
  %v334 = vunpack.c.h.b16 %v77
  %v335 = vunpack.c.l.b16 %v78
  %v336 = vunpack.c.h.b16 %v78
  %v337 = vunpack.c.l.b16 %v79
  %v338 = vunpack.c.h.b16 %v79
  %v339 = vunpack.c.l.b16 %v80
  %v340 = vunpack.c.h.b16 %v80
  %v341 = vunpack.c.l.b16 %v81
  %v342 = vunpack.c.h.b16 %v81
  %v343 = vunpack.c.l.b16 %v82
  %v344 = vunpack.c.h.b16 %v82
  %v345 = vunpack.c.l.b16 %v83
  %v346 = vunpack.c.h.b16 %v83
  %v347 = vunpack.c.l.b16 %v84
  %v348 = vunpack.c.h.b16 %v84
  %v349 = vunpack.c.l.b16 %v85
  %v350 = vunpack.c.h.b16 %v85
  %v351 = vunpack.c.l.b16 %v86
  %v352 = vunpack.c.h.b16 %v86
  %v353 = vunpack.c.l.b16 %v87
  %v354 = vunpack.c.h.b16 %v87
  %v355 = vunpack.c.l.b16 %v88
  %v356 = vunpack.c.h.b16 %v88
  %v357 = vunpack.c.l.b16 %v89
  %v358 = vunpack.c.h.b16 %v89
  %v359 = vunpack.c.l.b16 %v90
  %v360 = vunpack.c.h.b16 %v90
  %v361 = vunpack.c.l.b16 %v91
  %v362 = vunpack.c.h.b16 %v91
  %v363 = vunpack.c.l.b16 %v92
  %v364 = vunpack.c.h.b16 %v92
  %v365 = vunpack.c.l.b16 %v93
  %v366 = vunpack.c.h.b16 %v93
  %v367 = vunpack.c.l.b16 %v94
  %v368 = vunpack.c.h.b16 %v94
  %v369 = vunpack.c.l.b16 %v95
  %v370 = vunpack.c.h.b16 %v95
  %v371 = vunpack.c.l.b16 %v96
  %v372 = vunpack.c.h.b16 %v96
  %v373 = vunpack.c.l.b16 %v97
  %v374 = vunpack.c.h.b16 %v97
  %v375 = vunpack.c.l.b16 %v98
  %v376 = vunpack.c.h.b16 %v98
  %v377 = vpack.c.b16 %v235, %v233
  %v378 = vpack.c.b16 %v236, %v234
  %v379 = vpack.c.b16 %v239, %v237
  %v380 = vpack.c.b16 %v240, %v238
  %v381 = vpack.c.b16 %v243, %v241
  %v382 = vpack.c.b16 %v244, %v242
  %v383 = vpack.c.b16 %v247, %v245
  %v384 = vpack.c.b16 %v248, %v246
  %v385 = vpack.c.b16 %v251, %v249
  %v386 = vpack.c.b16 %v252, %v250
  %v387 = vpack.c.b16 %v255, %v253
  %v388 = vpack.c.b16 %v256, %v254
  %v389 = vpack.c.b16 %v259, %v257
  %v390 = vpack.c.b16 %v260, %v258
  %v391 = vpack.c.b16 %v263, %v261
  %v392 = vpack.c.b16 %v264, %v262
  %v393 = vpack.c.b16 %v267, %v265
  %v394 = vpack.c.b16 %v268, %v266
  %v395 = vpack.c.b16 %v271, %v269
  %v396 = vpack.c.b16 %v272, %v270
  %v397 = vpack.c.b16 %v275, %v273
  %v398 = vpack.c.b16 %v276, %v274
  %v399 = vpack.c.b16 %v279, %v277
  %v400 = vpack.c.b16 %v280, %v278
  %v401 = vpack.c.b16 %v283, %v281
  %v402 = vpack.c.b16 %v284, %v282
  %v403 = vpack.c.b16 %v287, %v285
  %v404 = vpack.c.b16 %v288, %v286
  %v405 = vpack.c.b16 %v291, %v289
  %v406 = vpack.c.b16 %v292, %v290
  %v407 = vpack.c.b16 %v295, %v293
  %v408 = vpack.c.b16 %v296, %v294
  %v409 = vpack.c.b16 %v299, %v297
  %v410 = vpack.c.b16 %v300, %v298
  %v411 = vpack.c.b16 %v303, %v301
  %v412 = vpack.c.b16 %v304, %v302
  %v413 = vpack.c.b16 %v307, %v305
  %v414 = vpack.c.b16 %v308, %v306
  %v415 = vpack.c.b16 %v311, %v309
  %v416 = vpack.c.b16 %v312, %v310
  %v417 = vpack.c.b16 %v315, %v313
  %v418 = vpack.c.b16 %v316, %v314
  %v419 = vpack.c.b16 %v319, %v317
  %v420 = vpack.c.b16 %v320, %v318
  %v421 = vpack.c.b16 %v323, %v321
  %v422 = vpack.c.b16 %v324, %v322
  %v423 = vpack.c.b16 %v327, %v325
  %v424 = vpack.c.b16 %v328, %v326
  %v425 = vpack.c.b16 %v331, %v329
  %v426 = vpack.c.b16 %v332, %v330
  %v427 = vpack.c.b16 %v335, %v333
  %v428 = vpack.c.b16 %v336, %v334
  %v429 = vpack.c.b16 %v339, %v337
  %v430 = vpack.c.b16 %v340, %v338
  %v431 = vpack.c.b16 %v343, %v341
  %v432 = vpack.c.b16 %v344, %v342
  %v433 = vpack.c.b16 %v347, %v345
  %v434 = vpack.c.b16 %v348, %v346
  %v435 = vpack.c.b16 %v351, %v349
  %v436 = vpack.c.b16 %v352, %v350
  %v437 = vpack.c.b16 %v355, %v353
  %v438 = vpack.c.b16 %v356, %v354
  %v439 = vpack.c.b16 %v359, %v357
  %v440 = vpack.c.b16 %v360, %v358
  %v441 = vpack.c.b16 %v363, %v361
  %v442 = vpack.c.b16 %v364, %v362
  %v443 = vpack.c.b16 %v367, %v365
  %v444 = vpack.c.b16 %v368, %v366
  %v445 = vpack.c.b16 %v371, %v369
  %v446 = vpack.c.b16 %v372, %v370
  %v447 = vpack.c.b16 %v375, %v373
  %v448 = vpack.c.b16 %v376, %v374
  %vm521 = vcmask 523264
  %v523 = vsel %vm521, %v147, 0
  %v526 = vsel %vm521, %v152, 0
  %528 = vmatprep.subr.bf16.mxu0 %v378
  %529 = vmatpush1.bf16.msra.mxu0 %v377
  %530 = vmatprep.subr.bf16.mxu0 %v380
  %531 = vmatpush1.bf16.msra.mxu0 %v379
  %532 = vmatprep.subr.bf16.mxu0 %v382
  %533 = vmatpush1.bf16.msra.mxu0 %v381
  %534 = vmatprep.subr.bf16.mxu0 %v384
  %535 = vmatpush1.bf16.msra.mxu0 %v383
  %536 = vmatprep.subr.bf16.mxu0 %v386
  %537 = vmatpush1.bf16.msra.mxu0 %v385
  %538 = vmatprep.subr.bf16.mxu0 %v388
  %539 = vmatpush1.bf16.msra.mxu0 %v387
  %540 = vmatprep.subr.bf16.mxu0 %v390
  %541 = vmatpush1.bf16.msra.mxu0 %v389
  %542 = vmatprep.subr.bf16.mxu0 %v392
  %543 = vmatpush1.bf16.msra.mxu0 %v391
  %544 = vmatprep.subr.bf16.mxu0 %v394
  %545 = vmatpush1.bf16.msra.mxu0 %v393
  %546 = vmatprep.subr.bf16.mxu0 %v396
  %547 = vmatpush1.bf16.msra.mxu0 %v395
  %548 = vmatprep.subr.bf16.mxu0 %v398
  %549 = vmatpush1.bf16.msra.mxu0 %v397
  %550 = vmatprep.subr.bf16.mxu0 %v400
  %551 = vmatpush1.bf16.msra.mxu0 %v399
  %552 = vmatprep.subr.bf16.mxu0 %v402
  %553 = vmatpush1.bf16.msra.mxu0 %v401
  %554 = vmatprep.subr.bf16.mxu0 %v404
  %555 = vmatpush1.bf16.msra.mxu0 %v403
  %556 = vmatprep.subr.bf16.mxu0 %v406
  %557 = vmatpush1.bf16.msra.mxu0 %v405
  %558 = vmatprep.subr.bf16.mxu0 %v408
  %559 = vmatpush1.bf16.msra.mxu0 %v407
  %560 = vmatprep.mubr.bf16.mxu0 %v144
  %561 = vmatmul.mubr.bf16.gmra.mrb[0].mxu0 %v143
  %v562 = vpop.f32.mrb[0].mxu0
  %v563 = vadd.f32 %v104, %v562
  %v564 = vpop.f32.mrb[0].mxu0
  %v565 = vadd.f32 %v108, %v564
  %v566 = vpop.f32.mrb[0].mxu0
  %v567 = vadd.f32 %v104, %v566
  %v568 = vpop.f32.mrb[0].mxu0
  %v569 = vadd.f32 %v108, %v568
  %570 = vmatprep.mubr.bf16.mxu0 %v149
  %571 = vmatmul.mubr.bf16.gmra.mrb[0].mxu0 %v148
  %v572 = vpop.f32.mrb[0].mxu0
  %v573 = vadd.f32 %v104, %v572
  %v574 = vpop.f32.mrb[0].mxu0
  %v575 = vadd.f32 %v108, %v574
  %v576 = vpop.f32.mrb[0].mxu0
  %v577 = vadd.f32 %v104, %v576
  %v578 = vpop.f32.mrb[0].mxu0
  %v579 = vadd.f32 %v108, %v578
  %580 = vdwg.mxu0
  %581 = vmatprep.subr.bf16.mxu0 %v410
  %582 = vmatpush1.bf16.msra.mxu0 %v409
  %583 = vmatprep.subr.bf16.mxu0 %v412
  %584 = vmatpush1.bf16.msra.mxu0 %v411
  %585 = vmatprep.subr.bf16.mxu0 %v414
  %586 = vmatpush1.bf16.msra.mxu0 %v413
  %587 = vmatprep.subr.bf16.mxu0 %v416
  %588 = vmatpush1.bf16.msra.mxu0 %v415
  %589 = vmatprep.subr.bf16.mxu0 %v418
  %590 = vmatpush1.bf16.msra.mxu0 %v417
  %591 = vmatprep.subr.bf16.mxu0 %v420
  %592 = vmatpush1.bf16.msra.mxu0 %v419
  %593 = vmatprep.subr.bf16.mxu0 %v422
  %594 = vmatpush1.bf16.msra.mxu0 %v421
  %595 = vmatprep.subr.bf16.mxu0 %v424
  %596 = vmatpush1.bf16.msra.mxu0 %v423
  %597 = vmatprep.subr.bf16.mxu0 %v426
  %598 = vmatpush1.bf16.msra.mxu0 %v425
  %599 = vmatprep.subr.bf16.mxu0 %v428
  %600 = vmatpush1.bf16.msra.mxu0 %v427
  %601 = vmatprep.subr.bf16.mxu0 %v430
  %602 = vmatpush1.bf16.msra.mxu0 %v429
  %603 = vmatprep.subr.bf16.mxu0 %v432
  %604 = vmatpush1.bf16.msra.mxu0 %v431
  %605 = vmatprep.subr.bf16.mxu0 %v434
  %606 = vmatpush1.bf16.msra.mxu0 %v433
  %607 = vmatprep.subr.bf16.mxu0 %v436
  %608 = vmatpush1.bf16.msra.mxu0 %v435
  %609 = vmatprep.subr.bf16.mxu0 %v438
  %610 = vmatpush1.bf16.msra.mxu0 %v437
  %611 = vmatprep.subr.bf16.mxu0 %v440
  %612 = vmatpush1.bf16.msra.mxu0 %v439
  %613 = vmatprep.mubr.bf16.mxu0 %v146
  %614 = vmatmul.mubr.bf16.gmra.mrb[0].mxu0 %v145
  %v615 = vpop.f32.mrb[0].mxu0
  %v616 = vadd.f32 %v563, %v615
  %v617 = vpop.f32.mrb[0].mxu0
  %v618 = vadd.f32 %v565, %v617
  %v619 = vpop.f32.mrb[0].mxu0
  %v620 = vadd.f32 %v567, %v619
  %v621 = vpop.f32.mrb[0].mxu0
  %v622 = vadd.f32 %v569, %v621
  %623 = vmatprep.mubr.bf16.mxu0 %v151
  %624 = vmatmul.mubr.bf16.gmra.mrb[0].mxu0 %v150
  %v625 = vpop.f32.mrb[0].mxu0
  %v626 = vadd.f32 %v573, %v625
  %v627 = vpop.f32.mrb[0].mxu0
  %v628 = vadd.f32 %v575, %v627
  %v629 = vpop.f32.mrb[0].mxu0
  %v630 = vadd.f32 %v577, %v629
  %v631 = vpop.f32.mrb[0].mxu0
  %v632 = vadd.f32 %v579, %v631
  %633 = vdwg.mxu0
  %634 = vmatprep.subr.bf16.mxu0 %v442
  %635 = vmatpush1.bf16.msra.mxu0 %v441
  %636 = vmatprep.subr.bf16.mxu0 %v444
  %637 = vmatpush1.bf16.msra.mxu0 %v443
  %638 = vmatprep.subr.bf16.mxu0 %v446
  %639 = vmatpush1.bf16.msra.mxu0 %v445
  %640 = vmatprep.subr.bf16.mxu0 %v448
  %641 = vmatpush1.bf16.msra.mxu0 %v447
  %642 = vmatprep.subr.bf16.mxu0 0
  %643 = vmatpush1.bf16.msra.mxu0 0
  %644 = vmatprep.subr.bf16.mxu0 0
  %645 = vmatpush1.bf16.msra.mxu0 0
  %646 = vmatprep.subr.bf16.mxu0 0
  %647 = vmatpush1.bf16.msra.mxu0 0
  %648 = vmatprep.subr.bf16.mxu0 0
  %649 = vmatpush1.bf16.msra.mxu0 0
  %650 = vmatprep.subr.bf16.mxu0 0
  %651 = vmatpush1.bf16.msra.mxu0 0
  %652 = vmatprep.subr.bf16.mxu0 0
  %653 = vmatpush1.bf16.msra.mxu0 0
  %654 = vmatprep.subr.bf16.mxu0 0
  %655 = vmatpush1.bf16.msra.mxu0 0
  %656 = vmatprep.subr.bf16.mxu0 0
  %657 = vmatpush1.bf16.msra.mxu0 0
  %658 = vmatprep.subr.bf16.mxu0 0
  %659 = vmatpush1.bf16.msra.mxu0 0
  %660 = vmatprep.subr.bf16.mxu0 0
  %661 = vmatpush1.bf16.msra.mxu0 0
  %662 = vmatprep.subr.bf16.mxu0 0
  %663 = vmatpush1.bf16.msra.mxu0 0
  %664 = vmatprep.subr.bf16.mxu0 0
  %665 = vmatpush1.bf16.msra.mxu0 0
  %666 = vmatprep.mubr.bf16.mxu0 0
  %667 = vmatmul.mubr.bf16.gmra.mrb[0].mxu0 %v523
  %v668 = vpop.f32.mrb[0].mxu0
  %v669 = vadd.f32 %v616, %v668
  %v670 = vpop.f32.mrb[0].mxu0
  %v671 = vadd.f32 %v618, %v670
  %v672 = vpop.f32.mrb[0].mxu0
  %v673 = vadd.f32 %v620, %v672
  %v674 = vpop.f32.mrb[0].mxu0
  %v675 = vadd.f32 %v622, %v674
  %676 = vmatprep.mubr.bf16.mxu0 0
  %677 = vmatmul.mubr.bf16.gmra.mrb[0].mxu0 %v526
  %v678 = vpop.f32.mrb[0].mxu0
  %v679 = vadd.f32 %v626, %v678
  %v680 = vpop.f32.mrb[0].mxu0
  %v681 = vadd.f32 %v628, %v680
  %v682 = vpop.f32.mrb[0].mxu0
  %v683 = vadd.f32 %v630, %v682
  %v684 = vpop.f32.mrb[0].mxu0
  %v685 = vadd.f32 %v632, %v684
  %686 = vdwg.mxu0
  %v687 = vmax.f32 %v669, 0.0
  %v688 = vmax.f32 %v671, 0.0
  %v689 = vmax.f32 %v673, 0.0
  %v690 = vmax.f32 %v675, 0.0
  %v691 = vmax.f32 %v679, 0.0
  %v692 = vmax.f32 %v681, 0.0
  %v693 = vmax.f32 %v683, 0.0
  %v694 = vmax.f32 %v685, 0.0
  %v695 = vpack.c.bf16 %v689, %v687
  %v696 = vpack.c.bf16 %v690, %v688
  %v697 = vpack.c.bf16 %v693, %v691
  %v698 = vpack.c.bf16 %v694, %v692
  %v703 = vunpack.c.l.b16 %v695
  %v704 = vunpack.c.l.b16 %v696
  %v705 = vunpack.c.h.b16 %v695
  %v706 = vunpack.c.h.b16 %v696
  %v707 = vunpack.c.l.b16 %v697
  %v708 = vunpack.c.l.b16 %v698
  %v709 = vunpack.c.h.b16 %v697
  %v710 = vunpack.c.h.b16 %v698
  %v711 = vpack.c.b16 %v704, %v703
  %v712 = vpack.c.b16 %v706, %v705
  %v713 = vpack.c.b16 %v708, %v707
  %v714 = vpack.c.b16 %v710, %v709
  %719 = vst [vmem:[%s3] sm:$0xff] %v711
  %720 = vst [vmem:[%s3 + $0x8] sm:$0xff] %v712
  %721 = vst [vmem:[%s3 + $0x10] sm:$0xff] %v713
  %722 = vst [vmem:[%s3 + $0x18] sm:$0xff] %v714
  // Predicated region
  $region14: #{fsq_vae_forward.17} parent=0 // pred_check
    _
  $region15: #{fsq_vae_forward.17} parent=0 // pred_check_branch
    %724 = sbr.rel (0) target = $region17
  $region16: #{fsq_vae_forward.17} parent=0 // pred_region
    _
  $region17: #{fsq_vae_forward.17} parent=0 // pred_fallthru
    _
  // Predicated region
  $region18: #{fsq_vae_forward.17} parent=0 // pred_check
    _
  $region19: #{fsq_vae_forward.17} parent=0 // pred_check_branch
    %726 = sbr.rel (0) target = $region21
  $region20: #{fsq_vae_forward.17} parent=0 // pred_region
    _
  $region21: #{fsq_vae_forward.17} parent=0 // pred_fallthru
    _

// kernel: fsq_vae_forward.18
$region0: #{fsq_vae_forward.18}
  #allocation0 [shape = 'u32[]', space=smem, size = 0x4, offset = 0x4, fixed_abs, tag = 'smem constant byte address 0x4 - core index']
  #allocation1 [shape = 'u32[144,128]{1,0:T(1,128)}', space=vmem, size = 0x12000, scoped, tag = 'internal scratch']
  %s0 = inlined_call_operand.vmem [shape: bf16[128,576], index: 0, kind: input, shape index: {}]
  %s1 = inlined_call_operand.vmem [shape: bf16[576,256], index: 1, kind: input, shape index: {}]
  %s2 = inlined_call_operand.vmem [shape: f32[1,256], index: 2, kind: input, shape index: {}]
  %s3 = inlined_call_operand.vmem [shape: bf16[128,256], index: 3, kind: output, shape index: {}]
  %s4 = sld [smem:[#allocation0]]
  $region22: #{fsq_vae_forward.18} parent=0
    _
  %s6 = ssub.s32 1, %s4
  %s7 = scalar_select 0, %s6, %s4
  // Predicated region
  $region2: #{fsq_vae_forward.18} parent=0 // pred_check
    _
  $region3: #{fsq_vae_forward.18} parent=0 // pred_check_branch
    %9 = sbr.rel (0) target = $region5
  $region4: #{fsq_vae_forward.18} parent=0 // pred_region
    _
  $region5: #{fsq_vae_forward.18} parent=0 // pred_fallthru
    _
  // Predicated region
  $region6: #{fsq_vae_forward.18} parent=0 // pred_check
    _
  $region7: #{fsq_vae_forward.18} parent=0 // pred_check_branch
    %11 = sbr.rel (0) target = $region9
  $region8: #{fsq_vae_forward.18} parent=0 // pred_region
    _
  $region9: #{fsq_vae_forward.18} parent=0 // pred_fallthru
    _
  // Predicated region
  $region10: #{fsq_vae_forward.18} parent=0 // pred_check
    _
  $region11: #{fsq_vae_forward.18} parent=0 // pred_check_branch
    %13 = sbr.rel (0) target = $region13
  $region12: #{fsq_vae_forward.18} parent=0 // pred_region
    _
  $region13: #{fsq_vae_forward.18} parent=0 // pred_fallthru
    _
  %v15 = vld [vmem:[%s0] sm:$0xff]
  %v16 = vld [vmem:[%s0 + $0x8] sm:$0xff]
  %v17 = vld [vmem:[%s0 + $0x10] sm:$0xf]
  %v18 = vld [vmem:[%s0 + $0x14] sm:$0xff]
  %v19 = vld [vmem:[%s0 + $0x1c] sm:$0xff]
  %v20 = vld [vmem:[%s0 + $0x24] sm:$0xf]
  %v21 = vld [vmem:[%s0 + $0x28] sm:$0xff]
  %v22 = vld [vmem:[%s0 + $0x30] sm:$0xff]
  %v23 = vld [vmem:[%s0 + $0x38] sm:$0xf]
  %v24 = vld [vmem:[%s0 + $0x3c] sm:$0xff]
  %v25 = vld [vmem:[%s0 + $0x44] sm:$0xff]
  %v26 = vld [vmem:[%s0 + $0x4c] sm:$0xf]
  %v27 = vld [vmem:[%s0 + $0x50] sm:$0xff]
  %v28 = vld [vmem:[%s0 + $0x58] sm:$0xff]
  %v29 = vld [vmem:[%s0 + $0x60] sm:$0xf]
  %v30 = vld [vmem:[%s0 + $0x64] sm:$0xff]
  %v31 = vld [vmem:[%s0 + $0x6c] sm:$0xff]
  %v32 = vld [vmem:[%s0 + $0x74] sm:$0xf]
  %v33 = vld [vmem:[%s0 + $0x78] sm:$0xff]
  %v34 = vld [vmem:[%s0 + $0x80] sm:$0xff]
  %v35 = vld [vmem:[%s0 + $0x88] sm:$0xf]
  %v36 = vld [vmem:[%s0 + $0x8c] sm:$0xff]
  %v37 = vld [vmem:[%s0 + $0x94] sm:$0xff]
  %v38 = vld [vmem:[%s0 + $0x9c] sm:$0xf]
  %v39 = vld [vmem:[%s0 + $0xa0] sm:$0xff]
  %v40 = vld [vmem:[%s0 + $0xa8] sm:$0xff]
  %v41 = vld [vmem:[%s0 + $0xb0] sm:$0xf]
  %v42 = vld [vmem:[%s0 + $0xb4] sm:$0xff]
  %v43 = vld [vmem:[%s0 + $0xbc] sm:$0xff]
  %v44 = vld [vmem:[%s0 + $0xc4] sm:$0xf]
  %v45 = vld [vmem:[%s0 + $0xc8] sm:$0xff]
  %v46 = vld [vmem:[%s0 + $0xd0] sm:$0xff]
  %v47 = vld [vmem:[%s0 + $0xd8] sm:$0xf]
  %v48 = vld [vmem:[%s0 + $0xdc] sm:$0xff]
  %v49 = vld [vmem:[%s0 + $0xe4] sm:$0xff]
  %v50 = vld [vmem:[%s0 + $0xec] sm:$0xf]
  %v51 = vld [vmem:[%s0 + $0xf0] sm:$0xff]
  %v52 = vld [vmem:[%s0 + $0xf8] sm:$0xff]
  %v53 = vld [vmem:[%s0 + $0x100] sm:$0xf]
  %v54 = vld [vmem:[%s0 + $0x104] sm:$0xff]
  %v55 = vld [vmem:[%s0 + $0x10c] sm:$0xff]
  %v56 = vld [vmem:[%s0 + $0x114] sm:$0xf]
  %v57 = vld [vmem:[%s0 + $0x118] sm:$0xff]
  %v58 = vld [vmem:[%s0 + $0x120] sm:$0xff]
  %v59 = vld [vmem:[%s0 + $0x128] sm:$0xf]
  %v60 = vld [vmem:[%s0 + $0x12c] sm:$0xff]
  %v61 = vld [vmem:[%s0 + $0x134] sm:$0xff]
  %v62 = vld [vmem:[%s0 + $0x13c] sm:$0xf]
  %v63 = vld [vmem:[%s1] sm:$0xff]
  %v64 = vld [vmem:[%s1 + $0x8] sm:$0xff]
  %v65 = vld [vmem:[%s1 + $0x10] sm:$0xff]
  %v66 = vld [vmem:[%s1 + $0x18] sm:$0xff]
  %v67 = vld [vmem:[%s1 + $0x20] sm:$0xff]
  %v68 = vld [vmem:[%s1 + $0x28] sm:$0xff]
  %v69 = vld [vmem:[%s1 + $0x30] sm:$0xff]
  %v70 = vld [vmem:[%s1 + $0x38] sm:$0xff]
  %v71 = vld [vmem:[%s1 + $0x40] sm:$0xff]
  %v72 = vld [vmem:[%s1 + $0x48] sm:$0xff]
  %v73 = vld [vmem:[%s1 + $0x50] sm:$0xff]
  %v74 = vld [vmem:[%s1 + $0x58] sm:$0xff]
  %v75 = vld [vmem:[%s1 + $0x60] sm:$0xff]
  %v76 = vld [vmem:[%s1 + $0x68] sm:$0xff]
  %v77 = vld [vmem:[%s1 + $0x70] sm:$0xff]
  %v78 = vld [vmem:[%s1 + $0x78] sm:$0xff]
  %v79 = vld [vmem:[%s1 + $0x80] sm:$0xff]
  %v80 = vld [vmem:[%s1 + $0x88] sm:$0xff]
  %v81 = vld [vmem:[%s1 + $0x90] sm:$0xff]
  %v82 = vld [vmem:[%s1 + $0x98] sm:$0xff]
  %v83 = vld [vmem:[%s1 + $0xa0] sm:$0xff]
  %v84 = vld [vmem:[%s1 + $0xa8] sm:$0xff]
  %v85 = vld [vmem:[%s1 + $0xb0] sm:$0xff]
  %v86 = vld [vmem:[%s1 + $0xb8] sm:$0xff]
  %v87 = vld [vmem:[%s1 + $0xc0] sm:$0xff]
  %v88 = vld [vmem:[%s1 + $0xc8] sm:$0xff]
  %v89 = vld [vmem:[%s1 + $0xd0] sm:$0xff]
  %v90 = vld [vmem:[%s1 + $0xd8] sm:$0xff]
  %v91 = vld [vmem:[%s1 + $0xe0] sm:$0xff]
  %v92 = vld [vmem:[%s1 + $0xe8] sm:$0xff]
  %v93 = vld [vmem:[%s1 + $0xf0] sm:$0xff]
  %v94 = vld [vmem:[%s1 + $0xf8] sm:$0xff]
  %v95 = vld [vmem:[%s1 + $0x100] sm:$0xff]
  %v96 = vld [vmem:[%s1 + $0x108] sm:$0xff]
  %v97 = vld [vmem:[%s1 + $0x110] sm:$0xff]
  %v98 = vld [vmem:[%s1 + $0x118] sm:$0xff]
  %v99 = vld [vmem:[%s1 + $0x120] sm:$0xff]
  %v100 = vld [vmem:[%s1 + $0x128] sm:$0xff]
  %v101 = vld [vmem:[%s1 + $0x130] sm:$0xff]
  %v102 = vld [vmem:[%s1 + $0x138] sm:$0xff]
  %v103 = vld [vmem:[%s1 + $0x140] sm:$0xff]
  %v104 = vld [vmem:[%s1 + $0x148] sm:$0xff]
  %v105 = vld [vmem:[%s1 + $0x150] sm:$0xff]
  %v106 = vld [vmem:[%s1 + $0x158] sm:$0xff]
  %v107 = vld [vmem:[%s1 + $0x160] sm:$0xff]
  %v108 = vld [vmem:[%s1 + $0x168] sm:$0xff]
  %v109 = vld [vmem:[%s1 + $0x170] sm:$0xff]
  %v110 = vld [vmem:[%s1 + $0x178] sm:$0xff]
  %v111 = vld [vmem:[%s1 + $0x180] sm:$0xff]
  %v112 = vld [vmem:[%s1 + $0x188] sm:$0xff]
  %v113 = vld [vmem:[%s1 + $0x190] sm:$0xff]
  %v114 = vld [vmem:[%s1 + $0x198] sm:$0xff]
  %v115 = vld [vmem:[%s1 + $0x1a0] sm:$0xff]
  %v116 = vld [vmem:[%s1 + $0x1a8] sm:$0xff]
  %v117 = vld [vmem:[%s1 + $0x1b0] sm:$0xff]
  %v118 = vld [vmem:[%s1 + $0x1b8] sm:$0xff]
  %v119 = vld [vmem:[%s1 + $0x1c0] sm:$0xff]
  %v120 = vld [vmem:[%s1 + $0x1c8] sm:$0xff]
  %v121 = vld [vmem:[%s1 + $0x1d0] sm:$0xff]
  %v122 = vld [vmem:[%s1 + $0x1d8] sm:$0xff]
  %v123 = vld [vmem:[%s1 + $0x1e0] sm:$0xff]
  %v124 = vld [vmem:[%s1 + $0x1e8] sm:$0xff]
  %v125 = vld [vmem:[%s1 + $0x1f0] sm:$0xff]
  %v126 = vld [vmem:[%s1 + $0x1f8] sm:$0xff]
  %v127 = vld [vmem:[%s1 + $0x200] sm:$0xff]
  %v128 = vld [vmem:[%s1 + $0x208] sm:$0xff]
  %v129 = vld [vmem:[%s1 + $0x210] sm:$0xff]
  %v130 = vld [vmem:[%s1 + $0x218] sm:$0xff]
  %v131 = vld [vmem:[%s1 + $0x220] sm:$0xff]
  %v132 = vld [vmem:[%s1 + $0x228] sm:$0xff]
  %v133 = vld [vmem:[%s1 + $0x230] sm:$0xff]
  %v134 = vld [vmem:[%s1 + $0x238] sm:$0xff]
  %v135 = vld [vmem:[%s2] sm:$0x3]
  %v137 = vlaneseq
  %v138 = vshrl.u32 %v137, 7
  %v139 = vsub.s32 0, %v138
  %v140 = vrot.slane %v135, %v139
  %v141 = vlaneseq
  %v142 = vshrl.u32 %v141, 7
  %v143 = vsub.s32 1, %v142
  %v144 = vrot.slane %v135, %v143
  %v195 = vunpack.c.l.b16 %v15
  %v196 = vunpack.c.h.b16 %v15
  %v197 = vunpack.c.l.b16 %v16
  %v198 = vunpack.c.h.b16 %v16
  %v199 = vunpack.c.l.b16 %v17
  %v200 = vunpack.c.l.b16 %v18
  %v201 = vunpack.c.h.b16 %v18
  %v202 = vunpack.c.l.b16 %v19
  %v203 = vunpack.c.h.b16 %v19
  %v204 = vunpack.c.l.b16 %v20
  %v205 = vunpack.c.l.b16 %v21
  %v206 = vunpack.c.h.b16 %v21
  %v207 = vunpack.c.l.b16 %v22
  %v208 = vunpack.c.h.b16 %v22
  %v209 = vunpack.c.l.b16 %v23
  %v210 = vunpack.c.l.b16 %v24
  %v211 = vunpack.c.h.b16 %v24
  %v212 = vunpack.c.l.b16 %v25
  %v213 = vunpack.c.h.b16 %v25
  %v214 = vunpack.c.l.b16 %v26
  %v215 = vunpack.c.l.b16 %v27
  %v216 = vunpack.c.h.b16 %v27
  %v217 = vunpack.c.l.b16 %v28
  %v218 = vunpack.c.h.b16 %v28
  %v219 = vunpack.c.l.b16 %v29
  %v220 = vunpack.c.l.b16 %v30
  %v221 = vunpack.c.h.b16 %v30
  %v222 = vunpack.c.l.b16 %v31
  %v223 = vunpack.c.h.b16 %v31
  %v224 = vunpack.c.l.b16 %v32
  %v225 = vunpack.c.l.b16 %v33
  %v226 = vunpack.c.h.b16 %v33
  %v227 = vunpack.c.l.b16 %v34
  %v228 = vunpack.c.h.b16 %v34
  %v229 = vunpack.c.l.b16 %v35
  %v230 = vunpack.c.l.b16 %v36
  %v231 = vunpack.c.h.b16 %v36
  %v232 = vunpack.c.l.b16 %v37
  %v233 = vunpack.c.h.b16 %v37
  %v234 = vunpack.c.l.b16 %v38
  %v235 = vunpack.c.l.b16 %v39
  %v236 = vunpack.c.h.b16 %v39
  %v237 = vunpack.c.l.b16 %v40
  %v238 = vunpack.c.h.b16 %v40
  %v239 = vunpack.c.l.b16 %v41
  %v240 = vunpack.c.l.b16 %v42
  %v241 = vunpack.c.h.b16 %v42
  %v242 = vunpack.c.l.b16 %v43
  %v243 = vunpack.c.h.b16 %v43
  %v244 = vunpack.c.l.b16 %v44
  %v245 = vunpack.c.l.b16 %v45
  %v246 = vunpack.c.h.b16 %v45
  %v247 = vunpack.c.l.b16 %v46
  %v248 = vunpack.c.h.b16 %v46
  %v249 = vunpack.c.l.b16 %v47
  %v250 = vunpack.c.l.b16 %v48
  %v251 = vunpack.c.h.b16 %v48
  %v252 = vunpack.c.l.b16 %v49
  %v253 = vunpack.c.h.b16 %v49
  %v254 = vunpack.c.l.b16 %v50
  %v255 = vunpack.c.l.b16 %v51
  %v256 = vunpack.c.h.b16 %v51
  %v257 = vunpack.c.l.b16 %v52
  %v258 = vunpack.c.h.b16 %v52
  %v259 = vunpack.c.l.b16 %v53
  %v260 = vunpack.c.l.b16 %v54
  %v261 = vunpack.c.h.b16 %v54
  %v262 = vunpack.c.l.b16 %v55
  %v263 = vunpack.c.h.b16 %v55
  %v264 = vunpack.c.l.b16 %v56
  %v265 = vunpack.c.l.b16 %v57
  %v266 = vunpack.c.h.b16 %v57
  %v267 = vunpack.c.l.b16 %v58
  %v268 = vunpack.c.h.b16 %v58
  %v269 = vunpack.c.l.b16 %v59
  %v270 = vunpack.c.l.b16 %v60
  %v271 = vunpack.c.h.b16 %v60
  %v272 = vunpack.c.l.b16 %v61
  %v273 = vunpack.c.h.b16 %v61
  %v274 = vunpack.c.l.b16 %v62
  %v275 = vpack.c.b16 %v200, %v195
  %v276 = vpack.c.b16 %v201, %v196
  %v277 = vpack.c.b16 %v202, %v197
  %v278 = vpack.c.b16 %v203, %v198
  %v279 = vpack.c.b16 %v204, %v199
  %v280 = vpack.c.b16 %v210, %v205
  %v281 = vpack.c.b16 %v211, %v206
  %v282 = vpack.c.b16 %v212, %v207
  %v283 = vpack.c.b16 %v213, %v208
  %v284 = vpack.c.b16 %v214, %v209
  %v285 = vpack.c.b16 %v220, %v215
  %v286 = vpack.c.b16 %v221, %v216
  %v287 = vpack.c.b16 %v222, %v217
  %v288 = vpack.c.b16 %v223, %v218
  %v289 = vpack.c.b16 %v224, %v219
  %v290 = vpack.c.b16 %v230, %v225
  %v291 = vpack.c.b16 %v231, %v226
  %v292 = vpack.c.b16 %v232, %v227
  %v293 = vpack.c.b16 %v233, %v228
  %v294 = vpack.c.b16 %v234, %v229
  %v295 = vpack.c.b16 %v240, %v235
  %v296 = vpack.c.b16 %v241, %v236
  %v297 = vpack.c.b16 %v242, %v237
  %v298 = vpack.c.b16 %v243, %v238
  %v299 = vpack.c.b16 %v244, %v239
  %v300 = vpack.c.b16 %v250, %v245
  %v301 = vpack.c.b16 %v251, %v246
  %v302 = vpack.c.b16 %v252, %v247
  %v303 = vpack.c.b16 %v253, %v248
  %v304 = vpack.c.b16 %v254, %v249
  %v305 = vpack.c.b16 %v260, %v255
  %v306 = vpack.c.b16 %v261, %v256
  %v307 = vpack.c.b16 %v262, %v257
  %v308 = vpack.c.b16 %v263, %v258
  %v309 = vpack.c.b16 %v264, %v259
  %v310 = vpack.c.b16 %v270, %v265
  %v311 = vpack.c.b16 %v271, %v266
  %v312 = vpack.c.b16 %v272, %v267
  %v313 = vpack.c.b16 %v273, %v268
  %v314 = vpack.c.b16 %v274, %v269
  %v419 = vunpack.c.l.b16 %v63
  %v420 = vunpack.c.h.b16 %v63
  %v421 = vunpack.c.l.b16 %v64
  %v422 = vunpack.c.h.b16 %v64
  %v423 = vunpack.c.l.b16 %v65
  %v424 = vunpack.c.h.b16 %v65
  %v425 = vunpack.c.l.b16 %v66
  %v426 = vunpack.c.h.b16 %v66
  %v427 = vunpack.c.l.b16 %v67
  %v428 = vunpack.c.h.b16 %v67
  %v429 = vunpack.c.l.b16 %v68
  %v430 = vunpack.c.h.b16 %v68
  %v431 = vunpack.c.l.b16 %v69
  %v432 = vunpack.c.h.b16 %v69
  %v433 = vunpack.c.l.b16 %v70
  %v434 = vunpack.c.h.b16 %v70
  %v435 = vunpack.c.l.b16 %v71
  %v436 = vunpack.c.h.b16 %v71
  %v437 = vunpack.c.l.b16 %v72
  %v438 = vunpack.c.h.b16 %v72
  %v439 = vunpack.c.l.b16 %v73
  %v440 = vunpack.c.h.b16 %v73
  %v441 = vunpack.c.l.b16 %v74
  %v442 = vunpack.c.h.b16 %v74
  %v443 = vunpack.c.l.b16 %v75
  %v444 = vunpack.c.h.b16 %v75
  %v445 = vunpack.c.l.b16 %v76
  %v446 = vunpack.c.h.b16 %v76
  %v447 = vunpack.c.l.b16 %v77
  %v448 = vunpack.c.h.b16 %v77
  %v449 = vunpack.c.l.b16 %v78
  %v450 = vunpack.c.h.b16 %v78
  %v451 = vunpack.c.l.b16 %v79
  %v452 = vunpack.c.h.b16 %v79
  %v453 = vunpack.c.l.b16 %v80
  %v454 = vunpack.c.h.b16 %v80
  %v455 = vunpack.c.l.b16 %v81
  %v456 = vunpack.c.h.b16 %v81
  %v457 = vunpack.c.l.b16 %v82
  %v458 = vunpack.c.h.b16 %v82
  %v459 = vunpack.c.l.b16 %v83
  %v460 = vunpack.c.h.b16 %v83
  %v461 = vunpack.c.l.b16 %v84
  %v462 = vunpack.c.h.b16 %v84
  %v463 = vunpack.c.l.b16 %v85
  %v464 = vunpack.c.h.b16 %v85
  %v465 = vunpack.c.l.b16 %v86
  %v466 = vunpack.c.h.b16 %v86
  %v467 = vunpack.c.l.b16 %v87
  %v468 = vunpack.c.h.b16 %v87
  %v469 = vunpack.c.l.b16 %v88
  %v470 = vunpack.c.h.b16 %v88
  %v471 = vunpack.c.l.b16 %v89
  %v472 = vunpack.c.h.b16 %v89
  %v473 = vunpack.c.l.b16 %v90
  %v474 = vunpack.c.h.b16 %v90
  %v475 = vunpack.c.l.b16 %v91
  %v476 = vunpack.c.h.b16 %v91
  %v477 = vunpack.c.l.b16 %v92
  %v478 = vunpack.c.h.b16 %v92
  %v479 = vunpack.c.l.b16 %v93
  %v480 = vunpack.c.h.b16 %v93
  %v481 = vunpack.c.l.b16 %v94
  %v482 = vunpack.c.h.b16 %v94
  %v483 = vunpack.c.l.b16 %v95
  %v484 = vunpack.c.h.b16 %v95
  %v485 = vunpack.c.l.b16 %v96
  %v486 = vunpack.c.h.b16 %v96
  %v487 = vunpack.c.l.b16 %v97
  %v488 = vunpack.c.h.b16 %v97
  %v489 = vunpack.c.l.b16 %v98
  %v490 = vunpack.c.h.b16 %v98
  %v491 = vunpack.c.l.b16 %v99
  %v492 = vunpack.c.h.b16 %v99
  %v493 = vunpack.c.l.b16 %v100
  %v494 = vunpack.c.h.b16 %v100
  %v495 = vunpack.c.l.b16 %v101
  %v496 = vunpack.c.h.b16 %v101
  %v497 = vunpack.c.l.b16 %v102
  %v498 = vunpack.c.h.b16 %v102
  %v499 = vunpack.c.l.b16 %v103
  %v500 = vunpack.c.h.b16 %v103
  %v501 = vunpack.c.l.b16 %v104
  %v502 = vunpack.c.h.b16 %v104
  %v503 = vunpack.c.l.b16 %v105
  %v504 = vunpack.c.h.b16 %v105
  %v505 = vunpack.c.l.b16 %v106
  %v506 = vunpack.c.h.b16 %v106
  %v507 = vunpack.c.l.b16 %v107
  %v508 = vunpack.c.h.b16 %v107
  %v509 = vunpack.c.l.b16 %v108
  %v510 = vunpack.c.h.b16 %v108
  %v511 = vunpack.c.l.b16 %v109
  %v512 = vunpack.c.h.b16 %v109
  %v513 = vunpack.c.l.b16 %v110
  %v514 = vunpack.c.h.b16 %v110
  %v515 = vunpack.c.l.b16 %v111
  %v516 = vunpack.c.h.b16 %v111
  %v517 = vunpack.c.l.b16 %v112
  %v518 = vunpack.c.h.b16 %v112
  %v519 = vunpack.c.l.b16 %v113
  %v520 = vunpack.c.h.b16 %v113
  %v521 = vunpack.c.l.b16 %v114
  %v522 = vunpack.c.h.b16 %v114
  %v523 = vunpack.c.l.b16 %v115
  %v524 = vunpack.c.h.b16 %v115
  %v525 = vunpack.c.l.b16 %v116
  %v526 = vunpack.c.h.b16 %v116
  %v527 = vunpack.c.l.b16 %v117
  %v528 = vunpack.c.h.b16 %v117
  %v529 = vunpack.c.l.b16 %v118
  %v530 = vunpack.c.h.b16 %v118
  %v531 = vunpack.c.l.b16 %v119
  %v532 = vunpack.c.h.b16 %v119
  %v533 = vunpack.c.l.b16 %v120
  %v534 = vunpack.c.h.b16 %v120
  %v535 = vunpack.c.l.b16 %v121
  %v536 = vunpack.c.h.b16 %v121
  %v537 = vunpack.c.l.b16 %v122
  %v538 = vunpack.c.h.b16 %v122
  %v539 = vunpack.c.l.b16 %v123
  %v540 = vunpack.c.h.b16 %v123
  %v541 = vunpack.c.l.b16 %v124
  %v542 = vunpack.c.h.b16 %v124
  %v543 = vunpack.c.l.b16 %v125
  %v544 = vunpack.c.h.b16 %v125
  %v545 = vunpack.c.l.b16 %v126
  %v546 = vunpack.c.h.b16 %v126
  %v547 = vunpack.c.l.b16 %v127
  %v548 = vunpack.c.h.b16 %v127
  %v549 = vunpack.c.l.b16 %v128
  %v550 = vunpack.c.h.b16 %v128
  %v551 = vunpack.c.l.b16 %v129
  %v552 = vunpack.c.h.b16 %v129
  %v553 = vunpack.c.l.b16 %v130
  %v554 = vunpack.c.h.b16 %v130
  %v555 = vunpack.c.l.b16 %v131
  %v556 = vunpack.c.h.b16 %v131
  %v557 = vunpack.c.l.b16 %v132
  %v558 = vunpack.c.h.b16 %v132
  %v559 = vunpack.c.l.b16 %v133
  %v560 = vunpack.c.h.b16 %v133
  %v561 = vunpack.c.l.b16 %v134
  %v562 = vunpack.c.h.b16 %v134
  %v563 = vpack.c.b16 %v421, %v419
  %v564 = vpack.c.b16 %v422, %v420
  %v565 = vpack.c.b16 %v425, %v423
  %v566 = vpack.c.b16 %v426, %v424
  %v567 = vpack.c.b16 %v429, %v427
  %v568 = vpack.c.b16 %v430, %v428
  %v569 = vpack.c.b16 %v433, %v431
  %v570 = vpack.c.b16 %v434, %v432
  %v571 = vpack.c.b16 %v437, %v435
  %v572 = vpack.c.b16 %v438, %v436
  %v573 = vpack.c.b16 %v441, %v439
  %v574 = vpack.c.b16 %v442, %v440
  %v575 = vpack.c.b16 %v445, %v443
  %v576 = vpack.c.b16 %v446, %v444
  %v577 = vpack.c.b16 %v449, %v447
  %v578 = vpack.c.b16 %v450, %v448
  %v579 = vpack.c.b16 %v453, %v451
  %v580 = vpack.c.b16 %v454, %v452
  %v581 = vpack.c.b16 %v457, %v455
  %v582 = vpack.c.b16 %v458, %v456
  %v583 = vpack.c.b16 %v461, %v459
  %v584 = vpack.c.b16 %v462, %v460
  %v585 = vpack.c.b16 %v465, %v463
  %v586 = vpack.c.b16 %v466, %v464
  %v587 = vpack.c.b16 %v469, %v467
  %v588 = vpack.c.b16 %v470, %v468
  %v589 = vpack.c.b16 %v473, %v471
  %v590 = vpack.c.b16 %v474, %v472
  %v591 = vpack.c.b16 %v477, %v475
  %v592 = vpack.c.b16 %v478, %v476
  %v593 = vpack.c.b16 %v481, %v479
  %v594 = vpack.c.b16 %v482, %v480
  %v595 = vpack.c.b16 %v485, %v483
  %v596 = vpack.c.b16 %v486, %v484
  %v597 = vpack.c.b16 %v489, %v487
  %v598 = vpack.c.b16 %v490, %v488
  %v599 = vpack.c.b16 %v493, %v491
  %v600 = vpack.c.b16 %v494, %v492
  %v601 = vpack.c.b16 %v497, %v495
  %v602 = vpack.c.b16 %v498, %v496
  %v603 = vpack.c.b16 %v501, %v499
  %v604 = vpack.c.b16 %v502, %v500
  %v605 = vpack.c.b16 %v505, %v503
  %v606 = vpack.c.b16 %v506, %v504
  %v607 = vpack.c.b16 %v509, %v507
  %v608 = vpack.c.b16 %v510, %v508
  %v609 = vpack.c.b16 %v513, %v511
  %v610 = vpack.c.b16 %v514, %v512
  %v611 = vpack.c.b16 %v517, %v515
  %v612 = vpack.c.b16 %v518, %v516
  %v613 = vpack.c.b16 %v521, %v519
  %v614 = vpack.c.b16 %v522, %v520
  %v615 = vpack.c.b16 %v525, %v523
  %v616 = vpack.c.b16 %v526, %v524
  %v617 = vpack.c.b16 %v529, %v527
  %v618 = vpack.c.b16 %v530, %v528
  %v619 = vpack.c.b16 %v533, %v531
  %v620 = vpack.c.b16 %v534, %v532
  %v621 = vpack.c.b16 %v537, %v535
  %v622 = vpack.c.b16 %v538, %v536
  %v623 = vpack.c.b16 %v541, %v539
  %v624 = vpack.c.b16 %v542, %v540
  %v625 = vpack.c.b16 %v545, %v543
  %v626 = vpack.c.b16 %v546, %v544
  %v627 = vpack.c.b16 %v549, %v547
  %v628 = vpack.c.b16 %v550, %v548
  %v629 = vpack.c.b16 %v553, %v551
  %v630 = vpack.c.b16 %v554, %v552
  %v631 = vpack.c.b16 %v557, %v555
  %v632 = vpack.c.b16 %v558, %v556
  %v633 = vpack.c.b16 %v561, %v559
  %v634 = vpack.c.b16 %v562, %v560
  %vm707 = vcmask 523264
  %v709 = vsel %vm707, %v279, 0
  %v712 = vsel %vm707, %v284, 0
  %v715 = vsel %vm707, %v289, 0
  %v718 = vsel %vm707, %v294, 0
  %v721 = vsel %vm707, %v299, 0
  %v724 = vsel %vm707, %v304, 0
  %v727 = vsel %vm707, %v309, 0
  %v730 = vsel %vm707, %v314, 0
  %732 = vmatprep.subr.bf16.mxu0 %v564
  %733 = vmatpush1.bf16.msra.mxu0 %v563
  %734 = vmatprep.subr.bf16.mxu0 %v566
  %735 = vmatpush1.bf16.msra.mxu0 %v565
  %736 = vmatprep.subr.bf16.mxu0 %v568
  %737 = vmatpush1.bf16.msra.mxu0 %v567
  %738 = vmatprep.subr.bf16.mxu0 %v570
  %739 = vmatpush1.bf16.msra.mxu0 %v569
  %740 = vmatprep.subr.bf16.mxu0 %v572
  %741 = vmatpush1.bf16.msra.mxu0 %v571
  %742 = vmatprep.subr.bf16.mxu0 %v574
  %743 = vmatpush1.bf16.msra.mxu0 %v573
  %744 = vmatprep.subr.bf16.mxu0 %v576
  %745 = vmatpush1.bf16.msra.mxu0 %v575
  %746 = vmatprep.subr.bf16.mxu0 %v578
  %747 = vmatpush1.bf16.msra.mxu0 %v577
  %748 = vmatprep.subr.bf16.mxu0 %v580
  %749 = vmatpush1.bf16.msra.mxu0 %v579
  %750 = vmatprep.subr.bf16.mxu0 %v582
  %751 = vmatpush1.bf16.msra.mxu0 %v581
  %752 = vmatprep.subr.bf16.mxu0 %v584
  %753 = vmatpush1.bf16.msra.mxu0 %v583
  %754 = vmatprep.subr.bf16.mxu0 %v586
  %755 = vmatpush1.bf16.msra.mxu0 %v585
  %756 = vmatprep.subr.bf16.mxu0 %v588
  %757 = vmatpush1.bf16.msra.mxu0 %v587
  %758 = vmatprep.subr.bf16.mxu0 %v590
  %759 = vmatpush1.bf16.msra.mxu0 %v589
  %760 = vmatprep.subr.bf16.mxu0 %v592
  %761 = vmatpush1.bf16.msra.mxu0 %v591
  %762 = vmatprep.subr.bf16.mxu0 %v594
  %763 = vmatpush1.bf16.msra.mxu0 %v593
  %764 = vmatprep.mubr.bf16.mxu0 %v276
  %765 = vmatmul.mubr.bf16.gmra.mrb[0].mxu0 %v275
  %v766 = vpop.f32.mrb[0].mxu0
  %v767 = vadd.f32 %v140, %v766
  %v768 = vpop.f32.mrb[0].mxu0
  %v769 = vadd.f32 %v144, %v768
  %v770 = vpop.f32.mrb[0].mxu0
  %v771 = vadd.f32 %v140, %v770
  %v772 = vpop.f32.mrb[0].mxu0
  %v773 = vadd.f32 %v144, %v772
  %774 = vmatprep.mubr.bf16.mxu0 %v281
  %775 = vmatmul.mubr.bf16.gmra.mrb[0].mxu0 %v280
  %v776 = vpop.f32.mrb[0].mxu0
  %v777 = vadd.f32 %v140, %v776
  %v778 = vpop.f32.mrb[0].mxu0
  %v779 = vadd.f32 %v144, %v778
  %v780 = vpop.f32.mrb[0].mxu0
  %v781 = vadd.f32 %v140, %v780
  %v782 = vpop.f32.mrb[0].mxu0
  %v783 = vadd.f32 %v144, %v782
  %784 = vmatprep.mubr.bf16.mxu0 %v286
  %785 = vmatmul.mubr.bf16.gmra.mrb[0].mxu0 %v285
  %v786 = vpop.f32.mrb[0].mxu0
  %v787 = vadd.f32 %v140, %v786
  %v788 = vpop.f32.mrb[0].mxu0
  %v789 = vadd.f32 %v144, %v788
  %v790 = vpop.f32.mrb[0].mxu0
  %v791 = vadd.f32 %v140, %v790
  %v792 = vpop.f32.mrb[0].mxu0
  %v793 = vadd.f32 %v144, %v792
  %794 = vmatprep.mubr.bf16.mxu0 %v291
  %795 = vmatmul.mubr.bf16.gmra.mrb[0].mxu0 %v290
  %v796 = vpop.f32.mrb[0].mxu0
  %v797 = vadd.f32 %v140, %v796
  %v798 = vpop.f32.mrb[0].mxu0
  %v799 = vadd.f32 %v144, %v798
  %v800 = vpop.f32.mrb[0].mxu0
  %v801 = vadd.f32 %v140, %v800
  %v802 = vpop.f32.mrb[0].mxu0
  %v803 = vadd.f32 %v144, %v802
  %804 = vmatprep.mubr.bf16.mxu0 %v296
  %805 = vmatmul.mubr.bf16.gmra.mrb[0].mxu0 %v295
  %v806 = vpop.f32.mrb[0].mxu0
  %v807 = vadd.f32 %v140, %v806
  %v808 = vpop.f32.mrb[0].mxu0
  %v809 = vadd.f32 %v144, %v808
  %v810 = vpop.f32.mrb[0].mxu0
  %v811 = vadd.f32 %v140, %v810
  %v812 = vpop.f32.mrb[0].mxu0
  %v813 = vadd.f32 %v144, %v812
  %814 = vmatprep.mubr.bf16.mxu0 %v301
  %815 = vmatmul.mubr.bf16.gmra.mrb[0].mxu0 %v300
  %v816 = vpop.f32.mrb[0].mxu0
  %v817 = vadd.f32 %v140, %v816
  %v818 = vpop.f32.mrb[0].mxu0
  %v819 = vadd.f32 %v144, %v818
  %v820 = vpop.f32.mrb[0].mxu0
  %v821 = vadd.f32 %v140, %v820
  %v822 = vpop.f32.mrb[0].mxu0
  %v823 = vadd.f32 %v144, %v822
  %824 = vmatprep.mubr.bf16.mxu0 %v306
  %825 = vmatmul.mubr.bf16.gmra.mrb[0].mxu0 %v305
  %v826 = vpop.f32.mrb[0].mxu0
  %v827 = vadd.f32 %v140, %v826
  %v828 = vpop.f32.mrb[0].mxu0
  %v829 = vadd.f32 %v144, %v828
  %v830 = vpop.f32.mrb[0].mxu0
  %v831 = vadd.f32 %v140, %v830
  %v832 = vpop.f32.mrb[0].mxu0
  %v833 = vadd.f32 %v144, %v832
  %834 = vmatprep.mubr.bf16.mxu0 %v311
  %835 = vmatmul.mubr.bf16.gmra.mrb[0].mxu0 %v310
  %v836 = vpop.f32.mrb[0].mxu0
  %v837 = vadd.f32 %v140, %v836
  %v838 = vpop.f32.mrb[0].mxu0
  %v839 = vadd.f32 %v144, %v838
  %v840 = vpop.f32.mrb[0].mxu0
  %v841 = vadd.f32 %v140, %v840
  %v842 = vpop.f32.mrb[0].mxu0
  %v843 = vadd.f32 %v144, %v842
  %844 = vdwg.mxu0
  %845 = vmatprep.subr.bf16.mxu0 %v596
  %846 = vmatpush1.bf16.msra.mxu0 %v595
  %847 = vmatprep.subr.bf16.mxu0 %v598
  %848 = vmatpush1.bf16.msra.mxu0 %v597
  %849 = vmatprep.subr.bf16.mxu0 %v600
  %850 = vmatpush1.bf16.msra.mxu0 %v599
  %851 = vmatprep.subr.bf16.mxu0 %v602
  %852 = vmatpush1.bf16.msra.mxu0 %v601
  %853 = vmatprep.subr.bf16.mxu0 %v604
  %854 = vmatpush1.bf16.msra.mxu0 %v603
  %855 = vmatprep.subr.bf16.mxu0 %v606
  %856 = vmatpush1.bf16.msra.mxu0 %v605
  %857 = vmatprep.subr.bf16.mxu0 %v608
  %858 = vmatpush1.bf16.msra.mxu0 %v607
  %859 = vmatprep.subr.bf16.mxu0 %v610
  %860 = vmatpush1.bf16.msra.mxu0 %v609
  %861 = vmatprep.subr.bf16.mxu0 %v612
  %862 = vmatpush1.bf16.msra.mxu0 %v611
  %863 = vmatprep.subr.bf16.mxu0 %v614
  %864 = vmatpush1.bf16.msra.mxu0 %v613
  %865 = vmatprep.subr.bf16.mxu0 %v616
  %866 = vmatpush1.bf16.msra.mxu0 %v615
  %867 = vmatprep.subr.bf16.mxu0 %v618
  %868 = vmatpush1.bf16.msra.mxu0 %v617
  %869 = vmatprep.subr.bf16.mxu0 %v620
  %870 = vmatpush1.bf16.msra.mxu0 %v619
  %871 = vmatprep.subr.bf16.mxu0 %v622
  %872 = vmatpush1.bf16.msra.mxu0 %v621
  %873 = vmatprep.subr.bf16.mxu0 %v624
  %874 = vmatpush1.bf16.msra.mxu0 %v623
  %875 = vmatprep.subr.bf16.mxu0 %v626
  %876 = vmatpush1.bf16.msra.mxu0 %v625
  %877 = vmatprep.mubr.bf16.mxu0 %v278
  %878 = vmatmul.mubr.bf16.gmra.mrb[0].mxu0 %v277
  %v879 = vpop.f32.mrb[0].mxu0
  %v880 = vadd.f32 %v767, %v879
  %v881 = vpop.f32.mrb[0].mxu0
  %v882 = vadd.f32 %v769, %v881
  %v883 = vpop.f32.mrb[0].mxu0
  %v884 = vadd.f32 %v771, %v883
  %v885 = vpop.f32.mrb[0].mxu0
  %v886 = vadd.f32 %v773, %v885
  %887 = vmatprep.mubr.bf16.mxu0 %v283
  %888 = vmatmul.mubr.bf16.gmra.mrb[0].mxu0 %v282
  %v889 = vpop.f32.mrb[0].mxu0
  %v890 = vadd.f32 %v777, %v889
  %v891 = vpop.f32.mrb[0].mxu0
  %v892 = vadd.f32 %v779, %v891
  %v893 = vpop.f32.mrb[0].mxu0
  %v894 = vadd.f32 %v781, %v893
  %v895 = vpop.f32.mrb[0].mxu0
  %v896 = vadd.f32 %v783, %v895
  %897 = vmatprep.mubr.bf16.mxu0 %v288
  %898 = vmatmul.mubr.bf16.gmra.mrb[0].mxu0 %v287
  %v899 = vpop.f32.mrb[0].mxu0
  %v900 = vadd.f32 %v787, %v899
  %v901 = vpop.f32.mrb[0].mxu0
  %v902 = vadd.f32 %v789, %v901
  %v903 = vpop.f32.mrb[0].mxu0
  %v904 = vadd.f32 %v791, %v903
  %v905 = vpop.f32.mrb[0].mxu0
  %v906 = vadd.f32 %v793, %v905
  %907 = vmatprep.mubr.bf16.mxu0 %v293
  %908 = vmatmul.mubr.bf16.gmra.mrb[0].mxu0 %v292
  %v909 = vpop.f32.mrb[0].mxu0
  %v910 = vadd.f32 %v797, %v909
  %v911 = vpop.f32.mrb[0].mxu0
  %v912 = vadd.f32 %v799, %v911
  %v913 = vpop.f32.mrb[0].mxu0
  %v914 = vadd.f32 %v801, %v913
  %v915 = vpop.f32.mrb[0].mxu0
  %v916 = vadd.f32 %v803, %v915
  %917 = vmatprep.mubr.bf16.mxu0 %v298
  %918 = vmatmul.mubr.bf16.gmra.mrb[0].mxu0 %v297
  %v919 = vpop.f32.mrb[0].mxu0
  %v920 = vadd.f32 %v807, %v919
  %v921 = vpop.f32.mrb[0].mxu0
  %v922 = vadd.f32 %v809, %v921
  %v923 = vpop.f32.mrb[0].mxu0
  %v924 = vadd.f32 %v811, %v923
  %v925 = vpop.f32.mrb[0].mxu0
  %v926 = vadd.f32 %v813, %v925
  %927 = vmatprep.mubr.bf16.mxu0 %v303
  %928 = vmatmul.mubr.bf16.gmra.mrb[0].mxu0 %v302
  %v929 = vpop.f32.mrb[0].mxu0
  %v930 = vadd.f32 %v817, %v929
  %v931 = vpop.f32.mrb[0].mxu0
  %v932 = vadd.f32 %v819, %v931
  %v933 = vpop.f32.mrb[0].mxu0
  %v934 = vadd.f32 %v821, %v933
  %v935 = vpop.f32.mrb[0].mxu0
  %v936 = vadd.f32 %v823, %v935
  %937 = vmatprep.mubr.bf16.mxu0 %v308
  %938 = vmatmul.mubr.bf16.gmra.mrb[0].mxu0 %v307
  %v939 = vpop.f32.mrb[0].mxu0
  %v940 = vadd.f32 %v827, %v939
  %v941 = vpop.f32.mrb[0].mxu0
  %v942 = vadd.f32 %v829, %v941
  %v943 = vpop.f32.mrb[0].mxu0
  %v944 = vadd.f32 %v831, %v943
  %v945 = vpop.f32.mrb[0].mxu0
  %v946 = vadd.f32 %v833, %v945
  %947 = vmatprep.mubr.bf16.mxu0 %v313
  %948 = vmatmul.mubr.bf16.gmra.mrb[0].mxu0 %v312
  %v949 = vpop.f32.mrb[0].mxu0
  %v950 = vadd.f32 %v837, %v949
  %v951 = vpop.f32.mrb[0].mxu0
  %v952 = vadd.f32 %v839, %v951
  %v953 = vpop.f32.mrb[0].mxu0
  %v954 = vadd.f32 %v841, %v953
  %v955 = vpop.f32.mrb[0].mxu0
  %v956 = vadd.f32 %v843, %v955
  %957 = vdwg.mxu0
  %958 = vmatprep.subr.bf16.mxu0 %v628
  %959 = vmatpush1.bf16.msra.mxu0 %v627
  %960 = vmatprep.subr.bf16.mxu0 %v630
  %961 = vmatpush1.bf16.msra.mxu0 %v629
  %962 = vmatprep.subr.bf16.mxu0 %v632
  %963 = vmatpush1.bf16.msra.mxu0 %v631
  %964 = vmatprep.subr.bf16.mxu0 %v634
  %965 = vmatpush1.bf16.msra.mxu0 %v633
  %966 = vmatprep.subr.bf16.mxu0 0
  %967 = vmatpush1.bf16.msra.mxu0 0
  %968 = vmatprep.subr.bf16.mxu0 0
  %969 = vmatpush1.bf16.msra.mxu0 0
  %970 = vmatprep.subr.bf16.mxu0 0
  %971 = vmatpush1.bf16.msra.mxu0 0
  %972 = vmatprep.subr.bf16.mxu0 0
  %973 = vmatpush1.bf16.msra.mxu0 0
  %974 = vmatprep.subr.bf16.mxu0 0
  %975 = vmatpush1.bf16.msra.mxu0 0
  %976 = vmatprep.subr.bf16.mxu0 0
  %977 = vmatpush1.bf16.msra.mxu0 0
  %978 = vmatprep.subr.bf16.mxu0 0
  %979 = vmatpush1.bf16.msra.mxu0 0
  %980 = vmatprep.subr.bf16.mxu0 0
  %981 = vmatpush1.bf16.msra.mxu0 0
  %982 = vmatprep.subr.bf16.mxu0 0
  %983 = vmatpush1.bf16.msra.mxu0 0
  %984 = vmatprep.subr.bf16.mxu0 0
  %985 = vmatpush1.bf16.msra.mxu0 0
  %986 = vmatprep.subr.bf16.mxu0 0
  %987 = vmatpush1.bf16.msra.mxu0 0
  %988 = vmatprep.subr.bf16.mxu0 0
  %989 = vmatpush1.bf16.msra.mxu0 0
  %990 = vmatprep.mubr.bf16.mxu0 0
  %991 = vmatmul.mubr.bf16.gmra.mrb[0].mxu0 %v709
  %v992 = vpop.f32.mrb[0].mxu0
  %v993 = vadd.f32 %v880, %v992
  %v994 = vpop.f32.mrb[0].mxu0
  %v995 = vadd.f32 %v882, %v994
  %v996 = vpop.f32.mrb[0].mxu0
  %v997 = vadd.f32 %v884, %v996
  %v998 = vpop.f32.mrb[0].mxu0
  %v999 = vadd.f32 %v886, %v998
  %1000 = vmatprep.mubr.bf16.mxu0 0
  %1001 = vmatmul.mubr.bf16.gmra.mrb[0].mxu0 %v712
  %v1002 = vpop.f32.mrb[0].mxu0
  %v1003 = vadd.f32 %v890, %v1002
  %v1004 = vpop.f32.mrb[0].mxu0
  %v1005 = vadd.f32 %v892, %v1004
  %v1006 = vpop.f32.mrb[0].mxu0
  %v1007 = vadd.f32 %v894, %v1006
  %v1008 = vpop.f32.mrb[0].mxu0
  %v1009 = vadd.f32 %v896, %v1008
  %1010 = vmatprep.mubr.bf16.mxu0 0
  %1011 = vmatmul.mubr.bf16.gmra.mrb[0].mxu0 %v715
  %v1012 = vpop.f32.mrb[0].mxu0
  %v1013 = vadd.f32 %v900, %v1012
  %v1014 = vpop.f32.mrb[0].mxu0
  %v1015 = vadd.f32 %v902, %v1014
  %v1016 = vpop.f32.mrb[0].mxu0
  %v1017 = vadd.f32 %v904, %v1016
  %v1018 = vpop.f32.mrb[0].mxu0
  %v1019 = vadd.f32 %v906, %v1018
  %1020 = vmatprep.mubr.bf16.mxu0 0
  %1021 = vmatmul.mubr.bf16.gmra.mrb[0].mxu0 %v718
  %v1022 = vpop.f32.mrb[0].mxu0
  %v1023 = vadd.f32 %v910, %v1022
  %v1024 = vpop.f32.mrb[0].mxu0
  %v1025 = vadd.f32 %v912, %v1024
  %v1026 = vpop.f32.mrb[0].mxu0
  %v1027 = vadd.f32 %v914, %v1026
  %v1028 = vpop.f32.mrb[0].mxu0
  %v1029 = vadd.f32 %v916, %v1028
  %1030 = vmatprep.mubr.bf16.mxu0 0
  %1031 = vmatmul.mubr.bf16.gmra.mrb[0].mxu0 %v721
  %v1032 = vpop.f32.mrb[0].mxu0
  %v1033 = vadd.f32 %v920, %v1032
  %v1034 = vpop.f32.mrb[0].mxu0
  %v1035 = vadd.f32 %v922, %v1034
  %v1036 = vpop.f32.mrb[0].mxu0
  %v1037 = vadd.f32 %v924, %v1036
  %v1038 = vpop.f32.mrb[0].mxu0
  %v1039 = vadd.f32 %v926, %v1038
  %1040 = vmatprep.mubr.bf16.mxu0 0
  %1041 = vmatmul.mubr.bf16.gmra.mrb[0].mxu0 %v724
  %v1042 = vpop.f32.mrb[0].mxu0
  %v1043 = vadd.f32 %v930, %v1042
  %v1044 = vpop.f32.mrb[0].mxu0
  %v1045 = vadd.f32 %v932, %v1044
  %v1046 = vpop.f32.mrb[0].mxu0
  %v1047 = vadd.f32 %v934, %v1046
  %v1048 = vpop.f32.mrb[0].mxu0
  %v1049 = vadd.f32 %v936, %v1048
  %1050 = vmatprep.mubr.bf16.mxu0 0
  %1051 = vmatmul.mubr.bf16.gmra.mrb[0].mxu0 %v727
  %v1052 = vpop.f32.mrb[0].mxu0
  %v1053 = vadd.f32 %v940, %v1052
  %v1054 = vpop.f32.mrb[0].mxu0
  %v1055 = vadd.f32 %v942, %v1054
  %v1056 = vpop.f32.mrb[0].mxu0
  %v1057 = vadd.f32 %v944, %v1056
  %v1058 = vpop.f32.mrb[0].mxu0
  %v1059 = vadd.f32 %v946, %v1058
  %1060 = vmatprep.mubr.bf16.mxu0 0
  %1061 = vmatmul.mubr.bf16.gmra.mrb[0].mxu0 %v730
  %v1062 = vpop.f32.mrb[0].mxu0
  %v1063 = vadd.f32 %v950, %v1062
  %v1064 = vpop.f32.mrb[0].mxu0
  %v1065 = vadd.f32 %v952, %v1064
  %v1066 = vpop.f32.mrb[0].mxu0
  %v1067 = vadd.f32 %v954, %v1066
  %v1068 = vpop.f32.mrb[0].mxu0
  %v1069 = vadd.f32 %v956, %v1068
  %1070 = vdwg.mxu0
  %v1071 = vmax.f32 %v993, 0.0
  %v1072 = vmax.f32 %v995, 0.0
  %v1073 = vmax.f32 %v997, 0.0
  %v1074 = vmax.f32 %v999, 0.0
  %v1075 = vmax.f32 %v1003, 0.0
  %v1076 = vmax.f32 %v1005, 0.0
  %v1077 = vmax.f32 %v1007, 0.0
  %v1078 = vmax.f32 %v1009, 0.0
  %v1079 = vmax.f32 %v1013, 0.0
  %v1080 = vmax.f32 %v1015, 0.0
  %v1081 = vmax.f32 %v1017, 0.0
  %v1082 = vmax.f32 %v1019, 0.0
  %v1083 = vmax.f32 %v1023, 0.0
  %v1084 = vmax.f32 %v1025, 0.0
  %v1085 = vmax.f32 %v1027, 0.0
  %v1086 = vmax.f32 %v1029, 0.0
  %v1087 = vmax.f32 %v1033, 0.0
  %v1088 = vmax.f32 %v1035, 0.0
  %v1089 = vmax.f32 %v1037, 0.0
  %v1090 = vmax.f32 %v1039, 0.0
  %v1091 = vmax.f32 %v1043, 0.0
  %v1092 = vmax.f32 %v1045, 0.0
  %v1093 = vmax.f32 %v1047, 0.0
  %v1094 = vmax.f32 %v1049, 0.0
  %v1095 = vmax.f32 %v1053, 0.0
  %v1096 = vmax.f32 %v1055, 0.0
  %v1097 = vmax.f32 %v1057, 0.0
  %v1098 = vmax.f32 %v1059, 0.0
  %v1099 = vmax.f32 %v1063, 0.0
  %v1100 = vmax.f32 %v1065, 0.0
  %v1101 = vmax.f32 %v1067, 0.0
  %v1102 = vmax.f32 %v1069, 0.0
  %v1103 = vpack.c.bf16 %v1073, %v1071
  %v1104 = vpack.c.bf16 %v1074, %v1072
  %v1105 = vpack.c.bf16 %v1077, %v1075
  %v1106 = vpack.c.bf16 %v1078, %v1076
  %v1107 = vpack.c.bf16 %v1081, %v1079
  %v1108 = vpack.c.bf16 %v1082, %v1080
  %v1109 = vpack.c.bf16 %v1085, %v1083
  %v1110 = vpack.c.bf16 %v1086, %v1084
  %v1111 = vpack.c.bf16 %v1089, %v1087
  %v1112 = vpack.c.bf16 %v1090, %v1088
  %v1113 = vpack.c.bf16 %v1093, %v1091
  %v1114 = vpack.c.bf16 %v1094, %v1092
  %v1115 = vpack.c.bf16 %v1097, %v1095
  %v1116 = vpack.c.bf16 %v1098, %v1096
  %v1117 = vpack.c.bf16 %v1101, %v1099
  %v1118 = vpack.c.bf16 %v1102, %v1100
  %v1135 = vunpack.c.l.b16 %v1103
  %v1136 = vunpack.c.l.b16 %v1104
  %v1137 = vunpack.c.h.b16 %v1103
  %v1138 = vunpack.c.h.b16 %v1104
  %v1139 = vunpack.c.l.b16 %v1105
  %v1140 = vunpack.c.l.b16 %v1106
  %v1141 = vunpack.c.h.b16 %v1105
  %v1142 = vunpack.c.h.b16 %v1106
  %v1143 = vunpack.c.l.b16 %v1107
  %v1144 = vunpack.c.l.b16 %v1108
  %v1145 = vunpack.c.h.b16 %v1107
  %v1146 = vunpack.c.h.b16 %v1108
  %v1147 = vunpack.c.l.b16 %v1109
  %v1148 = vunpack.c.l.b16 %v1110
  %v1149 = vunpack.c.h.b16 %v1109
  %v1150 = vunpack.c.h.b16 %v1110
  %v1151 = vunpack.c.l.b16 %v1111
  %v1152 = vunpack.c.l.b16 %v1112
  %v1153 = vunpack.c.h.b16 %v1111
  %v1154 = vunpack.c.h.b16 %v1112
  %v1155 = vunpack.c.l.b16 %v1113
  %v1156 = vunpack.c.l.b16 %v1114
  %v1157 = vunpack.c.h.b16 %v1113
  %v1158 = vunpack.c.h.b16 %v1114
  %v1159 = vunpack.c.l.b16 %v1115
  %v1160 = vunpack.c.l.b16 %v1116
  %v1161 = vunpack.c.h.b16 %v1115
  %v1162 = vunpack.c.h.b16 %v1116
  %v1163 = vunpack.c.l.b16 %v1117
  %v1164 = vunpack.c.l.b16 %v1118
  %v1165 = vunpack.c.h.b16 %v1117
  %v1166 = vunpack.c.h.b16 %v1118
  %v1167 = vpack.c.b16 %v1136, %v1135
  %v1168 = vpack.c.b16 %v1138, %v1137
  %v1169 = vpack.c.b16 %v1140, %v1139
  %v1170 = vpack.c.b16 %v1142, %v1141
  %v1171 = vpack.c.b16 %v1144, %v1143
  %v1172 = vpack.c.b16 %v1146, %v1145
  %v1173 = vpack.c.b16 %v1148, %v1147
  %v1174 = vpack.c.b16 %v1150, %v1149
  %v1175 = vpack.c.b16 %v1152, %v1151
  %v1176 = vpack.c.b16 %v1154, %v1153
  %v1177 = vpack.c.b16 %v1156, %v1155
  %v1178 = vpack.c.b16 %v1158, %v1157
  %v1179 = vpack.c.b16 %v1160, %v1159
  %v1180 = vpack.c.b16 %v1162, %v1161
  %v1181 = vpack.c.b16 %v1164, %v1163
  %v1182 = vpack.c.b16 %v1166, %v1165
  %1199 = vst [vmem:[%s3] sm:$0xff] %v1167
  %1200 = vst [vmem:[%s3 + $0x8] sm:$0xff] %v1168
  %1201 = vst [vmem:[%s3 + $0x10] sm:$0xff] %v1169
  %1202 = vst [vmem:[%s3 + $0x18] sm:$0xff] %v1170
  %1203 = vst [vmem:[%s3 + $0x20] sm:$0xff] %v1171
  %1204 = vst [vmem:[%s3 + $0x28] sm:$0xff] %v1172
  %1205 = vst [vmem:[%s3 + $0x30] sm:$0xff] %v1173
  %1206 = vst [vmem:[%s3 + $0x38] sm:$0xff] %v1174
  %1207 = vst [vmem:[%s3 + $0x40] sm:$0xff] %v1175
  %1208 = vst [vmem:[%s3 + $0x48] sm:$0xff] %v1176
  %1209 = vst [vmem:[%s3 + $0x50] sm:$0xff] %v1177
  %1210 = vst [vmem:[%s3 + $0x58] sm:$0xff] %v1178
  %1211 = vst [vmem:[%s3 + $0x60] sm:$0xff] %v1179
  %1212 = vst [vmem:[%s3 + $0x68] sm:$0xff] %v1180
  %1213 = vst [vmem:[%s3 + $0x70] sm:$0xff] %v1181
  %1214 = vst [vmem:[%s3 + $0x78] sm:$0xff] %v1182
  // Predicated region
  $region14: #{fsq_vae_forward.18} parent=0 // pred_check
    _
  $region15: #{fsq_vae_forward.18} parent=0 // pred_check_branch
    %1216 = sbr.rel (0) target = $region17
  $region16: #{fsq_vae_forward.18} parent=0 // pred_region
    _
  $region17: #{fsq_vae_forward.18} parent=0 // pred_fallthru
    _
  // Predicated region
  $region18: #{fsq_vae_forward.18} parent=0 // pred_check
    _
  $region19: #{fsq_vae_forward.18} parent=0 // pred_check_branch
    %1218 = sbr.rel (0) target = $region21
  $region20: #{fsq_vae_forward.18} parent=0 // pred_region
    _
  $region21: #{fsq_vae_forward.18} parent=0 // pred_fallthru
    _

// kernel: fsq_vae_forward.19
$region0: #{fsq_vae_forward.19}
  #allocation0 [shape = 'u32[]', space=smem, size = 0x4, offset = 0x4, fixed_abs, tag = 'smem constant byte address 0x4 - core index']
  #allocation1 [shape = 'u32[144,128]{1,0:T(1,128)}', space=vmem, size = 0x12000, scoped, tag = 'internal scratch']
  %s0 = inlined_call_operand.vmem [shape: bf16[512,576], index: 0, kind: input, shape index: {}]
  %s1 = inlined_call_operand.vmem [shape: bf16[576,12], index: 1, kind: input, shape index: {}]
  %s2 = inlined_call_operand.vmem [shape: f32[1,12], index: 2, kind: input, shape index: {}]
  %s3 = inlined_call_operand.vmem [shape: f32[512,12], index: 3, kind: input, shape index: {}]
  %s4 = inlined_call_operand.vmem [shape: f32[512,12], index: 4, kind: output, shape index: {0}]
  %s5 = inlined_call_operand.hbm [shape: f32[1,1], index: 5, kind: output, shape index: {1}]
  %6 = xla_tuple %s4, %s5
  %s7 = sld [smem:[#allocation0]]
  $region61: #{fsq_vae_forward.19} parent=0
    _
  %s9 = ssub.s32 1, %s7
  %s10 = scalar_select 0, %s9, %s7
  $region1: #{fsq_vae_forward.19} parent=0
    #allocation2 [shape = 'u8[512]{0}', space=vmem, size = 0x400, scoped, tag = 'output window, operand 1, single buffered']
    #allocation3 [shape = 's32[2]{0}', space=sflag, size = 0x8, scoped, tag = 'scoped memory for fsq_vae_forward.19']
    %11 = vsyncpa [#allocation3], 0
    loop: start=0, step=1, limit=4
    $region2: #{fsq_vae_forward.19} parent=1 // loop_pre_header
      _
    $region3: #{fsq_vae_forward.19} parent=1 // loop_header
      %s13 = sphi 0, %s17
      %p14 = scmp.ge.s32.totalorder %s13, 4
      %s23 = sphi 0, %s25
      %s26 = sphi 0, %s23
      %s27 = sphi 0, %s26
      %s43 = sphi 0, %s27
      %s47 = sphi 0, %s47
      %s49 = sphi 0, %s47
      %s50 = sphi 0, %s49
      %s64 = sphi 0, %s50
      %s68 = sphi 0, %s68
      %s70 = sphi 0, %s68
      %s71 = sphi 0, %s70
      %s85 = sphi 0, %s71
      %s91 = sphi 0, %s93
      %s94 = sphi 0, %s91
      %s95 = sphi 0, %s94
      %s111 = sphi 0, %s95
      %s117 = sphi 0, %s119
      %s120 = sphi 0, %s117
      %s121 = sphi 0, %s120
      %s137 = sphi 0, %s121
      %s141 = sphi 0, %s141
      %s143 = sphi 0, %s141
      %s144 = sphi 0, %s143
      %s158 = sphi 0, %s144
    $region4: #{fsq_vae_forward.19} parent=1 // loop_header_branch
      %16 = sbr.rel (%p14) target = $region8
    $region5: #{fsq_vae_forward.19} parent=1 // loop_body
      %s18 = ssub.s32 %s13, 1
      %s19 = ssub.s32 %s13, 2
      %s20 = sadd.s32 %s13, 1
      %s21 = ssub.s32 %s13, %s20
      %p22 = scmp.eq.s32.totalorder %s21, 0
      %s24 = sadd.s32 %s23, 1
      %s25 = scalar_select %p22, %s23, %s24
      %p28 = pneg %p22
      %p29 = scmp.eq.s32.totalorder %s13, 1
      %p30 = por %p28, %p29
      %p31 = scmp.ne.s32.totalorder %s23, %s26
      %p32 = scmp.eq.s32.totalorder %s13, 0
      %p33 = por %p31, %p32
      %p34 = scmp.ne.s32.totalorder %s23, %s26
      %p35 = scmp.eq.s32.totalorder %s18, 1
      %p36 = por %p34, %p35
      %p37 = scmp.ne.s32.totalorder %s26, %s27
      %p38 = scmp.eq.s32.totalorder %s18, 0
      %p39 = por %p37, %p38
      %p40 = scmp.ne.s32.totalorder %s26, %s27
      %p41 = scmp.eq.s32.totalorder %s19, 1
      %p42 = por %p40, %p41
      %p44 = scmp.ne.s32.totalorder %s27, %s43
      %p45 = scmp.eq.s32.totalorder %s19, 0
      %p46 = por %p44, %p45
      %s48 = sadd.s32 %s47, 1
      %p51 = scmp.eq.s32.totalorder %s13, 1
      %p52 = scmp.ne.s32.totalorder %s47, %s49
      %p53 = scmp.eq.s32.totalorder %s13, 0
      %p54 = por %p52, %p53
      %p55 = scmp.ne.s32.totalorder %s47, %s49
      %p56 = scmp.eq.s32.totalorder %s18, 1
      %p57 = por %p55, %p56
      %p58 = scmp.ne.s32.totalorder %s49, %s50
      %p59 = scmp.eq.s32.totalorder %s18, 0
      %p60 = por %p58, %p59
      %p61 = scmp.ne.s32.totalorder %s49, %s50
      %p62 = scmp.eq.s32.totalorder %s19, 1
      %p63 = por %p61, %p62
      %p65 = scmp.ne.s32.totalorder %s50, %s64
      %p66 = scmp.eq.s32.totalorder %s19, 0
      %p67 = por %p65, %p66
      %s69 = sadd.s32 %s68, 1
      %p72 = scmp.eq.s32.totalorder %s13, 1
      %p73 = scmp.ne.s32.totalorder %s68, %s70
      %p74 = scmp.eq.s32.totalorder %s13, 0
      %p75 = por %p73, %p74
      %p76 = scmp.ne.s32.totalorder %s68, %s70
      %p77 = scmp.eq.s32.totalorder %s18, 1
      %p78 = por %p76, %p77
      %p79 = scmp.ne.s32.totalorder %s70, %s71
      %p80 = scmp.eq.s32.totalorder %s18, 0
      %p81 = por %p79, %p80
      %p82 = scmp.ne.s32.totalorder %s70, %s71
      %p83 = scmp.eq.s32.totalorder %s19, 1
      %p84 = por %p82, %p83
      %p86 = scmp.ne.s32.totalorder %s71, %s85
      %p87 = scmp.eq.s32.totalorder %s19, 0
      %p88 = por %p86, %p87
      %s89 = ssub.s32 %s13, %s20
      %p90 = scmp.eq.s32.totalorder %s89, 0
      %s92 = sadd.s32 %s91, 1
      %s93 = scalar_select %p90, %s91, %s92
      %p96 = pneg %p90
      %p97 = scmp.eq.s32.totalorder %s13, 1
      %p98 = por %p96, %p97
      %p99 = scmp.ne.s32.totalorder %s91, %s94
      %p100 = scmp.eq.s32.totalorder %s13, 0
      %p101 = por %p99, %p100
      %p102 = scmp.ne.s32.totalorder %s91, %s94
      %p103 = scmp.eq.s32.totalorder %s18, 1
      %p104 = por %p102, %p103
      %p105 = scmp.ne.s32.totalorder %s94, %s95
      %p106 = scmp.eq.s32.totalorder %s18, 0
      %p107 = por %p105, %p106
      %p108 = scmp.ne.s32.totalorder %s94, %s95
      %p109 = scmp.eq.s32.totalorder %s19, 1
      %p110 = por %p108, %p109
      %p112 = scmp.ne.s32.totalorder %s95, %s111
      %p113 = scmp.eq.s32.totalorder %s19, 0
      %p114 = por %p112, %p113
      %s115 = ssub.s32 %s13, %s20
      %p116 = scmp.eq.s32.totalorder %s115, 0
      %s118 = sadd.s32 %s117, 1
      %s119 = scalar_select %p116, %s117, %s118
      %p122 = pneg %p116
      %p123 = scmp.eq.s32.totalorder %s13, 1
      %p124 = por %p122, %p123
      %p125 = scmp.ne.s32.totalorder %s117, %s120
      %p126 = scmp.eq.s32.totalorder %s13, 0
      %p127 = por %p125, %p126
      %p128 = scmp.ne.s32.totalorder %s117, %s120
      %p129 = scmp.eq.s32.totalorder %s18, 1
      %p130 = por %p128, %p129
      %p131 = scmp.ne.s32.totalorder %s120, %s121
      %p132 = scmp.eq.s32.totalorder %s18, 0
      %p133 = por %p131, %p132
      %p134 = scmp.ne.s32.totalorder %s120, %s121
      %p135 = scmp.eq.s32.totalorder %s19, 1
      %p136 = por %p134, %p135
      %p138 = scmp.ne.s32.totalorder %s121, %s137
      %p139 = scmp.eq.s32.totalorder %s19, 0
      %p140 = por %p138, %p139
      %s142 = sadd.s32 %s141, 1
      %p145 = scmp.eq.s32.totalorder %s13, 1
      %p146 = scmp.ne.s32.totalorder %s141, %s143
      %p147 = scmp.eq.s32.totalorder %s13, 0
      %p148 = por %p146, %p147
      %p149 = scmp.ne.s32.totalorder %s141, %s143
      %p150 = scmp.eq.s32.totalorder %s18, 1
      %p151 = por %p149, %p150
      %p152 = scmp.ne.s32.totalorder %s143, %s144
      %p153 = scmp.eq.s32.totalorder %s18, 0
      %p154 = por %p152, %p153
      %p155 = scmp.ne.s32.totalorder %s143, %s144
      %p156 = scmp.eq.s32.totalorder %s19, 1
      %p157 = por %p155, %p156
      %p159 = scmp.ne.s32.totalorder %s144, %s158
      %p160 = scmp.eq.s32.totalorder %s19, 0
      %p161 = por %p159, %p160
      %p162 = scmp.le.s32.totalorder 1, %s13
      %p163 = scmp.lt.s32.totalorder %s13, 3
      %p164 = pnand %p162, %p163
      %p165 = pneg %p164
      // Predicated region
      $region9: #{fsq_vae_forward.19} parent=5 // pred_check
        _
      $region10: #{fsq_vae_forward.19} parent=5 // pred_check_branch
        %167 = sbr.rel (%p164) target = $region12
      $region11: #{fsq_vae_forward.19} parent=5 // pred_region
        %s168 = ssub.s32 %s13, 1
        // Predicated region
        $region13: #{fsq_vae_forward.19} parent=11 // pred_check
          %p169 = pneg %p60
        $region14: #{fsq_vae_forward.19} parent=11 // pred_check_branch
          %171 = sbr.rel (%p169) target = $region16
        $region15: #{fsq_vae_forward.19} parent=11 // pred_region
          _
        $region16: #{fsq_vae_forward.19} parent=11 // pred_fallthru
          _
        // Predicated region
        $region17: #{fsq_vae_forward.19} parent=11 // pred_check
          %p172 = pneg %p81
        $region18: #{fsq_vae_forward.19} parent=11 // pred_check_branch
          %174 = sbr.rel (%p172) target = $region20
        $region19: #{fsq_vae_forward.19} parent=11 // pred_region
          _
        $region20: #{fsq_vae_forward.19} parent=11 // pred_fallthru
          _
      $region12: #{fsq_vae_forward.19} parent=5 // pred_fallthru
        _
      %p175 = scmp.lt.s32.totalorder %s13, 2
      // Predicated region
      $region21: #{fsq_vae_forward.19} parent=5 // pred_check
        %p176 = pneg %p175
      $region22: #{fsq_vae_forward.19} parent=5 // pred_check_branch
        %178 = sbr.rel (%p176) target = $region24
      $region23: #{fsq_vae_forward.19} parent=5 // pred_region
        // Predicated region
        $region25: #{fsq_vae_forward.19} parent=23 // pred_check
          %p179 = pneg %p33
        $region26: #{fsq_vae_forward.19} parent=23 // pred_check_branch
          %181 = sbr.rel (%p179) target = $region28
        $region27: #{fsq_vae_forward.19} parent=23 // pred_region
          %s182 = smul.u32 32, %s13
          %p183 = scmp.lt.s32.totalorder %s182, 63
          %s184 = scalar_select %p183, %s182, 63
          %s185 = smul.addr %s184, 5
          %s186 = smul.addr %s185, 4
          %s187 = scalar_lea.vmem %s0, %s186
          %s188 = smul.u32 32, %s13
        $region28: #{fsq_vae_forward.19} parent=23 // pred_fallthru
          _
        // Predicated region
        $region29: #{fsq_vae_forward.19} parent=23 // pred_check
          %p189 = pneg %p101
        $region30: #{fsq_vae_forward.19} parent=23 // pred_check_branch
          %191 = sbr.rel (%p189) target = $region32
        $region31: #{fsq_vae_forward.19} parent=23 // pred_region
          %s192 = smul.u32 32, %s13
          %p193 = scmp.lt.s32.totalorder %s192, 63
          %s194 = scalar_select %p193, %s192, 63
          %s195 = smul.addr %s194, 8
          %s196 = scalar_lea.vmem %s3, %s195
          %s197 = smul.u32 32, %s13
        $region32: #{fsq_vae_forward.19} parent=23 // pred_fallthru
          _
      $region24: #{fsq_vae_forward.19} parent=5 // pred_fallthru
        _
      %p198 = scmp.le.s32.totalorder 1, %s13
      %p199 = scmp.lt.s32.totalorder %s13, 3
      %p200 = pnand %p198, %p199
      %p201 = pneg %p200
      // Predicated region
      $region33: #{fsq_vae_forward.19} parent=5 // pred_check
        _
      $region34: #{fsq_vae_forward.19} parent=5 // pred_check_branch
        %203 = sbr.rel (%p200) target = $region36
      $region35: #{fsq_vae_forward.19} parent=5 // pred_region
        %s204 = ssub.s32 %s13, 1
        %s205 = smul.u32 32, %s18
        %p206 = scmp.lt.s32.totalorder %s205, 63
        %s207 = scalar_select %p206, %s205, 63
        %s208 = smul.addr %s207, 5
        %s209 = smul.addr %s208, 4
        %s210 = scalar_lea.vmem %s0, %s209
        %p211 = pneg %p39
        %p212 = pneg %p36
        %p213 = pneg %p60
        %p214 = pneg %p57
        %p215 = pneg %p81
        %p216 = pneg %p78
        %s217 = smul.u32 32, %s18
        %p218 = scmp.lt.s32.totalorder %s217, 63
        %s219 = scalar_select %p218, %s217, 63
        %s220 = smul.addr %s219, 8
        %s221 = scalar_lea.vmem %s3, %s220
        %p222 = pneg %p107
        %p223 = pneg %p104
        %p224 = pneg %p133
        %p225 = pneg %p130
        %s226 = smul.u32 32, %s18
        %p227 = scmp.lt.s32.totalorder %s226, 63
        %s228 = scalar_select %p227, %s226, 63
        %s229 = smul.addr %s228, 8
        %s230 = scalar_lea.vmem %s4, %s229
        %p231 = pneg %p154
        %p232 = pneg %p151
        %s233 = smul.u32 32, %s18
        %p234 = scmp.lt.s32.totalorder %s233, 63
        %s235 = scalar_select %p234, %s233, 63
        %s236 = smul.addr %s235, 5
        %s237 = smul.addr %s236, 4
        %s238 = scalar_lea.vmem %s0, %s237
        %s239 = smul.u32 32, %s18
        %s240 = smul.u32 32, %s18
        %p241 = scmp.lt.s32.totalorder %s240, 63
        %s242 = scalar_select %p241, %s240, 63
        %s243 = smul.addr %s242, 8
        %s244 = scalar_lea.vmem %s3, %s243
        %s245 = smul.u32 32, %s18
        %s246 = smul.u32 32, %s18
        %p247 = scmp.lt.s32.totalorder %s246, 63
        %s248 = scalar_select %p247, %s246, 63
        %s249 = smul.addr %s248, 8
        %s250 = scalar_lea.vmem %s4, %s249
        %s251 = smul.u32 32, %s18
        %v253 = vld [vmem:[%s238] sm:$0xff]
        %v254 = vld [vmem:[%s238 + $0x8] sm:$0xff]
        %v255 = vld [vmem:[%s238 + $0x10] sm:$0xf]
        %v256 = vld [vmem:[%s238 + $0x14] sm:$0xff]
        %v257 = vld [vmem:[%s238 + $0x1c] sm:$0xff]
        %v258 = vld [vmem:[%s238 + $0x24] sm:$0xf]
        %v259 = vld [vmem:[%s238 + $0x28] sm:$0xff]
        %v260 = vld [vmem:[%s238 + $0x30] sm:$0xff]
        %v261 = vld [vmem:[%s238 + $0x38] sm:$0xf]
        %v262 = vld [vmem:[%s238 + $0x3c] sm:$0xff]
        %v263 = vld [vmem:[%s238 + $0x44] sm:$0xff]
        %v264 = vld [vmem:[%s238 + $0x4c] sm:$0xf]
        %v265 = vld [vmem:[%s238 + $0x50] sm:$0xff]
        %v266 = vld [vmem:[%s238 + $0x58] sm:$0xff]
        %v267 = vld [vmem:[%s238 + $0x60] sm:$0xf]
        %v268 = vld [vmem:[%s238 + $0x64] sm:$0xff]
        %v269 = vld [vmem:[%s238 + $0x6c] sm:$0xff]
        %v270 = vld [vmem:[%s238 + $0x74] sm:$0xf]
        %v271 = vld [vmem:[%s238 + $0x78] sm:$0xff]
        %v272 = vld [vmem:[%s238 + $0x80] sm:$0xff]
        %v273 = vld [vmem:[%s238 + $0x88] sm:$0xf]
        %v274 = vld [vmem:[%s238 + $0x8c] sm:$0xff]
        %v275 = vld [vmem:[%s238 + $0x94] sm:$0xff]
        %v276 = vld [vmem:[%s238 + $0x9c] sm:$0xf]
        %v277 = vld [vmem:[%s238 + $0xa0] sm:$0xff]
        %v278 = vld [vmem:[%s238 + $0xa8] sm:$0xff]
        %v279 = vld [vmem:[%s238 + $0xb0] sm:$0xf]
        %v280 = vld [vmem:[%s238 + $0xb4] sm:$0xff]
        %v281 = vld [vmem:[%s238 + $0xbc] sm:$0xff]
        %v282 = vld [vmem:[%s238 + $0xc4] sm:$0xf]
        %v283 = vld [vmem:[%s238 + $0xc8] sm:$0xff]
        %v284 = vld [vmem:[%s238 + $0xd0] sm:$0xff]
        %v285 = vld [vmem:[%s238 + $0xd8] sm:$0xf]
        %v286 = vld [vmem:[%s238 + $0xdc] sm:$0xff]
        %v287 = vld [vmem:[%s238 + $0xe4] sm:$0xff]
        %v288 = vld [vmem:[%s238 + $0xec] sm:$0xf]
        %v289 = vld [vmem:[%s238 + $0xf0] sm:$0xff]
        %v290 = vld [vmem:[%s238 + $0xf8] sm:$0xff]
        %v291 = vld [vmem:[%s238 + $0x100] sm:$0xf]
        %v292 = vld [vmem:[%s238 + $0x104] sm:$0xff]
        %v293 = vld [vmem:[%s238 + $0x10c] sm:$0xff]
        %v294 = vld [vmem:[%s238 + $0x114] sm:$0xf]
        %v295 = vld [vmem:[%s238 + $0x118] sm:$0xff]
        %v296 = vld [vmem:[%s238 + $0x120] sm:$0xff]
        %v297 = vld [vmem:[%s238 + $0x128] sm:$0xf]
        %v298 = vld [vmem:[%s238 + $0x12c] sm:$0xff]
        %v299 = vld [vmem:[%s238 + $0x134] sm:$0xff]
        %v300 = vld [vmem:[%s238 + $0x13c] sm:$0xf]
        %v301 = vld [vmem:[%s238 + $0x140] sm:$0xff]
        %v302 = vld [vmem:[%s238 + $0x148] sm:$0xff]
        %v303 = vld [vmem:[%s238 + $0x150] sm:$0xf]
        %v304 = vld [vmem:[%s238 + $0x154] sm:$0xff]
        %v305 = vld [vmem:[%s238 + $0x15c] sm:$0xff]
        %v306 = vld [vmem:[%s238 + $0x164] sm:$0xf]
        %v307 = vld [vmem:[%s238 + $0x168] sm:$0xff]
        %v308 = vld [vmem:[%s238 + $0x170] sm:$0xff]
        %v309 = vld [vmem:[%s238 + $0x178] sm:$0xf]
        %v310 = vld [vmem:[%s238 + $0x17c] sm:$0xff]
        %v311 = vld [vmem:[%s238 + $0x184] sm:$0xff]
        %v312 = vld [vmem:[%s238 + $0x18c] sm:$0xf]
        %v313 = vld [vmem:[%s238 + $0x190] sm:$0xff]
        %v314 = vld [vmem:[%s238 + $0x198] sm:$0xff]
        %v315 = vld [vmem:[%s238 + $0x1a0] sm:$0xf]
        %v316 = vld [vmem:[%s238 + $0x1a4] sm:$0xff]
        %v317 = vld [vmem:[%s238 + $0x1ac] sm:$0xff]
        %v318 = vld [vmem:[%s238 + $0x1b4] sm:$0xf]
        %v319 = vld [vmem:[%s238 + $0x1b8] sm:$0xff]
        %v320 = vld [vmem:[%s238 + $0x1c0] sm:$0xff]
        %v321 = vld [vmem:[%s238 + $0x1c8] sm:$0xf]
        %v322 = vld [vmem:[%s238 + $0x1cc] sm:$0xff]
        %v323 = vld [vmem:[%s238 + $0x1d4] sm:$0xff]
        %v324 = vld [vmem:[%s238 + $0x1dc] sm:$0xf]
        %v325 = vld [vmem:[%s238 + $0x1e0] sm:$0xff]
        %v326 = vld [vmem:[%s238 + $0x1e8] sm:$0xff]
        %v327 = vld [vmem:[%s238 + $0x1f0] sm:$0xf]
        %v328 = vld [vmem:[%s238 + $0x1f4] sm:$0xff]
        %v329 = vld [vmem:[%s238 + $0x1fc] sm:$0xff]
        %v330 = vld [vmem:[%s238 + $0x204] sm:$0xf]
        %v331 = vld [vmem:[%s238 + $0x208] sm:$0xff]
        %v332 = vld [vmem:[%s238 + $0x210] sm:$0xff]
        %v333 = vld [vmem:[%s238 + $0x218] sm:$0xf]
        %v334 = vld [vmem:[%s238 + $0x21c] sm:$0xff]
        %v335 = vld [vmem:[%s238 + $0x224] sm:$0xff]
        %v336 = vld [vmem:[%s238 + $0x22c] sm:$0xf]
        %v337 = vld [vmem:[%s238 + $0x230] sm:$0xff]
        %v338 = vld [vmem:[%s238 + $0x238] sm:$0xff]
        %v339 = vld [vmem:[%s238 + $0x240] sm:$0xf]
        %v340 = vld [vmem:[%s238 + $0x244] sm:$0xff]
        %v341 = vld [vmem:[%s238 + $0x24c] sm:$0xff]
        %v342 = vld [vmem:[%s238 + $0x254] sm:$0xf]
        %v343 = vld [vmem:[%s238 + $0x258] sm:$0xff]
        %v344 = vld [vmem:[%s238 + $0x260] sm:$0xff]
        %v345 = vld [vmem:[%s238 + $0x268] sm:$0xf]
        %v346 = vld [vmem:[%s238 + $0x26c] sm:$0xff]
        %v347 = vld [vmem:[%s238 + $0x274] sm:$0xff]
        %v348 = vld [vmem:[%s238 + $0x27c] sm:$0xf]
        %v349 = vld [vmem:[%s1] sm:$0xf]
        %v350 = vld [vmem:[%s1 + $0x4] sm:$0xf]
        %v351 = vld [vmem:[%s1 + $0x8] sm:$0xf]
        %v352 = vld [vmem:[%s1 + $0xc] sm:$0xf]
        %v353 = vld [vmem:[%s1 + $0x10] sm:$0xf]
        %v354 = vld [vmem:[%s1 + $0x14] sm:$0xf]
        %v355 = vld [vmem:[%s1 + $0x18] sm:$0xf]
        %v356 = vld [vmem:[%s1 + $0x1c] sm:$0xf]
        %v357 = vld [vmem:[%s1 + $0x20] sm:$0xf]
        %v358 = vld [vmem:[%s1 + $0x24] sm:$0xf]
        %v359 = vld [vmem:[%s1 + $0x28] sm:$0xf]
        %v360 = vld [vmem:[%s1 + $0x2c] sm:$0xf]
        %v361 = vld [vmem:[%s1 + $0x30] sm:$0xf]
        %v362 = vld [vmem:[%s1 + $0x34] sm:$0xf]
        %v363 = vld [vmem:[%s1 + $0x38] sm:$0xf]
        %v364 = vld [vmem:[%s1 + $0x3c] sm:$0xf]
        %v365 = vld [vmem:[%s1 + $0x40] sm:$0xf]
        %v366 = vld [vmem:[%s1 + $0x44] sm:$0xf]
        %v367 = vld [vmem:[%s1 + $0x48] sm:$0xf]
        %v368 = vld [vmem:[%s1 + $0x4c] sm:$0xf]
        %v369 = vld [vmem:[%s1 + $0x50] sm:$0xf]
        %v370 = vld [vmem:[%s1 + $0x54] sm:$0xf]
        %v371 = vld [vmem:[%s1 + $0x58] sm:$0xf]
        %v372 = vld [vmem:[%s1 + $0x5c] sm:$0xf]
        %v373 = vld [vmem:[%s1 + $0x60] sm:$0xf]
        %v374 = vld [vmem:[%s1 + $0x64] sm:$0xf]
        %v375 = vld [vmem:[%s1 + $0x68] sm:$0xf]
        %v376 = vld [vmem:[%s1 + $0x6c] sm:$0xf]
        %v377 = vld [vmem:[%s1 + $0x70] sm:$0xf]
        %v378 = vld [vmem:[%s1 + $0x74] sm:$0xf]
        %v379 = vld [vmem:[%s1 + $0x78] sm:$0xf]
        %v380 = vld [vmem:[%s1 + $0x7c] sm:$0xf]
        %v381 = vld [vmem:[%s1 + $0x80] sm:$0xf]
        %v382 = vld [vmem:[%s1 + $0x84] sm:$0xf]
        %v383 = vld [vmem:[%s1 + $0x88] sm:$0xf]
        %v384 = vld [vmem:[%s1 + $0x8c] sm:$0xf]
        %v385 = vld [vmem:[%s1 + $0x90] sm:$0xf]
        %v386 = vld [vmem:[%s1 + $0x94] sm:$0xf]
        %v387 = vld [vmem:[%s1 + $0x98] sm:$0xf]
        %v388 = vld [vmem:[%s1 + $0x9c] sm:$0xf]
        %v389 = vld [vmem:[%s1 + $0xa0] sm:$0xf]
        %v390 = vld [vmem:[%s1 + $0xa4] sm:$0xf]
        %v391 = vld [vmem:[%s1 + $0xa8] sm:$0xf]
        %v392 = vld [vmem:[%s1 + $0xac] sm:$0xf]
        %v393 = vld [vmem:[%s1 + $0xb0] sm:$0xf]
        %v394 = vld [vmem:[%s1 + $0xb4] sm:$0xf]
        %v395 = vld [vmem:[%s1 + $0xb8] sm:$0xf]
        %v396 = vld [vmem:[%s1 + $0xbc] sm:$0xf]
        %v397 = vld [vmem:[%s1 + $0xc0] sm:$0xf]
        %v398 = vld [vmem:[%s1 + $0xc4] sm:$0xf]
        %v399 = vld [vmem:[%s1 + $0xc8] sm:$0xf]
        %v400 = vld [vmem:[%s1 + $0xcc] sm:$0xf]
        %v401 = vld [vmem:[%s1 + $0xd0] sm:$0xf]
        %v402 = vld [vmem:[%s1 + $0xd4] sm:$0xf]
        %v403 = vld [vmem:[%s1 + $0xd8] sm:$0xf]
        %v404 = vld [vmem:[%s1 + $0xdc] sm:$0xf]
        %v405 = vld [vmem:[%s1 + $0xe0] sm:$0xf]
        %v406 = vld [vmem:[%s1 + $0xe4] sm:$0xf]
        %v407 = vld [vmem:[%s1 + $0xe8] sm:$0xf]
        %v408 = vld [vmem:[%s1 + $0xec] sm:$0xf]
        %v409 = vld [vmem:[%s1 + $0xf0] sm:$0xf]
        %v410 = vld [vmem:[%s1 + $0xf4] sm:$0xf]
        %v411 = vld [vmem:[%s1 + $0xf8] sm:$0xf]
        %v412 = vld [vmem:[%s1 + $0xfc] sm:$0xf]
        %v413 = vld [vmem:[%s1 + $0x100] sm:$0xf]
        %v414 = vld [vmem:[%s1 + $0x104] sm:$0xf]
        %v415 = vld [vmem:[%s1 + $0x108] sm:$0xf]
        %v416 = vld [vmem:[%s1 + $0x10c] sm:$0xf]
        %v417 = vld [vmem:[%s1 + $0x110] sm:$0xf]
        %v418 = vld [vmem:[%s1 + $0x114] sm:$0xf]
        %v419 = vld [vmem:[%s1 + $0x118] sm:$0xf]
        %v420 = vld [vmem:[%s1 + $0x11c] sm:$0xf]
        %v421 = vld [vmem:[%s2] sm:$0x1]
        %v423 = vlaneseq
        %v424 = vshrl.u32 %v423, 7
        %v425 = vsub.s32 0, %v424
        %v426 = vrot.slane %v421, %v425
        %v524 = vunpack.c.l.b16 %v253
        %v525 = vunpack.c.h.b16 %v253
        %v526 = vunpack.c.l.b16 %v254
        %v527 = vunpack.c.h.b16 %v254
        %v528 = vunpack.c.l.b16 %v255
        %v529 = vunpack.c.l.b16 %v256
        %v530 = vunpack.c.h.b16 %v256
        %v531 = vunpack.c.l.b16 %v257
        %v532 = vunpack.c.h.b16 %v257
        %v533 = vunpack.c.l.b16 %v258
        %v534 = vunpack.c.l.b16 %v259
        %v535 = vunpack.c.h.b16 %v259
        %v536 = vunpack.c.l.b16 %v260
        %v537 = vunpack.c.h.b16 %v260
        %v538 = vunpack.c.l.b16 %v261
        %v539 = vunpack.c.l.b16 %v262
        %v540 = vunpack.c.h.b16 %v262
        %v541 = vunpack.c.l.b16 %v263
        %v542 = vunpack.c.h.b16 %v263
        %v543 = vunpack.c.l.b16 %v264
        %v544 = vunpack.c.l.b16 %v265
        %v545 = vunpack.c.h.b16 %v265
        %v546 = vunpack.c.l.b16 %v266
        %v547 = vunpack.c.h.b16 %v266
        %v548 = vunpack.c.l.b16 %v267
        %v549 = vunpack.c.l.b16 %v268
        %v550 = vunpack.c.h.b16 %v268
        %v551 = vunpack.c.l.b16 %v269
        %v552 = vunpack.c.h.b16 %v269
        %v553 = vunpack.c.l.b16 %v270
        %v554 = vunpack.c.l.b16 %v271
        %v555 = vunpack.c.h.b16 %v271
        %v556 = vunpack.c.l.b16 %v272
        %v557 = vunpack.c.h.b16 %v272
        %v558 = vunpack.c.l.b16 %v273
        %v559 = vunpack.c.l.b16 %v274
        %v560 = vunpack.c.h.b16 %v274
        %v561 = vunpack.c.l.b16 %v275
        %v562 = vunpack.c.h.b16 %v275
        %v563 = vunpack.c.l.b16 %v276
        %v564 = vunpack.c.l.b16 %v277
        %v565 = vunpack.c.h.b16 %v277
        %v566 = vunpack.c.l.b16 %v278
        %v567 = vunpack.c.h.b16 %v278
        %v568 = vunpack.c.l.b16 %v279
        %v569 = vunpack.c.l.b16 %v280
        %v570 = vunpack.c.h.b16 %v280
        %v571 = vunpack.c.l.b16 %v281
        %v572 = vunpack.c.h.b16 %v281
        %v573 = vunpack.c.l.b16 %v282
        %v574 = vunpack.c.l.b16 %v283
        %v575 = vunpack.c.h.b16 %v283
        %v576 = vunpack.c.l.b16 %v284
        %v577 = vunpack.c.h.b16 %v284
        %v578 = vunpack.c.l.b16 %v285
        %v579 = vunpack.c.l.b16 %v286
        %v580 = vunpack.c.h.b16 %v286
        %v581 = vunpack.c.l.b16 %v287
        %v582 = vunpack.c.h.b16 %v287
        %v583 = vunpack.c.l.b16 %v288
        %v584 = vunpack.c.l.b16 %v289
        %v585 = vunpack.c.h.b16 %v289
        %v586 = vunpack.c.l.b16 %v290
        %v587 = vunpack.c.h.b16 %v290
        %v588 = vunpack.c.l.b16 %v291
        %v589 = vunpack.c.l.b16 %v292
        %v590 = vunpack.c.h.b16 %v292
        %v591 = vunpack.c.l.b16 %v293
        %v592 = vunpack.c.h.b16 %v293
        %v593 = vunpack.c.l.b16 %v294
        %v594 = vunpack.c.l.b16 %v295
        %v595 = vunpack.c.h.b16 %v295
        %v596 = vunpack.c.l.b16 %v296
        %v597 = vunpack.c.h.b16 %v296
        %v598 = vunpack.c.l.b16 %v297
        %v599 = vunpack.c.l.b16 %v298
        %v600 = vunpack.c.h.b16 %v298
        %v601 = vunpack.c.l.b16 %v299
        %v602 = vunpack.c.h.b16 %v299
        %v603 = vunpack.c.l.b16 %v300
        %v604 = vunpack.c.l.b16 %v301
        %v605 = vunpack.c.h.b16 %v301
        %v606 = vunpack.c.l.b16 %v302
        %v607 = vunpack.c.h.b16 %v302
        %v608 = vunpack.c.l.b16 %v303
        %v609 = vunpack.c.l.b16 %v304
        %v610 = vunpack.c.h.b16 %v304
        %v611 = vunpack.c.l.b16 %v305
        %v612 = vunpack.c.h.b16 %v305
        %v613 = vunpack.c.l.b16 %v306
        %v614 = vunpack.c.l.b16 %v307
        %v615 = vunpack.c.h.b16 %v307
        %v616 = vunpack.c.l.b16 %v308
        %v617 = vunpack.c.h.b16 %v308
        %v618 = vunpack.c.l.b16 %v309
        %v619 = vunpack.c.l.b16 %v310
        %v620 = vunpack.c.h.b16 %v310
        %v621 = vunpack.c.l.b16 %v311
        %v622 = vunpack.c.h.b16 %v311
        %v623 = vunpack.c.l.b16 %v312
        %v624 = vunpack.c.l.b16 %v313
        %v625 = vunpack.c.h.b16 %v313
        %v626 = vunpack.c.l.b16 %v314
        %v627 = vunpack.c.h.b16 %v314
        %v628 = vunpack.c.l.b16 %v315
        %v629 = vunpack.c.l.b16 %v316
        %v630 = vunpack.c.h.b16 %v316
        %v631 = vunpack.c.l.b16 %v317
        %v632 = vunpack.c.h.b16 %v317
        %v633 = vunpack.c.l.b16 %v318
        %v634 = vunpack.c.l.b16 %v319
        %v635 = vunpack.c.h.b16 %v319
        %v636 = vunpack.c.l.b16 %v320
        %v637 = vunpack.c.h.b16 %v320
        %v638 = vunpack.c.l.b16 %v321
        %v639 = vunpack.c.l.b16 %v322
        %v640 = vunpack.c.h.b16 %v322
        %v641 = vunpack.c.l.b16 %v323
        %v642 = vunpack.c.h.b16 %v323
        %v643 = vunpack.c.l.b16 %v324
        %v644 = vunpack.c.l.b16 %v325
        %v645 = vunpack.c.h.b16 %v325
        %v646 = vunpack.c.l.b16 %v326
        %v647 = vunpack.c.h.b16 %v326
        %v648 = vunpack.c.l.b16 %v327
        %v649 = vunpack.c.l.b16 %v328
        %v650 = vunpack.c.h.b16 %v328
        %v651 = vunpack.c.l.b16 %v329
        %v652 = vunpack.c.h.b16 %v329
        %v653 = vunpack.c.l.b16 %v330
        %v654 = vunpack.c.l.b16 %v331
        %v655 = vunpack.c.h.b16 %v331
        %v656 = vunpack.c.l.b16 %v332
        %v657 = vunpack.c.h.b16 %v332
        %v658 = vunpack.c.l.b16 %v333
        %v659 = vunpack.c.l.b16 %v334
        %v660 = vunpack.c.h.b16 %v334
        %v661 = vunpack.c.l.b16 %v335
        %v662 = vunpack.c.h.b16 %v335
        %v663 = vunpack.c.l.b16 %v336
        %v664 = vunpack.c.l.b16 %v337
        %v665 = vunpack.c.h.b16 %v337
        %v666 = vunpack.c.l.b16 %v338
        %v667 = vunpack.c.h.b16 %v338
        %v668 = vunpack.c.l.b16 %v339
        %v669 = vunpack.c.l.b16 %v340
        %v670 = vunpack.c.h.b16 %v340
        %v671 = vunpack.c.l.b16 %v341
        %v672 = vunpack.c.h.b16 %v341
        %v673 = vunpack.c.l.b16 %v342
        %v674 = vunpack.c.l.b16 %v343
        %v675 = vunpack.c.h.b16 %v343
        %v676 = vunpack.c.l.b16 %v344
        %v677 = vunpack.c.h.b16 %v344
        %v678 = vunpack.c.l.b16 %v345
        %v679 = vunpack.c.l.b16 %v346
        %v680 = vunpack.c.h.b16 %v346
        %v681 = vunpack.c.l.b16 %v347
        %v682 = vunpack.c.h.b16 %v347
        %v683 = vunpack.c.l.b16 %v348
        %v684 = vpack.c.b16 %v529, %v524
        %v685 = vpack.c.b16 %v530, %v525
        %v686 = vpack.c.b16 %v531, %v526
        %v687 = vpack.c.b16 %v532, %v527
        %v688 = vpack.c.b16 %v533, %v528
        %v689 = vpack.c.b16 %v539, %v534
        %v690 = vpack.c.b16 %v540, %v535
        %v691 = vpack.c.b16 %v541, %v536
        %v692 = vpack.c.b16 %v542, %v537
        %v693 = vpack.c.b16 %v543, %v538
        %v694 = vpack.c.b16 %v549, %v544
        %v695 = vpack.c.b16 %v550, %v545
        %v696 = vpack.c.b16 %v551, %v546
        %v697 = vpack.c.b16 %v552, %v547
        %v698 = vpack.c.b16 %v553, %v548
        %v699 = vpack.c.b16 %v559, %v554
        %v700 = vpack.c.b16 %v560, %v555
        %v701 = vpack.c.b16 %v561, %v556
        %v702 = vpack.c.b16 %v562, %v557
        %v703 = vpack.c.b16 %v563, %v558
        %v704 = vpack.c.b16 %v569, %v564
        %v705 = vpack.c.b16 %v570, %v565
        %v706 = vpack.c.b16 %v571, %v566
        %v707 = vpack.c.b16 %v572, %v567
        %v708 = vpack.c.b16 %v573, %v568
        %v709 = vpack.c.b16 %v579, %v574
        %v710 = vpack.c.b16 %v580, %v575
        %v711 = vpack.c.b16 %v581, %v576
        %v712 = vpack.c.b16 %v582, %v577
        %v713 = vpack.c.b16 %v583, %v578
        %v714 = vpack.c.b16 %v589, %v584
        %v715 = vpack.c.b16 %v590, %v585
        %v716 = vpack.c.b16 %v591, %v586
        %v717 = vpack.c.b16 %v592, %v587
        %v718 = vpack.c.b16 %v593, %v588
        %v719 = vpack.c.b16 %v599, %v594
        %v720 = vpack.c.b16 %v600, %v595
        %v721 = vpack.c.b16 %v601, %v596
        %v722 = vpack.c.b16 %v602, %v597
        %v723 = vpack.c.b16 %v603, %v598
        %v724 = vpack.c.b16 %v609, %v604
        %v725 = vpack.c.b16 %v610, %v605
        %v726 = vpack.c.b16 %v611, %v606
        %v727 = vpack.c.b16 %v612, %v607
        %v728 = vpack.c.b16 %v613, %v608
        %v729 = vpack.c.b16 %v619, %v614
        %v730 = vpack.c.b16 %v620, %v615
        %v731 = vpack.c.b16 %v621, %v616
        %v732 = vpack.c.b16 %v622, %v617
        %v733 = vpack.c.b16 %v623, %v618
        %v734 = vpack.c.b16 %v629, %v624
        %v735 = vpack.c.b16 %v630, %v625
        %v736 = vpack.c.b16 %v631, %v626
        %v737 = vpack.c.b16 %v632, %v627
        %v738 = vpack.c.b16 %v633, %v628
        %v739 = vpack.c.b16 %v639, %v634
        %v740 = vpack.c.b16 %v640, %v635
        %v741 = vpack.c.b16 %v641, %v636
        %v742 = vpack.c.b16 %v642, %v637
        %v743 = vpack.c.b16 %v643, %v638
        %v744 = vpack.c.b16 %v649, %v644
        %v745 = vpack.c.b16 %v650, %v645
        %v746 = vpack.c.b16 %v651, %v646
        %v747 = vpack.c.b16 %v652, %v647
        %v748 = vpack.c.b16 %v653, %v648
        %v749 = vpack.c.b16 %v659, %v654
        %v750 = vpack.c.b16 %v660, %v655
        %v751 = vpack.c.b16 %v661, %v656
        %v752 = vpack.c.b16 %v662, %v657
        %v753 = vpack.c.b16 %v663, %v658
        %v754 = vpack.c.b16 %v669, %v664
        %v755 = vpack.c.b16 %v670, %v665
        %v756 = vpack.c.b16 %v671, %v666
        %v757 = vpack.c.b16 %v672, %v667
        %v758 = vpack.c.b16 %v673, %v668
        %v759 = vpack.c.b16 %v679, %v674
        %v760 = vpack.c.b16 %v680, %v675
        %v761 = vpack.c.b16 %v681, %v676
        %v762 = vpack.c.b16 %v682, %v677
        %v763 = vpack.c.b16 %v683, %v678
        %v900 = vunpack.c.l.b16 %v349
        %v901 = vunpack.c.l.b16 %v350
        %v902 = vunpack.c.l.b16 %v351
        %v903 = vunpack.c.l.b16 %v352
        %v904 = vunpack.c.l.b16 %v353
        %v905 = vunpack.c.l.b16 %v354
        %v906 = vunpack.c.l.b16 %v355
        %v907 = vunpack.c.l.b16 %v356
        %v908 = vunpack.c.l.b16 %v357
        %v909 = vunpack.c.l.b16 %v358
        %v910 = vunpack.c.l.b16 %v359
        %v911 = vunpack.c.l.b16 %v360
        %v912 = vunpack.c.l.b16 %v361
        %v913 = vunpack.c.l.b16 %v362
        %v914 = vunpack.c.l.b16 %v363
        %v915 = vunpack.c.l.b16 %v364
        %v916 = vunpack.c.l.b16 %v365
        %v917 = vunpack.c.l.b16 %v366
        %v918 = vunpack.c.l.b16 %v367
        %v919 = vunpack.c.l.b16 %v368
        %v920 = vunpack.c.l.b16 %v369
        %v921 = vunpack.c.l.b16 %v370
        %v922 = vunpack.c.l.b16 %v371
        %v923 = vunpack.c.l.b16 %v372
        %v924 = vunpack.c.l.b16 %v373
        %v925 = vunpack.c.l.b16 %v374
        %v926 = vunpack.c.l.b16 %v375
        %v927 = vunpack.c.l.b16 %v376
        %v928 = vunpack.c.l.b16 %v377
        %v929 = vunpack.c.l.b16 %v378
        %v930 = vunpack.c.l.b16 %v379
        %v931 = vunpack.c.l.b16 %v380
        %v932 = vunpack.c.l.b16 %v381
        %v933 = vunpack.c.l.b16 %v382
        %v934 = vunpack.c.l.b16 %v383
        %v935 = vunpack.c.l.b16 %v384
        %v936 = vunpack.c.l.b16 %v385
        %v937 = vunpack.c.l.b16 %v386
        %v938 = vunpack.c.l.b16 %v387
        %v939 = vunpack.c.l.b16 %v388
        %v940 = vunpack.c.l.b16 %v389
        %v941 = vunpack.c.l.b16 %v390
        %v942 = vunpack.c.l.b16 %v391
        %v943 = vunpack.c.l.b16 %v392
        %v944 = vunpack.c.l.b16 %v393
        %v945 = vunpack.c.l.b16 %v394
        %v946 = vunpack.c.l.b16 %v395
        %v947 = vunpack.c.l.b16 %v396
        %v948 = vunpack.c.l.b16 %v397
        %v949 = vunpack.c.l.b16 %v398
        %v950 = vunpack.c.l.b16 %v399
        %v951 = vunpack.c.l.b16 %v400
        %v952 = vunpack.c.l.b16 %v401
        %v953 = vunpack.c.l.b16 %v402
        %v954 = vunpack.c.l.b16 %v403
        %v955 = vunpack.c.l.b16 %v404
        %v956 = vunpack.c.l.b16 %v405
        %v957 = vunpack.c.l.b16 %v406
        %v958 = vunpack.c.l.b16 %v407
        %v959 = vunpack.c.l.b16 %v408
        %v960 = vunpack.c.l.b16 %v409
        %v961 = vunpack.c.l.b16 %v410
        %v962 = vunpack.c.l.b16 %v411
        %v963 = vunpack.c.l.b16 %v412
        %v964 = vunpack.c.l.b16 %v413
        %v965 = vunpack.c.l.b16 %v414
        %v966 = vunpack.c.l.b16 %v415
        %v967 = vunpack.c.l.b16 %v416
        %v968 = vunpack.c.l.b16 %v417
        %v969 = vunpack.c.l.b16 %v418
        %v970 = vunpack.c.l.b16 %v419
        %v971 = vunpack.c.l.b16 %v420
        %v972 = vpack.c.b16 %v901, %v900
        %v973 = vpack.c.b16 %v903, %v902
        %v974 = vpack.c.b16 %v905, %v904
        %v975 = vpack.c.b16 %v907, %v906
        %v976 = vpack.c.b16 %v909, %v908
        %v977 = vpack.c.b16 %v911, %v910
        %v978 = vpack.c.b16 %v913, %v912
        %v979 = vpack.c.b16 %v915, %v914
        %v980 = vpack.c.b16 %v917, %v916
        %v981 = vpack.c.b16 %v919, %v918
        %v982 = vpack.c.b16 %v921, %v920
        %v983 = vpack.c.b16 %v923, %v922
        %v984 = vpack.c.b16 %v925, %v924
        %v985 = vpack.c.b16 %v927, %v926
        %v986 = vpack.c.b16 %v929, %v928
        %v987 = vpack.c.b16 %v931, %v930
        %v988 = vpack.c.b16 %v933, %v932
        %v989 = vpack.c.b16 %v935, %v934
        %v990 = vpack.c.b16 %v937, %v936
        %v991 = vpack.c.b16 %v939, %v938
        %v992 = vpack.c.b16 %v941, %v940
        %v993 = vpack.c.b16 %v943, %v942
        %v994 = vpack.c.b16 %v945, %v944
        %v995 = vpack.c.b16 %v947, %v946
        %v996 = vpack.c.b16 %v949, %v948
        %v997 = vpack.c.b16 %v951, %v950
        %v998 = vpack.c.b16 %v953, %v952
        %v999 = vpack.c.b16 %v955, %v954
        %v1000 = vpack.c.b16 %v957, %v956
        %v1001 = vpack.c.b16 %v959, %v958
        %v1002 = vpack.c.b16 %v961, %v960
        %v1003 = vpack.c.b16 %v963, %v962
        %v1004 = vpack.c.b16 %v965, %v964
        %v1005 = vpack.c.b16 %v967, %v966
        %v1006 = vpack.c.b16 %v969, %v968
        %v1007 = vpack.c.b16 %v971, %v970
        %vm1044 = vcmask 523264
        %v1046 = vsel %vm1044, %v688, 0
        %v1049 = vsel %vm1044, %v693, 0
        %v1052 = vsel %vm1044, %v698, 0
        %v1055 = vsel %vm1044, %v703, 0
        %v1058 = vsel %vm1044, %v708, 0
        %v1061 = vsel %vm1044, %v713, 0
        %v1064 = vsel %vm1044, %v718, 0
        %v1067 = vsel %vm1044, %v723, 0
        %v1070 = vsel %vm1044, %v728, 0
        %v1073 = vsel %vm1044, %v733, 0
        %v1076 = vsel %vm1044, %v738, 0
        %v1079 = vsel %vm1044, %v743, 0
        %v1082 = vsel %vm1044, %v748, 0
        %v1085 = vsel %vm1044, %v753, 0
        %v1088 = vsel %vm1044, %v758, 0
        %v1091 = vsel %vm1044, %v763, 0
        %1093 = vmatprep.subr.bf16.mxu0 0
        %1094 = vmatpush1.bf16.msra.mxu0 %v972
        %1095 = vmatprep.subr.bf16.mxu0 0
        %1096 = vmatpush1.bf16.msra.mxu0 %v973
        %1097 = vmatprep.subr.bf16.mxu0 0
        %1098 = vmatpush1.bf16.msra.mxu0 %v974
        %1099 = vmatprep.subr.bf16.mxu0 0
        %1100 = vmatpush1.bf16.msra.mxu0 %v975
        %1101 = vmatprep.subr.bf16.mxu0 0
        %1102 = vmatpush1.bf16.msra.mxu0 %v976
        %1103 = vmatprep.subr.bf16.mxu0 0
        %1104 = vmatpush1.bf16.msra.mxu0 %v977
        %1105 = vmatprep.subr.bf16.mxu0 0
        %1106 = vmatpush1.bf16.msra.mxu0 %v978
        %1107 = vmatprep.subr.bf16.mxu0 0
        %1108 = vmatpush1.bf16.msra.mxu0 %v979
        %1109 = vmatprep.subr.bf16.mxu0 0
        %1110 = vmatpush1.bf16.msra.mxu0 %v980
        %1111 = vmatprep.subr.bf16.mxu0 0
        %1112 = vmatpush1.bf16.msra.mxu0 %v981
        %1113 = vmatprep.subr.bf16.mxu0 0
        %1114 = vmatpush1.bf16.msra.mxu0 %v982
        %1115 = vmatprep.subr.bf16.mxu0 0
        %1116 = vmatpush1.bf16.msra.mxu0 %v983
        %1117 = vmatprep.subr.bf16.mxu0 0
        %1118 = vmatpush1.bf16.msra.mxu0 %v984
        %1119 = vmatprep.subr.bf16.mxu0 0
        %1120 = vmatpush1.bf16.msra.mxu0 %v985
        %1121 = vmatprep.subr.bf16.mxu0 0
        %1122 = vmatpush1.bf16.msra.mxu0 %v986
        %1123 = vmatprep.subr.bf16.mxu0 0
        %1124 = vmatpush1.bf16.msra.mxu0 %v987
        %1125 = vmatprep.mubr.bf16.mxu0 %v685
        %1126 = vmatmul.mubr.bf16.gmra.mrb[0].mxu0 %v684
        %v1127 = vpop.f32.mrb[0].mxu0
        %v1128 = vadd.f32 %v426, %v1127
        %v1129 = vpop.f32.mrb[0].mxu0
        %v1130 = vpop.f32.mrb[0].mxu0
        %v1131 = vadd.f32 %v426, %v1130
        %v1132 = vpop.f32.mrb[0].mxu0
        %1133 = vmatprep.mubr.bf16.mxu0 %v690
        %1134 = vmatmul.mubr.bf16.gmra.mrb[0].mxu0 %v689
        %v1135 = vpop.f32.mrb[0].mxu0
        %v1136 = vadd.f32 %v426, %v1135
        %v1137 = vpop.f32.mrb[0].mxu0
        %v1138 = vpop.f32.mrb[0].mxu0
        %v1139 = vadd.f32 %v426, %v1138
        %v1140 = vpop.f32.mrb[0].mxu0
        %1141 = vmatprep.mubr.bf16.mxu0 %v695
        %1142 = vmatmul.mubr.bf16.gmra.mrb[0].mxu0 %v694
        %v1143 = vpop.f32.mrb[0].mxu0
        %v1144 = vadd.f32 %v426, %v1143
        %v1145 = vpop.f32.mrb[0].mxu0
        %v1146 = vpop.f32.mrb[0].mxu0
        %v1147 = vadd.f32 %v426, %v1146
        %v1148 = vpop.f32.mrb[0].mxu0
        %1149 = vmatprep.mubr.bf16.mxu0 %v700
        %1150 = vmatmul.mubr.bf16.gmra.mrb[0].mxu0 %v699
        %v1151 = vpop.f32.mrb[0].mxu0
        %v1152 = vadd.f32 %v426, %v1151
        %v1153 = vpop.f32.mrb[0].mxu0
        %v1154 = vpop.f32.mrb[0].mxu0
        %v1155 = vadd.f32 %v426, %v1154
        %v1156 = vpop.f32.mrb[0].mxu0
        %1157 = vmatprep.mubr.bf16.mxu0 %v705
        %1158 = vmatmul.mubr.bf16.gmra.mrb[0].mxu0 %v704
        %v1159 = vpop.f32.mrb[0].mxu0
        %v1160 = vadd.f32 %v426, %v1159
        %v1161 = vpop.f32.mrb[0].mxu0
        %v1162 = vpop.f32.mrb[0].mxu0
        %v1163 = vadd.f32 %v426, %v1162
        %v1164 = vpop.f32.mrb[0].mxu0
        %1165 = vmatprep.mubr.bf16.mxu0 %v710
        %1166 = vmatmul.mubr.bf16.gmra.mrb[0].mxu0 %v709
        %v1167 = vpop.f32.mrb[0].mxu0
        %v1168 = vadd.f32 %v426, %v1167
        %v1169 = vpop.f32.mrb[0].mxu0
        %v1170 = vpop.f32.mrb[0].mxu0
        %v1171 = vadd.f32 %v426, %v1170
        %v1172 = vpop.f32.mrb[0].mxu0
        %1173 = vmatprep.mubr.bf16.mxu0 %v715
        %1174 = vmatmul.mubr.bf16.gmra.mrb[0].mxu0 %v714
        %v1175 = vpop.f32.mrb[0].mxu0
        %v1176 = vadd.f32 %v426, %v1175
        %v1177 = vpop.f32.mrb[0].mxu0
        %v1178 = vpop.f32.mrb[0].mxu0
        %v1179 = vadd.f32 %v426, %v1178
        %v1180 = vpop.f32.mrb[0].mxu0
        %1181 = vmatprep.mubr.bf16.mxu0 %v720
        %1182 = vmatmul.mubr.bf16.gmra.mrb[0].mxu0 %v719
        %v1183 = vpop.f32.mrb[0].mxu0
        %v1184 = vadd.f32 %v426, %v1183
        %v1185 = vpop.f32.mrb[0].mxu0
        %v1186 = vpop.f32.mrb[0].mxu0
        %v1187 = vadd.f32 %v426, %v1186
        %v1188 = vpop.f32.mrb[0].mxu0
        %1189 = vmatprep.mubr.bf16.mxu0 %v725
        %1190 = vmatmul.mubr.bf16.gmra.mrb[0].mxu0 %v724
        %v1191 = vpop.f32.mrb[0].mxu0
        %v1192 = vadd.f32 %v426, %v1191
        %v1193 = vpop.f32.mrb[0].mxu0
        %v1194 = vpop.f32.mrb[0].mxu0
        %v1195 = vadd.f32 %v426, %v1194
        %v1196 = vpop.f32.mrb[0].mxu0
        %1197 = vmatprep.mubr.bf16.mxu0 %v730
        %1198 = vmatmul.mubr.bf16.gmra.mrb[0].mxu0 %v729
        %v1199 = vpop.f32.mrb[0].mxu0
        %v1200 = vadd.f32 %v426, %v1199
        %v1201 = vpop.f32.mrb[0].mxu0
        %v1202 = vpop.f32.mrb[0].mxu0
        %v1203 = vadd.f32 %v426, %v1202
        %v1204 = vpop.f32.mrb[0].mxu0
        %1205 = vmatprep.mubr.bf16.mxu0 %v735
        %1206 = vmatmul.mubr.bf16.gmra.mrb[0].mxu0 %v734
        %v1207 = vpop.f32.mrb[0].mxu0
        %v1208 = vadd.f32 %v426, %v1207
        %v1209 = vpop.f32.mrb[0].mxu0
        %v1210 = vpop.f32.mrb[0].mxu0
        %v1211 = vadd.f32 %v426, %v1210
        %v1212 = vpop.f32.mrb[0].mxu0
        %1213 = vmatprep.mubr.bf16.mxu0 %v740
        %1214 = vmatmul.mubr.bf16.gmra.mrb[0].mxu0 %v739
        %v1215 = vpop.f32.mrb[0].mxu0
        %v1216 = vadd.f32 %v426, %v1215
        %v1217 = vpop.f32.mrb[0].mxu0
        %v1218 = vpop.f32.mrb[0].mxu0
        %v1219 = vadd.f32 %v426, %v1218
        %v1220 = vpop.f32.mrb[0].mxu0
        %1221 = vmatprep.mubr.bf16.mxu0 %v745
        %1222 = vmatmul.mubr.bf16.gmra.mrb[0].mxu0 %v744
        %v1223 = vpop.f32.mrb[0].mxu0
        %v1224 = vadd.f32 %v426, %v1223
        %v1225 = vpop.f32.mrb[0].mxu0
        %v1226 = vpop.f32.mrb[0].mxu0
        %v1227 = vadd.f32 %v426, %v1226
        %v1228 = vpop.f32.mrb[0].mxu0
        %1229 = vmatprep.mubr.bf16.mxu0 %v750
        %1230 = vmatmul.mubr.bf16.gmra.mrb[0].mxu0 %v749
        %v1231 = vpop.f32.mrb[0].mxu0
        %v1232 = vadd.f32 %v426, %v1231
        %v1233 = vpop.f32.mrb[0].mxu0
        %v1234 = vpop.f32.mrb[0].mxu0
        %v1235 = vadd.f32 %v426, %v1234
        %v1236 = vpop.f32.mrb[0].mxu0
        %1237 = vmatprep.mubr.bf16.mxu0 %v755
        %1238 = vmatmul.mubr.bf16.gmra.mrb[0].mxu0 %v754
        %v1239 = vpop.f32.mrb[0].mxu0
        %v1240 = vadd.f32 %v426, %v1239
        %v1241 = vpop.f32.mrb[0].mxu0
        %v1242 = vpop.f32.mrb[0].mxu0
        %v1243 = vadd.f32 %v426, %v1242
        %v1244 = vpop.f32.mrb[0].mxu0
        %1245 = vmatprep.mubr.bf16.mxu0 %v760
        %1246 = vmatmul.mubr.bf16.gmra.mrb[0].mxu0 %v759
        %v1247 = vpop.f32.mrb[0].mxu0
        %v1248 = vadd.f32 %v426, %v1247
        %v1249 = vpop.f32.mrb[0].mxu0
        %v1250 = vpop.f32.mrb[0].mxu0
        %v1251 = vadd.f32 %v426, %v1250
        %v1252 = vpop.f32.mrb[0].mxu0
        %1253 = vdwg.mxu0
        %1254 = vmatprep.subr.bf16.mxu0 0
        %1255 = vmatpush1.bf16.msra.mxu0 %v988
        %1256 = vmatprep.subr.bf16.mxu0 0
        %1257 = vmatpush1.bf16.msra.mxu0 %v989
        %1258 = vmatprep.subr.bf16.mxu0 0
        %1259 = vmatpush1.bf16.msra.mxu0 %v990
        %1260 = vmatprep.subr.bf16.mxu0 0
        %1261 = vmatpush1.bf16.msra.mxu0 %v991
        %1262 = vmatprep.subr.bf16.mxu0 0
        %1263 = vmatpush1.bf16.msra.mxu0 %v992
        %1264 = vmatprep.subr.bf16.mxu0 0
        %1265 = vmatpush1.bf16.msra.mxu0 %v993
        %1266 = vmatprep.subr.bf16.mxu0 0
        %1267 = vmatpush1.bf16.msra.mxu0 %v994
        %1268 = vmatprep.subr.bf16.mxu0 0
        %1269 = vmatpush1.bf16.msra.mxu0 %v995
        %1270 = vmatprep.subr.bf16.mxu0 0
        %1271 = vmatpush1.bf16.msra.mxu0 %v996
        %1272 = vmatprep.subr.bf16.mxu0 0
        %1273 = vmatpush1.bf16.msra.mxu0 %v997
        %1274 = vmatprep.subr.bf16.mxu0 0
        %1275 = vmatpush1.bf16.msra.mxu0 %v998
        %1276 = vmatprep.subr.bf16.mxu0 0
        %1277 = vmatpush1.bf16.msra.mxu0 %v999
        %1278 = vmatprep.subr.bf16.mxu0 0
        %1279 = vmatpush1.bf16.msra.mxu0 %v1000
        %1280 = vmatprep.subr.bf16.mxu0 0
        %1281 = vmatpush1.bf16.msra.mxu0 %v1001
        %1282 = vmatprep.subr.bf16.mxu0 0
        %1283 = vmatpush1.bf16.msra.mxu0 %v1002
        %1284 = vmatprep.subr.bf16.mxu0 0
        %1285 = vmatpush1.bf16.msra.mxu0 %v1003
        %1286 = vmatprep.mubr.bf16.mxu0 %v687
        %1287 = vmatmul.mubr.bf16.gmra.mrb[0].mxu0 %v686
        %v1288 = vpop.f32.mrb[0].mxu0
        %v1289 = vadd.f32 %v1128, %v1288
        %v1290 = vpop.f32.mrb[0].mxu0
        %v1291 = vpop.f32.mrb[0].mxu0
        %v1292 = vadd.f32 %v1131, %v1291
        %v1293 = vpop.f32.mrb[0].mxu0
        %1294 = vmatprep.mubr.bf16.mxu0 %v692
        %1295 = vmatmul.mubr.bf16.gmra.mrb[0].mxu0 %v691
        %v1296 = vpop.f32.mrb[0].mxu0
        %v1297 = vadd.f32 %v1136, %v1296
        %v1298 = vpop.f32.mrb[0].mxu0
        %v1299 = vpop.f32.mrb[0].mxu0
        %v1300 = vadd.f32 %v1139, %v1299
        %v1301 = vpop.f32.mrb[0].mxu0
        %1302 = vmatprep.mubr.bf16.mxu0 %v697
        %1303 = vmatmul.mubr.bf16.gmra.mrb[0].mxu0 %v696
        %v1304 = vpop.f32.mrb[0].mxu0
        %v1305 = vadd.f32 %v1144, %v1304
        %v1306 = vpop.f32.mrb[0].mxu0
        %v1307 = vpop.f32.mrb[0].mxu0
        %v1308 = vadd.f32 %v1147, %v1307
        %v1309 = vpop.f32.mrb[0].mxu0
        %1310 = vmatprep.mubr.bf16.mxu0 %v702
        %1311 = vmatmul.mubr.bf16.gmra.mrb[0].mxu0 %v701
        %v1312 = vpop.f32.mrb[0].mxu0
        %v1313 = vadd.f32 %v1152, %v1312
        %v1314 = vpop.f32.mrb[0].mxu0
        %v1315 = vpop.f32.mrb[0].mxu0
        %v1316 = vadd.f32 %v1155, %v1315
        %v1317 = vpop.f32.mrb[0].mxu0
        %1318 = vmatprep.mubr.bf16.mxu0 %v707
        %1319 = vmatmul.mubr.bf16.gmra.mrb[0].mxu0 %v706
        %v1320 = vpop.f32.mrb[0].mxu0
        %v1321 = vadd.f32 %v1160, %v1320
        %v1322 = vpop.f32.mrb[0].mxu0
        %v1323 = vpop.f32.mrb[0].mxu0
        %v1324 = vadd.f32 %v1163, %v1323
        %v1325 = vpop.f32.mrb[0].mxu0
        %1326 = vmatprep.mubr.bf16.mxu0 %v712
        %1327 = vmatmul.mubr.bf16.gmra.mrb[0].mxu0 %v711
        %v1328 = vpop.f32.mrb[0].mxu0
        %v1329 = vadd.f32 %v1168, %v1328
        %v1330 = vpop.f32.mrb[0].mxu0
        %v1331 = vpop.f32.mrb[0].mxu0
        %v1332 = vadd.f32 %v1171, %v1331
        %v1333 = vpop.f32.mrb[0].mxu0
        %1334 = vmatprep.mubr.bf16.mxu0 %v717
        %1335 = vmatmul.mubr.bf16.gmra.mrb[0].mxu0 %v716
        %v1336 = vpop.f32.mrb[0].mxu0
        %v1337 = vadd.f32 %v1176, %v1336
        %v1338 = vpop.f32.mrb[0].mxu0
        %v1339 = vpop.f32.mrb[0].mxu0
        %v1340 = vadd.f32 %v1179, %v1339
        %v1341 = vpop.f32.mrb[0].mxu0
        %1342 = vmatprep.mubr.bf16.mxu0 %v722
        %1343 = vmatmul.mubr.bf16.gmra.mrb[0].mxu0 %v721
        %v1344 = vpop.f32.mrb[0].mxu0
        %v1345 = vadd.f32 %v1184, %v1344
        %v1346 = vpop.f32.mrb[0].mxu0
        %v1347 = vpop.f32.mrb[0].mxu0
        %v1348 = vadd.f32 %v1187, %v1347
        %v1349 = vpop.f32.mrb[0].mxu0
        %1350 = vmatprep.mubr.bf16.mxu0 %v727
        %1351 = vmatmul.mubr.bf16.gmra.mrb[0].mxu0 %v726
        %v1352 = vpop.f32.mrb[0].mxu0
        %v1353 = vadd.f32 %v1192, %v1352
        %v1354 = vpop.f32.mrb[0].mxu0
        %v1355 = vpop.f32.mrb[0].mxu0
        %v1356 = vadd.f32 %v1195, %v1355
        %v1357 = vpop.f32.mrb[0].mxu0
        %1358 = vmatprep.mubr.bf16.mxu0 %v732
        %1359 = vmatmul.mubr.bf16.gmra.mrb[0].mxu0 %v731
        %v1360 = vpop.f32.mrb[0].mxu0
        %v1361 = vadd.f32 %v1200, %v1360
        %v1362 = vpop.f32.mrb[0].mxu0
        %v1363 = vpop.f32.mrb[0].mxu0
        %v1364 = vadd.f32 %v1203, %v1363
        %v1365 = vpop.f32.mrb[0].mxu0
        %1366 = vmatprep.mubr.bf16.mxu0 %v737
        %1367 = vmatmul.mubr.bf16.gmra.mrb[0].mxu0 %v736
        %v1368 = vpop.f32.mrb[0].mxu0
        %v1369 = vadd.f32 %v1208, %v1368
        %v1370 = vpop.f32.mrb[0].mxu0
        %v1371 = vpop.f32.mrb[0].mxu0
        %v1372 = vadd.f32 %v1211, %v1371
        %v1373 = vpop.f32.mrb[0].mxu0
        %1374 = vmatprep.mubr.bf16.mxu0 %v742
        %1375 = vmatmul.mubr.bf16.gmra.mrb[0].mxu0 %v741
        %v1376 = vpop.f32.mrb[0].mxu0
        %v1377 = vadd.f32 %v1216, %v1376
        %v1378 = vpop.f32.mrb[0].mxu0
        %v1379 = vpop.f32.mrb[0].mxu0
        %v1380 = vadd.f32 %v1219, %v1379
        %v1381 = vpop.f32.mrb[0].mxu0
        %1382 = vmatprep.mubr.bf16.mxu0 %v747
        %1383 = vmatmul.mubr.bf16.gmra.mrb[0].mxu0 %v746
        %v1384 = vpop.f32.mrb[0].mxu0
        %v1385 = vadd.f32 %v1224, %v1384
        %v1386 = vpop.f32.mrb[0].mxu0
        %v1387 = vpop.f32.mrb[0].mxu0
        %v1388 = vadd.f32 %v1227, %v1387
        %v1389 = vpop.f32.mrb[0].mxu0
        %1390 = vmatprep.mubr.bf16.mxu0 %v752
        %1391 = vmatmul.mubr.bf16.gmra.mrb[0].mxu0 %v751
        %v1392 = vpop.f32.mrb[0].mxu0
        %v1393 = vadd.f32 %v1232, %v1392
        %v1394 = vpop.f32.mrb[0].mxu0
        %v1395 = vpop.f32.mrb[0].mxu0
        %v1396 = vadd.f32 %v1235, %v1395
        %v1397 = vpop.f32.mrb[0].mxu0
        %1398 = vmatprep.mubr.bf16.mxu0 %v757
        %1399 = vmatmul.mubr.bf16.gmra.mrb[0].mxu0 %v756
        %v1400 = vpop.f32.mrb[0].mxu0
        %v1401 = vadd.f32 %v1240, %v1400
        %v1402 = vpop.f32.mrb[0].mxu0
        %v1403 = vpop.f32.mrb[0].mxu0
        %v1404 = vadd.f32 %v1243, %v1403
        %v1405 = vpop.f32.mrb[0].mxu0
        %1406 = vmatprep.mubr.bf16.mxu0 %v762
        %1407 = vmatmul.mubr.bf16.gmra.mrb[0].mxu0 %v761
        %v1408 = vpop.f32.mrb[0].mxu0
        %v1409 = vadd.f32 %v1248, %v1408
        %v1410 = vpop.f32.mrb[0].mxu0
        %v1411 = vpop.f32.mrb[0].mxu0
        %v1412 = vadd.f32 %v1251, %v1411
        %v1413 = vpop.f32.mrb[0].mxu0
        %1414 = vdwg.mxu0
        %1415 = vmatprep.subr.bf16.mxu0 0
        %1416 = vmatpush1.bf16.msra.mxu0 %v1004
        %1417 = vmatprep.subr.bf16.mxu0 0
        %1418 = vmatpush1.bf16.msra.mxu0 %v1005
        %1419 = vmatprep.subr.bf16.mxu0 0
        %1420 = vmatpush1.bf16.msra.mxu0 %v1006
        %1421 = vmatprep.subr.bf16.mxu0 0
        %1422 = vmatpush1.bf16.msra.mxu0 %v1007
        %1423 = vmatprep.subr.bf16.mxu0 0
        %1424 = vmatpush1.bf16.msra.mxu0 0
        %1425 = vmatprep.subr.bf16.mxu0 0
        %1426 = vmatpush1.bf16.msra.mxu0 0
        %1427 = vmatprep.subr.bf16.mxu0 0
        %1428 = vmatpush1.bf16.msra.mxu0 0
        %1429 = vmatprep.subr.bf16.mxu0 0
        %1430 = vmatpush1.bf16.msra.mxu0 0
        %1431 = vmatprep.subr.bf16.mxu0 0
        %1432 = vmatpush1.bf16.msra.mxu0 0
        %1433 = vmatprep.subr.bf16.mxu0 0
        %1434 = vmatpush1.bf16.msra.mxu0 0
        %1435 = vmatprep.subr.bf16.mxu0 0
        %1436 = vmatpush1.bf16.msra.mxu0 0
        %1437 = vmatprep.subr.bf16.mxu0 0
        %1438 = vmatpush1.bf16.msra.mxu0 0
        %1439 = vmatprep.subr.bf16.mxu0 0
        %1440 = vmatpush1.bf16.msra.mxu0 0
        %1441 = vmatprep.subr.bf16.mxu0 0
        %1442 = vmatpush1.bf16.msra.mxu0 0
        %1443 = vmatprep.subr.bf16.mxu0 0
        %1444 = vmatpush1.bf16.msra.mxu0 0
        %1445 = vmatprep.subr.bf16.mxu0 0
        %1446 = vmatpush1.bf16.msra.mxu0 0
        %1447 = vmatprep.mubr.bf16.mxu0 0
        %1448 = vmatmul.mubr.bf16.gmra.mrb[0].mxu0 %v1046
        %v1449 = vpop.f32.mrb[0].mxu0
        %v1450 = vadd.f32 %v1289, %v1449
        %v1451 = vpop.f32.mrb[0].mxu0
        %v1452 = vpop.f32.mrb[0].mxu0
        %v1453 = vadd.f32 %v1292, %v1452
        %v1454 = vpop.f32.mrb[0].mxu0
        %1455 = vmatprep.mubr.bf16.mxu0 0
        %1456 = vmatmul.mubr.bf16.gmra.mrb[0].mxu0 %v1049
        %v1457 = vpop.f32.mrb[0].mxu0
        %v1458 = vadd.f32 %v1297, %v1457
        %v1459 = vpop.f32.mrb[0].mxu0
        %v1460 = vpop.f32.mrb[0].mxu0
        %v1461 = vadd.f32 %v1300, %v1460
        %v1462 = vpop.f32.mrb[0].mxu0
        %1463 = vmatprep.mubr.bf16.mxu0 0
        %1464 = vmatmul.mubr.bf16.gmra.mrb[0].mxu0 %v1052
        %v1465 = vpop.f32.mrb[0].mxu0
        %v1466 = vadd.f32 %v1305, %v1465
        %v1467 = vpop.f32.mrb[0].mxu0
        %v1468 = vpop.f32.mrb[0].mxu0
        %v1469 = vadd.f32 %v1308, %v1468
        %v1470 = vpop.f32.mrb[0].mxu0
        %1471 = vmatprep.mubr.bf16.mxu0 0
        %1472 = vmatmul.mubr.bf16.gmra.mrb[0].mxu0 %v1055
        %v1473 = vpop.f32.mrb[0].mxu0
        %v1474 = vadd.f32 %v1313, %v1473
        %v1475 = vpop.f32.mrb[0].mxu0
        %v1476 = vpop.f32.mrb[0].mxu0
        %v1477 = vadd.f32 %v1316, %v1476
        %v1478 = vpop.f32.mrb[0].mxu0
        %1479 = vmatprep.mubr.bf16.mxu0 0
        %1480 = vmatmul.mubr.bf16.gmra.mrb[0].mxu0 %v1058
        %v1481 = vpop.f32.mrb[0].mxu0
        %v1482 = vadd.f32 %v1321, %v1481
        %v1483 = vpop.f32.mrb[0].mxu0
        %v1484 = vpop.f32.mrb[0].mxu0
        %v1485 = vadd.f32 %v1324, %v1484
        %v1486 = vpop.f32.mrb[0].mxu0
        %1487 = vmatprep.mubr.bf16.mxu0 0
        %1488 = vmatmul.mubr.bf16.gmra.mrb[0].mxu0 %v1061
        %v1489 = vpop.f32.mrb[0].mxu0
        %v1490 = vadd.f32 %v1329, %v1489
        %v1491 = vpop.f32.mrb[0].mxu0
        %v1492 = vpop.f32.mrb[0].mxu0
        %v1493 = vadd.f32 %v1332, %v1492
        %v1494 = vpop.f32.mrb[0].mxu0
        %1495 = vmatprep.mubr.bf16.mxu0 0
        %1496 = vmatmul.mubr.bf16.gmra.mrb[0].mxu0 %v1064
        %v1497 = vpop.f32.mrb[0].mxu0
        %v1498 = vadd.f32 %v1337, %v1497
        %v1499 = vpop.f32.mrb[0].mxu0
        %v1500 = vpop.f32.mrb[0].mxu0
        %v1501 = vadd.f32 %v1340, %v1500
        %v1502 = vpop.f32.mrb[0].mxu0
        %1503 = vmatprep.mubr.bf16.mxu0 0
        %1504 = vmatmul.mubr.bf16.gmra.mrb[0].mxu0 %v1067
        %v1505 = vpop.f32.mrb[0].mxu0
        %v1506 = vadd.f32 %v1345, %v1505
        %v1507 = vpop.f32.mrb[0].mxu0
        %v1508 = vpop.f32.mrb[0].mxu0
        %v1509 = vadd.f32 %v1348, %v1508
        %v1510 = vpop.f32.mrb[0].mxu0
        %1511 = vmatprep.mubr.bf16.mxu0 0
        %1512 = vmatmul.mubr.bf16.gmra.mrb[0].mxu0 %v1070
        %v1513 = vpop.f32.mrb[0].mxu0
        %v1514 = vadd.f32 %v1353, %v1513
        %v1515 = vpop.f32.mrb[0].mxu0
        %v1516 = vpop.f32.mrb[0].mxu0
        %v1517 = vadd.f32 %v1356, %v1516
        %v1518 = vpop.f32.mrb[0].mxu0
        %1519 = vmatprep.mubr.bf16.mxu0 0
        %1520 = vmatmul.mubr.bf16.gmra.mrb[0].mxu0 %v1073
        %v1521 = vpop.f32.mrb[0].mxu0
        %v1522 = vadd.f32 %v1361, %v1521
        %v1523 = vpop.f32.mrb[0].mxu0
        %v1524 = vpop.f32.mrb[0].mxu0
        %v1525 = vadd.f32 %v1364, %v1524
        %v1526 = vpop.f32.mrb[0].mxu0
        %1527 = vmatprep.mubr.bf16.mxu0 0
        %1528 = vmatmul.mubr.bf16.gmra.mrb[0].mxu0 %v1076
        %v1529 = vpop.f32.mrb[0].mxu0
        %v1530 = vadd.f32 %v1369, %v1529
        %v1531 = vpop.f32.mrb[0].mxu0
        %v1532 = vpop.f32.mrb[0].mxu0
        %v1533 = vadd.f32 %v1372, %v1532
        %v1534 = vpop.f32.mrb[0].mxu0
        %1535 = vmatprep.mubr.bf16.mxu0 0
        %1536 = vmatmul.mubr.bf16.gmra.mrb[0].mxu0 %v1079
        %v1537 = vpop.f32.mrb[0].mxu0
        %v1538 = vadd.f32 %v1377, %v1537
        %v1539 = vpop.f32.mrb[0].mxu0
        %v1540 = vpop.f32.mrb[0].mxu0
        %v1541 = vadd.f32 %v1380, %v1540
        %v1542 = vpop.f32.mrb[0].mxu0
        %1543 = vmatprep.mubr.bf16.mxu0 0
        %1544 = vmatmul.mubr.bf16.gmra.mrb[0].mxu0 %v1082
        %v1545 = vpop.f32.mrb[0].mxu0
        %v1546 = vadd.f32 %v1385, %v1545
        %v1547 = vpop.f32.mrb[0].mxu0
        %v1548 = vpop.f32.mrb[0].mxu0
        %v1549 = vadd.f32 %v1388, %v1548
        %v1550 = vpop.f32.mrb[0].mxu0
        %1551 = vmatprep.mubr.bf16.mxu0 0
        %1552 = vmatmul.mubr.bf16.gmra.mrb[0].mxu0 %v1085
        %v1553 = vpop.f32.mrb[0].mxu0
        %v1554 = vadd.f32 %v1393, %v1553
        %v1555 = vpop.f32.mrb[0].mxu0
        %v1556 = vpop.f32.mrb[0].mxu0
        %v1557 = vadd.f32 %v1396, %v1556
        %v1558 = vpop.f32.mrb[0].mxu0
        %1559 = vmatprep.mubr.bf16.mxu0 0
        %1560 = vmatmul.mubr.bf16.gmra.mrb[0].mxu0 %v1088
        %v1561 = vpop.f32.mrb[0].mxu0
        %v1562 = vadd.f32 %v1401, %v1561
        %v1563 = vpop.f32.mrb[0].mxu0
        %v1564 = vpop.f32.mrb[0].mxu0
        %v1565 = vadd.f32 %v1404, %v1564
        %v1566 = vpop.f32.mrb[0].mxu0
        %1567 = vmatprep.mubr.bf16.mxu0 0
        %1568 = vmatmul.mubr.bf16.gmra.mrb[0].mxu0 %v1091
        %v1569 = vpop.f32.mrb[0].mxu0
        %v1570 = vadd.f32 %v1409, %v1569
        %v1571 = vpop.f32.mrb[0].mxu0
        %v1572 = vpop.f32.mrb[0].mxu0
        %v1573 = vadd.f32 %v1412, %v1572
        %v1574 = vpop.f32.mrb[0].mxu0
        %1575 = vdwg.mxu0
        %v1576 = vsub.f32 0.0, %v1450
        %v1577 = vsub.f32 0.0, %v1453
        %v1578 = vsub.f32 0.0, %v1458
        %v1579 = vsub.f32 0.0, %v1461
        %v1580 = vsub.f32 0.0, %v1466
        %v1581 = vsub.f32 0.0, %v1469
        %v1582 = vsub.f32 0.0, %v1474
        %v1583 = vsub.f32 0.0, %v1477
        %v1584 = vsub.f32 0.0, %v1482
        %v1585 = vsub.f32 0.0, %v1485
        %v1586 = vsub.f32 0.0, %v1490
        %v1587 = vsub.f32 0.0, %v1493
        %v1588 = vsub.f32 0.0, %v1498
        %v1589 = vsub.f32 0.0, %v1501
        %v1590 = vsub.f32 0.0, %v1506
        %v1591 = vsub.f32 0.0, %v1509
        %v1592 = vsub.f32 0.0, %v1514
        %v1593 = vsub.f32 0.0, %v1517
        %v1594 = vsub.f32 0.0, %v1522
        %v1595 = vsub.f32 0.0, %v1525
        %v1596 = vsub.f32 0.0, %v1530
        %v1597 = vsub.f32 0.0, %v1533
        %v1598 = vsub.f32 0.0, %v1538
        %v1599 = vsub.f32 0.0, %v1541
        %v1600 = vsub.f32 0.0, %v1546
        %v1601 = vsub.f32 0.0, %v1549
        %v1602 = vsub.f32 0.0, %v1554
        %v1603 = vsub.f32 0.0, %v1557
        %v1604 = vsub.f32 0.0, %v1562
        %v1605 = vsub.f32 0.0, %v1565
        %v1606 = vsub.f32 0.0, %v1570
        %v1607 = vsub.f32 0.0, %v1573
        %v1608 = vmul.f32 %v1576, 1.442695
        %v1609 = vpow.pop %v1608
        %v1610 = vmul.f32 %v1577, 1.442695
        %v1611 = vpow.pop %v1610
        %v1612 = vmul.f32 %v1578, 1.442695
        %v1613 = vpow.pop %v1612
        %v1614 = vmul.f32 %v1579, 1.442695
        %v1615 = vpow.pop %v1614
        %v1616 = vmul.f32 %v1580, 1.442695
        %v1617 = vpow.pop %v1616
        %v1618 = vmul.f32 %v1581, 1.442695
        %v1619 = vpow.pop %v1618
        %v1620 = vmul.f32 %v1582, 1.442695
        %v1621 = vpow.pop %v1620
        %v1622 = vmul.f32 %v1583, 1.442695
        %v1623 = vpow.pop %v1622
        %v1624 = vmul.f32 %v1584, 1.442695
        %v1625 = vpow.pop %v1624
        %v1626 = vmul.f32 %v1585, 1.442695
        %v1627 = vpow.pop %v1626
        %v1628 = vmul.f32 %v1586, 1.442695
        %v1629 = vpow.pop %v1628
        %v1630 = vmul.f32 %v1587, 1.442695
        %v1631 = vpow.pop %v1630
        %v1632 = vmul.f32 %v1588, 1.442695
        %v1633 = vpow.pop %v1632
        %v1634 = vmul.f32 %v1589, 1.442695
        %v1635 = vpow.pop %v1634
        %v1636 = vmul.f32 %v1590, 1.442695
        %v1637 = vpow.pop %v1636
        %v1638 = vmul.f32 %v1591, 1.442695
        %v1639 = vpow.pop %v1638
        %v1640 = vmul.f32 %v1592, 1.442695
        %v1641 = vpow.pop %v1640
        %v1642 = vmul.f32 %v1593, 1.442695
        %v1643 = vpow.pop %v1642
        %v1644 = vmul.f32 %v1594, 1.442695
        %v1645 = vpow.pop %v1644
        %v1646 = vmul.f32 %v1595, 1.442695
        %v1647 = vpow.pop %v1646
        %v1648 = vmul.f32 %v1596, 1.442695
        %v1649 = vpow.pop %v1648
        %v1650 = vmul.f32 %v1597, 1.442695
        %v1651 = vpow.pop %v1650
        %v1652 = vmul.f32 %v1598, 1.442695
        %v1653 = vpow.pop %v1652
        %v1654 = vmul.f32 %v1599, 1.442695
        %v1655 = vpow.pop %v1654
        %v1656 = vmul.f32 %v1600, 1.442695
        %v1657 = vpow.pop %v1656
        %v1658 = vmul.f32 %v1601, 1.442695
        %v1659 = vpow.pop %v1658
        %v1660 = vmul.f32 %v1602, 1.442695
        %v1661 = vpow.pop %v1660
        %v1662 = vmul.f32 %v1603, 1.442695
        %v1663 = vpow.pop %v1662
        %v1664 = vmul.f32 %v1604, 1.442695
        %v1665 = vpow.pop %v1664
        %v1666 = vmul.f32 %v1605, 1.442695
        %v1667 = vpow.pop %v1666
        %v1668 = vmul.f32 %v1606, 1.442695
        %v1669 = vpow.pop %v1668
        %v1670 = vmul.f32 %v1607, 1.442695
        %v1671 = vpow.pop %v1670
        %v1672 = vadd.f32 %v1609, 1.0
        %v1673 = vadd.f32 %v1611, 1.0
        %v1674 = vadd.f32 %v1613, 1.0
        %v1675 = vadd.f32 %v1615, 1.0
        %v1676 = vadd.f32 %v1617, 1.0
        %v1677 = vadd.f32 %v1619, 1.0
        %v1678 = vadd.f32 %v1621, 1.0
        %v1679 = vadd.f32 %v1623, 1.0
        %v1680 = vadd.f32 %v1625, 1.0
        %v1681 = vadd.f32 %v1627, 1.0
        %v1682 = vadd.f32 %v1629, 1.0
        %v1683 = vadd.f32 %v1631, 1.0
        %v1684 = vadd.f32 %v1633, 1.0
        %v1685 = vadd.f32 %v1635, 1.0
        %v1686 = vadd.f32 %v1637, 1.0
        %v1687 = vadd.f32 %v1639, 1.0
        %v1688 = vadd.f32 %v1641, 1.0
        %v1689 = vadd.f32 %v1643, 1.0
        %v1690 = vadd.f32 %v1645, 1.0
        %v1691 = vadd.f32 %v1647, 1.0
        %v1692 = vadd.f32 %v1649, 1.0
        %v1693 = vadd.f32 %v1651, 1.0
        %v1694 = vadd.f32 %v1653, 1.0
        %v1695 = vadd.f32 %v1655, 1.0
        %v1696 = vadd.f32 %v1657, 1.0
        %v1697 = vadd.f32 %v1659, 1.0
        %v1698 = vadd.f32 %v1661, 1.0
        %v1699 = vadd.f32 %v1663, 1.0
        %v1700 = vadd.f32 %v1665, 1.0
        %v1701 = vadd.f32 %v1667, 1.0
        %v1702 = vadd.f32 %v1669, 1.0
        %v1703 = vadd.f32 %v1671, 1.0
        %v1704 = vrcp.pop %v1672
        %v1705 = vmul.f32 1.0, %v1704
        %v1706 = vrcp.pop %v1673
        %v1707 = vmul.f32 1.0, %v1706
        %v1708 = vrcp.pop %v1674
        %v1709 = vmul.f32 1.0, %v1708
        %v1710 = vrcp.pop %v1675
        %v1711 = vmul.f32 1.0, %v1710
        %v1712 = vrcp.pop %v1676
        %v1713 = vmul.f32 1.0, %v1712
        %v1714 = vrcp.pop %v1677
        %v1715 = vmul.f32 1.0, %v1714
        %v1716 = vrcp.pop %v1678
        %v1717 = vmul.f32 1.0, %v1716
        %v1718 = vrcp.pop %v1679
        %v1719 = vmul.f32 1.0, %v1718
        %v1720 = vrcp.pop %v1680
        %v1721 = vmul.f32 1.0, %v1720
        %v1722 = vrcp.pop %v1681
        %v1723 = vmul.f32 1.0, %v1722
        %v1724 = vrcp.pop %v1682
        %v1725 = vmul.f32 1.0, %v1724
        %v1726 = vrcp.pop %v1683
        %v1727 = vmul.f32 1.0, %v1726
        %v1728 = vrcp.pop %v1684
        %v1729 = vmul.f32 1.0, %v1728
        %v1730 = vrcp.pop %v1685
        %v1731 = vmul.f32 1.0, %v1730
        %v1732 = vrcp.pop %v1686
        %v1733 = vmul.f32 1.0, %v1732
        %v1734 = vrcp.pop %v1687
        %v1735 = vmul.f32 1.0, %v1734
        %v1736 = vrcp.pop %v1688
        %v1737 = vmul.f32 1.0, %v1736
        %v1738 = vrcp.pop %v1689
        %v1739 = vmul.f32 1.0, %v1738
        %v1740 = vrcp.pop %v1690
        %v1741 = vmul.f32 1.0, %v1740
        %v1742 = vrcp.pop %v1691
        %v1743 = vmul.f32 1.0, %v1742
        %v1744 = vrcp.pop %v1692
        %v1745 = vmul.f32 1.0, %v1744
        %v1746 = vrcp.pop %v1693
        %v1747 = vmul.f32 1.0, %v1746
        %v1748 = vrcp.pop %v1694
        %v1749 = vmul.f32 1.0, %v1748
        %v1750 = vrcp.pop %v1695
        %v1751 = vmul.f32 1.0, %v1750
        %v1752 = vrcp.pop %v1696
        %v1753 = vmul.f32 1.0, %v1752
        %v1754 = vrcp.pop %v1697
        %v1755 = vmul.f32 1.0, %v1754
        %v1756 = vrcp.pop %v1698
        %v1757 = vmul.f32 1.0, %v1756
        %v1758 = vrcp.pop %v1699
        %v1759 = vmul.f32 1.0, %v1758
        %v1760 = vrcp.pop %v1700
        %v1761 = vmul.f32 1.0, %v1760
        %v1762 = vrcp.pop %v1701
        %v1763 = vmul.f32 1.0, %v1762
        %v1764 = vrcp.pop %v1702
        %v1765 = vmul.f32 1.0, %v1764
        %v1766 = vrcp.pop %v1703
        %v1767 = vmul.f32 1.0, %v1766
        %vm1768 = vcmask 97280
        %1769 = vst.msk [vmem:[%s250] sm:$0xff] %vm1768, %v1705
        %1770 = vst.msk [vmem:[%s250 + $0x8] sm:$0xff] %vm1768, %v1707
        %1771 = vst.msk [vmem:[%s250 + $0x10] sm:$0xff] %vm1768, %v1709
        %1772 = vst.msk [vmem:[%s250 + $0x18] sm:$0xff] %vm1768, %v1711
        %1773 = vst.msk [vmem:[%s250 + $0x20] sm:$0xff] %vm1768, %v1713
        %1774 = vst.msk [vmem:[%s250 + $0x28] sm:$0xff] %vm1768, %v1715
        %1775 = vst.msk [vmem:[%s250 + $0x30] sm:$0xff] %vm1768, %v1717
        %1776 = vst.msk [vmem:[%s250 + $0x38] sm:$0xff] %vm1768, %v1719
        %1777 = vst.msk [vmem:[%s250 + $0x40] sm:$0xff] %vm1768, %v1721
        %1778 = vst.msk [vmem:[%s250 + $0x48] sm:$0xff] %vm1768, %v1723
        %1779 = vst.msk [vmem:[%s250 + $0x50] sm:$0xff] %vm1768, %v1725
        %1780 = vst.msk [vmem:[%s250 + $0x58] sm:$0xff] %vm1768, %v1727
        %1781 = vst.msk [vmem:[%s250 + $0x60] sm:$0xff] %vm1768, %v1729
        %1782 = vst.msk [vmem:[%s250 + $0x68] sm:$0xff] %vm1768, %v1731
        %1783 = vst.msk [vmem:[%s250 + $0x70] sm:$0xff] %vm1768, %v1733
        %1784 = vst.msk [vmem:[%s250 + $0x78] sm:$0xff] %vm1768, %v1735
        %1785 = vst.msk [vmem:[%s250 + $0x80] sm:$0xff] %vm1768, %v1737
        %1786 = vst.msk [vmem:[%s250 + $0x88] sm:$0xff] %vm1768, %v1739
        %1787 = vst.msk [vmem:[%s250 + $0x90] sm:$0xff] %vm1768, %v1741
        %1788 = vst.msk [vmem:[%s250 + $0x98] sm:$0xff] %vm1768, %v1743
        %1789 = vst.msk [vmem:[%s250 + $0xa0] sm:$0xff] %vm1768, %v1745
        %1790 = vst.msk [vmem:[%s250 + $0xa8] sm:$0xff] %vm1768, %v1747
        %1791 = vst.msk [vmem:[%s250 + $0xb0] sm:$0xff] %vm1768, %v1749
        %1792 = vst.msk [vmem:[%s250 + $0xb8] sm:$0xff] %vm1768, %v1751
        %1793 = vst.msk [vmem:[%s250 + $0xc0] sm:$0xff] %vm1768, %v1753
        %1794 = vst.msk [vmem:[%s250 + $0xc8] sm:$0xff] %vm1768, %v1755
        %1795 = vst.msk [vmem:[%s250 + $0xd0] sm:$0xff] %vm1768, %v1757
        %1796 = vst.msk [vmem:[%s250 + $0xd8] sm:$0xff] %vm1768, %v1759
        %1797 = vst.msk [vmem:[%s250 + $0xe0] sm:$0xff] %vm1768, %v1761
        %1798 = vst.msk [vmem:[%s250 + $0xe8] sm:$0xff] %vm1768, %v1763
        %1799 = vst.msk [vmem:[%s250 + $0xf0] sm:$0xff] %vm1768, %v1765
        %1800 = vst.msk [vmem:[%s250 + $0xf8] sm:$0xff] %vm1768, %v1767
        %v1801 = vld [vmem:[%s244] sm:$0xff]
        %v1802 = vld [vmem:[%s244 + $0x8] sm:$0xff]
        %v1803 = vld [vmem:[%s244 + $0x10] sm:$0xff]
        %v1804 = vld [vmem:[%s244 + $0x18] sm:$0xff]
        %v1805 = vld [vmem:[%s244 + $0x20] sm:$0xff]
        %v1806 = vld [vmem:[%s244 + $0x28] sm:$0xff]
        %v1807 = vld [vmem:[%s244 + $0x30] sm:$0xff]
        %v1808 = vld [vmem:[%s244 + $0x38] sm:$0xff]
        %v1809 = vld [vmem:[%s244 + $0x40] sm:$0xff]
        %v1810 = vld [vmem:[%s244 + $0x48] sm:$0xff]
        %v1811 = vld [vmem:[%s244 + $0x50] sm:$0xff]
        %v1812 = vld [vmem:[%s244 + $0x58] sm:$0xff]
        %v1813 = vld [vmem:[%s244 + $0x60] sm:$0xff]
        %v1814 = vld [vmem:[%s244 + $0x68] sm:$0xff]
        %v1815 = vld [vmem:[%s244 + $0x70] sm:$0xff]
        %v1816 = vld [vmem:[%s244 + $0x78] sm:$0xff]
        %v1817 = vld [vmem:[%s244 + $0x80] sm:$0xff]
        %v1818 = vld [vmem:[%s244 + $0x88] sm:$0xff]
        %v1819 = vld [vmem:[%s244 + $0x90] sm:$0xff]
        %v1820 = vld [vmem:[%s244 + $0x98] sm:$0xff]
        %v1821 = vld [vmem:[%s244 + $0xa0] sm:$0xff]
        %v1822 = vld [vmem:[%s244 + $0xa8] sm:$0xff]
        %v1823 = vld [vmem:[%s244 + $0xb0] sm:$0xff]
        %v1824 = vld [vmem:[%s244 + $0xb8] sm:$0xff]
        %v1825 = vld [vmem:[%s244 + $0xc0] sm:$0xff]
        %v1826 = vld [vmem:[%s244 + $0xc8] sm:$0xff]
        %v1827 = vld [vmem:[%s244 + $0xd0] sm:$0xff]
        %v1828 = vld [vmem:[%s244 + $0xd8] sm:$0xff]
        %v1829 = vld [vmem:[%s244 + $0xe0] sm:$0xff]
        %v1830 = vld [vmem:[%s244 + $0xe8] sm:$0xff]
        %v1831 = vld [vmem:[%s244 + $0xf0] sm:$0xff]
        %v1832 = vld [vmem:[%s244 + $0xf8] sm:$0xff]
        %v1833 = vlog2.pop %v1705
        %v1834 = vmul.f32 %v1833, 0.6931472
        %v1835 = vlog2.pop %v1707
        %v1836 = vmul.f32 %v1835, 0.6931472
        %v1837 = vlog2.pop %v1709
        %v1838 = vmul.f32 %v1837, 0.6931472
        %v1839 = vlog2.pop %v1711
        %v1840 = vmul.f32 %v1839, 0.6931472
        %v1841 = vlog2.pop %v1713
        %v1842 = vmul.f32 %v1841, 0.6931472
        %v1843 = vlog2.pop %v1715
        %v1844 = vmul.f32 %v1843, 0.6931472
        %v1845 = vlog2.pop %v1717
        %v1846 = vmul.f32 %v1845, 0.6931472
        %v1847 = vlog2.pop %v1719
        %v1848 = vmul.f32 %v1847, 0.6931472
        %v1849 = vlog2.pop %v1721
        %v1850 = vmul.f32 %v1849, 0.6931472
        %v1851 = vlog2.pop %v1723
        %v1852 = vmul.f32 %v1851, 0.6931472
        %v1853 = vlog2.pop %v1725
        %v1854 = vmul.f32 %v1853, 0.6931472
        %v1855 = vlog2.pop %v1727
        %v1856 = vmul.f32 %v1855, 0.6931472
        %v1857 = vlog2.pop %v1729
        %v1858 = vmul.f32 %v1857, 0.6931472
        %v1859 = vlog2.pop %v1731
        %v1860 = vmul.f32 %v1859, 0.6931472
        %v1861 = vlog2.pop %v1733
        %v1862 = vmul.f32 %v1861, 0.6931472
        %v1863 = vlog2.pop %v1735
        %v1864 = vmul.f32 %v1863, 0.6931472
        %v1865 = vlog2.pop %v1737
        %v1866 = vmul.f32 %v1865, 0.6931472
        %v1867 = vlog2.pop %v1739
        %v1868 = vmul.f32 %v1867, 0.6931472
        %v1869 = vlog2.pop %v1741
        %v1870 = vmul.f32 %v1869, 0.6931472
        %v1871 = vlog2.pop %v1743
        %v1872 = vmul.f32 %v1871, 0.6931472
        %v1873 = vlog2.pop %v1745
        %v1874 = vmul.f32 %v1873, 0.6931472
        %v1875 = vlog2.pop %v1747
        %v1876 = vmul.f32 %v1875, 0.6931472
        %v1877 = vlog2.pop %v1749
        %v1878 = vmul.f32 %v1877, 0.6931472
        %v1879 = vlog2.pop %v1751
        %v1880 = vmul.f32 %v1879, 0.6931472
        %v1881 = vlog2.pop %v1753
        %v1882 = vmul.f32 %v1881, 0.6931472
        %v1883 = vlog2.pop %v1755
        %v1884 = vmul.f32 %v1883, 0.6931472
        %v1885 = vlog2.pop %v1757
        %v1886 = vmul.f32 %v1885, 0.6931472
        %v1887 = vlog2.pop %v1759
        %v1888 = vmul.f32 %v1887, 0.6931472
        %v1889 = vlog2.pop %v1761
        %v1890 = vmul.f32 %v1889, 0.6931472
        %v1891 = vlog2.pop %v1763
        %v1892 = vmul.f32 %v1891, 0.6931472
        %v1893 = vlog2.pop %v1765
        %v1894 = vmul.f32 %v1893, 0.6931472
        %v1895 = vlog2.pop %v1767
        %v1896 = vmul.f32 %v1895, 0.6931472
        %v1897 = vmax.f32 %v1834, -100.0
        %v1898 = vmax.f32 %v1836, -100.0
        %v1899 = vmax.f32 %v1838, -100.0
        %v1900 = vmax.f32 %v1840, -100.0
        %v1901 = vmax.f32 %v1842, -100.0
        %v1902 = vmax.f32 %v1844, -100.0
        %v1903 = vmax.f32 %v1846, -100.0
        %v1904 = vmax.f32 %v1848, -100.0
        %v1905 = vmax.f32 %v1850, -100.0
        %v1906 = vmax.f32 %v1852, -100.0
        %v1907 = vmax.f32 %v1854, -100.0
        %v1908 = vmax.f32 %v1856, -100.0
        %v1909 = vmax.f32 %v1858, -100.0
        %v1910 = vmax.f32 %v1860, -100.0
        %v1911 = vmax.f32 %v1862, -100.0
        %v1912 = vmax.f32 %v1864, -100.0
        %v1913 = vmax.f32 %v1866, -100.0
        %v1914 = vmax.f32 %v1868, -100.0
        %v1915 = vmax.f32 %v1870, -100.0
        %v1916 = vmax.f32 %v1872, -100.0
        %v1917 = vmax.f32 %v1874, -100.0
        %v1918 = vmax.f32 %v1876, -100.0
        %v1919 = vmax.f32 %v1878, -100.0
        %v1920 = vmax.f32 %v1880, -100.0
        %v1921 = vmax.f32 %v1882, -100.0
        %v1922 = vmax.f32 %v1884, -100.0
        %v1923 = vmax.f32 %v1886, -100.0
        %v1924 = vmax.f32 %v1888, -100.0
        %v1925 = vmax.f32 %v1890, -100.0
        %v1926 = vmax.f32 %v1892, -100.0
        %v1927 = vmax.f32 %v1894, -100.0
        %v1928 = vmax.f32 %v1896, -100.0
        %v1929 = vsub.f32 1.0, %v1705
        %v1930 = vsub.f32 1.0, %v1707
        %v1931 = vsub.f32 1.0, %v1709
        %v1932 = vsub.f32 1.0, %v1711
        %v1933 = vsub.f32 1.0, %v1713
        %v1934 = vsub.f32 1.0, %v1715
        %v1935 = vsub.f32 1.0, %v1717
        %v1936 = vsub.f32 1.0, %v1719
        %v1937 = vsub.f32 1.0, %v1721
        %v1938 = vsub.f32 1.0, %v1723
        %v1939 = vsub.f32 1.0, %v1725
        %v1940 = vsub.f32 1.0, %v1727
        %v1941 = vsub.f32 1.0, %v1729
        %v1942 = vsub.f32 1.0, %v1731
        %v1943 = vsub.f32 1.0, %v1733
        %v1944 = vsub.f32 1.0, %v1735
        %v1945 = vsub.f32 1.0, %v1737
        %v1946 = vsub.f32 1.0, %v1739
        %v1947 = vsub.f32 1.0, %v1741
        %v1948 = vsub.f32 1.0, %v1743
        %v1949 = vsub.f32 1.0, %v1745
        %v1950 = vsub.f32 1.0, %v1747
        %v1951 = vsub.f32 1.0, %v1749
        %v1952 = vsub.f32 1.0, %v1751
        %v1953 = vsub.f32 1.0, %v1753
        %v1954 = vsub.f32 1.0, %v1755
        %v1955 = vsub.f32 1.0, %v1757
        %v1956 = vsub.f32 1.0, %v1759
        %v1957 = vsub.f32 1.0, %v1761
        %v1958 = vsub.f32 1.0, %v1763
        %v1959 = vsub.f32 1.0, %v1765
        %v1960 = vsub.f32 1.0, %v1767
        %v1961 = vlog2.pop %v1929
        %v1962 = vmul.f32 %v1961, 0.6931472
        %v1963 = vlog2.pop %v1930
        %v1964 = vmul.f32 %v1963, 0.6931472
        %v1965 = vlog2.pop %v1931
        %v1966 = vmul.f32 %v1965, 0.6931472
        %v1967 = vlog2.pop %v1932
        %v1968 = vmul.f32 %v1967, 0.6931472
        %v1969 = vlog2.pop %v1933
        %v1970 = vmul.f32 %v1969, 0.6931472
        %v1971 = vlog2.pop %v1934
        %v1972 = vmul.f32 %v1971, 0.6931472
        %v1973 = vlog2.pop %v1935
        %v1974 = vmul.f32 %v1973, 0.6931472
        %v1975 = vlog2.pop %v1936
        %v1976 = vmul.f32 %v1975, 0.6931472
        %v1977 = vlog2.pop %v1937
        %v1978 = vmul.f32 %v1977, 0.6931472
        %v1979 = vlog2.pop %v1938
        %v1980 = vmul.f32 %v1979, 0.6931472
        %v1981 = vlog2.pop %v1939
        %v1982 = vmul.f32 %v1981, 0.6931472
        %v1983 = vlog2.pop %v1940
        %v1984 = vmul.f32 %v1983, 0.6931472
        %v1985 = vlog2.pop %v1941
        %v1986 = vmul.f32 %v1985, 0.6931472
        %v1987 = vlog2.pop %v1942
        %v1988 = vmul.f32 %v1987, 0.6931472
        %v1989 = vlog2.pop %v1943
        %v1990 = vmul.f32 %v1989, 0.6931472
        %v1991 = vlog2.pop %v1944
        %v1992 = vmul.f32 %v1991, 0.6931472
        %v1993 = vlog2.pop %v1945
        %v1994 = vmul.f32 %v1993, 0.6931472
        %v1995 = vlog2.pop %v1946
        %v1996 = vmul.f32 %v1995, 0.6931472
        %v1997 = vlog2.pop %v1947
        %v1998 = vmul.f32 %v1997, 0.6931472
        %v1999 = vlog2.pop %v1948
        %v2000 = vmul.f32 %v1999, 0.6931472
        %v2001 = vlog2.pop %v1949
        %v2002 = vmul.f32 %v2001, 0.6931472
        %v2003 = vlog2.pop %v1950
        %v2004 = vmul.f32 %v2003, 0.6931472
        %v2005 = vlog2.pop %v1951
        %v2006 = vmul.f32 %v2005, 0.6931472
        %v2007 = vlog2.pop %v1952
        %v2008 = vmul.f32 %v2007, 0.6931472
        %v2009 = vlog2.pop %v1953
        %v2010 = vmul.f32 %v2009, 0.6931472
        %v2011 = vlog2.pop %v1954
        %v2012 = vmul.f32 %v2011, 0.6931472
        %v2013 = vlog2.pop %v1955
        %v2014 = vmul.f32 %v2013, 0.6931472
        %v2015 = vlog2.pop %v1956
        %v2016 = vmul.f32 %v2015, 0.6931472
        %v2017 = vlog2.pop %v1957
        %v2018 = vmul.f32 %v2017, 0.6931472
        %v2019 = vlog2.pop %v1958
        %v2020 = vmul.f32 %v2019, 0.6931472
        %v2021 = vlog2.pop %v1959
        %v2022 = vmul.f32 %v2021, 0.6931472
        %v2023 = vlog2.pop %v1960
        %v2024 = vmul.f32 %v2023, 0.6931472
        %v2025 = vmax.f32 %v1962, -100.0
        %v2026 = vmax.f32 %v1964, -100.0
        %v2027 = vmax.f32 %v1966, -100.0
        %v2028 = vmax.f32 %v1968, -100.0
        %v2029 = vmax.f32 %v1970, -100.0
        %v2030 = vmax.f32 %v1972, -100.0
        %v2031 = vmax.f32 %v1974, -100.0
        %v2032 = vmax.f32 %v1976, -100.0
        %v2033 = vmax.f32 %v1978, -100.0
        %v2034 = vmax.f32 %v1980, -100.0
        %v2035 = vmax.f32 %v1982, -100.0
        %v2036 = vmax.f32 %v1984, -100.0
        %v2037 = vmax.f32 %v1986, -100.0
        %v2038 = vmax.f32 %v1988, -100.0
        %v2039 = vmax.f32 %v1990, -100.0
        %v2040 = vmax.f32 %v1992, -100.0
        %v2041 = vmax.f32 %v1994, -100.0
        %v2042 = vmax.f32 %v1996, -100.0
        %v2043 = vmax.f32 %v1998, -100.0
        %v2044 = vmax.f32 %v2000, -100.0
        %v2045 = vmax.f32 %v2002, -100.0
        %v2046 = vmax.f32 %v2004, -100.0
        %v2047 = vmax.f32 %v2006, -100.0
        %v2048 = vmax.f32 %v2008, -100.0
        %v2049 = vmax.f32 %v2010, -100.0
        %v2050 = vmax.f32 %v2012, -100.0
        %v2051 = vmax.f32 %v2014, -100.0
        %v2052 = vmax.f32 %v2016, -100.0
        %v2053 = vmax.f32 %v2018, -100.0
        %v2054 = vmax.f32 %v2020, -100.0
        %v2055 = vmax.f32 %v2022, -100.0
        %v2056 = vmax.f32 %v2024, -100.0
        %v2057 = vmul.f32 %v1801, %v1897
        %v2058 = vmul.f32 %v1802, %v1898
        %v2059 = vmul.f32 %v1803, %v1899
        %v2060 = vmul.f32 %v1804, %v1900
        %v2061 = vmul.f32 %v1805, %v1901
        %v2062 = vmul.f32 %v1806, %v1902
        %v2063 = vmul.f32 %v1807, %v1903
        %v2064 = vmul.f32 %v1808, %v1904
        %v2065 = vmul.f32 %v1809, %v1905
        %v2066 = vmul.f32 %v1810, %v1906
        %v2067 = vmul.f32 %v1811, %v1907
        %v2068 = vmul.f32 %v1812, %v1908
        %v2069 = vmul.f32 %v1813, %v1909
        %v2070 = vmul.f32 %v1814, %v1910
        %v2071 = vmul.f32 %v1815, %v1911
        %v2072 = vmul.f32 %v1816, %v1912
        %v2073 = vmul.f32 %v1817, %v1913
        %v2074 = vmul.f32 %v1818, %v1914
        %v2075 = vmul.f32 %v1819, %v1915
        %v2076 = vmul.f32 %v1820, %v1916
        %v2077 = vmul.f32 %v1821, %v1917
        %v2078 = vmul.f32 %v1822, %v1918
        %v2079 = vmul.f32 %v1823, %v1919
        %v2080 = vmul.f32 %v1824, %v1920
        %v2081 = vmul.f32 %v1825, %v1921
        %v2082 = vmul.f32 %v1826, %v1922
        %v2083 = vmul.f32 %v1827, %v1923
        %v2084 = vmul.f32 %v1828, %v1924
        %v2085 = vmul.f32 %v1829, %v1925
        %v2086 = vmul.f32 %v1830, %v1926
        %v2087 = vmul.f32 %v1831, %v1927
        %v2088 = vmul.f32 %v1832, %v1928
        %v2089 = vsub.f32 1.0, %v1801
        %v2090 = vsub.f32 1.0, %v1802
        %v2091 = vsub.f32 1.0, %v1803
        %v2092 = vsub.f32 1.0, %v1804
        %v2093 = vsub.f32 1.0, %v1805
        %v2094 = vsub.f32 1.0, %v1806
        %v2095 = vsub.f32 1.0, %v1807
        %v2096 = vsub.f32 1.0, %v1808
        %v2097 = vsub.f32 1.0, %v1809
        %v2098 = vsub.f32 1.0, %v1810
        %v2099 = vsub.f32 1.0, %v1811
        %v2100 = vsub.f32 1.0, %v1812
        %v2101 = vsub.f32 1.0, %v1813
        %v2102 = vsub.f32 1.0, %v1814
        %v2103 = vsub.f32 1.0, %v1815
        %v2104 = vsub.f32 1.0, %v1816
        %v2105 = vsub.f32 1.0, %v1817
        %v2106 = vsub.f32 1.0, %v1818
        %v2107 = vsub.f32 1.0, %v1819
        %v2108 = vsub.f32 1.0, %v1820
        %v2109 = vsub.f32 1.0, %v1821
        %v2110 = vsub.f32 1.0, %v1822
        %v2111 = vsub.f32 1.0, %v1823
        %v2112 = vsub.f32 1.0, %v1824
        %v2113 = vsub.f32 1.0, %v1825
        %v2114 = vsub.f32 1.0, %v1826
        %v2115 = vsub.f32 1.0, %v1827
        %v2116 = vsub.f32 1.0, %v1828
        %v2117 = vsub.f32 1.0, %v1829
        %v2118 = vsub.f32 1.0, %v1830
        %v2119 = vsub.f32 1.0, %v1831
        %v2120 = vsub.f32 1.0, %v1832
        %v2121 = vmul.f32 %v2089, %v2025
        %v2122 = vmul.f32 %v2090, %v2026
        %v2123 = vmul.f32 %v2091, %v2027
        %v2124 = vmul.f32 %v2092, %v2028
        %v2125 = vmul.f32 %v2093, %v2029
        %v2126 = vmul.f32 %v2094, %v2030
        %v2127 = vmul.f32 %v2095, %v2031
        %v2128 = vmul.f32 %v2096, %v2032
        %v2129 = vmul.f32 %v2097, %v2033
        %v2130 = vmul.f32 %v2098, %v2034
        %v2131 = vmul.f32 %v2099, %v2035
        %v2132 = vmul.f32 %v2100, %v2036
        %v2133 = vmul.f32 %v2101, %v2037
        %v2134 = vmul.f32 %v2102, %v2038
        %v2135 = vmul.f32 %v2103, %v2039
        %v2136 = vmul.f32 %v2104, %v2040
        %v2137 = vmul.f32 %v2105, %v2041
        %v2138 = vmul.f32 %v2106, %v2042
        %v2139 = vmul.f32 %v2107, %v2043
        %v2140 = vmul.f32 %v2108, %v2044
        %v2141 = vmul.f32 %v2109, %v2045
        %v2142 = vmul.f32 %v2110, %v2046
        %v2143 = vmul.f32 %v2111, %v2047
        %v2144 = vmul.f32 %v2112, %v2048
        %v2145 = vmul.f32 %v2113, %v2049
        %v2146 = vmul.f32 %v2114, %v2050
        %v2147 = vmul.f32 %v2115, %v2051
        %v2148 = vmul.f32 %v2116, %v2052
        %v2149 = vmul.f32 %v2117, %v2053
        %v2150 = vmul.f32 %v2118, %v2054
        %v2151 = vmul.f32 %v2119, %v2055
        %v2152 = vmul.f32 %v2120, %v2056
        %v2153 = vadd.f32 %v2057, %v2121
        %v2154 = vadd.f32 %v2058, %v2122
        %v2155 = vadd.f32 %v2059, %v2123
        %v2156 = vadd.f32 %v2060, %v2124
        %v2157 = vadd.f32 %v2061, %v2125
        %v2158 = vadd.f32 %v2062, %v2126
        %v2159 = vadd.f32 %v2063, %v2127
        %v2160 = vadd.f32 %v2064, %v2128
        %v2161 = vadd.f32 %v2065, %v2129
        %v2162 = vadd.f32 %v2066, %v2130
        %v2163 = vadd.f32 %v2067, %v2131
        %v2164 = vadd.f32 %v2068, %v2132
        %v2165 = vadd.f32 %v2069, %v2133
        %v2166 = vadd.f32 %v2070, %v2134
        %v2167 = vadd.f32 %v2071, %v2135
        %v2168 = vadd.f32 %v2072, %v2136
        %v2169 = vadd.f32 %v2073, %v2137
        %v2170 = vadd.f32 %v2074, %v2138
        %v2171 = vadd.f32 %v2075, %v2139
        %v2172 = vadd.f32 %v2076, %v2140
        %v2173 = vadd.f32 %v2077, %v2141
        %v2174 = vadd.f32 %v2078, %v2142
        %v2175 = vadd.f32 %v2079, %v2143
        %v2176 = vadd.f32 %v2080, %v2144
        %v2177 = vadd.f32 %v2081, %v2145
        %v2178 = vadd.f32 %v2082, %v2146
        %v2179 = vadd.f32 %v2083, %v2147
        %v2180 = vadd.f32 %v2084, %v2148
        %v2181 = vadd.f32 %v2085, %v2149
        %v2182 = vadd.f32 %v2086, %v2150
        %v2183 = vadd.f32 %v2087, %v2151
        %v2184 = vadd.f32 %v2088, %v2152
        %v2185 = vsel %vm1768, %v2153, 0.0
        %v2186 = vsel %vm1768, %v2154, 0.0
        %v2187 = vadd.f32 %v2185, %v2186
        %v2188 = vsel %vm1768, %v2155, 0.0
        %v2189 = vadd.f32 %v2187, %v2188
        %v2190 = vsel %vm1768, %v2156, 0.0
        %v2191 = vadd.f32 %v2189, %v2190
        %v2192 = vsel %vm1768, %v2157, 0.0
        %v2193 = vadd.f32 %v2191, %v2192
        %v2194 = vsel %vm1768, %v2158, 0.0
        %v2195 = vadd.f32 %v2193, %v2194
        %v2196 = vsel %vm1768, %v2159, 0.0
        %v2197 = vadd.f32 %v2195, %v2196
        %v2198 = vsel %vm1768, %v2160, 0.0
        %v2199 = vadd.f32 %v2197, %v2198
        %v2200 = vsel %vm1768, %v2161, 0.0
        %v2201 = vadd.f32 %v2199, %v2200
        %v2202 = vsel %vm1768, %v2162, 0.0
        %v2203 = vadd.f32 %v2201, %v2202
        %v2204 = vsel %vm1768, %v2163, 0.0
        %v2205 = vadd.f32 %v2203, %v2204
        %v2206 = vsel %vm1768, %v2164, 0.0
        %v2207 = vadd.f32 %v2205, %v2206
        %v2208 = vsel %vm1768, %v2165, 0.0
        %v2209 = vadd.f32 %v2207, %v2208
        %v2210 = vsel %vm1768, %v2166, 0.0
        %v2211 = vadd.f32 %v2209, %v2210
        %v2212 = vsel %vm1768, %v2167, 0.0
        %v2213 = vadd.f32 %v2211, %v2212
        %v2214 = vsel %vm1768, %v2168, 0.0
        %v2215 = vadd.f32 %v2213, %v2214
        %v2216 = vsel %vm1768, %v2169, 0.0
        %v2217 = vadd.f32 %v2215, %v2216
        %v2218 = vsel %vm1768, %v2170, 0.0
        %v2219 = vadd.f32 %v2217, %v2218
        %v2220 = vsel %vm1768, %v2171, 0.0
        %v2221 = vadd.f32 %v2219, %v2220
        %v2222 = vsel %vm1768, %v2172, 0.0
        %v2223 = vadd.f32 %v2221, %v2222
        %v2224 = vsel %vm1768, %v2173, 0.0
        %v2225 = vadd.f32 %v2223, %v2224
        %v2226 = vsel %vm1768, %v2174, 0.0
        %v2227 = vadd.f32 %v2225, %v2226
        %v2228 = vsel %vm1768, %v2175, 0.0
        %v2229 = vadd.f32 %v2227, %v2228
        %v2230 = vsel %vm1768, %v2176, 0.0
        %v2231 = vadd.f32 %v2229, %v2230
        %v2232 = vsel %vm1768, %v2177, 0.0
        %v2233 = vadd.f32 %v2231, %v2232
        %v2234 = vsel %vm1768, %v2178, 0.0
        %v2235 = vadd.f32 %v2233, %v2234
        %v2236 = vsel %vm1768, %v2179, 0.0
        %v2237 = vadd.f32 %v2235, %v2236
        %v2238 = vsel %vm1768, %v2180, 0.0
        %v2239 = vadd.f32 %v2237, %v2238
        %v2240 = vsel %vm1768, %v2181, 0.0
        %v2241 = vadd.f32 %v2239, %v2240
        %v2242 = vsel %vm1768, %v2182, 0.0
        %v2243 = vadd.f32 %v2241, %v2242
        %v2244 = vsel %vm1768, %v2183, 0.0
        %v2245 = vadd.f32 %v2243, %v2244
        %v2246 = vsel %vm1768, %v2184, 0.0
        %v2247 = vadd.f32 %v2245, %v2246
        %2248 = vadd.xlane.f32.xlu0 %v2247
        %v2249 = vpop.xlane.xlu0 %2248
        %v2250 = vrot.slane %v2249, 4
        %v2251 = vadd.f32 %v2249, %v2250
        %v2252 = vrot.slane %v2251, 2
        %v2253 = vadd.f32 %v2251, %v2252
        %v2254 = vrot.slane %v2253, 1
        %v2255 = vadd.f32 %v2253, %v2254
        %s2256 = vtos %v2255
        %s2257 = ssub.f32 0.0, %s2256
        %p2258 = scmp.eq.s32.totalorder %s18, 0
        // Predicated region
        $region37: #{fsq_vae_forward.19} parent=35 // pred_check
          %p2259 = pneg %p2258
        $region38: #{fsq_vae_forward.19} parent=35 // pred_check_branch
          %2261 = sbr.rel (%p2259) target = $region40
        $region39: #{fsq_vae_forward.19} parent=35 // pred_region
          %vm2262 = vcmask 0
          %2263 = vst.msk [vmem:[#allocation2] sm:$0x1] %vm2262, 0.0
        $region40: #{fsq_vae_forward.19} parent=35 // pred_fallthru
          _
        %v2264 = vld [vmem:[#allocation2] sm:$0x1]
        %v2265 = vstv %s2257
        %v2266 = vadd.f32 %v2264, %v2265
        %vm2267 = vcmask 0
        %2268 = vst.msk [vmem:[#allocation2] sm:$0x1] %vm2267, %v2266
        %s2269 = smul.u32 32, %s18
        %p2270 = scmp.lt.s32.totalorder %s2269, 63
        %s2271 = scalar_select %p2270, %s2269, 63
        %s2272 = smul.addr %s2271, 8
        %s2273 = scalar_lea.vmem %s4, %s2272
        // Predicated region
        $region41: #{fsq_vae_forward.19} parent=35 // pred_check
          %p2274 = pneg %p130
        $region42: #{fsq_vae_forward.19} parent=35 // pred_check_branch
          %2276 = sbr.rel (%p2274) target = $region44
        $region43: #{fsq_vae_forward.19} parent=35 // pred_region
          %s2277 = smul.u32 32, %s18
        $region44: #{fsq_vae_forward.19} parent=35 // pred_fallthru
          _
        // Predicated region
        $region45: #{fsq_vae_forward.19} parent=35 // pred_check
          %p2278 = pneg %p151
        $region46: #{fsq_vae_forward.19} parent=35 // pred_check_branch
          %2280 = sbr.rel (%p2278) target = $region48
        $region47: #{fsq_vae_forward.19} parent=35 // pred_region
          %s2282 = ssub.s32 16, 16
          %2283 = vsyncadd [#allocation3], %s2282
          %s2285 = sshll.u32 [#allocation2], 4
          %s2286 = int_to_ptr.vmem [resolvable:$true] %s2285
          %2288 = dma.vmem_to_hbm [thread:$0]  %s2286, 16, %s5, [#allocation3]
        $region48: #{fsq_vae_forward.19} parent=35 // pred_fallthru
          _
        // Predicated region
        $region49: #{fsq_vae_forward.19} parent=35 // pred_check
          %p2289 = pneg %p151
        $region50: #{fsq_vae_forward.19} parent=35 // pred_check_branch
          %2291 = sbr.rel (%p2289) target = $region52
        $region51: #{fsq_vae_forward.19} parent=35 // pred_region
          %2292 = dma.done [#allocation3], 16
        $region52: #{fsq_vae_forward.19} parent=35 // pred_fallthru
          _
      $region36: #{fsq_vae_forward.19} parent=5 // pred_fallthru
        _
      %p2293 = scmp.le.s32.totalorder 2, %s13
      // Predicated region
      $region53: #{fsq_vae_forward.19} parent=5 // pred_check
        %p2294 = pneg %p2293
      $region54: #{fsq_vae_forward.19} parent=5 // pred_check_branch
        %2296 = sbr.rel (%p2294) target = $region56
      $region55: #{fsq_vae_forward.19} parent=5 // pred_region
        %s2297 = ssub.s32 %s13, 2
        // Predicated region
        $region57: #{fsq_vae_forward.19} parent=55 // pred_check
          %p2298 = pneg %p136
        $region58: #{fsq_vae_forward.19} parent=55 // pred_check_branch
          %2300 = sbr.rel (%p2298) target = $region60
        $region59: #{fsq_vae_forward.19} parent=55 // pred_region
          %s2301 = smul.u32 32, %s19
          %p2302 = scmp.lt.s32.totalorder %s2301, 63
          %s2303 = scalar_select %p2302, %s2301, 63
          %s2304 = smul.addr %s2303, 8
          %s2305 = scalar_lea.vmem %s4, %s2304
        $region60: #{fsq_vae_forward.19} parent=55 // pred_fallthru
          _
      $region56: #{fsq_vae_forward.19} parent=5 // pred_fallthru
        _
    $region6: #{fsq_vae_forward.19} parent=1 // loop_footer
      %s17 = sadd.s32 1, %s13
    $region7: #{fsq_vae_forward.19} parent=1 // loop_footer_branch
      %12 = sbr.rel target = $region3
    $region8: #{fsq_vae_forward.19} parent=1 // loop_exit
      _
    %2306 = vsyncpa [#allocation3], 1
    %s2307 = scalar_lea.sflag [#allocation3], 1
    %2308 = vsyncpa %s2307, 1

</llo_original>
